<compile_context>
chip_gen: v6e
topology: v6e:2x2x1
jax: 0.10.0
libtpu: 0.0.40
codegen_flags: <defaults>
</compile_context>

<pallas_src>
import jax
import jax.numpy as jnp
from jax.experimental import pallas as pl
from jax.experimental.pallas import tpu as pltpu


# --------------------------------------------------------------------------
# helpers
# --------------------------------------------------------------------------
def _sigmoid(x):
    return 1.0 / (1.0 + jnp.exp(-x))


def _full_spec(a):
    """Whole-array block with a constant index map (stays VMEM resident)."""
    nd = a.ndim
    return pl.BlockSpec(a.shape, lambda *_args, _nd=nd: (0,) * _nd)


# --------------------------------------------------------------------------
# Kernel 1: TextEncoder  (LSTM over captions, take last step, then Linear)
# --------------------------------------------------------------------------
def _text_lstm_kernel(x_ref, w_ih_ref, w_hh_ref, b_ref, wfc_ref, bfc_ref,
                      out_ref, h_s, c_s):
    t = pl.program_id(0)
    d = h_s.shape[-1]

    @pl.when(t == 0)
    def _():
        h_s[...] = jnp.zeros_like(h_s)
        c_s[...] = jnp.zeros_like(c_s)

    x = x_ref[...][0]                           # (B, M)
    h = h_s[...]
    c = c_s[...]

    gates = (jnp.dot(x, w_ih_ref[...], preferred_element_type=jnp.float32)
             + jnp.dot(h, w_hh_ref[...], preferred_element_type=jnp.float32)
             + b_ref[...])
    i = _sigmoid(gates[:, 0:d])
    f = _sigmoid(gates[:, d:2 * d])
    g = jnp.tanh(gates[:, 2 * d:3 * d])
    o = _sigmoid(gates[:, 3 * d:4 * d])
    c_new = f * c + i * g
    h_new = o * jnp.tanh(c_new)

    h_s[...] = h_new
    c_s[...] = c_new

    @pl.when(t == pl.num_programs(0) - 1)
    def _():
        out_ref[...] = (jnp.dot(h_new, wfc_ref[...],
                                preferred_element_type=jnp.float32)
                        + bfc_ref[...])


def text_encoder_forward(p, emb):
    """emb: (B, T, M) -> text_feature (B, A)."""
    b, t_len, m = emb.shape
    d = p["te_w_hh"].shape[0]
    a = p["te_fc_w"].shape[1]
    x = jnp.transpose(emb, (1, 0, 2))           # (T, B, M)
    weights = (p["te_w_ih"], p["te_w_hh"], p["te_b"],
               p["te_fc_w"], p["te_fc_b"])
    in_specs = ([pl.BlockSpec((1, b, m), lambda t: (t, 0, 0))]
                + [_full_spec(w) for w in weights])
    return pl.pallas_call(
        _text_lstm_kernel,
        out_shape=jax.ShapeDtypeStruct((b, a), jnp.float32),
        grid_spec=pltpu.PrefetchScalarGridSpec(
            num_scalar_prefetch=0,
            grid=(t_len,),
            in_specs=in_specs,
            out_specs=pl.BlockSpec((b, a), lambda t: (0, 0)),
            scratch_shapes=[pltpu.VMEM((b, d), jnp.float32),
                            pltpu.VMEM((b, d), jnp.float32)]),
        compiler_params=pltpu.CompilerParams(
            dimension_semantics=("arbitrary",)),
    )(x, *weights)


# --------------------------------------------------------------------------
# Kernel 2: init_h / init_c / nnimg fused  (mean over pixels + one Linear)
# --------------------------------------------------------------------------
def _init_kernel(enc_ref, w_ref, b_ref, out_ref):
    eo = enc_ref[...]                            # (B, P, E)
    mean_eo = jnp.mean(eo, axis=1)               # (B, E)
    out_ref[...] = (jnp.dot(mean_eo, w_ref[...],
                            preferred_element_type=jnp.float32)
                    + b_ref[...])


def init_forward(p, enc):
    """enc: (B, P, E) -> (B, 2D + A) = [init_h | init_c | nnimg]."""
    b = enc.shape[0]
    n_out = p["init_w"].shape[1]
    ins = (enc, p["init_w"], p["init_b"])
    return pl.pallas_call(
        _init_kernel,
        out_shape=jax.ShapeDtypeStruct((b, n_out), jnp.float32),
        grid_spec=pltpu.PrefetchScalarGridSpec(
            num_scalar_prefetch=0,
            grid=(1,),
            in_specs=[_full_spec(x) for x in ins],
            out_specs=pl.BlockSpec((b, n_out), lambda i: (0, 0))),
        compiler_params=pltpu.CompilerParams(
            dimension_semantics=("arbitrary",)),
    )(*ins)


# --------------------------------------------------------------------------
# Kernel 3: fused decoder step (TVAttention + LSTMCell + Attention + LSTMCell
#           + fc), one grid step per decode timestep.
# --------------------------------------------------------------------------
def _decoder_step_kernel(
        enc_ref, emb_ref, dl_ref, h0_ref, c0_ref,
        nn2_w, nn2_b, mha_wv, mha_bv, mha_wo, mha_bo, ln1_g, ln1_b,
        nn1_w, nn1_b,
        l1_wih, l1_whh, l1_b,
        aenc_w, aenc_b, adec_w, adec_b, afull_w,
        l2_wih, l2_whh, l2_b,
        fc_w, fc_b,
        preds_ref, alphas_ref,
        h1_s, c1_s, h2_s, c2_s):
    t = pl.program_id(0)
    f32 = jnp.float32

    @pl.when(t == 0)
    def _():
        # init_hidden_state is called twice with identical weights -> h1==h2.
        h1_s[...] = h0_ref[...]
        c1_s[...] = c0_ref[...]
        h2_s[...] = h0_ref[...]
        c2_s[...] = c0_ref[...]

    eo = enc_ref[...]                            # (B, P, E)
    b, p_pix, e = eo.shape
    dm = e // 2
    d = h1_s.shape[-1]

    emb_t = emb_ref[...][0]                      # (B, M)
    h1 = h1_s[...]
    c1 = c1_s[...]
    h2 = h2_s[...]
    c2 = c2_s[...]

    # ---------------- TVAttention(h2, emb_t, encoder_out) ----------------
    vision1 = eo[:, :, :dm]                      # (B, P, dm)
    vision2 = eo[:, :, dm:]                      # (B, P, dm)

    # nn2 on the text feature (h2)
    text = (jnp.dot(h2, nn2_w[...], preferred_element_type=f32)
            + nn2_b[...])                        # (B, dm)
    sim = vision1 * text[:, None, :]             # (B, P, dm)
    sim = sim - jnp.max(sim, axis=1, keepdims=True)
    sim = jnp.exp(sim)
    sim = sim / jnp.sum(sim, axis=1, keepdims=True)   # softmax over pixels
    vision1_t = vision1 * sim + vision1

    # CrossAttention with key/value length 1 -> softmax == 1 exactly.
    v_w = (jnp.dot(emb_t, mha_wv[...], preferred_element_type=f32)
           + mha_bv[...])                        # v_proj(word)
    attn = (jnp.dot(v_w, mha_wo[...], preferred_element_type=f32)
            + mha_bo[...])                       # out_proj(...)
    x = vision2 + attn[:, None, :]               # residual (dropout = id)
    mu = jnp.mean(x, axis=-1, keepdims=True)
    var = jnp.mean((x - mu) ** 2, axis=-1, keepdims=True)
    xn = (x - mu) * jax.lax.rsqrt(var + 1e-5)
    xn = xn * ln1_g[...] + ln1_b[...]
    vision2_w = jnp.maximum(xn, 0.0) + vision2

    cat12 = jnp.concatenate([vision1_t, vision2_w], axis=-1)   # (B, P, E)
    vis = (jnp.dot(cat12.reshape(b * p_pix, e), nn1_w[...],
                   preferred_element_type=f32) + nn1_b[...])   # (B*P, E)
    out_feature = jnp.mean(vis.reshape(b, p_pix, e), axis=1)   # (B, E)

    # ---------------- top-down attention LSTMCell -------------------------
    x1 = jnp.concatenate([h2, out_feature, emb_t], axis=-1)    # (B, D+E+M)
    g1 = (jnp.dot(x1, l1_wih[...], preferred_element_type=f32)
          + jnp.dot(h1, l1_whh[...], preferred_element_type=f32)
          + l1_b[...])
    i1 = _sigmoid(g1[:, 0:d])
    f1 = _sigmoid(g1[:, d:2 * d])
    gg1 = jnp.tanh(g1[:, 2 * d:3 * d])
    o1 = _sigmoid(g1[:, 3 * d:4 * d])
    c1n = f1 * c1 + i1 * gg1
    h1n = o1 * jnp.tanh(c1n)

    # ---------------- Attention(encoder_out, h1n) -------------------------
    att1 = (jnp.dot(eo.reshape(b * p_pix, e), aenc_w[...],
                    preferred_element_type=f32) + aenc_b[...])   # (B*P, A)
    att2 = (jnp.dot(h1n, adec_w[...], preferred_element_type=f32)
            + adec_b[...])                                       # (B, A)
    a_dim = att1.shape[-1]
    pre = jnp.maximum(att1.reshape(b, p_pix, a_dim) + att2[:, None, :], 0.0)
    # full_att bias dropped exactly (softmax shift invariance).
    att = jnp.sum(pre * afull_w[...].reshape(1, 1, a_dim), axis=-1)  # (B, P)
    att = att - jnp.max(att, axis=-1, keepdims=True)
    att = jnp.exp(att)
    alpha = att / jnp.sum(att, axis=-1, keepdims=True)               # (B, P)
    awe = jnp.sum(eo * alpha[:, :, None], axis=1)                    # (B, E)

    # ---------------- language LSTMCell ------------------------------------
    x2 = jnp.concatenate([h1n, awe], axis=-1)                        # (B, D+E)
    g2 = (jnp.dot(x2, l2_wih[...], preferred_element_type=f32)
          + jnp.dot(h2, l2_whh[...], preferred_element_type=f32)
          + l2_b[...])
    i2 = _sigmoid(g2[:, 0:d])
    f2 = _sigmoid(g2[:, d:2 * d])
    gg2 = jnp.tanh(g2[:, 2 * d:3 * d])
    o2 = _sigmoid(g2[:, 3 * d:4 * d])
    c2n = f2 * c2 + i2 * gg2
    h2n = o2 * jnp.tanh(c2n)

    preds = (jnp.dot(h2n, fc_w[...], preferred_element_type=f32)
             + fc_b[...])                                            # (B, V)

    # mask rows whose caption is already finished (matches batch_size_t)
    maskf = (dl_ref[...] > t).astype(f32)                            # (B, 1)
    preds_ref[...] = (preds * maskf)[None, :, :]
    alphas_ref[...] = (alpha * maskf)[None, :, :]

    h1_s[...] = h1n
    c1_s[...] = c1n
    h2_s[...] = h2n
    c2_s[...] = c2n


def decoder_steps_forward(p, enc, emb_dec, decode_lengths, h0, c0, t_dec):
    """Run the full decode loop in one pallas_call (grid over timesteps)."""
    b, p_pix, _ = enc.shape
    m = emb_dec.shape[2]
    d = h0.shape[1]
    v = p["fc_w"].shape[1]

    emb_tm = jnp.transpose(emb_dec, (1, 0, 2))          # (T_dec, B, M)
    dl2 = decode_lengths.reshape(b, 1).astype(jnp.int32)

    # order must match _decoder_step_kernel's signature
    weights = (p["nn2_w"], p["nn2_b"],
               p["mha_wv"], p["mha_bv"], p["mha_wo"], p["mha_bo"],
               p["ln1_g"], p["ln1_b"],
               p["nn1_w"], p["nn1_b"],
               p["lstm1_w_ih"], p["lstm1_w_hh"], p["lstm1_b"],
               p["att_enc_w"], p["att_enc_b"],
               p["att_dec_w"], p["att_dec_b"], p["att_full_w"],
               p["lstm2_w_ih"], p["lstm2_w_hh"], p["lstm2_b"],
               p["fc_w"], p["fc_b"])

    in_arrays = (enc, emb_tm, dl2, h0, c0) + weights
    in_specs = ([_full_spec(enc),
                 pl.BlockSpec((1, b, m), lambda t: (t, 0, 0)),
                 _full_spec(dl2), _full_spec(h0), _full_spec(c0)]
                + [_full_spec(w) for w in weights])

    out_shapes = (jax.ShapeDtypeStruct((t_dec, b, v), jnp.float32),
                  jax.ShapeDtypeStruct((t_dec, b, p_pix), jnp.float32))
    out_specs = [pl.BlockSpec((1, b, v), lambda t: (t, 0, 0)),
                 pl.BlockSpec((1, b, p_pix), lambda t: (t, 0, 0))]

    preds_tm, alphas_tm = pl.pallas_call(
        _decoder_step_kernel,
        out_shape=out_shapes,
        grid_spec=pltpu.PrefetchScalarGridSpec(
            num_scalar_prefetch=0,
            grid=(t_dec,),
            in_specs=in_specs,
            out_specs=out_specs,
            scratch_shapes=[pltpu.VMEM((b, d), jnp.float32)] * 4),
        compiler_params=pltpu.CompilerParams(
            dimension_semantics=("arbitrary",)),
    )(*in_arrays)

    predictions = jnp.transpose(preds_tm, (1, 0, 2))    # (B, T_dec, V)
    alphas = jnp.transpose(alphas_tm, (1, 0, 2))        # (B, T_dec, P)
    return predictions, alphas


# --------------------------------------------------------------------------
# Full forward (glue: sorting, embedding gather, output packaging)
# --------------------------------------------------------------------------
def decoder_forward(params, encoder_out, encoded_captions, caption_lengths, *,
                    t_dec):
    b = encoder_out.shape[0]
    e = encoder_out.shape[-1]
    enc = encoder_out.reshape(b, -1, e)                 # (B, P, E)

    # sort by decreasing caption length (glue; small)
    cap_len = caption_lengths.reshape(b)
    sort_ind = jnp.argsort(-cap_len)
    cap_len = cap_len[sort_ind]
    enc = enc[sort_ind]
    caps = encoded_captions[sort_ind]

    # TODO(synk): embedding lookup (gather) stays in XLA glue.
    emb = jnp.take(params["embedding"], caps, axis=0)   # (B, T, M)

    text_feature = text_encoder_forward(params, emb)    # (B, A)

    d = params["lstm1_w_hh"].shape[0]
    init_out = init_forward(params, enc)                # (B, 2D + A)
    h0 = init_out[:, :d]
    c0 = init_out[:, d:2 * d]
    img_feature = init_out[:, 2 * d:]

    decode_lengths = cap_len - 1
    emb_dec = emb[:, :t_dec, :]
    predictions, alphas = decoder_steps_forward(
        params, enc, emb_dec, decode_lengths, h0, c0, t_dec)

    return (predictions, caps, decode_lengths, alphas, sort_ind,
            img_feature, text_feature)


# --------------------------------------------------------------------------
# Deterministic parameter construction (weights stored as (in, out))
# --------------------------------------------------------------------------
def make_params(key, *, E, A, D, M, V):
    # Hard-coded constraints of the PyTorch module (d_model = encoder_dim/2,
    # nn2 input = decoder_dim, embed_dim = d_model) scaled to small dims.
    dm = E // 2
    assert A == dm and M == dm

    keys = jax.random.split(key, 64)
    it = iter(keys)

    def w(fin, fout):
        return jax.random.normal(next(it), (fin, fout),
                                 jnp.float32) / jnp.sqrt(fin)

    def bvec(fout):
        return 0.02 * jax.random.normal(next(it), (1, fout), jnp.float32)

    p = {}
    p["embedding"] = jax.random.uniform(next(it), (V, M), jnp.float32,
                                        -0.1, 0.1)
    # TextEncoder: LSTM(M -> D) + Linear(D -> A)
    p["te_w_ih"] = w(M, 4 * D)
    p["te_w_hh"] = w(D, 4 * D)
    p["te_b"] = bvec(4 * D)
    p["te_fc_w"] = w(D, A)
    p["te_fc_b"] = bvec(A)
    # init_h | init_c | nnimg fused
    p["init_w"] = w(E, 2 * D + A)
    p["init_b"] = bvec(2 * D + A)
    # TVAttention
    p["nn2_w"] = w(D, A)
    p["nn2_b"] = bvec(A)
    p["mha_wv"] = w(dm, dm)      # v_proj slice of in_proj_weight
    p["mha_bv"] = bvec(dm)
    p["mha_wo"] = w(dm, dm)      # out_proj
    p["mha_bo"] = bvec(dm)
    p["ln1_g"] = jnp.ones((1, dm), jnp.float32)
    p["ln1_b"] = jnp.zeros((1, dm), jnp.float32)
    p["nn1_w"] = w(E, E)
    p["nn1_b"] = bvec(E)
    # top_down_attention LSTMCell: input = [h2 | out_feature | emb]
    p["lstm1_w_ih"] = w(D + E + M, 4 * D)
    p["lstm1_w_hh"] = w(D, 4 * D)
    p["lstm1_b"] = bvec(4 * D)
    # Attention
    p["att_enc_w"] = w(E, A)
    p["att_enc_b"] = bvec(A)
    p["att_dec_w"] = w(D, A)
    p["att_dec_b"] = bvec(A)
    p["att_full_w"] = w(A, 1).reshape(1, A)
    # language_attention LSTMCell: input = [h1 | awe]
    p["lstm2_w_ih"] = w(D + E, 4 * D)
    p["lstm2_w_hh"] = w(D, 4 * D)
    p["lstm2_b"] = bvec(4 * D)
    # output fc
    p["fc_w"] = w(D, V)
    p["fc_b"] = bvec(V)
    return p


# --------------------------------------------------------------------------
if __name__ == "__main__":
    key = jax.random.PRNGKey(0)
    kp, ke, kc = jax.random.split(key, 3)

    B = 2        # batch
    GRID = 4     # enc_image_size (num_pixels = 16)
    E = 256      # encoder_dim
    A = 128      # attention_dim (= encoder_dim // 2, required by TVAttention)
    D = 128      # decoder_dim
    M = 128      # embed_dim (= cross-attention d_model)
    V = 512      # vocab_size
    T = 6        # max caption length

    params = make_params(kp, E=E, A=A, D=D, M=M, V=V)
    encoder_out = jax.random.normal(ke, (B, GRID, GRID, E), jnp.float32)
    encoded_captions = jax.random.randint(kc, (B, T), 0, V, jnp.int32)
    caption_lengths = jnp.array([[4], [T]], dtype=jnp.int32)
    t_dec = int(jnp.max(caption_lengths)) - 1     # max(decode_lengths)

    fwd = jax.jit(decoder_forward, static_argnames=("t_dec",))
    outs = fwd(params, encoder_out, encoded_captions, caption_lengths,
               t_dec=t_dec)
    outs = jax.block_until_ready(outs)

    (predictions, caps_sorted, decode_lengths, alphas, sort_ind,
     img_feature, text_feature) = outs

    P = GRID * GRID
    assert predictions.shape == (B, t_dec, V), predictions.shape
    assert alphas.shape == (B, t_dec, P), alphas.shape
    assert caps_sorted.shape == (B, T)
    assert img_feature.shape == (B, A)
    assert text_feature.shape == (B, A)
    for o in (predictions, alphas, img_feature, text_feature):
        assert bool(jnp.all(jnp.isfinite(o)))
    # finished rows must be exactly zero (batch_size_t masking)
    dl_host = jax.device_get(decode_lengths)
    for bb in range(B):
        if int(dl_host[bb]) < t_dec:
            assert float(jnp.max(jnp.abs(
                predictions[bb, int(dl_host[bb]):, :]))) == 0.0

    print("KERNEL_OK")
</pallas_src>

<mosaic_0001>
module attributes {stable_mosaic.version = 11 : i64} {
  func.func @_init_kernel(%arg0: i32, %arg1: memref<2x16x256xf32, #tpu.memory_space<vmem>>, %arg2: memref<256x384xf32, #tpu.memory_space<vmem>>, %arg3: memref<1x384xf32, #tpu.memory_space<vmem>>, %arg4: memref<2x384xf32, #tpu.memory_space<vmem>>) attributes {dimension_semantics = [#tpu.dimension_semantics<arbitrary>], iteration_bounds = array<i64: 1>, scalar_prefetch = 0 : i64, scratch_operands = 0 : i64, tpu.core_type = #tpu.core_type<tc>, window_params = [{pipeline_mode = #tpu.pipeline_mode<synchronous>, transform_indices = @transform_0, window_bounds = array<i64: 2, 16, 256>}, {pipeline_mode = #tpu.pipeline_mode<synchronous>, transform_indices = @transform_1, window_bounds = array<i64: 256, 384>}, {pipeline_mode = #tpu.pipeline_mode<synchronous>, transform_indices = @transform_2, window_bounds = array<i64: 1, 384>}, {pipeline_mode = #tpu.pipeline_mode<synchronous>, transform_indices = @transform_3, window_bounds = array<i64: 2, 384>}]} {
    %c0 = arith.constant 0 : index
    %c0_0 = arith.constant 0 : index
    %c0_1 = arith.constant 0 : index
    %0 = vector.load %arg1[%c0, %c0_0, %c0_1] : memref<2x16x256xf32, #tpu.memory_space<vmem>>, vector<2x16x256xf32>
    %cst = arith.constant dense<0.000000e+00> : vector<2x256xf32>
    %1 = vector.multi_reduction <add>, %0, %cst [1] : vector<2x16x256xf32> to vector<2x256xf32>
    %cst_2 = arith.constant 1.600000e+01 : f32
    %2 = vector.broadcast %cst_2 : f32 to vector<2x256xf32>
    %3 = arith.divf %1, %2 : vector<2x256xf32>
    %c0_3 = arith.constant 0 : index
    %c0_4 = arith.constant 0 : index
    %4 = vector.load %arg2[%c0_3, %c0_4] : memref<256x384xf32, #tpu.memory_space<vmem>>, vector<256x384xf32>
    %cst_5 = arith.constant dense<0.000000e+00> : vector<2x384xf32>
    %5 = tpu.matmul %3, %4, %cst_5 {dimension_numbers = #tpu.dot_dimension_numbers<[1], [0], [0], [1], [0, 0, 1, 1], [], []>} : vector<2x256xf32>, vector<256x384xf32>, vector<2x384xf32> -> vector<2x384xf32>
    %c0_6 = arith.constant 0 : index
    %c0_7 = arith.constant 0 : index
    %6 = vector.load %arg3[%c0_6, %c0_7] : memref<1x384xf32, #tpu.memory_space<vmem>>, vector<1x384xf32>
    %7 = vector.broadcast %6 : vector<1x384xf32> to vector<2x384xf32>
    %8 = arith.addf %5, %7 : vector<2x384xf32>
    %c0_8 = arith.constant 0 : index
    %c0_9 = arith.constant 0 : index
    %9 = vector.load %arg4[%c0_8, %c0_9] : memref<2x384xf32, #tpu.memory_space<vmem>>, vector<2x384xf32>
    tpu.vector_store %arg4[%c0_8, %c0_9], %8 {strides = array<i32>} : memref<2x384xf32, #tpu.memory_space<vmem>>, vector<2x384xf32>,
    return
  }
  func.func @transform_0(%arg0: i32) -> (i32, i32, i32) {
    %c0_i32 = arith.constant 0 : i32
    %c0_i32_0 = arith.constant 0 : i32
    %c0_i32_1 = arith.constant 0 : i32
    %c0_i32_2 = arith.constant 0 : i32
    return %c0_i32, %c0_i32_0, %c0_i32_1 : i32, i32, i32
  }
  func.func @transform_1(%arg0: i32) -> (i32, i32) {
    %c0_i32 = arith.constant 0 : i32
    %c0_i32_0 = arith.constant 0 : i32
    %c0_i32_1 = arith.constant 0 : i32
    return %c0_i32, %c0_i32_0 : i32, i32
  }
  func.func @transform_2(%arg0: i32) -> (i32, i32) {
    %c0_i32 = arith.constant 0 : i32
    %c0_i32_0 = arith.constant 0 : i32
    %c0_i32_1 = arith.constant 0 : i32
    return %c0_i32, %c0_i32_0 : i32, i32
  }
  func.func @transform_3(%arg0: i32) -> (i32, i32) {
    %c0_i32 = arith.constant 0 : i32
    %c0_i32_0 = arith.constant 0 : i32
    %c0_i32_1 = arith.constant 0 : i32
    return %c0_i32, %c0_i32_0 : i32, i32
  }
}

module attributes {stable_mosaic.version = 11 : i64} {
  func.func @_decoder_step_kernel(%arg0: i32, %arg1: memref<2x16x256xf32, #tpu.memory_space<vmem>>, %arg2: memref<1x2x128xf32, #tpu.memory_space<vmem>>, %arg3: memref<2x1xi32, #tpu.memory_space<vmem>>, %arg4: memref<2x128xf32, #tpu.memory_space<vmem>>, %arg5: memref<2x128xf32, #tpu.memory_space<vmem>>, %arg6: memref<128x128xf32, #tpu.memory_space<vmem>>, %arg7: memref<1x128xf32, #tpu.memory_space<vmem>>, %arg8: memref<128x128xf32, #tpu.memory_space<vmem>>, %arg9: memref<1x128xf32, #tpu.memory_space<vmem>>, %arg10: memref<128x128xf32, #tpu.memory_space<vmem>>, %arg11: memref<1x128xf32, #tpu.memory_space<vmem>>, %arg12: memref<1x128xf32, #tpu.memory_space<vmem>>, %arg13: memref<1x128xf32, #tpu.memory_space<vmem>>, %arg14: memref<256x256xf32, #tpu.memory_space<vmem>>, %arg15: memref<1x256xf32, #tpu.memory_space<vmem>>, %arg16: memref<512x512xf32, #tpu.memory_space<vmem>>, %arg17: memref<128x512xf32, #tpu.memory_space<vmem>>, %arg18: memref<1x512xf32, #tpu.memory_space<vmem>>, %arg19: memref<256x128xf32, #tpu.memory_space<vmem>>, %arg20: memref<1x128xf32, #tpu.memory_space<vmem>>, %arg21: memref<128x128xf32, #tpu.memory_space<vmem>>, %arg22: memref<1x128xf32, #tpu.memory_space<vmem>>, %arg23: memref<1x128xf32, #tpu.memory_space<vmem>>, %arg24: memref<384x512xf32, #tpu.memory_space<vmem>>, %arg25: memref<128x512xf32, #tpu.memory_space<vmem>>, %arg26: memref<1x512xf32, #tpu.memory_space<vmem>>, %arg27: memref<128x512xf32, #tpu.memory_space<vmem>>, %arg28: memref<1x512xf32, #tpu.memory_space<vmem>>, %arg29: memref<1x2x512xf32, #tpu.memory_space<vmem>>, %arg30: memref<1x2x16xf32, #tpu.memory_space<vmem>>, %arg31: memref<2x128xf32, #tpu.memory_space<vmem>>, %arg32: memref<2x128xf32, #tpu.memory_space<vmem>>, %arg33: memref<2x128xf32, #tpu.memory_space<vmem>>, %arg34: memref<2x128xf32, #tpu.memory_space<vmem>>) attributes {dimension_semantics = [#tpu.dimension_semantics<arbitrary>], iteration_bounds = array<i64: 5>, scalar_prefetch = 0 : i64, scratch_operands = 4 : i64, tpu.core_type = #tpu.core_type<tc>, window_params = [{pipeline_mode = #tpu.pipeline_mode<synchronous>, transform_indices = @transform_0, window_bounds = array<i64: 2, 16, 256>}, {transform_indices = @transform_1, window_bounds = array<i64: 1, 2, 128>}, {pipeline_mode = #tpu.pipeline_mode<synchronous>, transform_indices = @transform_2, window_bounds = array<i64: 2, 1>}, {pipeline_mode = #tpu.pipeline_mode<synchronous>, transform_indices = @transform_3, window_bounds = array<i64: 2, 128>}, {pipeline_mode = #tpu.pipeline_mode<synchronous>, transform_indices = @transform_4, window_bounds = array<i64: 2, 128>}, {pipeline_mode = #tpu.pipeline_mode<synchronous>, transform_indices = @transform_5, window_bounds = array<i64: 128, 128>}, {pipeline_mode = #tpu.pipeline_mode<synchronous>, transform_indices = @transform_6, window_bounds = array<i64: 1, 128>}, {pipeline_mode = #tpu.pipeline_mode<synchronous>, transform_indices = @transform_7, window_bounds = array<i64: 128, 128>}, {pipeline_mode = #tpu.pipeline_mode<synchronous>, transform_indices = @transform_8, window_bounds = array<i64: 1, 128>}, {pipeline_mode = #tpu.pipeline_mode<synchronous>, transform_indices = @transform_9, window_bounds = array<i64: 128, 128>}, {pipeline_mode = #tpu.pipeline_mode<synchronous>, transform_indices = @transform_10, window_bounds = array<i64: 1, 128>}, {pipeline_mode = #tpu.pipeline_mode<synchronous>, transform_indices = @transform_11, window_bounds = array<i64: 1, 128>}, {pipeline_mode = #tpu.pipeline_mode<synchronous>, transform_indices = @transform_12, window_bounds = array<i64: 1, 128>}, {pipeline_mode = #tpu.pipeline_mode<synchronous>, transform_indices = @transform_13, window_bounds = array<i64: 256, 256>}, {pipeline_mode = #tpu.pipeline_mode<synchronous>, transform_indices = @transform_14, window_bounds = array<i64: 1, 256>}, {pipeline_mode = #tpu.pipeline_mode<synchronous>, transform_indices = @transform_15, window_bounds = array<i64: 512, 512>}, {pipeline_mode = #tpu.pipeline_mode<synchronous>, transform_indices = @transform_16, window_bounds = array<i64: 128, 512>}, {pipeline_mode = #tpu.pipeline_mode<synchronous>, transform_indices = @transform_17, window_bounds = array<i64: 1, 512>}, {pipeline_mode = #tpu.pipeline_mode<synchronous>, transform_indices = @transform_18, window_bounds = array<i64: 256, 128>}, {pipeline_mode = #tpu.pipeline_mode<synchronous>, transform_indices = @transform_19, window_bounds = array<i64: 1, 128>}, {pipeline_mode = #tpu.pipeline_mode<synchronous>, transform_indices = @transform_20, window_bounds = array<i64: 128, 128>}, {pipeline_mode = #tpu.pipeline_mode<synchronous>, transform_indices = @transform_21, window_bounds = array<i64: 1, 128>}, {pipeline_mode = #tpu.pipeline_mode<synchronous>, transform_indices = @transform_22, window_bounds = array<i64: 1, 128>}, {pipeline_mode = #tpu.pipeline_mode<synchronous>, transform_indices = @transform_23, window_bounds = array<i64: 384, 512>}, {pipeline_mode = #tpu.pipeline_mode<synchronous>, transform_indices = @transform_24, window_bounds = array<i64: 128, 512>}, {pipeline_mode = #tpu.pipeline_mode<synchronous>, transform_indices = @transform_25, window_bounds = array<i64: 1, 512>}, {pipeline_mode = #tpu.pipeline_mode<synchronous>, transform_indices = @transform_26, window_bounds = array<i64: 128, 512>}, {pipeline_mode = #tpu.pipeline_mode<synchronous>, transform_indices = @transform_27, window_bounds = array<i64: 1, 512>}, {transform_indices = @transform_28, window_bounds = array<i64: 1, 2, 512>}, {transform_indices = @transform_29, window_bounds = array<i64: 1, 2, 16>}]} {
    %c0_i32 = arith.constant 0 : i32
    %0 = arith.cmpi eq, %arg0, %c0_i32 : i32
    %1 = arith.extui %0 : i1 to i32
    %c0_i32_0 = arith.constant 0 : i32
    %2 = arith.cmpi ne, %1, %c0_i32_0 : i32
    scf.if %2 {
      %c0_119 = arith.constant 0 : index
      %c0_120 = arith.constant 0 : index
      %221 = vector.load %arg4[%c0_119, %c0_120] : memref<2x128xf32, #tpu.memory_space<vmem>>, vector<2x128xf32>
      %c0_121 = arith.constant 0 : index
      %c0_122 = arith.constant 0 : index
      %222 = vector.load %arg31[%c0_121, %c0_122] : memref<2x128xf32, #tpu.memory_space<vmem>>, vector<2x128xf32>
      tpu.vector_store %arg31[%c0_121, %c0_122], %221 {strides = array<i32>} : memref<2x128xf32, #tpu.memory_space<vmem>>, vector<2x128xf32>,
      %c0_123 = arith.constant 0 : index
      %c0_124 = arith.constant 0 : index
      %223 = vector.load %arg5[%c0_123, %c0_124] : memref<2x128xf32, #tpu.memory_space<vmem>>, vector<2x128xf32>
      %c0_125 = arith.constant 0 : index
      %c0_126 = arith.constant 0 : index
      %224 = vector.load %arg32[%c0_125, %c0_126] : memref<2x128xf32, #tpu.memory_space<vmem>>, vector<2x128xf32>
      tpu.vector_store %arg32[%c0_125, %c0_126], %223 {strides = array<i32>} : memref<2x128xf32, #tpu.memory_space<vmem>>, vector<2x128xf32>,
      %c0_127 = arith.constant 0 : index
      %c0_128 = arith.constant 0 : index
      %225 = vector.load %arg4[%c0_127, %c0_128] : memref<2x128xf32, #tpu.memory_space<vmem>>, vector<2x128xf32>
      %c0_129 = arith.constant 0 : index
      %c0_130 = arith.constant 0 : index
      %226 = vector.load %arg33[%c0_129, %c0_130] : memref<2x128xf32, #tpu.memory_space<vmem>>, vector<2x128xf32>
      tpu.vector_store %arg33[%c0_129, %c0_130], %225 {strides = array<i32>} : memref<2x128xf32, #tpu.memory_space<vmem>>, vector<2x128xf32>,
      %c0_131 = arith.constant 0 : index
      %c0_132 = arith.constant 0 : index
      %227 = vector.load %arg5[%c0_131, %c0_132] : memref<2x128xf32, #tpu.memory_space<vmem>>, vector<2x128xf32>
      %c0_133 = arith.constant 0 : index
      %c0_134 = arith.constant 0 : index
      %228 = vector.load %arg34[%c0_133, %c0_134] : memref<2x128xf32, #tpu.memory_space<vmem>>, vector<2x128xf32>
      tpu.vector_store %arg34[%c0_133, %c0_134], %227 {strides = array<i32>} : memref<2x128xf32, #tpu.memory_space<vmem>>, vector<2x128xf32>,
    } else {
    }
    %c0 = arith.constant 0 : index
    %c0_1 = arith.constant 0 : index
    %c0_2 = arith.constant 0 : index
    %3 = vector.load %arg1[%c0, %c0_1, %c0_2] : memref<2x16x256xf32, #tpu.memory_space<vmem>>, vector<2x16x256xf32>
    %c0_3 = arith.constant 0 : index
    %c0_4 = arith.constant 0 : index
    %c0_5 = arith.constant 0 : index
    %4 = vector.load %arg2[%c0_3, %c0_4, %c0_5] : memref<1x2x128xf32, #tpu.memory_space<vmem>>, vector<1x2x128xf32>
    %5 = vector.shape_cast %4 : vector<1x2x128xf32> to vector<2x128xf32>
    %c0_6 = arith.constant 0 : index
    %c0_7 = arith.constant 0 : index
    %6 = vector.load %arg31[%c0_6, %c0_7] : memref<2x128xf32, #tpu.memory_space<vmem>>, vector<2x128xf32>
    %c0_8 = arith.constant 0 : index
    %c0_9 = arith.constant 0 : index
    %7 = vector.load %arg32[%c0_8, %c0_9] : memref<2x128xf32, #tpu.memory_space<vmem>>, vector<2x128xf32>
    %c0_10 = arith.constant 0 : index
    %c0_11 = arith.constant 0 : index
    %8 = vector.load %arg33[%c0_10, %c0_11] : memref<2x128xf32, #tpu.memory_space<vmem>>, vector<2x128xf32>
    %c0_12 = arith.constant 0 : index
    %c0_13 = arith.constant 0 : index
    %9 = vector.load %arg34[%c0_12, %c0_13] : memref<2x128xf32, #tpu.memory_space<vmem>>, vector<2x128xf32>
    %10 = vector.extract_strided_slice %3 {offsets = [0, 0, 0], sizes = [2, 16, 128], strides = [1, 1, 1]} : vector<2x16x256xf32> to vector<2x16x128xf32>
    %11 = vector.extract_strided_slice %3 {offsets = [0, 0, 128], sizes = [2, 16, 128], strides = [1, 1, 1]} : vector<2x16x256xf32> to vector<2x16x128xf32>
    %c0_14 = arith.constant 0 : index
    %c0_15 = arith.constant 0 : index
    %12 = vector.load %arg6[%c0_14, %c0_15] : memref<128x128xf32, #tpu.memory_space<vmem>>, vector<128x128xf32>
    %cst = arith.constant dense<0.000000e+00> : vector<2x128xf32>
    %13 = tpu.matmul %8, %12, %cst {dimension_numbers = #tpu.dot_dimension_numbers<[1], [0], [0], [1], [0, 0, 1, 1], [], []>} : vector<2x128xf32>, vector<128x128xf32>, vector<2x128xf32> -> vector<2x128xf32>
    %c0_16 = arith.constant 0 : index
    %c0_17 = arith.constant 0 : index
    %14 = vector.load %arg7[%c0_16, %c0_17] : memref<1x128xf32, #tpu.memory_space<vmem>>, vector<1x128xf32>
    %15 = vector.broadcast %14 : vector<1x128xf32> to vector<2x128xf32>
    %16 = arith.addf %13, %15 : vector<2x128xf32>
    %17 = vector.shape_cast %16 : vector<2x128xf32> to vector<2x1x128xf32>
    %18 = vector.broadcast %17 : vector<2x1x128xf32> to vector<2x16x128xf32>
    %19 = arith.mulf %10, %18 : vector<2x16x128xf32>
    %cst_18 = arith.constant dense<0xFF800000> : vector<2x128xf32>
    %20 = vector.multi_reduction <maximumf>, %19, %cst_18 [1] : vector<2x16x128xf32> to vector<2x128xf32>
    %21 = vector.shape_cast %20 : vector<2x128xf32> to vector<2x1x128xf32>
    %22 = vector.broadcast %21 : vector<2x1x128xf32> to vector<2x16x128xf32>
    %23 = arith.subf %19, %22 : vector<2x16x128xf32>
    %24 = math.exp %23 : vector<2x16x128xf32>
    %cst_19 = arith.constant dense<0.000000e+00> : vector<2x128xf32>
    %25 = vector.multi_reduction <add>, %24, %cst_19 [1] : vector<2x16x128xf32> to vector<2x128xf32>
    %26 = vector.shape_cast %25 : vector<2x128xf32> to vector<2x1x128xf32>
    %27 = vector.broadcast %26 : vector<2x1x128xf32> to vector<2x16x128xf32>
    %28 = arith.divf %24, %27 : vector<2x16x128xf32>
    %29 = arith.mulf %10, %28 : vector<2x16x128xf32>
    %30 = arith.addf %29, %10 : vector<2x16x128xf32>
    %c0_20 = arith.constant 0 : index
    %c0_21 = arith.constant 0 : index
    %31 = vector.load %arg8[%c0_20, %c0_21] : memref<128x128xf32, #tpu.memory_space<vmem>>, vector<128x128xf32>
    %cst_22 = arith.constant dense<0.000000e+00> : vector<2x128xf32>
    %32 = tpu.matmul %5, %31, %cst_22 {dimension_numbers = #tpu.dot_dimension_numbers<[1], [0], [0], [1], [0, 0, 1, 1], [], []>} : vector<2x128xf32>, vector<128x128xf32>, vector<2x128xf32> -> vector<2x128xf32>
    %c0_23 = arith.constant 0 : index
    %c0_24 = arith.constant 0 : index
    %33 = vector.load %arg9[%c0_23, %c0_24] : memref<1x128xf32, #tpu.memory_space<vmem>>, vector<1x128xf32>
    %34 = vector.broadcast %33 : vector<1x128xf32> to vector<2x128xf32>
    %35 = arith.addf %32, %34 : vector<2x128xf32>
    %c0_25 = arith.constant 0 : index
    %c0_26 = arith.constant 0 : index
    %36 = vector.load %arg10[%c0_25, %c0_26] : memref<128x128xf32, #tpu.memory_space<vmem>>, vector<128x128xf32>
    %cst_27 = arith.constant dense<0.000000e+00> : vector<2x128xf32>
    %37 = tpu.matmul %35, %36, %cst_27 {dimension_numbers = #tpu.dot_dimension_numbers<[1], [0], [0], [1], [0, 0, 1, 1], [], []>} : vector<2x128xf32>, vector<128x128xf32>, vector<2x128xf32> -> vector<2x128xf32>
    %c0_28 = arith.constant 0 : index
    %c0_29 = arith.constant 0 : index
    %38 = vector.load %arg11[%c0_28, %c0_29] : memref<1x128xf32, #tpu.memory_space<vmem>>, vector<1x128xf32>
    %39 = vector.broadcast %38 : vector<1x128xf32> to vector<2x128xf32>
    %40 = arith.addf %37, %39 : vector<2x128xf32>
    %41 = vector.shape_cast %40 : vector<2x128xf32> to vector<2x1x128xf32>
    %42 = vector.broadcast %41 : vector<2x1x128xf32> to vector<2x16x128xf32>
    %43 = arith.addf %11, %42 : vector<2x16x128xf32>
    %cst_30 = arith.constant dense<0.000000e+00> : vector<2x16xf32>
    %44 = vector.multi_reduction <add>, %43, %cst_30 [2] : vector<2x16x128xf32> to vector<2x16xf32>
    %45 = vector.shape_cast %44 : vector<2x16xf32> to vector<2x16x1xf32>
    %cst_31 = arith.constant 1.280000e+02 : f32
    %46 = vector.broadcast %cst_31 : f32 to vector<2x16x1xf32>
    %47 = arith.divf %45, %46 : vector<2x16x1xf32>
    %48 = vector.broadcast %47 : vector<2x16x1xf32> to vector<2x16x128xf32>
    %49 = arith.subf %43, %48 : vector<2x16x128xf32>
    %50 = arith.mulf %49, %49 : vector<2x16x128xf32>
    %cst_32 = arith.constant dense<0.000000e+00> : vector<2x16xf32>
    %51 = vector.multi_reduction <add>, %50, %cst_32 [2] : vector<2x16x128xf32> to vector<2x16xf32>
    %52 = vector.shape_cast %51 : vector<2x16xf32> to vector<2x16x1xf32>
    %cst_33 = arith.constant 1.280000e+02 : f32
    %53 = vector.broadcast %cst_33 : f32 to vector<2x16x1xf32>
    %54 = arith.divf %52, %53 : vector<2x16x1xf32>
    %55 = vector.broadcast %47 : vector<2x16x1xf32> to vector<2x16x128xf32>
    %56 = arith.subf %43, %55 : vector<2x16x128xf32>
    %cst_34 = arith.constant 9.99999974E-6 : f32
    %57 = vector.broadcast %cst_34 : f32 to vector<2x16x1xf32>
    %58 = arith.addf %54, %57 : vector<2x16x1xf32>
    %59 = math.rsqrt %58 : vector<2x16x1xf32>
    %60 = vector.broadcast %59 : vector<2x16x1xf32> to vector<2x16x128xf32>
    %61 = arith.mulf %56, %60 : vector<2x16x128xf32>
    %c0_35 = arith.constant 0 : index
    %c0_36 = arith.constant 0 : index
    %62 = vector.load %arg12[%c0_35, %c0_36] : memref<1x128xf32, #tpu.memory_space<vmem>>, vector<1x128xf32>
    %63 = vector.shape_cast %62 : vector<1x128xf32> to vector<1x1x128xf32>
    %64 = vector.broadcast %63 : vector<1x1x128xf32> to vector<2x16x128xf32>
    %65 = arith.mulf %61, %64 : vector<2x16x128xf32>
    %c0_37 = arith.constant 0 : index
    %c0_38 = arith.constant 0 : index
    %66 = vector.load %arg13[%c0_37, %c0_38] : memref<1x128xf32, #tpu.memory_space<vmem>>, vector<1x128xf32>
    %67 = vector.shape_cast %66 : vector<1x128xf32> to vector<1x1x128xf32>
    %68 = vector.broadcast %67 : vector<1x1x128xf32> to vector<2x16x128xf32>
    %69 = arith.addf %65, %68 : vector<2x16x128xf32>
    %cst_39 = arith.constant 0.000000e+00 : f32
    %70 = vector.broadcast %cst_39 : f32 to vector<2x16x128xf32>
    %71 = arith.maximumf %69, %70 : vector<2x16x128xf32>
    %72 = arith.addf %71, %11 : vector<2x16x128xf32>
    %73 = tpu.concatenate %30, %72 in 2 : vector<2x16x128xf32>, vector<2x16x128xf32> -> vector<2x16x256xf32>
    %74 = vector.shape_cast %73 : vector<2x16x256xf32> to vector<32x256xf32>
    %c0_40 = arith.constant 0 : index
    %c0_41 = arith.constant 0 : index
    %75 = vector.load %arg14[%c0_40, %c0_41] : memref<256x256xf32, #tpu.memory_space<vmem>>, vector<256x256xf32>
    %cst_42 = arith.constant dense<0.000000e+00> : vector<32x256xf32>
    %76 = tpu.matmul %74, %75, %cst_42 {dimension_numbers = #tpu.dot_dimension_numbers<[1], [0], [0], [1], [0, 0, 1, 1], [], []>} : vector<32x256xf32>, vector<256x256xf32>, vector<32x256xf32> -> vector<32x256xf32>
    %c0_43 = arith.constant 0 : index
    %c0_44 = arith.constant 0 : index
    %77 = vector.load %arg15[%c0_43, %c0_44] : memref<1x256xf32, #tpu.memory_space<vmem>>, vector<1x256xf32>
    %78 = vector.broadcast %77 : vector<1x256xf32> to vector<32x256xf32>
    %79 = arith.addf %76, %78 : vector<32x256xf32>
    %80 = vector.shape_cast %79 : vector<32x256xf32> to vector<2x16x256xf32>
    %cst_45 = arith.constant dense<0.000000e+00> : vector<2x256xf32>
    %81 = vector.multi_reduction <add>, %80, %cst_45 [1] : vector<2x16x256xf32> to vector<2x256xf32>
    %cst_46 = arith.constant 1.600000e+01 : f32
    %82 = vector.broadcast %cst_46 : f32 to vector<2x256xf32>
    %83 = arith.divf %81, %82 : vector<2x256xf32>
    %84 = tpu.concatenate %8, %83, %5 in 1 : vector<2x128xf32>, vector<2x256xf32>, vector<2x128xf32> -> vector<2x512xf32>
    %c0_47 = arith.constant 0 : index
    %c0_48 = arith.constant 0 : index
    %85 = vector.load %arg16[%c0_47, %c0_48] : memref<512x512xf32, #tpu.memory_space<vmem>>, vector<512x512xf32>
    %cst_49 = arith.constant dense<0.000000e+00> : vector<2x512xf32>
    %86 = tpu.matmul %84, %85, %cst_49 {dimension_numbers = #tpu.dot_dimension_numbers<[1], [0], [0], [1], [0, 0, 1, 1], [], []>} : vector<2x512xf32>, vector<512x512xf32>, vector<2x512xf32> -> vector<2x512xf32>
    %c0_50 = arith.constant 0 : index
    %c0_51 = arith.constant 0 : index
    %87 = vector.load %arg17[%c0_50, %c0_51] : memref<128x512xf32, #tpu.memory_space<vmem>>, vector<128x512xf32>
    %cst_52 = arith.constant dense<0.000000e+00> : vector<2x512xf32>
    %88 = tpu.matmul %6, %87, %cst_52 {dimension_numbers = #tpu.dot_dimension_numbers<[1], [0], [0], [1], [0, 0, 1, 1], [], []>} : vector<2x128xf32>, vector<128x512xf32>, vector<2x512xf32> -> vector<2x512xf32>
    %89 = arith.addf %86, %88 : vector<2x512xf32>
    %c0_53 = arith.constant 0 : index
    %c0_54 = arith.constant 0 : index
    %90 = vector.load %arg18[%c0_53, %c0_54] : memref<1x512xf32, #tpu.memory_space<vmem>>, vector<1x512xf32>
    %91 = vector.broadcast %90 : vector<1x512xf32> to vector<2x512xf32>
    %92 = arith.addf %89, %91 : vector<2x512xf32>
    %93 = vector.extract_strided_slice %92 {offsets = [0, 0], sizes = [2, 128], strides = [1, 1]} : vector<2x512xf32> to vector<2x128xf32>
    %cst_55 = arith.constant 0.000000e+00 : f32
    %94 = vector.broadcast %cst_55 : f32 to vector<2x128xf32>
    %95 = arith.subf %94, %93 : vector<2x128xf32>
    %96 = math.exp %95 : vector<2x128xf32>
    %cst_56 = arith.constant 1.000000e+00 : f32
    %97 = vector.broadcast %cst_56 : f32 to vector<2x128xf32>
    %98 = arith.addf %97, %96 : vector<2x128xf32>
    %cst_57 = arith.constant 1.000000e+00 : f32
    %99 = vector.broadcast %cst_57 : f32 to vector<2x128xf32>
    %100 = arith.divf %99, %98 : vector<2x128xf32>
    %101 = vector.extract_strided_slice %92 {offsets = [0, 128], sizes = [2, 128], strides = [1, 1]} : vector<2x512xf32> to vector<2x128xf32>
    %cst_58 = arith.constant 0.000000e+00 : f32
    %102 = vector.broadcast %cst_58 : f32 to vector<2x128xf32>
    %103 = arith.subf %102, %101 : vector<2x128xf32>
    %104 = math.exp %103 : vector<2x128xf32>
    %cst_59 = arith.constant 1.000000e+00 : f32
    %105 = vector.broadcast %cst_59 : f32 to vector<2x128xf32>
    %106 = arith.addf %105, %104 : vector<2x128xf32>
    %cst_60 = arith.constant 1.000000e+00 : f32
    %107 = vector.broadcast %cst_60 : f32 to vector<2x128xf32>
    %108 = arith.divf %107, %106 : vector<2x128xf32>
    %109 = vector.extract_strided_slice %92 {offsets = [0, 256], sizes = [2, 128], strides = [1, 1]} : vector<2x512xf32> to vector<2x128xf32>
    %110 = math.tanh %109 : vector<2x128xf32>
    %111 = vector.extract_strided_slice %92 {offsets = [0, 384], sizes = [2, 128], strides = [1, 1]} : vector<2x512xf32> to vector<2x128xf32>
    %cst_61 = arith.constant 0.000000e+00 : f32
    %112 = vector.broadcast %cst_61 : f32 to vector<2x128xf32>
    %113 = arith.subf %112, %111 : vector<2x128xf32>
    %114 = math.exp %113 : vector<2x128xf32>
    %cst_62 = arith.constant 1.000000e+00 : f32
    %115 = vector.broadcast %cst_62 : f32 to vector<2x128xf32>
    %116 = arith.addf %115, %114 : vector<2x128xf32>
    %cst_63 = arith.constant 1.000000e+00 : f32
    %117 = vector.broadcast %cst_63 : f32 to vector<2x128xf32>
    %118 = arith.divf %117, %116 : vector<2x128xf32>
    %119 = arith.mulf %108, %7 : vector<2x128xf32>
    %120 = arith.mulf %100, %110 : vector<2x128xf32>
    %121 = arith.addf %119, %120 : vector<2x128xf32>
    %122 = math.tanh %121 : vector<2x128xf32>
    %123 = arith.mulf %118, %122 : vector<2x128xf32>
    %124 = vector.shape_cast %3 : vector<2x16x256xf32> to vector<32x256xf32>
    %c0_64 = arith.constant 0 : index
    %c0_65 = arith.constant 0 : index
    %125 = vector.load %arg19[%c0_64, %c0_65] : memref<256x128xf32, #tpu.memory_space<vmem>>, vector<256x128xf32>
    %cst_66 = arith.constant dense<0.000000e+00> : vector<32x128xf32>
    %126 = tpu.matmul %124, %125, %cst_66 {dimension_numbers = #tpu.dot_dimension_numbers<[1], [0], [0], [1], [0, 0, 1, 1], [], []>} : vector<32x256xf32>, vector<256x128xf32>, vector<32x128xf32> -> vector<32x128xf32>
    %c0_67 = arith.constant 0 : index
    %c0_68 = arith.constant 0 : index
    %127 = vector.load %arg20[%c0_67, %c0_68] : memref<1x128xf32, #tpu.memory_space<vmem>>, vector<1x128xf32>
    %128 = vector.broadcast %127 : vector<1x128xf32> to vector<32x128xf32>
    %129 = arith.addf %126, %128 : vector<32x128xf32>
    %c0_69 = arith.constant 0 : index
    %c0_70 = arith.constant 0 : index
    %130 = vector.load %arg21[%c0_69, %c0_70] : memref<128x128xf32, #tpu.memory_space<vmem>>, vector<128x128xf32>
    %cst_71 = arith.constant dense<0.000000e+00> : vector<2x128xf32>
    %131 = tpu.matmul %123, %130, %cst_71 {dimension_numbers = #tpu.dot_dimension_numbers<[1], [0], [0], [1], [0, 0, 1, 1], [], []>} : vector<2x128xf32>, vector<128x128xf32>, vector<2x128xf32> -> vector<2x128xf32>
    %c0_72 = arith.constant 0 : index
    %c0_73 = arith.constant 0 : index
    %132 = vector.load %arg22[%c0_72, %c0_73] : memref<1x128xf32, #tpu.memory_space<vmem>>, vector<1x128xf32>
    %133 = vector.broadcast %132 : vector<1x128xf32> to vector<2x128xf32>
    %134 = arith.addf %131, %133 : vector<2x128xf32>
    %135 = vector.shape_cast %129 : vector<32x128xf32> to vector<2x16x128xf32>
    %136 = vector.shape_cast %134 : vector<2x128xf32> to vector<2x1x128xf32>
    %137 = vector.broadcast %136 : vector<2x1x128xf32> to vector<2x16x128xf32>
    %138 = arith.addf %135, %137 : vector<2x16x128xf32>
    %cst_74 = arith.constant 0.000000e+00 : f32
    %139 = vector.broadcast %cst_74 : f32 to vector<2x16x128xf32>
    %140 = arith.maximumf %138, %139 : vector<2x16x128xf32>
    %c0_75 = arith.constant 0 : index
    %c0_76 = arith.constant 0 : index
    %141 = vector.load %arg23[%c0_75, %c0_76] : memref<1x128xf32, #tpu.memory_space<vmem>>, vector<1x128xf32>
    %142 = vector.shape_cast %141 : vector<1x128xf32> to vector<1x1x128xf32>
    %143 = vector.broadcast %142 : vector<1x1x128xf32> to vector<2x16x128xf32>
    %144 = arith.mulf %140, %143 : vector<2x16x128xf32>
    %cst_77 = arith.constant dense<0.000000e+00> : vector<2x16xf32>
    %145 = vector.multi_reduction <add>, %144, %cst_77 [2] : vector<2x16x128xf32> to vector<2x16xf32>
    %cst_78 = arith.constant dense<0xFF800000> : vector<2xf32>
    %146 = vector.multi_reduction <maximumf>, %145, %cst_78 [1] : vector<2x16xf32> to vector<2xf32>
    %147 = vector.shape_cast %146 : vector<2xf32> to vector<2x1xf32>
    %148 = vector.broadcast %147 : vector<2x1xf32> to vector<2x16xf32>
    %149 = arith.subf %145, %148 : vector<2x16xf32>
    %150 = math.exp %149 : vector<2x16xf32>
    %cst_79 = arith.constant dense<0.000000e+00> : vector<2xf32>
    %151 = vector.multi_reduction <add>, %150, %cst_79 [1] : vector<2x16xf32> to vector<2xf32>
    %152 = vector.shape_cast %151 : vector<2xf32> to vector<2x1xf32>
    %153 = vector.broadcast %152 : vector<2x1xf32> to vector<2x16xf32>
    %154 = arith.divf %150, %153 : vector<2x16xf32>
    %155 = vector.shape_cast %154 : vector<2x16xf32> to vector<2x16x1xf32>
    %156 = vector.broadcast %155 : vector<2x16x1xf32> to vector<2x16x256xf32>
    %157 = arith.mulf %3, %156 : vector<2x16x256xf32>
    %cst_80 = arith.constant dense<0.000000e+00> : vector<2x256xf32>
    %158 = vector.multi_reduction <add>, %157, %cst_80 [1] : vector<2x16x256xf32> to vector<2x256xf32>
    %159 = tpu.concatenate %123, %158 in 1 : vector<2x128xf32>, vector<2x256xf32> -> vector<2x384xf32>
    %c0_81 = arith.constant 0 : index
    %c0_82 = arith.constant 0 : index
    %160 = vector.load %arg24[%c0_81, %c0_82] : memref<384x512xf32, #tpu.memory_space<vmem>>, vector<384x512xf32>
    %cst_83 = arith.constant dense<0.000000e+00> : vector<2x512xf32>
    %161 = tpu.matmul %159, %160, %cst_83 {dimension_numbers = #tpu.dot_dimension_numbers<[1], [0], [0], [1], [0, 0, 1, 1], [], []>} : vector<2x384xf32>, vector<384x512xf32>, vector<2x512xf32> -> vector<2x512xf32>
    %c0_84 = arith.constant 0 : index
    %c0_85 = arith.constant 0 : index
    %162 = vector.load %arg25[%c0_84, %c0_85] : memref<128x512xf32, #tpu.memory_space<vmem>>, vector<128x512xf32>
    %cst_86 = arith.constant dense<0.000000e+00> : vector<2x512xf32>
    %163 = tpu.matmul %8, %162, %cst_86 {dimension_numbers = #tpu.dot_dimension_numbers<[1], [0], [0], [1], [0, 0, 1, 1], [], []>} : vector<2x128xf32>, vector<128x512xf32>, vector<2x512xf32> -> vector<2x512xf32>
    %164 = arith.addf %161, %163 : vector<2x512xf32>
    %c0_87 = arith.constant 0 : index
    %c0_88 = arith.constant 0 : index
    %165 = vector.load %arg26[%c0_87, %c0_88] : memref<1x512xf32, #tpu.memory_space<vmem>>, vector<1x512xf32>
    %166 = vector.broadcast %165 : vector<1x512xf32> to vector<2x512xf32>
    %167 = arith.addf %164, %166 : vector<2x512xf32>
    %168 = vector.extract_strided_slice %167 {offsets = [0, 0], sizes = [2, 128], strides = [1, 1]} : vector<2x512xf32> to vector<2x128xf32>
    %cst_89 = arith.constant 0.000000e+00 : f32
    %169 = vector.broadcast %cst_89 : f32 to vector<2x128xf32>
    %170 = arith.subf %169, %168 : vector<2x128xf32>
    %171 = math.exp %170 : vector<2x128xf32>
    %cst_90 = arith.constant 1.000000e+00 : f32
    %172 = vector.broadcast %cst_90 : f32 to vector<2x128xf32>
    %173 = arith.addf %172, %171 : vector<2x128xf32>
    %cst_91 = arith.constant 1.000000e+00 : f32
    %174 = vector.broadcast %cst_91 : f32 to vector<2x128xf32>
    %175 = arith.divf %174, %173 : vector<2x128xf32>
    %176 = vector.extract_strided_slice %167 {offsets = [0, 128], sizes = [2, 128], strides = [1, 1]} : vector<2x512xf32> to vector<2x128xf32>
    %cst_92 = arith.constant 0.000000e+00 : f32
    %177 = vector.broadcast %cst_92 : f32 to vector<2x128xf32>
    %178 = arith.subf %177, %176 : vector<2x128xf32>
    %179 = math.exp %178 : vector<2x128xf32>
    %cst_93 = arith.constant 1.000000e+00 : f32
    %180 = vector.broadcast %cst_93 : f32 to vector<2x128xf32>
    %181 = arith.addf %180, %179 : vector<2x128xf32>
    %cst_94 = arith.constant 1.000000e+00 : f32
    %182 = vector.broadcast %cst_94 : f32 to vector<2x128xf32>
    %183 = arith.divf %182, %181 : vector<2x128xf32>
    %184 = vector.extract_strided_slice %167 {offsets = [0, 256], sizes = [2, 128], strides = [1, 1]} : vector<2x512xf32> to vector<2x128xf32>
    %185 = math.tanh %184 : vector<2x128xf32>
    %186 = vector.extract_strided_slice %167 {offsets = [0, 384], sizes = [2, 128], strides = [1, 1]} : vector<2x512xf32> to vector<2x128xf32>
    %cst_95 = arith.constant 0.000000e+00 : f32
    %187 = vector.broadcast %cst_95 : f32 to vector<2x128xf32>
    %188 = arith.subf %187, %186 : vector<2x128xf32>
    %189 = math.exp %188 : vector<2x128xf32>
    %cst_96 = arith.constant 1.000000e+00 : f32
    %190 = vector.broadcast %cst_96 : f32 to vector<2x128xf32>
    %191 = arith.addf %190, %189 : vector<2x128xf32>
    %cst_97 = arith.constant 1.000000e+00 : f32
    %192 = vector.broadcast %cst_97 : f32 to vector<2x128xf32>
    %193 = arith.divf %192, %191 : vector<2x128xf32>
    %194 = arith.mulf %183, %9 : vector<2x128xf32>
    %195 = arith.mulf %175, %185 : vector<2x128xf32>
    %196 = arith.addf %194, %195 : vector<2x128xf32>
    %197 = math.tanh %196 : vector<2x128xf32>
    %198 = arith.mulf %193, %197 : vector<2x128xf32>
    %c0_98 = arith.constant 0 : index
    %c0_99 = arith.constant 0 : index
    %199 = vector.load %arg27[%c0_98, %c0_99] : memref<128x512xf32, #tpu.memory_space<vmem>>, vector<128x512xf32>
    %cst_100 = arith.constant dense<0.000000e+00> : vector<2x512xf32>
    %200 = tpu.matmul %198, %199, %cst_100 {dimension_numbers = #tpu.dot_dimension_numbers<[1], [0], [0], [1], [0, 0, 1, 1], [], []>} : vector<2x128xf32>, vector<128x512xf32>, vector<2x512xf32> -> vector<2x512xf32>
    %c0_101 = arith.constant 0 : index
    %c0_102 = arith.constant 0 : index
    %201 = vector.load %arg28[%c0_101, %c0_102] : memref<1x512xf32, #tpu.memory_space<vmem>>, vector<1x512xf32>
    %202 = vector.broadcast %201 : vector<1x512xf32> to vector<2x512xf32>
    %203 = arith.addf %200, %202 : vector<2x512xf32>
    %c0_103 = arith.constant 0 : index
    %c0_104 = arith.constant 0 : index
    %204 = vector.load %arg3[%c0_103, %c0_104] : memref<2x1xi32, #tpu.memory_space<vmem>>, vector<2x1xi32>
    %205 = vector.broadcast %arg0 : i32 to vector<2x1xi32>
    %206 = arith.cmpi sgt, %204, %205 : vector<2x1xi32>
    %207 = arith.extui %206 : vector<2x1xi1> to vector<2x1xi32>
    %208 = arith.sitofp %207 : vector<2x1xi32> to vector<2x1xf32>
    %209 = vector.broadcast %208 : vector<2x1xf32> to vector<2x512xf32>
    %210 = arith.mulf %203, %209 : vector<2x512xf32>
    %211 = vector.shape_cast %210 : vector<2x512xf32> to vector<1x2x512xf32>
    %c0_105 = arith.constant 0 : index
    %c0_106 = arith.constant 0 : index
    %c0_107 = arith.constant 0 : index
    %212 = vector.load %arg29[%c0_105, %c0_106, %c0_107] : memref<1x2x512xf32, #tpu.memory_space<vmem>>, vector<1x2x512xf32>
    tpu.vector_store %arg29[%c0_105, %c0_106, %c0_107], %211 {strides = array<i32>} : memref<1x2x512xf32, #tpu.memory_space<vmem>>, vector<1x2x512xf32>,
    %213 = vector.broadcast %208 : vector<2x1xf32> to vector<2x16xf32>
    %214 = arith.mulf %154, %213 : vector<2x16xf32>
    %215 = vector.shape_cast %214 : vector<2x16xf32> to vector<1x2x16xf32>
    %c0_108 = arith.constant 0 : index
    %c0_109 = arith.constant 0 : index
    %c0_110 = arith.constant 0 : index
    %216 = vector.load %arg30[%c0_108, %c0_109, %c0_110] : memref<1x2x16xf32, #tpu.memory_space<vmem>>, vector<1x2x16xf32>
    tpu.vector_store %arg30[%c0_108, %c0_109, %c0_110], %215 {strides = array<i32>} : memref<1x2x16xf32, #tpu.memory_space<vmem>>, vector<1x2x16xf32>,
    %c0_111 = arith.constant 0 : index
    %c0_112 = arith.constant 0 : index
    %217 = vector.load %arg31[%c0_111, %c0_112] : memref<2x128xf32, #tpu.memory_space<vmem>>, vector<2x128xf32>
    tpu.vector_store %arg31[%c0_111, %c0_112], %123 {strides = array<i32>} : memref<2x128xf32, #tpu.memory_space<vmem>>, vector<2x128xf32>,
    %c0_113 = arith.constant 0 : index
    %c0_114 = arith.constant 0 : index
    %218 = vector.load %arg32[%c0_113, %c0_114] : memref<2x128xf32, #tpu.memory_space<vmem>>, vector<2x128xf32>
    tpu.vector_store %arg32[%c0_113, %c0_114], %121 {strides = array<i32>} : memref<2x128xf32, #tpu.memory_space<vmem>>, vector<2x128xf32>,
    %c0_115 = arith.constant 0 : index
    %c0_116 = arith.constant 0 : index
    %219 = vector.load %arg33[%c0_115, %c0_116] : memref<2x128xf32, #tpu.memory_space<vmem>>, vector<2x128xf32>
    tpu.vector_store %arg33[%c0_115, %c0_116], %198 {strides = array<i32>} : memref<2x128xf32, #tpu.memory_space<vmem>>, vector<2x128xf32>,
    %c0_117 = arith.constant 0 : index
    %c0_118 = arith.constant 0 : index
    %220 = vector.load %arg34[%c0_117, %c0_118] : memref<2x128xf32, #tpu.memory_space<vmem>>, vector<2x128xf32>
    tpu.vector_store %arg34[%c0_117, %c0_118], %196 {strides = array<i32>} : memref<2x128xf32, #tpu.memory_space<vmem>>, vector<2x128xf32>,
    return
  }
  func.func @transform_0(%arg0: i32) -> (i32, i32, i32) {
    %c0_i32 = arith.constant 0 : i32
    %c0_i32_0 = arith.constant 0 : i32
    %c0_i32_1 = arith.constant 0 : i32
    %c0_i32_2 = arith.constant 0 : i32
    return %c0_i32, %c0_i32_0, %c0_i32_1 : i32, i32, i32
  }
  func.func @transform_1(%arg0: i32) -> (i32, i32, i32) {
    %c0_i32 = arith.constant 0 : i32
    %c0_i32_0 = arith.constant 0 : i32
    %c0_i32_1 = arith.constant 0 : i32
    return %arg0, %c0_i32, %c0_i32_0 : i32, i32, i32
  }
  func.func @transform_2(%arg0: i32) -> (i32, i32) {
    %c0_i32 = arith.constant 0 : i32
    %c0_i32_0 = arith.constant 0 : i32
    %c0_i32_1 = arith.constant 0 : i32
    return %c0_i32, %c0_i32_0 : i32, i32
  }
  func.func @transform_3(%arg0: i32) -> (i32, i32) {
    %c0_i32 = arith.constant 0 : i32
    %c0_i32_0 = arith.constant 0 : i32
    %c0_i32_1 = arith.constant 0 : i32
    return %c0_i32, %c0_i32_0 : i32, i32
  }
  func.func @transform_4(%arg0: i32) -> (i32, i32) {
    %c0_i32 = arith.constant 0 : i32
    %c0_i32_0 = arith.constant 0 : i32
    %c0_i32_1 = arith.constant 0 : i32
    return %c0_i32, %c0_i32_0 : i32, i32
  }
  func.func @transform_5(%arg0: i32) -> (i32, i32) {
    %c0_i32 = arith.constant 0 : i32
    %c0_i32_0 = arith.constant 0 : i32
    %c0_i32_1 = arith.constant 0 : i32
    return %c0_i32, %c0_i32_0 : i32, i32
  }
  func.func @transform_6(%arg0: i32) -> (i32, i32) {
    %c0_i32 = arith.constant 0 : i32
    %c0_i32_0 = arith.constant 0 : i32
    %c0_i32_1 = arith.constant 0 : i32
    return %c0_i32, %c0_i32_0 : i32, i32
  }
  func.func @transform_7(%arg0: i32) -> (i32, i32) {
    %c0_i32 = arith.constant 0 : i32
    %c0_i32_0 = arith.constant 0 : i32
    %c0_i32_1 = arith.constant 0 : i32
    return %c0_i32, %c0_i32_0 : i32, i32
  }
  func.func @transform_8(%arg0: i32) -> (i32, i32) {
    %c0_i32 = arith.constant 0 : i32
    %c0_i32_0 = arith.constant 0 : i32
    %c0_i32_1 = arith.constant 0 : i32
    return %c0_i32, %c0_i32_0 : i32, i32
  }
  func.func @transform_9(%arg0: i32) -> (i32, i32) {
    %c0_i32 = arith.constant 0 : i32
    %c0_i32_0 = arith.constant 0 : i32
    %c0_i32_1 = arith.constant 0 : i32
    return %c0_i32, %c0_i32_0 : i32, i32
  }
  func.func @transform_10(%arg0: i32) -> (i32, i32) {
    %c0_i32 = arith.constant 0 : i32
    %c0_i32_0 = arith.constant 0 : i32
    %c0_i32_1 = arith.constant 0 : i32
    return %c0_i32, %c0_i32_0 : i32, i32
  }
  func.func @transform_11(%arg0: i32) -> (i32, i32) {
    %c0_i32 = arith.constant 0 : i32
    %c0_i32_0 = arith.constant 0 : i32
    %c0_i32_1 = arith.constant 0 : i32
    return %c0_i32, %c0_i32_0 : i32, i32
  }
  func.func @transform_12(%arg0: i32) -> (i32, i32) {
    %c0_i32 = arith.constant 0 : i32
    %c0_i32_0 = arith.constant 0 : i32
    %c0_i32_1 = arith.constant 0 : i32
    return %c0_i32, %c0_i32_0 : i32, i32
  }
  func.func @transform_13(%arg0: i32) -> (i32, i32) {
    %c0_i32 = arith.constant 0 : i32
    %c0_i32_0 = arith.constant 0 : i32
    %c0_i32_1 = arith.constant 0 : i32
    return %c0_i32, %c0_i32_0 : i32, i32
  }
  func.func @transform_14(%arg0: i32) -> (i32, i32) {
    %c0_i32 = arith.constant 0 : i32
    %c0_i32_0 = arith.constant 0 : i32
    %c0_i32_1 = arith.constant 0 : i32
    return %c0_i32, %c0_i32_0 : i32, i32
  }
  func.func @transform_15(%arg0: i32) -> (i32, i32) {
    %c0_i32 = arith.constant 0 : i32
    %c0_i32_0 = arith.constant 0 : i32
    %c0_i32_1 = arith.constant 0 : i32
    return %c0_i32, %c0_i32_0 : i32, i32
  }
  func.func @transform_16(%arg0: i32) -> (i32, i32) {
    %c0_i32 = arith.constant 0 : i32
    %c0_i32_0 = arith.constant 0 : i32
    %c0_i32_1 = arith.constant 0 : i32
    return %c0_i32, %c0_i32_0 : i32, i32
  }
  func.func @transform_17(%arg0: i32) -> (i32, i32) {
    %c0_i32 = arith.constant 0 : i32
    %c0_i32_0 = arith.constant 0 : i32
    %c0_i32_1 = arith.constant 0 : i32
    return %c0_i32, %c0_i32_0 : i32, i32
  }
  func.func @transform_18(%arg0: i32) -> (i32, i32) {
    %c0_i32 = arith.constant 0 : i32
    %c0_i32_0 = arith.constant 0 : i32
    %c0_i32_1 = arith.constant 0 : i32
    return %c0_i32, %c0_i32_0 : i32, i32
  }
  func.func @transform_19(%arg0: i32) -> (i32, i32) {
    %c0_i32 = arith.constant 0 : i32
    %c0_i32_0 = arith.constant 0 : i32
    %c0_i32_1 = arith.constant 0 : i32
    return %c0_i32, %c0_i32_0 : i32, i32
  }
  func.func @transform_20(%arg0: i32) -> (i32, i32) {
    %c0_i32 = arith.constant 0 : i32
    %c0_i32_0 = arith.constant 0 : i32
    %c0_i32_1 = arith.constant 0 : i32
    return %c0_i32, %c0_i32_0 : i32, i32
  }
  func.func @transform_21(%arg0: i32) -> (i32, i32) {
    %c0_i32 = arith.constant 0 : i32
    %c0_i32_0 = arith.constant 0 : i32
    %c0_i32_1 = arith.constant 0 : i32
    return %c0_i32, %c0_i32_0 : i32, i32
  }
  func.func @transform_22(%arg0: i32) -> (i32, i32) {
    %c0_i32 = arith.constant 0 : i32
    %c0_i32_0 = arith.constant 0 : i32
    %c0_i32_1 = arith.constant 0 : i32
    return %c0_i32, %c0_i32_0 : i32, i32
  }
  func.func @transform_23(%arg0: i32) -> (i32, i32) {
    %c0_i32 = arith.constant 0 : i32
    %c0_i32_0 = arith.constant 0 : i32
    %c0_i32_1 = arith.constant 0 : i32
    return %c0_i32, %c0_i32_0 : i32, i32
  }
  func.func @transform_24(%arg0: i32) -> (i32, i32) {
    %c0_i32 = arith.constant 0 : i32
    %c0_i32_0 = arith.constant 0 : i32
    %c0_i32_1 = arith.constant 0 : i32
    return %c0_i32, %c0_i32_0 : i32, i32
  }
  func.func @transform_25(%arg0: i32) -> (i32, i32) {
    %c0_i32 = arith.constant 0 : i32
    %c0_i32_0 = arith.constant 0 : i32
    %c0_i32_1 = arith.constant 0 : i32
    return %c0_i32, %c0_i32_0 : i32, i32
  }
  func.func @transform_26(%arg0: i32) -> (i32, i32) {
    %c0_i32 = arith.constant 0 : i32
    %c0_i32_0 = arith.constant 0 : i32
    %c0_i32_1 = arith.constant 0 : i32
    return %c0_i32, %c0_i32_0 : i32, i32
  }
  func.func @transform_27(%arg0: i32) -> (i32, i32) {
    %c0_i32 = arith.constant 0 : i32
    %c0_i32_0 = arith.constant 0 : i32
    %c0_i32_1 = arith.constant 0 : i32
    return %c0_i32, %c0_i32_0 : i32, i32
  }
  func.func @transform_28(%arg0: i32) -> (i32, i32, i32) {
    %c0_i32 = arith.constant 0 : i32
    %c0_i32_0 = arith.constant 0 : i32
    %c0_i32_1 = arith.constant 0 : i32
    return %arg0, %c0_i32, %c0_i32_0 : i32, i32, i32
  }
  func.func @transform_29(%arg0: i32) -> (i32, i32, i32) {
    %c0_i32 = arith.constant 0 : i32
    %c0_i32_0 = arith.constant 0 : i32
    %c0_i32_1 = arith.constant 0 : i32
    return %arg0, %c0_i32, %c0_i32_0 : i32, i32, i32
  }
}

module attributes {stable_mosaic.version = 11 : i64} {
  func.func @_text_lstm_kernel(%arg0: i32, %arg1: memref<1x2x128xf32, #tpu.memory_space<vmem>>, %arg2: memref<128x512xf32, #tpu.memory_space<vmem>>, %arg3: memref<128x512xf32, #tpu.memory_space<vmem>>, %arg4: memref<1x512xf32, #tpu.memory_space<vmem>>, %arg5: memref<128x128xf32, #tpu.memory_space<vmem>>, %arg6: memref<1x128xf32, #tpu.memory_space<vmem>>, %arg7: memref<2x128xf32, #tpu.memory_space<vmem>>, %arg8: memref<2x128xf32, #tpu.memory_space<vmem>>, %arg9: memref<2x128xf32, #tpu.memory_space<vmem>>) attributes {dimension_semantics = [#tpu.dimension_semantics<arbitrary>], iteration_bounds = array<i64: 6>, scalar_prefetch = 0 : i64, scratch_operands = 2 : i64, tpu.core_type = #tpu.core_type<tc>, window_params = [{transform_indices = @transform_0, window_bounds = array<i64: 1, 2, 128>}, {pipeline_mode = #tpu.pipeline_mode<synchronous>, transform_indices = @transform_1, window_bounds = array<i64: 128, 512>}, {pipeline_mode = #tpu.pipeline_mode<synchronous>, transform_indices = @transform_2, window_bounds = array<i64: 128, 512>}, {pipeline_mode = #tpu.pipeline_mode<synchronous>, transform_indices = @transform_3, window_bounds = array<i64: 1, 512>}, {pipeline_mode = #tpu.pipeline_mode<synchronous>, transform_indices = @transform_4, window_bounds = array<i64: 128, 128>}, {pipeline_mode = #tpu.pipeline_mode<synchronous>, transform_indices = @transform_5, window_bounds = array<i64: 1, 128>}, {pipeline_mode = #tpu.pipeline_mode<synchronous>, transform_indices = @transform_6, window_bounds = array<i64: 2, 128>}]} {
    %c0_i32 = arith.constant 0 : i32
    %0 = arith.cmpi eq, %arg0, %c0_i32 : i32
    %1 = arith.extui %0 : i1 to i32
    %c0_i32_0 = arith.constant 0 : i32
    %2 = arith.cmpi ne, %1, %c0_i32_0 : i32
    scf.if %2 {
      %cst_28 = arith.constant 0.000000e+00 : f32
      %51 = vector.broadcast %cst_28 : f32 to vector<2x128xf32>
      %c0_29 = arith.constant 0 : index
      %c0_30 = arith.constant 0 : index
      %52 = vector.load %arg8[%c0_29, %c0_30] : memref<2x128xf32, #tpu.memory_space<vmem>>, vector<2x128xf32>
      tpu.vector_store %arg8[%c0_29, %c0_30], %51 {strides = array<i32>} : memref<2x128xf32, #tpu.memory_space<vmem>>, vector<2x128xf32>,
      %cst_31 = arith.constant 0.000000e+00 : f32
      %53 = vector.broadcast %cst_31 : f32 to vector<2x128xf32>
      %c0_32 = arith.constant 0 : index
      %c0_33 = arith.constant 0 : index
      %54 = vector.load %arg9[%c0_32, %c0_33] : memref<2x128xf32, #tpu.memory_space<vmem>>, vector<2x128xf32>
      tpu.vector_store %arg9[%c0_32, %c0_33], %53 {strides = array<i32>} : memref<2x128xf32, #tpu.memory_space<vmem>>, vector<2x128xf32>,
    } else {
    }
    %c0 = arith.constant 0 : index
    %c0_1 = arith.constant 0 : index
    %c0_2 = arith.constant 0 : index
    %3 = vector.load %arg1[%c0, %c0_1, %c0_2] : memref<1x2x128xf32, #tpu.memory_space<vmem>>, vector<1x2x128xf32>
    %4 = vector.shape_cast %3 : vector<1x2x128xf32> to vector<2x128xf32>
    %c0_3 = arith.constant 0 : index
    %c0_4 = arith.constant 0 : index
    %5 = vector.load %arg8[%c0_3, %c0_4] : memref<2x128xf32, #tpu.memory_space<vmem>>, vector<2x128xf32>
    %c0_5 = arith.constant 0 : index
    %c0_6 = arith.constant 0 : index
    %6 = vector.load %arg9[%c0_5, %c0_6] : memref<2x128xf32, #tpu.memory_space<vmem>>, vector<2x128xf32>
    %c0_7 = arith.constant 0 : index
    %c0_8 = arith.constant 0 : index
    %7 = vector.load %arg2[%c0_7, %c0_8] : memref<128x512xf32, #tpu.memory_space<vmem>>, vector<128x512xf32>
    %cst = arith.constant dense<0.000000e+00> : vector<2x512xf32>
    %8 = tpu.matmul %4, %7, %cst {dimension_numbers = #tpu.dot_dimension_numbers<[1], [0], [0], [1], [0, 0, 1, 1], [], []>} : vector<2x128xf32>, vector<128x512xf32>, vector<2x512xf32> -> vector<2x512xf32>
    %c0_9 = arith.constant 0 : index
    %c0_10 = arith.constant 0 : index
    %9 = vector.load %arg3[%c0_9, %c0_10] : memref<128x512xf32, #tpu.memory_space<vmem>>, vector<128x512xf32>
    %cst_11 = arith.constant dense<0.000000e+00> : vector<2x512xf32>
    %10 = tpu.matmul %5, %9, %cst_11 {dimension_numbers = #tpu.dot_dimension_numbers<[1], [0], [0], [1], [0, 0, 1, 1], [], []>} : vector<2x128xf32>, vector<128x512xf32>, vector<2x512xf32> -> vector<2x512xf32>
    %11 = arith.addf %8, %10 : vector<2x512xf32>
    %c0_12 = arith.constant 0 : index
    %c0_13 = arith.constant 0 : index
    %12 = vector.load %arg4[%c0_12, %c0_13] : memref<1x512xf32, #tpu.memory_space<vmem>>, vector<1x512xf32>
    %13 = vector.broadcast %12 : vector<1x512xf32> to vector<2x512xf32>
    %14 = arith.addf %11, %13 : vector<2x512xf32>
    %15 = vector.extract_strided_slice %14 {offsets = [0, 0], sizes = [2, 128], strides = [1, 1]} : vector<2x512xf32> to vector<2x128xf32>
    %cst_14 = arith.constant 0.000000e+00 : f32
    %16 = vector.broadcast %cst_14 : f32 to vector<2x128xf32>
    %17 = arith.subf %16, %15 : vector<2x128xf32>
    %18 = math.exp %17 : vector<2x128xf32>
    %cst_15 = arith.constant 1.000000e+00 : f32
    %19 = vector.broadcast %cst_15 : f32 to vector<2x128xf32>
    %20 = arith.addf %19, %18 : vector<2x128xf32>
    %cst_16 = arith.constant 1.000000e+00 : f32
    %21 = vector.broadcast %cst_16 : f32 to vector<2x128xf32>
    %22 = arith.divf %21, %20 : vector<2x128xf32>
    %23 = vector.extract_strided_slice %14 {offsets = [0, 128], sizes = [2, 128], strides = [1, 1]} : vector<2x512xf32> to vector<2x128xf32>
    %cst_17 = arith.constant 0.000000e+00 : f32
    %24 = vector.broadcast %cst_17 : f32 to vector<2x128xf32>
    %25 = arith.subf %24, %23 : vector<2x128xf32>
    %26 = math.exp %25 : vector<2x128xf32>
    %cst_18 = arith.constant 1.000000e+00 : f32
    %27 = vector.broadcast %cst_18 : f32 to vector<2x128xf32>
    %28 = arith.addf %27, %26 : vector<2x128xf32>
    %cst_19 = arith.constant 1.000000e+00 : f32
    %29 = vector.broadcast %cst_19 : f32 to vector<2x128xf32>
    %30 = arith.divf %29, %28 : vector<2x128xf32>
    %31 = vector.extract_strided_slice %14 {offsets = [0, 256], sizes = [2, 128], strides = [1, 1]} : vector<2x512xf32> to vector<2x128xf32>
    %32 = math.tanh %31 : vector<2x128xf32>
    %33 = vector.extract_strided_slice %14 {offsets = [0, 384], sizes = [2, 128], strides = [1, 1]} : vector<2x512xf32> to vector<2x128xf32>
    %cst_20 = arith.constant 0.000000e+00 : f32
    %34 = vector.broadcast %cst_20 : f32 to vector<2x128xf32>
    %35 = arith.subf %34, %33 : vector<2x128xf32>
    %36 = math.exp %35 : vector<2x128xf32>
    %cst_21 = arith.constant 1.000000e+00 : f32
    %37 = vector.broadcast %cst_21 : f32 to vector<2x128xf32>
    %38 = arith.addf %37, %36 : vector<2x128xf32>
    %cst_22 = arith.constant 1.000000e+00 : f32
    %39 = vector.broadcast %cst_22 : f32 to vector<2x128xf32>
    %40 = arith.divf %39, %38 : vector<2x128xf32>
    %41 = arith.mulf %30, %6 : vector<2x128xf32>
    %42 = arith.mulf %22, %32 : vector<2x128xf32>
    %43 = arith.addf %41, %42 : vector<2x128xf32>
    %44 = math.tanh %43 : vector<2x128xf32>
    %45 = arith.mulf %40, %44 : vector<2x128xf32>
    %c0_23 = arith.constant 0 : index
    %c0_24 = arith.constant 0 : index
    %46 = vector.load %arg8[%c0_23, %c0_24] : memref<2x128xf32, #tpu.memory_space<vmem>>, vector<2x128xf32>
    tpu.vector_store %arg8[%c0_23, %c0_24], %45 {strides = array<i32>} : memref<2x128xf32, #tpu.memory_space<vmem>>, vector<2x128xf32>,
    %c0_25 = arith.constant 0 : index
    %c0_26 = arith.constant 0 : index
    %47 = vector.load %arg9[%c0_25, %c0_26] : memref<2x128xf32, #tpu.memory_space<vmem>>, vector<2x128xf32>
    tpu.vector_store %arg9[%c0_25, %c0_26], %43 {strides = array<i32>} : memref<2x128xf32, #tpu.memory_space<vmem>>, vector<2x128xf32>,
    %c5_i32 = arith.constant 5 : i32
    %48 = arith.cmpi eq, %arg0, %c5_i32 : i32
    %49 = arith.extui %48 : i1 to i32
    %c0_i32_27 = arith.constant 0 : i32
    %50 = arith.cmpi ne, %49, %c0_i32_27 : i32
    scf.if %50 {
      %c0_28 = arith.constant 0 : index
      %c0_29 = arith.constant 0 : index
      %51 = vector.load %arg5[%c0_28, %c0_29] : memref<128x128xf32, #tpu.memory_space<vmem>>, vector<128x128xf32>
      %cst_30 = arith.constant dense<0.000000e+00> : vector<2x128xf32>
      %52 = tpu.matmul %45, %51, %cst_30 {dimension_numbers = #tpu.dot_dimension_numbers<[1], [0], [0], [1], [0, 0, 1, 1], [], []>} : vector<2x128xf32>, vector<128x128xf32>, vector<2x128xf32> -> vector<2x128xf32>
      %c0_31 = arith.constant 0 : index
      %c0_32 = arith.constant 0 : index
      %53 = vector.load %arg6[%c0_31, %c0_32] : memref<1x128xf32, #tpu.memory_space<vmem>>, vector<1x128xf32>
      %54 = vector.broadcast %53 : vector<1x128xf32> to vector<2x128xf32>
      %55 = arith.addf %52, %54 : vector<2x128xf32>
      %c0_33 = arith.constant 0 : index
      %c0_34 = arith.constant 0 : index
      %56 = vector.load %arg7[%c0_33, %c0_34] : memref<2x128xf32, #tpu.memory_space<vmem>>, vector<2x128xf32>
      tpu.vector_store %arg7[%c0_33, %c0_34], %55 {strides = array<i32>} : memref<2x128xf32, #tpu.memory_space<vmem>>, vector<2x128xf32>,
    } else {
    }
    return
  }
  func.func @transform_0(%arg0: i32) -> (i32, i32, i32) {
    %c0_i32 = arith.constant 0 : i32
    %c0_i32_0 = arith.constant 0 : i32
    %c0_i32_1 = arith.constant 0 : i32
    return %arg0, %c0_i32, %c0_i32_0 : i32, i32, i32
  }
  func.func @transform_1(%arg0: i32) -> (i32, i32) {
    %c0_i32 = arith.constant 0 : i32
    %c0_i32_0 = arith.constant 0 : i32
    %c0_i32_1 = arith.constant 0 : i32
    return %c0_i32, %c0_i32_0 : i32, i32
  }
  func.func @transform_2(%arg0: i32) -> (i32, i32) {
    %c0_i32 = arith.constant 0 : i32
    %c0_i32_0 = arith.constant 0 : i32
    %c0_i32_1 = arith.constant 0 : i32
    return %c0_i32, %c0_i32_0 : i32, i32
  }
  func.func @transform_3(%arg0: i32) -> (i32, i32) {
    %c0_i32 = arith.constant 0 : i32
    %c0_i32_0 = arith.constant 0 : i32
    %c0_i32_1 = arith.constant 0 : i32
    return %c0_i32, %c0_i32_0 : i32, i32
  }
  func.func @transform_4(%arg0: i32) -> (i32, i32) {
    %c0_i32 = arith.constant 0 : i32
    %c0_i32_0 = arith.constant 0 : i32
    %c0_i32_1 = arith.constant 0 : i32
    return %c0_i32, %c0_i32_0 : i32, i32
  }
  func.func @transform_5(%arg0: i32) -> (i32, i32) {
    %c0_i32 = arith.constant 0 : i32
    %c0_i32_0 = arith.constant 0 : i32
    %c0_i32_1 = arith.constant 0 : i32
    return %c0_i32, %c0_i32_0 : i32, i32
  }
  func.func @transform_6(%arg0: i32) -> (i32, i32) {
    %c0_i32 = arith.constant 0 : i32
    %c0_i32_0 = arith.constant 0 : i32
    %c0_i32_1 = arith.constant 0 : i32
    return %c0_i32, %c0_i32_0 : i32, i32
  }
}

</mosaic_0001>

<llo_original>
// kernel: decoder_forward.4
$region0: #{decoder_forward.4}
  #allocation0 [shape = 'u32[]', space=smem, size = 0x4, offset = 0x4, fixed_abs, tag = 'smem constant byte address 0x4 - core index']
  #allocation1 [shape = 'u32[144,128]{1,0:T(1,128)}', space=vmem, size = 0x12000, scoped, tag = 'internal scratch']
  %s0 = inlined_call_operand.vmem [shape: f32[2,16,256], index: 0, kind: input, shape index: {}]
  %s1 = inlined_call_operand.hbm [shape: f32[256,384], index: 1, kind: input, shape index: {}]
  %s2 = inlined_call_operand.vmem [shape: f32[1,384], index: 2, kind: input, shape index: {}]
  %s3 = inlined_call_operand.vmem [shape: f32[2,384], index: 3, kind: output, shape index: {}]
  %s4 = sld [smem:[#allocation0]]
  $region26: #{decoder_forward.4} parent=0
    _
  %s6 = ssub.s32 1, %s4
  %s7 = scalar_select 0, %s6, %s4
  $region1: #{decoder_forward.4} parent=0
    #allocation2 [shape = 'u8[393216]{0}', space=vmem, size = 0x60000, scoped, tag = 'input window, operand 1, single buffered']
    #allocation3 [shape = 's32[1]{0}', space=sflag, size = 0x4, scoped, tag = 'scoped memory for decoder_forward.4']
    %8 = vsyncpa [#allocation3], 0
    // Predicated region
    $region2: #{decoder_forward.4} parent=1 // pred_check
      _
    $region3: #{decoder_forward.4} parent=1 // pred_check_branch
      %10 = sbr.rel (0) target = $region5
    $region4: #{decoder_forward.4} parent=1 // pred_region
      _
    $region5: #{decoder_forward.4} parent=1 // pred_fallthru
      _
    // Predicated region
    $region6: #{decoder_forward.4} parent=1 // pred_check
      _
    $region7: #{decoder_forward.4} parent=1 // pred_check_branch
      %12 = sbr.rel (0) target = $region9
    $region8: #{decoder_forward.4} parent=1 // pred_region
      %s14 = ssub.s32 12288, 12288
      %15 = vsyncadd [#allocation3], %s14
      %s16 = sshll.u32 [#allocation2], 4
      %s17 = int_to_ptr.vmem [resolvable:$true] %s16
      %22 = dma.hbm_to_vmem [thread:$0]  %s1, 12288, %s17, [#allocation3], 384, 384, 24
    $region9: #{decoder_forward.4} parent=1 // pred_fallthru
      _
    // Predicated region
    $region10: #{decoder_forward.4} parent=1 // pred_check
      _
    $region11: #{decoder_forward.4} parent=1 // pred_check_branch
      %24 = sbr.rel (0) target = $region13
    $region12: #{decoder_forward.4} parent=1 // pred_region
      _
    $region13: #{decoder_forward.4} parent=1 // pred_fallthru
      _
    // Predicated region
    $region14: #{decoder_forward.4} parent=1 // pred_check
      _
    $region15: #{decoder_forward.4} parent=1 // pred_check_branch
      %26 = sbr.rel (0) target = $region17
    $region16: #{decoder_forward.4} parent=1 // pred_region
      %27 = dma.done [#allocation3], 12288
    $region17: #{decoder_forward.4} parent=1 // pred_fallthru
      _
    %v28 = vld [vmem:[%s0] sm:$0xff]
    %v29 = vld [vmem:[%s0 + $0x8] sm:$0xff]
    %v30 = vld [vmem:[%s0 + $0x10] sm:$0xff]
    %v31 = vld [vmem:[%s0 + $0x18] sm:$0xff]
    %v32 = vld [vmem:[%s0 + $0x20] sm:$0xff]
    %v33 = vld [vmem:[%s0 + $0x28] sm:$0xff]
    %v34 = vld [vmem:[%s0 + $0x30] sm:$0xff]
    %v35 = vld [vmem:[%s0 + $0x38] sm:$0xff]
    %v36 = vadd.f32 %v28, %v30
    %v37 = vrot.slane %v36, 4
    %v38 = vadd.f32 %v36, %v37
    %v39 = vrot.slane %v38, 2
    %v40 = vadd.f32 %v38, %v39
    %v41 = vrot.slane %v40, 1
    %v42 = vadd.f32 %v40, %v41
    %v43 = vadd.f32 %v29, %v31
    %v44 = vrot.slane %v43, 4
    %v45 = vadd.f32 %v43, %v44
    %v46 = vrot.slane %v45, 2
    %v47 = vadd.f32 %v45, %v46
    %v48 = vrot.slane %v47, 1
    %v49 = vadd.f32 %v47, %v48
    %v50 = vadd.f32 %v32, %v34
    %v51 = vrot.slane %v50, 4
    %v52 = vadd.f32 %v50, %v51
    %v53 = vrot.slane %v52, 2
    %v54 = vadd.f32 %v52, %v53
    %v55 = vrot.slane %v54, 1
    %v56 = vadd.f32 %v54, %v55
    %v57 = vadd.f32 %v33, %v35
    %v58 = vrot.slane %v57, 4
    %v59 = vadd.f32 %v57, %v58
    %v60 = vrot.slane %v59, 2
    %v61 = vadd.f32 %v59, %v60
    %v62 = vrot.slane %v61, 1
    %v63 = vadd.f32 %v61, %v62
    %v64 = vrcp.pop 16.0
    %v65 = vmul.f32 %v42, %v64
    %v66 = vmul.f32 %v49, %v64
    %v67 = vmul.f32 %v56, %v64
    %v68 = vmul.f32 %v63, %v64
    %v69 = vld [vmem:[#allocation2] sm:$0xff]
    %v70 = vld [vmem:[#allocation2 + $0x8] sm:$0xff]
    %v71 = vld [vmem:[#allocation2 + $0x10] sm:$0xff]
    %v72 = vld [vmem:[#allocation2 + $0x18] sm:$0xff]
    %v73 = vld [vmem:[#allocation2 + $0x20] sm:$0xff]
    %v74 = vld [vmem:[#allocation2 + $0x28] sm:$0xff]
    %v75 = vld [vmem:[#allocation2 + $0x30] sm:$0xff]
    %v76 = vld [vmem:[#allocation2 + $0x38] sm:$0xff]
    %v77 = vld [vmem:[#allocation2 + $0x40] sm:$0xff]
    %v78 = vld [vmem:[#allocation2 + $0x48] sm:$0xff]
    %v79 = vld [vmem:[#allocation2 + $0x50] sm:$0xff]
    %v80 = vld [vmem:[#allocation2 + $0x58] sm:$0xff]
    %v81 = vld [vmem:[#allocation2 + $0x60] sm:$0xff]
    %v82 = vld [vmem:[#allocation2 + $0x68] sm:$0xff]
    %v83 = vld [vmem:[#allocation2 + $0x70] sm:$0xff]
    %v84 = vld [vmem:[#allocation2 + $0x78] sm:$0xff]
    %v85 = vld [vmem:[#allocation2 + $0x80] sm:$0xff]
    %v86 = vld [vmem:[#allocation2 + $0x88] sm:$0xff]
    %v87 = vld [vmem:[#allocation2 + $0x90] sm:$0xff]
    %v88 = vld [vmem:[#allocation2 + $0x98] sm:$0xff]
    %v89 = vld [vmem:[#allocation2 + $0xa0] sm:$0xff]
    %v90 = vld [vmem:[#allocation2 + $0xa8] sm:$0xff]
    %v91 = vld [vmem:[#allocation2 + $0xb0] sm:$0xff]
    %v92 = vld [vmem:[#allocation2 + $0xb8] sm:$0xff]
    %v93 = vld [vmem:[#allocation2 + $0xc0] sm:$0xff]
    %v94 = vld [vmem:[#allocation2 + $0xc8] sm:$0xff]
    %v95 = vld [vmem:[#allocation2 + $0xd0] sm:$0xff]
    %v96 = vld [vmem:[#allocation2 + $0xd8] sm:$0xff]
    %v97 = vld [vmem:[#allocation2 + $0xe0] sm:$0xff]
    %v98 = vld [vmem:[#allocation2 + $0xe8] sm:$0xff]
    %v99 = vld [vmem:[#allocation2 + $0xf0] sm:$0xff]
    %v100 = vld [vmem:[#allocation2 + $0xf8] sm:$0xff]
    %v101 = vld [vmem:[#allocation2 + $0x100] sm:$0xff]
    %v102 = vld [vmem:[#allocation2 + $0x108] sm:$0xff]
    %v103 = vld [vmem:[#allocation2 + $0x110] sm:$0xff]
    %v104 = vld [vmem:[#allocation2 + $0x118] sm:$0xff]
    %v105 = vld [vmem:[#allocation2 + $0x120] sm:$0xff]
    %v106 = vld [vmem:[#allocation2 + $0x128] sm:$0xff]
    %v107 = vld [vmem:[#allocation2 + $0x130] sm:$0xff]
    %v108 = vld [vmem:[#allocation2 + $0x138] sm:$0xff]
    %v109 = vld [vmem:[#allocation2 + $0x140] sm:$0xff]
    %v110 = vld [vmem:[#allocation2 + $0x148] sm:$0xff]
    %v111 = vld [vmem:[#allocation2 + $0x150] sm:$0xff]
    %v112 = vld [vmem:[#allocation2 + $0x158] sm:$0xff]
    %v113 = vld [vmem:[#allocation2 + $0x160] sm:$0xff]
    %v114 = vld [vmem:[#allocation2 + $0x168] sm:$0xff]
    %v115 = vld [vmem:[#allocation2 + $0x170] sm:$0xff]
    %v116 = vld [vmem:[#allocation2 + $0x178] sm:$0xff]
    %v117 = vld [vmem:[#allocation2 + $0x180] sm:$0xff]
    %v118 = vld [vmem:[#allocation2 + $0x188] sm:$0xff]
    %v119 = vld [vmem:[#allocation2 + $0x190] sm:$0xff]
    %v120 = vld [vmem:[#allocation2 + $0x198] sm:$0xff]
    %v121 = vld [vmem:[#allocation2 + $0x1a0] sm:$0xff]
    %v122 = vld [vmem:[#allocation2 + $0x1a8] sm:$0xff]
    %v123 = vld [vmem:[#allocation2 + $0x1b0] sm:$0xff]
    %v124 = vld [vmem:[#allocation2 + $0x1b8] sm:$0xff]
    %v125 = vld [vmem:[#allocation2 + $0x1c0] sm:$0xff]
    %v126 = vld [vmem:[#allocation2 + $0x1c8] sm:$0xff]
    %v127 = vld [vmem:[#allocation2 + $0x1d0] sm:$0xff]
    %v128 = vld [vmem:[#allocation2 + $0x1d8] sm:$0xff]
    %v129 = vld [vmem:[#allocation2 + $0x1e0] sm:$0xff]
    %v130 = vld [vmem:[#allocation2 + $0x1e8] sm:$0xff]
    %v131 = vld [vmem:[#allocation2 + $0x1f0] sm:$0xff]
    %v132 = vld [vmem:[#allocation2 + $0x1f8] sm:$0xff]
    %v133 = vld [vmem:[#allocation2 + $0x200] sm:$0xff]
    %v134 = vld [vmem:[#allocation2 + $0x208] sm:$0xff]
    %v135 = vld [vmem:[#allocation2 + $0x210] sm:$0xff]
    %v136 = vld [vmem:[#allocation2 + $0x218] sm:$0xff]
    %v137 = vld [vmem:[#allocation2 + $0x220] sm:$0xff]
    %v138 = vld [vmem:[#allocation2 + $0x228] sm:$0xff]
    %v139 = vld [vmem:[#allocation2 + $0x230] sm:$0xff]
    %v140 = vld [vmem:[#allocation2 + $0x238] sm:$0xff]
    %v141 = vld [vmem:[#allocation2 + $0x240] sm:$0xff]
    %v142 = vld [vmem:[#allocation2 + $0x248] sm:$0xff]
    %v143 = vld [vmem:[#allocation2 + $0x250] sm:$0xff]
    %v144 = vld [vmem:[#allocation2 + $0x258] sm:$0xff]
    %v145 = vld [vmem:[#allocation2 + $0x260] sm:$0xff]
    %v146 = vld [vmem:[#allocation2 + $0x268] sm:$0xff]
    %v147 = vld [vmem:[#allocation2 + $0x270] sm:$0xff]
    %v148 = vld [vmem:[#allocation2 + $0x278] sm:$0xff]
    %v149 = vld [vmem:[#allocation2 + $0x280] sm:$0xff]
    %v150 = vld [vmem:[#allocation2 + $0x288] sm:$0xff]
    %v151 = vld [vmem:[#allocation2 + $0x290] sm:$0xff]
    %v152 = vld [vmem:[#allocation2 + $0x298] sm:$0xff]
    %v153 = vld [vmem:[#allocation2 + $0x2a0] sm:$0xff]
    %v154 = vld [vmem:[#allocation2 + $0x2a8] sm:$0xff]
    %v155 = vld [vmem:[#allocation2 + $0x2b0] sm:$0xff]
    %v156 = vld [vmem:[#allocation2 + $0x2b8] sm:$0xff]
    %v157 = vld [vmem:[#allocation2 + $0x2c0] sm:$0xff]
    %v158 = vld [vmem:[#allocation2 + $0x2c8] sm:$0xff]
    %v159 = vld [vmem:[#allocation2 + $0x2d0] sm:$0xff]
    %v160 = vld [vmem:[#allocation2 + $0x2d8] sm:$0xff]
    %v161 = vld [vmem:[#allocation2 + $0x2e0] sm:$0xff]
    %v162 = vld [vmem:[#allocation2 + $0x2e8] sm:$0xff]
    %v163 = vld [vmem:[#allocation2 + $0x2f0] sm:$0xff]
    %v164 = vld [vmem:[#allocation2 + $0x2f8] sm:$0xff]
    %v165 = vld [vmem:[%s2] sm:$0x7]
    %v167 = vlaneseq
    %v168 = vshrl.u32 %v167, 7
    %v169 = vsub.s32 0, %v168
    %v170 = vrot.slane %v165, %v169
    %v171 = vlaneseq
    %v172 = vshrl.u32 %v171, 7
    %v173 = vsub.s32 1, %v172
    %v174 = vrot.slane %v165, %v173
    %v175 = vlaneseq
    %v176 = vshrl.u32 %v175, 7
    %v177 = vsub.s32 2, %v176
    %v178 = vrot.slane %v165, %v177
    %vm186 = vcmask 1041409
    %v187 = vsel %vm186, %v67, %v65
    %v188 = vsel %vm186, %v68, %v66
    %191 = vmatprep.subr.mxu0 %v115
    %192 = vmatpush1.msra.mxu0 %v114
    %193 = vmatprep.subr.mxu0 %v112
    %194 = vmatpush1.msra.mxu0 %v111
    %195 = vmatprep.subr.mxu0 %v109
    %196 = vmatpush1.msra.mxu0 %v108
    %197 = vmatprep.subr.mxu0 %v106
    %198 = vmatpush1.msra.mxu0 %v105
    %199 = vmatprep.subr.mxu0 %v103
    %200 = vmatpush1.msra.mxu0 %v102
    %201 = vmatprep.subr.mxu0 %v100
    %202 = vmatpush1.msra.mxu0 %v99
    %203 = vmatprep.subr.mxu0 %v97
    %204 = vmatpush1.msra.mxu0 %v96
    %205 = vmatprep.subr.mxu0 %v94
    %206 = vmatpush1.msra.mxu0 %v93
    %207 = vmatprep.subr.mxu0 %v91
    %208 = vmatpush1.msra.mxu0 %v90
    %209 = vmatprep.subr.mxu0 %v88
    %210 = vmatpush1.msra.mxu0 %v87
    %211 = vmatprep.subr.mxu0 %v85
    %212 = vmatpush1.msra.mxu0 %v84
    %213 = vmatprep.subr.mxu0 %v82
    %214 = vmatpush1.msra.mxu0 %v81
    %215 = vmatprep.subr.mxu0 %v79
    %216 = vmatpush1.msra.mxu0 %v78
    %217 = vmatprep.subr.mxu0 %v76
    %218 = vmatpush1.msra.mxu0 %v75
    %219 = vmatprep.subr.mxu0 %v73
    %220 = vmatpush1.msra.mxu0 %v72
    %221 = vmatprep.subr.mxu0 %v70
    %222 = vmatpush1.msra.mxu0 %v69
    %223 = vmatprep.subr.mxu0 %v163
    %224 = vmatpush2.msra.mxu0 %v162
    %225 = vmatprep.subr.mxu0 %v160
    %226 = vmatpush2.msra.mxu0 %v159
    %227 = vmatprep.subr.mxu0 %v157
    %228 = vmatpush2.msra.mxu0 %v156
    %229 = vmatprep.subr.mxu0 %v154
    %230 = vmatpush2.msra.mxu0 %v153
    %231 = vmatprep.subr.mxu0 %v151
    %232 = vmatpush2.msra.mxu0 %v150
    %233 = vmatprep.subr.mxu0 %v148
    %234 = vmatpush2.msra.mxu0 %v147
    %235 = vmatprep.subr.mxu0 %v145
    %236 = vmatpush2.msra.mxu0 %v144
    %237 = vmatprep.subr.mxu0 %v142
    %238 = vmatpush2.msra.mxu0 %v141
    %239 = vmatprep.subr.mxu0 %v139
    %240 = vmatpush2.msra.mxu0 %v138
    %241 = vmatprep.subr.mxu0 %v136
    %242 = vmatpush2.msra.mxu0 %v135
    %243 = vmatprep.subr.mxu0 %v133
    %244 = vmatpush2.msra.mxu0 %v132
    %245 = vmatprep.subr.mxu0 %v130
    %246 = vmatpush2.msra.mxu0 %v129
    %247 = vmatprep.subr.mxu0 %v127
    %248 = vmatpush2.msra.mxu0 %v126
    %249 = vmatprep.subr.mxu0 %v124
    %250 = vmatpush2.msra.mxu0 %v123
    %251 = vmatprep.subr.mxu0 %v121
    %252 = vmatpush2.msra.mxu0 %v120
    %253 = vmatprep.subr.mxu0 %v118
    %254 = vmatpush2.msra.mxu0 %v117
    %255 = vmatprep.mubr.f32.mxu0 %v188
    %256 = vmatmul.mubr.f32.gmra.mxu0 %v187
    %v257 = vpop.f32.mrf.mxu0
    %v258 = vadd.f32 %v170, %v257
    %v259 = vpop.f32.mrf.mxu0
    %v260 = vadd.f32 %v174, %v259
    %261 = vdwg.mxu0
    %262 = vmatprep.subr.mxu0 0.0
    %263 = vmatpush1.msra.mxu0 %v116
    %264 = vmatprep.subr.mxu0 0.0
    %265 = vmatpush1.msra.mxu0 %v113
    %266 = vmatprep.subr.mxu0 0.0
    %267 = vmatpush1.msra.mxu0 %v110
    %268 = vmatprep.subr.mxu0 0.0
    %269 = vmatpush1.msra.mxu0 %v107
    %270 = vmatprep.subr.mxu0 0.0
    %271 = vmatpush1.msra.mxu0 %v104
    %272 = vmatprep.subr.mxu0 0.0
    %273 = vmatpush1.msra.mxu0 %v101
    %274 = vmatprep.subr.mxu0 0.0
    %275 = vmatpush1.msra.mxu0 %v98
    %276 = vmatprep.subr.mxu0 0.0
    %277 = vmatpush1.msra.mxu0 %v95
    %278 = vmatprep.subr.mxu0 0.0
    %279 = vmatpush1.msra.mxu0 %v92
    %280 = vmatprep.subr.mxu0 0.0
    %281 = vmatpush1.msra.mxu0 %v89
    %282 = vmatprep.subr.mxu0 0.0
    %283 = vmatpush1.msra.mxu0 %v86
    %284 = vmatprep.subr.mxu0 0.0
    %285 = vmatpush1.msra.mxu0 %v83
    %286 = vmatprep.subr.mxu0 0.0
    %287 = vmatpush1.msra.mxu0 %v80
    %288 = vmatprep.subr.mxu0 0.0
    %289 = vmatpush1.msra.mxu0 %v77
    %290 = vmatprep.subr.mxu0 0.0
    %291 = vmatpush1.msra.mxu0 %v74
    %292 = vmatprep.subr.mxu0 0.0
    %293 = vmatpush1.msra.mxu0 %v71
    %294 = vmatprep.subr.mxu0 0.0
    %295 = vmatpush2.msra.mxu0 %v164
    %296 = vmatprep.subr.mxu0 0.0
    %297 = vmatpush2.msra.mxu0 %v161
    %298 = vmatprep.subr.mxu0 0.0
    %299 = vmatpush2.msra.mxu0 %v158
    %300 = vmatprep.subr.mxu0 0.0
    %301 = vmatpush2.msra.mxu0 %v155
    %302 = vmatprep.subr.mxu0 0.0
    %303 = vmatpush2.msra.mxu0 %v152
    %304 = vmatprep.subr.mxu0 0.0
    %305 = vmatpush2.msra.mxu0 %v149
    %306 = vmatprep.subr.mxu0 0.0
    %307 = vmatpush2.msra.mxu0 %v146
    %308 = vmatprep.subr.mxu0 0.0
    %309 = vmatpush2.msra.mxu0 %v143
    %310 = vmatprep.subr.mxu0 0.0
    %311 = vmatpush2.msra.mxu0 %v140
    %312 = vmatprep.subr.mxu0 0.0
    %313 = vmatpush2.msra.mxu0 %v137
    %314 = vmatprep.subr.mxu0 0.0
    %315 = vmatpush2.msra.mxu0 %v134
    %316 = vmatprep.subr.mxu0 0.0
    %317 = vmatpush2.msra.mxu0 %v131
    %318 = vmatprep.subr.mxu0 0.0
    %319 = vmatpush2.msra.mxu0 %v128
    %320 = vmatprep.subr.mxu0 0.0
    %321 = vmatpush2.msra.mxu0 %v125
    %322 = vmatprep.subr.mxu0 0.0
    %323 = vmatpush2.msra.mxu0 %v122
    %324 = vmatprep.subr.mxu0 0.0
    %325 = vmatpush2.msra.mxu0 %v119
    %326 = vmatprep.mubr.f32.mxu0 %v188
    %327 = vmatmul.mubr.f32.gmra.mxu0 %v187
    %v328 = vpop.f32.mrf.mxu0
    %v329 = vadd.f32 %v178, %v328
    %v330 = vpop.f32.mrf.mxu0
    %331 = vdwg.mxu0
    %v335 = vcombine.low %v258, %v260
    %v337 = vunpack.c.l.s4 1983009808
    %v338 = vunpack.c.0.s8 %v337
    %v339 = vlaneseq
    %v340 = vshrl.u32 %v339, 7
    %v341 = vsub.s32 %v338, %v340
    %v342 = vrot.slane %v335, %v341
    %v344 = vunpack.c.l.s4 1983009808
    %v345 = vunpack.c.0.s8 %v344
    %v346 = vlaneseq
    %v347 = vshrl.u32 %v346, 7
    %v348 = vsub.s32 %v345, %v347
    %v349 = vrot.slane %v329, %v348
    %v350 = vcombine.low %v342, %v349
    %352 = vst [vmem:[%s3] sm:$0x3f] %v350
    // Predicated region
    $region18: #{decoder_forward.4} parent=1 // pred_check
      _
    $region19: #{decoder_forward.4} parent=1 // pred_check_branch
      %354 = sbr.rel (0) target = $region21
    $region20: #{decoder_forward.4} parent=1 // pred_region
      _
    $region21: #{decoder_forward.4} parent=1 // pred_fallthru
      _
    // Predicated region
    $region22: #{decoder_forward.4} parent=1 // pred_check
      _
    $region23: #{decoder_forward.4} parent=1 // pred_check_branch
      %356 = sbr.rel (0) target = $region25
    $region24: #{decoder_forward.4} parent=1 // pred_region
      _
    $region25: #{decoder_forward.4} parent=1 // pred_fallthru
      _
    %357 = vsyncpa [#allocation3], 1

// kernel: decoder_forward.3
$region0: #{decoder_forward.3}
  #allocation0 [shape = 'u32[]', space=smem, size = 0x4, offset = 0x4, fixed_abs, tag = 'smem constant byte address 0x4 - core index']
  #allocation1 [shape = 'u32[144,128]{1,0:T(1,128)}', space=vmem, size = 0x12000, scoped, tag = 'internal scratch']
  #allocation2 [shape = 'f32[2,128]{1,0:T(2,128)}', space=vmem, size = 0x400, scoped, tag = 'scratch operand']
  #allocation3 [shape = 'f32[2,128]{1,0:T(2,128)}', space=vmem, size = 0x400, scoped, tag = 'scratch operand']
  %s0 = inlined_call_operand.vmem [shape: f32[6,2,128], index: 0, kind: input, shape index: {}]
  %s1 = inlined_call_operand.vmem [shape: f32[128,512], index: 1, kind: input, shape index: {}]
  %s2 = inlined_call_operand.vmem [shape: f32[128,512], index: 2, kind: input, shape index: {}]
  %s3 = inlined_call_operand.vmem [shape: f32[1,512], index: 3, kind: input, shape index: {}]
  %s4 = inlined_call_operand.vmem [shape: f32[128,128], index: 4, kind: input, shape index: {}]
  %s5 = inlined_call_operand.vmem [shape: f32[1,128], index: 5, kind: input, shape index: {}]
  %s6 = inlined_call_operand.hbm [shape: f32[2,128], index: 6, kind: output, shape index: {}]
  %s7 = sld [smem:[#allocation0]]
  $region65: #{decoder_forward.3} parent=0
    _
  %s9 = ssub.s32 1, %s7
  %s10 = scalar_select 0, %s9, %s7
  $region1: #{decoder_forward.3} parent=0
    #allocation4 [shape = 'u8[1024]{0}', space=vmem, size = 0x400, scoped, tag = 'output window, operand 0, single buffered']
    #allocation5 [shape = 's32[2]{0}', space=sflag, size = 0x8, scoped, tag = 'scoped memory for decoder_forward.3']
    %11 = vsyncpa [#allocation5], 0
    loop: start=0, step=1, limit=8
    $region2: #{decoder_forward.3} parent=1 // loop_pre_header
      _
    $region3: #{decoder_forward.3} parent=1 // loop_header
      %s13 = sphi 0, %s17
      %p14 = scmp.ge.s32.totalorder %s13, 8
      %s23 = sphi 0, %s25
      %s26 = sphi 0, %s23
      %s27 = sphi 0, %s26
      %s43 = sphi 0, %s27
      %s47 = sphi 0, %s47
      %s49 = sphi 0, %s47
      %s50 = sphi 0, %s49
      %s64 = sphi 0, %s50
      %s68 = sphi 0, %s68
      %s70 = sphi 0, %s68
      %s71 = sphi 0, %s70
      %s85 = sphi 0, %s71
      %s89 = sphi 0, %s89
      %s91 = sphi 0, %s89
      %s92 = sphi 0, %s91
      %s106 = sphi 0, %s92
      %s110 = sphi 0, %s110
      %s112 = sphi 0, %s110
      %s113 = sphi 0, %s112
      %s127 = sphi 0, %s113
      %s131 = sphi 0, %s131
      %s133 = sphi 0, %s131
      %s134 = sphi 0, %s133
      %s148 = sphi 0, %s134
      %s152 = sphi 0, %s152
      %s154 = sphi 0, %s152
      %s155 = sphi 0, %s154
      %s169 = sphi 0, %s155
    $region4: #{decoder_forward.3} parent=1 // loop_header_branch
      %16 = sbr.rel (%p14) target = $region8
    $region5: #{decoder_forward.3} parent=1 // loop_body
      %s18 = ssub.s32 %s13, 1
      %s19 = ssub.s32 %s13, 2
      %s20 = sadd.s32 %s13, 1
      %s21 = ssub.s32 %s13, %s20
      %p22 = scmp.eq.s32.totalorder %s21, 0
      %s24 = sadd.s32 %s23, 1
      %s25 = scalar_select %p22, %s23, %s24
      %p28 = pneg %p22
      %p29 = scmp.eq.s32.totalorder %s13, 5
      %p30 = por %p28, %p29
      %p31 = scmp.ne.s32.totalorder %s23, %s26
      %p32 = scmp.eq.s32.totalorder %s13, 0
      %p33 = por %p31, %p32
      %p34 = scmp.ne.s32.totalorder %s23, %s26
      %p35 = scmp.eq.s32.totalorder %s18, 5
      %p36 = por %p34, %p35
      %p37 = scmp.ne.s32.totalorder %s26, %s27
      %p38 = scmp.eq.s32.totalorder %s18, 0
      %p39 = por %p37, %p38
      %p40 = scmp.ne.s32.totalorder %s26, %s27
      %p41 = scmp.eq.s32.totalorder %s19, 5
      %p42 = por %p40, %p41
      %p44 = scmp.ne.s32.totalorder %s27, %s43
      %p45 = scmp.eq.s32.totalorder %s19, 0
      %p46 = por %p44, %p45
      %s48 = sadd.s32 %s47, 1
      %p51 = scmp.eq.s32.totalorder %s13, 5
      %p52 = scmp.ne.s32.totalorder %s47, %s49
      %p53 = scmp.eq.s32.totalorder %s13, 0
      %p54 = por %p52, %p53
      %p55 = scmp.ne.s32.totalorder %s47, %s49
      %p56 = scmp.eq.s32.totalorder %s18, 5
      %p57 = por %p55, %p56
      %p58 = scmp.ne.s32.totalorder %s49, %s50
      %p59 = scmp.eq.s32.totalorder %s18, 0
      %p60 = por %p58, %p59
      %p61 = scmp.ne.s32.totalorder %s49, %s50
      %p62 = scmp.eq.s32.totalorder %s19, 5
      %p63 = por %p61, %p62
      %p65 = scmp.ne.s32.totalorder %s50, %s64
      %p66 = scmp.eq.s32.totalorder %s19, 0
      %p67 = por %p65, %p66
      %s69 = sadd.s32 %s68, 1
      %p72 = scmp.eq.s32.totalorder %s13, 5
      %p73 = scmp.ne.s32.totalorder %s68, %s70
      %p74 = scmp.eq.s32.totalorder %s13, 0
      %p75 = por %p73, %p74
      %p76 = scmp.ne.s32.totalorder %s68, %s70
      %p77 = scmp.eq.s32.totalorder %s18, 5
      %p78 = por %p76, %p77
      %p79 = scmp.ne.s32.totalorder %s70, %s71
      %p80 = scmp.eq.s32.totalorder %s18, 0
      %p81 = por %p79, %p80
      %p82 = scmp.ne.s32.totalorder %s70, %s71
      %p83 = scmp.eq.s32.totalorder %s19, 5
      %p84 = por %p82, %p83
      %p86 = scmp.ne.s32.totalorder %s71, %s85
      %p87 = scmp.eq.s32.totalorder %s19, 0
      %p88 = por %p86, %p87
      %s90 = sadd.s32 %s89, 1
      %p93 = scmp.eq.s32.totalorder %s13, 5
      %p94 = scmp.ne.s32.totalorder %s89, %s91
      %p95 = scmp.eq.s32.totalorder %s13, 0
      %p96 = por %p94, %p95
      %p97 = scmp.ne.s32.totalorder %s89, %s91
      %p98 = scmp.eq.s32.totalorder %s18, 5
      %p99 = por %p97, %p98
      %p100 = scmp.ne.s32.totalorder %s91, %s92
      %p101 = scmp.eq.s32.totalorder %s18, 0
      %p102 = por %p100, %p101
      %p103 = scmp.ne.s32.totalorder %s91, %s92
      %p104 = scmp.eq.s32.totalorder %s19, 5
      %p105 = por %p103, %p104
      %p107 = scmp.ne.s32.totalorder %s92, %s106
      %p108 = scmp.eq.s32.totalorder %s19, 0
      %p109 = por %p107, %p108
      %s111 = sadd.s32 %s110, 1
      %p114 = scmp.eq.s32.totalorder %s13, 5
      %p115 = scmp.ne.s32.totalorder %s110, %s112
      %p116 = scmp.eq.s32.totalorder %s13, 0
      %p117 = por %p115, %p116
      %p118 = scmp.ne.s32.totalorder %s110, %s112
      %p119 = scmp.eq.s32.totalorder %s18, 5
      %p120 = por %p118, %p119
      %p121 = scmp.ne.s32.totalorder %s112, %s113
      %p122 = scmp.eq.s32.totalorder %s18, 0
      %p123 = por %p121, %p122
      %p124 = scmp.ne.s32.totalorder %s112, %s113
      %p125 = scmp.eq.s32.totalorder %s19, 5
      %p126 = por %p124, %p125
      %p128 = scmp.ne.s32.totalorder %s113, %s127
      %p129 = scmp.eq.s32.totalorder %s19, 0
      %p130 = por %p128, %p129
      %s132 = sadd.s32 %s131, 1
      %p135 = scmp.eq.s32.totalorder %s13, 5
      %p136 = scmp.ne.s32.totalorder %s131, %s133
      %p137 = scmp.eq.s32.totalorder %s13, 0
      %p138 = por %p136, %p137
      %p139 = scmp.ne.s32.totalorder %s131, %s133
      %p140 = scmp.eq.s32.totalorder %s18, 5
      %p141 = por %p139, %p140
      %p142 = scmp.ne.s32.totalorder %s133, %s134
      %p143 = scmp.eq.s32.totalorder %s18, 0
      %p144 = por %p142, %p143
      %p145 = scmp.ne.s32.totalorder %s133, %s134
      %p146 = scmp.eq.s32.totalorder %s19, 5
      %p147 = por %p145, %p146
      %p149 = scmp.ne.s32.totalorder %s134, %s148
      %p150 = scmp.eq.s32.totalorder %s19, 0
      %p151 = por %p149, %p150
      %s153 = sadd.s32 %s152, 1
      %p156 = scmp.eq.s32.totalorder %s13, 5
      %p157 = scmp.ne.s32.totalorder %s152, %s154
      %p158 = scmp.eq.s32.totalorder %s13, 0
      %p159 = por %p157, %p158
      %p160 = scmp.ne.s32.totalorder %s152, %s154
      %p161 = scmp.eq.s32.totalorder %s18, 5
      %p162 = por %p160, %p161
      %p163 = scmp.ne.s32.totalorder %s154, %s155
      %p164 = scmp.eq.s32.totalorder %s18, 0
      %p165 = por %p163, %p164
      %p166 = scmp.ne.s32.totalorder %s154, %s155
      %p167 = scmp.eq.s32.totalorder %s19, 5
      %p168 = por %p166, %p167
      %p170 = scmp.ne.s32.totalorder %s155, %s169
      %p171 = scmp.eq.s32.totalorder %s19, 0
      %p172 = por %p170, %p171
      %p173 = scmp.le.s32.totalorder 1, %s13
      %p174 = scmp.lt.s32.totalorder %s13, 7
      %p175 = pnand %p173, %p174
      %p176 = pneg %p175
      // Predicated region
      $region9: #{decoder_forward.3} parent=5 // pred_check
        _
      $region10: #{decoder_forward.3} parent=5 // pred_check_branch
        %178 = sbr.rel (%p175) target = $region12
      $region11: #{decoder_forward.3} parent=5 // pred_region
        %s179 = ssub.s32 %s13, 1
        // Predicated region
        $region13: #{decoder_forward.3} parent=11 // pred_check
          %p180 = pneg %p60
        $region14: #{decoder_forward.3} parent=11 // pred_check_branch
          %182 = sbr.rel (%p180) target = $region16
        $region15: #{decoder_forward.3} parent=11 // pred_region
          _
        $region16: #{decoder_forward.3} parent=11 // pred_fallthru
          _
        // Predicated region
        $region17: #{decoder_forward.3} parent=11 // pred_check
          %p183 = pneg %p81
        $region18: #{decoder_forward.3} parent=11 // pred_check_branch
          %185 = sbr.rel (%p183) target = $region20
        $region19: #{decoder_forward.3} parent=11 // pred_region
          _
        $region20: #{decoder_forward.3} parent=11 // pred_fallthru
          _
        // Predicated region
        $region21: #{decoder_forward.3} parent=11 // pred_check
          %p186 = pneg %p102
        $region22: #{decoder_forward.3} parent=11 // pred_check_branch
          %188 = sbr.rel (%p186) target = $region24
        $region23: #{decoder_forward.3} parent=11 // pred_region
          _
        $region24: #{decoder_forward.3} parent=11 // pred_fallthru
          _
        // Predicated region
        $region25: #{decoder_forward.3} parent=11 // pred_check
          %p189 = pneg %p123
        $region26: #{decoder_forward.3} parent=11 // pred_check_branch
          %191 = sbr.rel (%p189) target = $region28
        $region27: #{decoder_forward.3} parent=11 // pred_region
          _
        $region28: #{decoder_forward.3} parent=11 // pred_fallthru
          _
        // Predicated region
        $region29: #{decoder_forward.3} parent=11 // pred_check
          %p192 = pneg %p144
        $region30: #{decoder_forward.3} parent=11 // pred_check_branch
          %194 = sbr.rel (%p192) target = $region32
        $region31: #{decoder_forward.3} parent=11 // pred_region
          _
        $region32: #{decoder_forward.3} parent=11 // pred_fallthru
          _
      $region12: #{decoder_forward.3} parent=5 // pred_fallthru
        _
      %p195 = scmp.lt.s32.totalorder %s13, 6
      // Predicated region
      $region33: #{decoder_forward.3} parent=5 // pred_check
        %p196 = pneg %p195
      $region34: #{decoder_forward.3} parent=5 // pred_check_branch
        %198 = sbr.rel (%p196) target = $region36
      $region35: #{decoder_forward.3} parent=5 // pred_region
        // Predicated region
        $region37: #{decoder_forward.3} parent=35 // pred_check
          %p199 = pneg %p33
        $region38: #{decoder_forward.3} parent=35 // pred_check_branch
          %201 = sbr.rel (%p199) target = $region40
        $region39: #{decoder_forward.3} parent=35 // pred_region
          %p202 = scmp.lt.s32.totalorder %s13, 5
          %s203 = scalar_select %p202, %s13, 5
          %s204 = smul.addr %s203, 2
          %s205 = scalar_lea.vmem %s0, %s204
        $region40: #{decoder_forward.3} parent=35 // pred_fallthru
          _
      $region36: #{decoder_forward.3} parent=5 // pred_fallthru
        _
      %p206 = scmp.le.s32.totalorder 1, %s13
      %p207 = scmp.lt.s32.totalorder %s13, 7
      %p208 = pnand %p206, %p207
      %p209 = pneg %p208
      // Predicated region
      $region41: #{decoder_forward.3} parent=5 // pred_check
        _
      $region42: #{decoder_forward.3} parent=5 // pred_check_branch
        %211 = sbr.rel (%p208) target = $region44
      $region43: #{decoder_forward.3} parent=5 // pred_region
        %s212 = ssub.s32 %s13, 1
        %p213 = scmp.lt.s32.totalorder %s18, 5
        %s214 = scalar_select %p213, %s18, 5
        %s215 = smul.addr %s214, 2
        %s216 = scalar_lea.vmem %s0, %s215
        %p217 = pneg %p39
        %p218 = pneg %p36
        %p219 = pneg %p60
        %p220 = pneg %p57
        %p221 = pneg %p81
        %p222 = pneg %p78
        %p223 = pneg %p102
        %p224 = pneg %p99
        %p225 = pneg %p123
        %p226 = pneg %p120
        %p227 = pneg %p144
        %p228 = pneg %p141
        %p229 = pneg %p165
        %p230 = pneg %p162
        %p231 = scmp.lt.s32.totalorder %s18, 5
        %s232 = scalar_select %p231, %s18, 5
        %s233 = smul.addr %s232, 2
        %s234 = scalar_lea.vmem %s0, %s233
        %p235 = scmp.eq.s32.totalorder %s18, 0
        // Predicated region
        $region45: #{decoder_forward.3} parent=43 // pred_check
          %p236 = pneg %p235
        $region46: #{decoder_forward.3} parent=43 // pred_check_branch
          %238 = sbr.rel (%p236) target = $region48
        $region47: #{decoder_forward.3} parent=43 // pred_region
          %239 = vst [vmem:[#allocation2] sm:$0x3] 0.0
          %240 = vst [vmem:[#allocation3] sm:$0x3] 0.0
        $region48: #{decoder_forward.3} parent=43 // pred_fallthru
          _
        %v241 = vld [vmem:[%s234] sm:$0x3]
        %v242 = vld [vmem:[#allocation2] sm:$0x3]
        %v243 = vld [vmem:[#allocation3] sm:$0x3]
        %v244 = vld [vmem:[%s1] sm:$0xff]
        %v245 = vld [vmem:[%s1 + $0x8] sm:$0xff]
        %v246 = vld [vmem:[%s1 + $0x10] sm:$0xff]
        %v247 = vld [vmem:[%s1 + $0x18] sm:$0xff]
        %v248 = vld [vmem:[%s1 + $0x20] sm:$0xff]
        %v249 = vld [vmem:[%s1 + $0x28] sm:$0xff]
        %v250 = vld [vmem:[%s1 + $0x30] sm:$0xff]
        %v251 = vld [vmem:[%s1 + $0x38] sm:$0xff]
        %v252 = vld [vmem:[%s1 + $0x40] sm:$0xff]
        %v253 = vld [vmem:[%s1 + $0x48] sm:$0xff]
        %v254 = vld [vmem:[%s1 + $0x50] sm:$0xff]
        %v255 = vld [vmem:[%s1 + $0x58] sm:$0xff]
        %v256 = vld [vmem:[%s1 + $0x60] sm:$0xff]
        %v257 = vld [vmem:[%s1 + $0x68] sm:$0xff]
        %v258 = vld [vmem:[%s1 + $0x70] sm:$0xff]
        %v259 = vld [vmem:[%s1 + $0x78] sm:$0xff]
        %v260 = vld [vmem:[%s1 + $0x80] sm:$0xff]
        %v261 = vld [vmem:[%s1 + $0x88] sm:$0xff]
        %v262 = vld [vmem:[%s1 + $0x90] sm:$0xff]
        %v263 = vld [vmem:[%s1 + $0x98] sm:$0xff]
        %v264 = vld [vmem:[%s1 + $0xa0] sm:$0xff]
        %v265 = vld [vmem:[%s1 + $0xa8] sm:$0xff]
        %v266 = vld [vmem:[%s1 + $0xb0] sm:$0xff]
        %v267 = vld [vmem:[%s1 + $0xb8] sm:$0xff]
        %v268 = vld [vmem:[%s1 + $0xc0] sm:$0xff]
        %v269 = vld [vmem:[%s1 + $0xc8] sm:$0xff]
        %v270 = vld [vmem:[%s1 + $0xd0] sm:$0xff]
        %v271 = vld [vmem:[%s1 + $0xd8] sm:$0xff]
        %v272 = vld [vmem:[%s1 + $0xe0] sm:$0xff]
        %v273 = vld [vmem:[%s1 + $0xe8] sm:$0xff]
        %v274 = vld [vmem:[%s1 + $0xf0] sm:$0xff]
        %v275 = vld [vmem:[%s1 + $0xf8] sm:$0xff]
        %v276 = vld [vmem:[%s1 + $0x100] sm:$0xff]
        %v277 = vld [vmem:[%s1 + $0x108] sm:$0xff]
        %v278 = vld [vmem:[%s1 + $0x110] sm:$0xff]
        %v279 = vld [vmem:[%s1 + $0x118] sm:$0xff]
        %v280 = vld [vmem:[%s1 + $0x120] sm:$0xff]
        %v281 = vld [vmem:[%s1 + $0x128] sm:$0xff]
        %v282 = vld [vmem:[%s1 + $0x130] sm:$0xff]
        %v283 = vld [vmem:[%s1 + $0x138] sm:$0xff]
        %v284 = vld [vmem:[%s1 + $0x140] sm:$0xff]
        %v285 = vld [vmem:[%s1 + $0x148] sm:$0xff]
        %v286 = vld [vmem:[%s1 + $0x150] sm:$0xff]
        %v287 = vld [vmem:[%s1 + $0x158] sm:$0xff]
        %v288 = vld [vmem:[%s1 + $0x160] sm:$0xff]
        %v289 = vld [vmem:[%s1 + $0x168] sm:$0xff]
        %v290 = vld [vmem:[%s1 + $0x170] sm:$0xff]
        %v291 = vld [vmem:[%s1 + $0x178] sm:$0xff]
        %v292 = vld [vmem:[%s1 + $0x180] sm:$0xff]
        %v293 = vld [vmem:[%s1 + $0x188] sm:$0xff]
        %v294 = vld [vmem:[%s1 + $0x190] sm:$0xff]
        %v295 = vld [vmem:[%s1 + $0x198] sm:$0xff]
        %v296 = vld [vmem:[%s1 + $0x1a0] sm:$0xff]
        %v297 = vld [vmem:[%s1 + $0x1a8] sm:$0xff]
        %v298 = vld [vmem:[%s1 + $0x1b0] sm:$0xff]
        %v299 = vld [vmem:[%s1 + $0x1b8] sm:$0xff]
        %v300 = vld [vmem:[%s1 + $0x1c0] sm:$0xff]
        %v301 = vld [vmem:[%s1 + $0x1c8] sm:$0xff]
        %v302 = vld [vmem:[%s1 + $0x1d0] sm:$0xff]
        %v303 = vld [vmem:[%s1 + $0x1d8] sm:$0xff]
        %v304 = vld [vmem:[%s1 + $0x1e0] sm:$0xff]
        %v305 = vld [vmem:[%s1 + $0x1e8] sm:$0xff]
        %v306 = vld [vmem:[%s1 + $0x1f0] sm:$0xff]
        %v307 = vld [vmem:[%s1 + $0x1f8] sm:$0xff]
        %v308 = vld [vmem:[%s2] sm:$0xff]
        %v309 = vld [vmem:[%s2 + $0x8] sm:$0xff]
        %v310 = vld [vmem:[%s2 + $0x10] sm:$0xff]
        %v311 = vld [vmem:[%s2 + $0x18] sm:$0xff]
        %v312 = vld [vmem:[%s2 + $0x20] sm:$0xff]
        %v313 = vld [vmem:[%s2 + $0x28] sm:$0xff]
        %v314 = vld [vmem:[%s2 + $0x30] sm:$0xff]
        %v315 = vld [vmem:[%s2 + $0x38] sm:$0xff]
        %v316 = vld [vmem:[%s2 + $0x40] sm:$0xff]
        %v317 = vld [vmem:[%s2 + $0x48] sm:$0xff]
        %v318 = vld [vmem:[%s2 + $0x50] sm:$0xff]
        %v319 = vld [vmem:[%s2 + $0x58] sm:$0xff]
        %v320 = vld [vmem:[%s2 + $0x60] sm:$0xff]
        %v321 = vld [vmem:[%s2 + $0x68] sm:$0xff]
        %v322 = vld [vmem:[%s2 + $0x70] sm:$0xff]
        %v323 = vld [vmem:[%s2 + $0x78] sm:$0xff]
        %v324 = vld [vmem:[%s2 + $0x80] sm:$0xff]
        %v325 = vld [vmem:[%s2 + $0x88] sm:$0xff]
        %v326 = vld [vmem:[%s2 + $0x90] sm:$0xff]
        %v327 = vld [vmem:[%s2 + $0x98] sm:$0xff]
        %v328 = vld [vmem:[%s2 + $0xa0] sm:$0xff]
        %v329 = vld [vmem:[%s2 + $0xa8] sm:$0xff]
        %v330 = vld [vmem:[%s2 + $0xb0] sm:$0xff]
        %v331 = vld [vmem:[%s2 + $0xb8] sm:$0xff]
        %v332 = vld [vmem:[%s2 + $0xc0] sm:$0xff]
        %v333 = vld [vmem:[%s2 + $0xc8] sm:$0xff]
        %v334 = vld [vmem:[%s2 + $0xd0] sm:$0xff]
        %v335 = vld [vmem:[%s2 + $0xd8] sm:$0xff]
        %v336 = vld [vmem:[%s2 + $0xe0] sm:$0xff]
        %v337 = vld [vmem:[%s2 + $0xe8] sm:$0xff]
        %v338 = vld [vmem:[%s2 + $0xf0] sm:$0xff]
        %v339 = vld [vmem:[%s2 + $0xf8] sm:$0xff]
        %v340 = vld [vmem:[%s2 + $0x100] sm:$0xff]
        %v341 = vld [vmem:[%s2 + $0x108] sm:$0xff]
        %v342 = vld [vmem:[%s2 + $0x110] sm:$0xff]
        %v343 = vld [vmem:[%s2 + $0x118] sm:$0xff]
        %v344 = vld [vmem:[%s2 + $0x120] sm:$0xff]
        %v345 = vld [vmem:[%s2 + $0x128] sm:$0xff]
        %v346 = vld [vmem:[%s2 + $0x130] sm:$0xff]
        %v347 = vld [vmem:[%s2 + $0x138] sm:$0xff]
        %v348 = vld [vmem:[%s2 + $0x140] sm:$0xff]
        %v349 = vld [vmem:[%s2 + $0x148] sm:$0xff]
        %v350 = vld [vmem:[%s2 + $0x150] sm:$0xff]
        %v351 = vld [vmem:[%s2 + $0x158] sm:$0xff]
        %v352 = vld [vmem:[%s2 + $0x160] sm:$0xff]
        %v353 = vld [vmem:[%s2 + $0x168] sm:$0xff]
        %v354 = vld [vmem:[%s2 + $0x170] sm:$0xff]
        %v355 = vld [vmem:[%s2 + $0x178] sm:$0xff]
        %v356 = vld [vmem:[%s2 + $0x180] sm:$0xff]
        %v357 = vld [vmem:[%s2 + $0x188] sm:$0xff]
        %v358 = vld [vmem:[%s2 + $0x190] sm:$0xff]
        %v359 = vld [vmem:[%s2 + $0x198] sm:$0xff]
        %v360 = vld [vmem:[%s2 + $0x1a0] sm:$0xff]
        %v361 = vld [vmem:[%s2 + $0x1a8] sm:$0xff]
        %v362 = vld [vmem:[%s2 + $0x1b0] sm:$0xff]
        %v363 = vld [vmem:[%s2 + $0x1b8] sm:$0xff]
        %v364 = vld [vmem:[%s2 + $0x1c0] sm:$0xff]
        %v365 = vld [vmem:[%s2 + $0x1c8] sm:$0xff]
        %v366 = vld [vmem:[%s2 + $0x1d0] sm:$0xff]
        %v367 = vld [vmem:[%s2 + $0x1d8] sm:$0xff]
        %v368 = vld [vmem:[%s2 + $0x1e0] sm:$0xff]
        %v369 = vld [vmem:[%s2 + $0x1e8] sm:$0xff]
        %v370 = vld [vmem:[%s2 + $0x1f0] sm:$0xff]
        %v371 = vld [vmem:[%s2 + $0x1f8] sm:$0xff]
        %372 = vmatprep.subr.mxu0 %v369
        %373 = vmatpush1.msra.mxu0 %v368
        %374 = vmatprep.subr.mxu0 %v365
        %375 = vmatpush1.msra.mxu0 %v364
        %376 = vmatprep.subr.mxu0 %v361
        %377 = vmatpush1.msra.mxu0 %v360
        %378 = vmatprep.subr.mxu0 %v357
        %379 = vmatpush1.msra.mxu0 %v356
        %380 = vmatprep.subr.mxu0 %v353
        %381 = vmatpush1.msra.mxu0 %v352
        %382 = vmatprep.subr.mxu0 %v349
        %383 = vmatpush1.msra.mxu0 %v348
        %384 = vmatprep.subr.mxu0 %v345
        %385 = vmatpush1.msra.mxu0 %v344
        %386 = vmatprep.subr.mxu0 %v341
        %387 = vmatpush1.msra.mxu0 %v340
        %388 = vmatprep.subr.mxu0 %v337
        %389 = vmatpush1.msra.mxu0 %v336
        %390 = vmatprep.subr.mxu0 %v333
        %391 = vmatpush1.msra.mxu0 %v332
        %392 = vmatprep.subr.mxu0 %v329
        %393 = vmatpush1.msra.mxu0 %v328
        %394 = vmatprep.subr.mxu0 %v325
        %395 = vmatpush1.msra.mxu0 %v324
        %396 = vmatprep.subr.mxu0 %v321
        %397 = vmatpush1.msra.mxu0 %v320
        %398 = vmatprep.subr.mxu0 %v317
        %399 = vmatpush1.msra.mxu0 %v316
        %400 = vmatprep.subr.mxu0 %v313
        %401 = vmatpush1.msra.mxu0 %v312
        %402 = vmatprep.subr.mxu0 %v309
        %403 = vmatpush1.msra.mxu0 %v308
        %404 = vmatprep.subr.mxu0 0.0
        %405 = vmatpush2.msra.mxu0 0.0
        %406 = vmatprep.subr.mxu0 0.0
        %407 = vmatpush2.msra.mxu0 0.0
        %408 = vmatprep.subr.mxu0 0.0
        %409 = vmatpush2.msra.mxu0 0.0
        %410 = vmatprep.subr.mxu0 0.0
        %411 = vmatpush2.msra.mxu0 0.0
        %412 = vmatprep.subr.mxu0 0.0
        %413 = vmatpush2.msra.mxu0 0.0
        %414 = vmatprep.subr.mxu0 0.0
        %415 = vmatpush2.msra.mxu0 0.0
        %416 = vmatprep.subr.mxu0 0.0
        %417 = vmatpush2.msra.mxu0 0.0
        %418 = vmatprep.subr.mxu0 0.0
        %419 = vmatpush2.msra.mxu0 0.0
        %420 = vmatprep.subr.mxu0 0.0
        %421 = vmatpush2.msra.mxu0 0.0
        %422 = vmatprep.subr.mxu0 0.0
        %423 = vmatpush2.msra.mxu0 0.0
        %424 = vmatprep.subr.mxu0 0.0
        %425 = vmatpush2.msra.mxu0 0.0
        %426 = vmatprep.subr.mxu0 0.0
        %427 = vmatpush2.msra.mxu0 0.0
        %428 = vmatprep.subr.mxu0 0.0
        %429 = vmatpush2.msra.mxu0 0.0
        %430 = vmatprep.subr.mxu0 0.0
        %431 = vmatpush2.msra.mxu0 0.0
        %432 = vmatprep.subr.mxu0 0.0
        %433 = vmatpush2.msra.mxu0 0.0
        %434 = vmatprep.subr.mxu0 0.0
        %435 = vmatpush2.msra.mxu0 0.0
        %436 = vmatprep.mubr.f32.mxu0 0.0
        %437 = vmatmul.mubr.f32.gmra.mxu0 %v242
        %v438 = vpop.f32.mrf.mxu0
        %v439 = vadd.f32 0.0, %v438
        %v440 = vpop.f32.mrf.mxu0
        %v441 = vadd.f32 0.0, %v440
        %442 = vdwg.mxu0
        %443 = vmatprep.subr.mxu0 %v371
        %444 = vmatpush1.msra.mxu0 %v370
        %445 = vmatprep.subr.mxu0 %v367
        %446 = vmatpush1.msra.mxu0 %v366
        %447 = vmatprep.subr.mxu0 %v363
        %448 = vmatpush1.msra.mxu0 %v362
        %449 = vmatprep.subr.mxu0 %v359
        %450 = vmatpush1.msra.mxu0 %v358
        %451 = vmatprep.subr.mxu0 %v355
        %452 = vmatpush1.msra.mxu0 %v354
        %453 = vmatprep.subr.mxu0 %v351
        %454 = vmatpush1.msra.mxu0 %v350
        %455 = vmatprep.subr.mxu0 %v347
        %456 = vmatpush1.msra.mxu0 %v346
        %457 = vmatprep.subr.mxu0 %v343
        %458 = vmatpush1.msra.mxu0 %v342
        %459 = vmatprep.subr.mxu0 %v339
        %460 = vmatpush1.msra.mxu0 %v338
        %461 = vmatprep.subr.mxu0 %v335
        %462 = vmatpush1.msra.mxu0 %v334
        %463 = vmatprep.subr.mxu0 %v331
        %464 = vmatpush1.msra.mxu0 %v330
        %465 = vmatprep.subr.mxu0 %v327
        %466 = vmatpush1.msra.mxu0 %v326
        %467 = vmatprep.subr.mxu0 %v323
        %468 = vmatpush1.msra.mxu0 %v322
        %469 = vmatprep.subr.mxu0 %v319
        %470 = vmatpush1.msra.mxu0 %v318
        %471 = vmatprep.subr.mxu0 %v315
        %472 = vmatpush1.msra.mxu0 %v314
        %473 = vmatprep.subr.mxu0 %v311
        %474 = vmatpush1.msra.mxu0 %v310
        %475 = vmatprep.subr.mxu0 0.0
        %476 = vmatpush2.msra.mxu0 0.0
        %477 = vmatprep.subr.mxu0 0.0
        %478 = vmatpush2.msra.mxu0 0.0
        %479 = vmatprep.subr.mxu0 0.0
        %480 = vmatpush2.msra.mxu0 0.0
        %481 = vmatprep.subr.mxu0 0.0
        %482 = vmatpush2.msra.mxu0 0.0
        %483 = vmatprep.subr.mxu0 0.0
        %484 = vmatpush2.msra.mxu0 0.0
        %485 = vmatprep.subr.mxu0 0.0
        %486 = vmatpush2.msra.mxu0 0.0
        %487 = vmatprep.subr.mxu0 0.0
        %488 = vmatpush2.msra.mxu0 0.0
        %489 = vmatprep.subr.mxu0 0.0
        %490 = vmatpush2.msra.mxu0 0.0
        %491 = vmatprep.subr.mxu0 0.0
        %492 = vmatpush2.msra.mxu0 0.0
        %493 = vmatprep.subr.mxu0 0.0
        %494 = vmatpush2.msra.mxu0 0.0
        %495 = vmatprep.subr.mxu0 0.0
        %496 = vmatpush2.msra.mxu0 0.0
        %497 = vmatprep.subr.mxu0 0.0
        %498 = vmatpush2.msra.mxu0 0.0
        %499 = vmatprep.subr.mxu0 0.0
        %500 = vmatpush2.msra.mxu0 0.0
        %501 = vmatprep.subr.mxu0 0.0
        %502 = vmatpush2.msra.mxu0 0.0
        %503 = vmatprep.subr.mxu0 0.0
        %504 = vmatpush2.msra.mxu0 0.0
        %505 = vmatprep.subr.mxu0 0.0
        %506 = vmatpush2.msra.mxu0 0.0
        %507 = vmatprep.mubr.f32.mxu0 0.0
        %508 = vmatmul.mubr.f32.gmra.mxu0 %v242
        %v509 = vpop.f32.mrf.mxu0
        %v510 = vadd.f32 0.0, %v509
        %v511 = vpop.f32.mrf.mxu0
        %v512 = vadd.f32 0.0, %v511
        %513 = vdwg.mxu0
        %514 = vmatprep.subr.mxu0 %v305
        %515 = vmatpush1.msra.mxu0 %v304
        %516 = vmatprep.subr.mxu0 %v301
        %517 = vmatpush1.msra.mxu0 %v300
        %518 = vmatprep.subr.mxu0 %v297
        %519 = vmatpush1.msra.mxu0 %v296
        %520 = vmatprep.subr.mxu0 %v293
        %521 = vmatpush1.msra.mxu0 %v292
        %522 = vmatprep.subr.mxu0 %v289
        %523 = vmatpush1.msra.mxu0 %v288
        %524 = vmatprep.subr.mxu0 %v285
        %525 = vmatpush1.msra.mxu0 %v284
        %526 = vmatprep.subr.mxu0 %v281
        %527 = vmatpush1.msra.mxu0 %v280
        %528 = vmatprep.subr.mxu0 %v277
        %529 = vmatpush1.msra.mxu0 %v276
        %530 = vmatprep.subr.mxu0 %v273
        %531 = vmatpush1.msra.mxu0 %v272
        %532 = vmatprep.subr.mxu0 %v269
        %533 = vmatpush1.msra.mxu0 %v268
        %534 = vmatprep.subr.mxu0 %v265
        %535 = vmatpush1.msra.mxu0 %v264
        %536 = vmatprep.subr.mxu0 %v261
        %537 = vmatpush1.msra.mxu0 %v260
        %538 = vmatprep.subr.mxu0 %v257
        %539 = vmatpush1.msra.mxu0 %v256
        %540 = vmatprep.subr.mxu0 %v253
        %541 = vmatpush1.msra.mxu0 %v252
        %542 = vmatprep.subr.mxu0 %v249
        %543 = vmatpush1.msra.mxu0 %v248
        %544 = vmatprep.subr.mxu0 %v245
        %545 = vmatpush1.msra.mxu0 %v244
        %546 = vmatprep.subr.mxu0 0.0
        %547 = vmatpush2.msra.mxu0 0.0
        %548 = vmatprep.subr.mxu0 0.0
        %549 = vmatpush2.msra.mxu0 0.0
        %550 = vmatprep.subr.mxu0 0.0
        %551 = vmatpush2.msra.mxu0 0.0
        %552 = vmatprep.subr.mxu0 0.0
        %553 = vmatpush2.msra.mxu0 0.0
        %554 = vmatprep.subr.mxu0 0.0
        %555 = vmatpush2.msra.mxu0 0.0
        %556 = vmatprep.subr.mxu0 0.0
        %557 = vmatpush2.msra.mxu0 0.0
        %558 = vmatprep.subr.mxu0 0.0
        %559 = vmatpush2.msra.mxu0 0.0
        %560 = vmatprep.subr.mxu0 0.0
        %561 = vmatpush2.msra.mxu0 0.0
        %562 = vmatprep.subr.mxu0 0.0
        %563 = vmatpush2.msra.mxu0 0.0
        %564 = vmatprep.subr.mxu0 0.0
        %565 = vmatpush2.msra.mxu0 0.0
        %566 = vmatprep.subr.mxu0 0.0
        %567 = vmatpush2.msra.mxu0 0.0
        %568 = vmatprep.subr.mxu0 0.0
        %569 = vmatpush2.msra.mxu0 0.0
        %570 = vmatprep.subr.mxu0 0.0
        %571 = vmatpush2.msra.mxu0 0.0
        %572 = vmatprep.subr.mxu0 0.0
        %573 = vmatpush2.msra.mxu0 0.0
        %574 = vmatprep.subr.mxu0 0.0
        %575 = vmatpush2.msra.mxu0 0.0
        %576 = vmatprep.subr.mxu0 0.0
        %577 = vmatpush2.msra.mxu0 0.0
        %578 = vmatprep.mubr.f32.mxu0 0.0
        %579 = vmatmul.mubr.f32.gmra.mxu0 %v241
        %v580 = vpop.f32.mrf.mxu0
        %v581 = vadd.f32 %v439, %v580
        %v582 = vpop.f32.mrf.mxu0
        %v583 = vadd.f32 %v441, %v582
        %584 = vdwg.mxu0
        %585 = vmatprep.subr.mxu0 %v307
        %586 = vmatpush1.msra.mxu0 %v306
        %587 = vmatprep.subr.mxu0 %v303
        %588 = vmatpush1.msra.mxu0 %v302
        %589 = vmatprep.subr.mxu0 %v299
        %590 = vmatpush1.msra.mxu0 %v298
        %591 = vmatprep.subr.mxu0 %v295
        %592 = vmatpush1.msra.mxu0 %v294
        %593 = vmatprep.subr.mxu0 %v291
        %594 = vmatpush1.msra.mxu0 %v290
        %595 = vmatprep.subr.mxu0 %v287
        %596 = vmatpush1.msra.mxu0 %v286
        %597 = vmatprep.subr.mxu0 %v283
        %598 = vmatpush1.msra.mxu0 %v282
        %599 = vmatprep.subr.mxu0 %v279
        %600 = vmatpush1.msra.mxu0 %v278
        %601 = vmatprep.subr.mxu0 %v275
        %602 = vmatpush1.msra.mxu0 %v274
        %603 = vmatprep.subr.mxu0 %v271
        %604 = vmatpush1.msra.mxu0 %v270
        %605 = vmatprep.subr.mxu0 %v267
        %606 = vmatpush1.msra.mxu0 %v266
        %607 = vmatprep.subr.mxu0 %v263
        %608 = vmatpush1.msra.mxu0 %v262
        %609 = vmatprep.subr.mxu0 %v259
        %610 = vmatpush1.msra.mxu0 %v258
        %611 = vmatprep.subr.mxu0 %v255
        %612 = vmatpush1.msra.mxu0 %v254
        %613 = vmatprep.subr.mxu0 %v251
        %614 = vmatpush1.msra.mxu0 %v250
        %615 = vmatprep.subr.mxu0 %v247
        %616 = vmatpush1.msra.mxu0 %v246
        %617 = vmatprep.subr.mxu0 0.0
        %618 = vmatpush2.msra.mxu0 0.0
        %619 = vmatprep.subr.mxu0 0.0
        %620 = vmatpush2.msra.mxu0 0.0
        %621 = vmatprep.subr.mxu0 0.0
        %622 = vmatpush2.msra.mxu0 0.0
        %623 = vmatprep.subr.mxu0 0.0
        %624 = vmatpush2.msra.mxu0 0.0
        %625 = vmatprep.subr.mxu0 0.0
        %626 = vmatpush2.msra.mxu0 0.0
        %627 = vmatprep.subr.mxu0 0.0
        %628 = vmatpush2.msra.mxu0 0.0
        %629 = vmatprep.subr.mxu0 0.0
        %630 = vmatpush2.msra.mxu0 0.0
        %631 = vmatprep.subr.mxu0 0.0
        %632 = vmatpush2.msra.mxu0 0.0
        %633 = vmatprep.subr.mxu0 0.0
        %634 = vmatpush2.msra.mxu0 0.0
        %635 = vmatprep.subr.mxu0 0.0
        %636 = vmatpush2.msra.mxu0 0.0
        %637 = vmatprep.subr.mxu0 0.0
        %638 = vmatpush2.msra.mxu0 0.0
        %639 = vmatprep.subr.mxu0 0.0
        %640 = vmatpush2.msra.mxu0 0.0
        %641 = vmatprep.subr.mxu0 0.0
        %642 = vmatpush2.msra.mxu0 0.0
        %643 = vmatprep.subr.mxu0 0.0
        %644 = vmatpush2.msra.mxu0 0.0
        %645 = vmatprep.subr.mxu0 0.0
        %646 = vmatpush2.msra.mxu0 0.0
        %647 = vmatprep.subr.mxu0 0.0
        %648 = vmatpush2.msra.mxu0 0.0
        %649 = vmatprep.mubr.f32.mxu0 0.0
        %650 = vmatmul.mubr.f32.gmra.mxu0 %v241
        %v651 = vpop.f32.mrf.mxu0
        %v652 = vadd.f32 %v510, %v651
        %v653 = vpop.f32.mrf.mxu0
        %v654 = vadd.f32 %v512, %v653
        %655 = vdwg.mxu0
        %v656 = vld [vmem:[%s3] sm:$0xf]
        %v658 = vlaneseq
        %v659 = vshrl.u32 %v658, 7
        %v660 = vsub.s32 0, %v659
        %v661 = vrot.slane %v656, %v660
        %v662 = vlaneseq
        %v663 = vshrl.u32 %v662, 7
        %v664 = vsub.s32 1, %v663
        %v665 = vrot.slane %v656, %v664
        %v666 = vlaneseq
        %v667 = vshrl.u32 %v666, 7
        %v668 = vsub.s32 2, %v667
        %v669 = vrot.slane %v656, %v668
        %v670 = vlaneseq
        %v671 = vshrl.u32 %v670, 7
        %v672 = vsub.s32 3, %v671
        %v673 = vrot.slane %v656, %v672
        %v678 = vadd.f32 %v581, %v661
        %v679 = vadd.f32 %v583, %v665
        %v680 = vadd.f32 %v652, %v669
        %v681 = vadd.f32 %v654, %v673
        %v682 = vsub.f32 0.0, %v678
        %v683 = vmul.f32 %v682, 1.442695
        %v684 = vpow.pop %v683
        %v685 = vadd.f32 %v684, 1.0
        %v686 = vrcp.pop %v685
        %v687 = vmul.f32 1.0, %v686
        %v688 = vsub.f32 0.0, %v679
        %v689 = vmul.f32 %v688, 1.442695
        %v690 = vpow.pop %v689
        %v691 = vadd.f32 %v690, 1.0
        %v692 = vrcp.pop %v691
        %v693 = vmul.f32 1.0, %v692
        %v694 = vtanh.pop %v680
        %v695 = vsub.f32 0.0, %v681
        %v696 = vmul.f32 %v695, 1.442695
        %v697 = vpow.pop %v696
        %v698 = vadd.f32 %v697, 1.0
        %v699 = vrcp.pop %v698
        %v700 = vmul.f32 1.0, %v699
        %v701 = vmul.f32 %v693, %v243
        %v702 = vmul.f32 %v687, %v694
        %v703 = vadd.f32 %v701, %v702
        %v704 = vtanh.pop %v703
        %v705 = vmul.f32 %v700, %v704
        %706 = vst [vmem:[#allocation2] sm:$0x3] %v705
        %707 = vst [vmem:[#allocation3] sm:$0x3] %v703
        %p708 = scmp.eq.s32.totalorder %s18, 5
        // Predicated region
        $region49: #{decoder_forward.3} parent=43 // pred_check
          %p709 = pneg %p708
        $region50: #{decoder_forward.3} parent=43 // pred_check_branch
          %711 = sbr.rel (%p709) target = $region52
        $region51: #{decoder_forward.3} parent=43 // pred_region
          %v712 = vld [vmem:[%s4] sm:$0xff]
          %v713 = vld [vmem:[%s4 + $0x8] sm:$0xff]
          %v714 = vld [vmem:[%s4 + $0x10] sm:$0xff]
          %v715 = vld [vmem:[%s4 + $0x18] sm:$0xff]
          %v716 = vld [vmem:[%s4 + $0x20] sm:$0xff]
          %v717 = vld [vmem:[%s4 + $0x28] sm:$0xff]
          %v718 = vld [vmem:[%s4 + $0x30] sm:$0xff]
          %v719 = vld [vmem:[%s4 + $0x38] sm:$0xff]
          %v720 = vld [vmem:[%s4 + $0x40] sm:$0xff]
          %v721 = vld [vmem:[%s4 + $0x48] sm:$0xff]
          %v722 = vld [vmem:[%s4 + $0x50] sm:$0xff]
          %v723 = vld [vmem:[%s4 + $0x58] sm:$0xff]
          %v724 = vld [vmem:[%s4 + $0x60] sm:$0xff]
          %v725 = vld [vmem:[%s4 + $0x68] sm:$0xff]
          %v726 = vld [vmem:[%s4 + $0x70] sm:$0xff]
          %v727 = vld [vmem:[%s4 + $0x78] sm:$0xff]
          %v728 = vld [vmem:[%s5] sm:$0x1]
          %v730 = vlaneseq
          %v731 = vshrl.u32 %v730, 7
          %v732 = vsub.s32 0, %v731
          %v733 = vrot.slane %v728, %v732
          %735 = vmatprep.subr.mxu0 0.0
          %736 = vmatpush1.msra.mxu0 %v727
          %737 = vmatprep.subr.mxu0 0.0
          %738 = vmatpush1.msra.mxu0 %v726
          %739 = vmatprep.subr.mxu0 0.0
          %740 = vmatpush1.msra.mxu0 %v725
          %741 = vmatprep.subr.mxu0 0.0
          %742 = vmatpush1.msra.mxu0 %v724
          %743 = vmatprep.subr.mxu0 0.0
          %744 = vmatpush1.msra.mxu0 %v723
          %745 = vmatprep.subr.mxu0 0.0
          %746 = vmatpush1.msra.mxu0 %v722
          %747 = vmatprep.subr.mxu0 0.0
          %748 = vmatpush1.msra.mxu0 %v721
          %749 = vmatprep.subr.mxu0 0.0
          %750 = vmatpush1.msra.mxu0 %v720
          %751 = vmatprep.subr.mxu0 0.0
          %752 = vmatpush1.msra.mxu0 %v719
          %753 = vmatprep.subr.mxu0 0.0
          %754 = vmatpush1.msra.mxu0 %v718
          %755 = vmatprep.subr.mxu0 0.0
          %756 = vmatpush1.msra.mxu0 %v717
          %757 = vmatprep.subr.mxu0 0.0
          %758 = vmatpush1.msra.mxu0 %v716
          %759 = vmatprep.subr.mxu0 0.0
          %760 = vmatpush1.msra.mxu0 %v715
          %761 = vmatprep.subr.mxu0 0.0
          %762 = vmatpush1.msra.mxu0 %v714
          %763 = vmatprep.subr.mxu0 0.0
          %764 = vmatpush1.msra.mxu0 %v713
          %765 = vmatprep.subr.mxu0 0.0
          %766 = vmatpush1.msra.mxu0 %v712
          %767 = vmatprep.subr.mxu0 0.0
          %768 = vmatpush2.msra.mxu0 0.0
          %769 = vmatprep.subr.mxu0 0.0
          %770 = vmatpush2.msra.mxu0 0.0
          %771 = vmatprep.subr.mxu0 0.0
          %772 = vmatpush2.msra.mxu0 0.0
          %773 = vmatprep.subr.mxu0 0.0
          %774 = vmatpush2.msra.mxu0 0.0
          %775 = vmatprep.subr.mxu0 0.0
          %776 = vmatpush2.msra.mxu0 0.0
          %777 = vmatprep.subr.mxu0 0.0
          %778 = vmatpush2.msra.mxu0 0.0
          %779 = vmatprep.subr.mxu0 0.0
          %780 = vmatpush2.msra.mxu0 0.0
          %781 = vmatprep.subr.mxu0 0.0
          %782 = vmatpush2.msra.mxu0 0.0
          %783 = vmatprep.subr.mxu0 0.0
          %784 = vmatpush2.msra.mxu0 0.0
          %785 = vmatprep.subr.mxu0 0.0
          %786 = vmatpush2.msra.mxu0 0.0
          %787 = vmatprep.subr.mxu0 0.0
          %788 = vmatpush2.msra.mxu0 0.0
          %789 = vmatprep.subr.mxu0 0.0
          %790 = vmatpush2.msra.mxu0 0.0
          %791 = vmatprep.subr.mxu0 0.0
          %792 = vmatpush2.msra.mxu0 0.0
          %793 = vmatprep.subr.mxu0 0.0
          %794 = vmatpush2.msra.mxu0 0.0
          %795 = vmatprep.subr.mxu0 0.0
          %796 = vmatpush2.msra.mxu0 0.0
          %797 = vmatprep.subr.mxu0 0.0
          %798 = vmatpush2.msra.mxu0 0.0
          %799 = vmatprep.mubr.f32.mxu0 0.0
          %800 = vmatmul.mubr.f32.gmra.mxu0 %v705
          %v801 = vpop.f32.mrf.mxu0
          %v802 = vadd.f32 %v733, %v801
          %v803 = vpop.f32.mrf.mxu0
          %804 = vdwg.mxu0
          %805 = vst [vmem:[#allocation4] sm:$0x3] %v802
        $region52: #{decoder_forward.3} parent=43 // pred_fallthru
          _
        // Predicated region
        $region53: #{decoder_forward.3} parent=43 // pred_check
          %p806 = pneg %p162
        $region54: #{decoder_forward.3} parent=43 // pred_check_branch
          %808 = sbr.rel (%p806) target = $region56
        $region55: #{decoder_forward.3} parent=43 // pred_region
          %s810 = ssub.s32 32, 32
          %811 = vsyncadd [#allocation5], %s810
          %s813 = sshll.u32 [#allocation4], 4
          %s814 = int_to_ptr.vmem [resolvable:$true] %s813
          %816 = dma.vmem_to_hbm [thread:$0]  %s814, 32, %s6, [#allocation5]
        $region56: #{decoder_forward.3} parent=43 // pred_fallthru
          _
        // Predicated region
        $region57: #{decoder_forward.3} parent=43 // pred_check
          %p817 = pneg %p162
        $region58: #{decoder_forward.3} parent=43 // pred_check_branch
          %819 = sbr.rel (%p817) target = $region60
        $region59: #{decoder_forward.3} parent=43 // pred_region
          %820 = dma.done [#allocation5], 32
        $region60: #{decoder_forward.3} parent=43 // pred_fallthru
          _
      $region44: #{decoder_forward.3} parent=5 // pred_fallthru
        _
      %p821 = scmp.le.s32.totalorder 2, %s13
      // Predicated region
      $region61: #{decoder_forward.3} parent=5 // pred_check
        %p822 = pneg %p821
      $region62: #{decoder_forward.3} parent=5 // pred_check_branch
        %824 = sbr.rel (%p822) target = $region64
      $region63: #{decoder_forward.3} parent=5 // pred_region
        %s825 = ssub.s32 %s13, 2
      $region64: #{decoder_forward.3} parent=5 // pred_fallthru
        _
    $region6: #{decoder_forward.3} parent=1 // loop_footer
      %s17 = sadd.s32 1, %s13
    $region7: #{decoder_forward.3} parent=1 // loop_footer_branch
      %12 = sbr.rel target = $region3
    $region8: #{decoder_forward.3} parent=1 // loop_exit
      _
    %826 = vsyncpa [#allocation5], 1
    %s827 = scalar_lea.sflag [#allocation5], 1
    %828 = vsyncpa %s827, 1

// kernel: decoder_forward.5
$region0: #{decoder_forward.5}
  #allocation0 [shape = 'u32[]', space=smem, size = 0x4, offset = 0x4, fixed_abs, tag = 'smem constant byte address 0x4 - core index']
  #allocation1 [shape = 'u32[144,128]{1,0:T(1,128)}', space=vmem, size = 0x12000, scoped, tag = 'internal scratch']
  #allocation2 [shape = 'f32[2,128]{1,0:T(2,128)}', space=vmem, size = 0x400, scoped, tag = 'scratch operand']
  #allocation3 [shape = 'f32[2,128]{1,0:T(2,128)}', space=vmem, size = 0x400, scoped, tag = 'scratch operand']
  #allocation4 [shape = 'f32[2,128]{1,0:T(2,128)}', space=vmem, size = 0x400, scoped, tag = 'scratch operand']
  #allocation5 [shape = 'f32[2,128]{1,0:T(2,128)}', space=vmem, size = 0x400, scoped, tag = 'scratch operand']
  %s0 = inlined_call_operand.smem [shape: u32[30], index: -1, kind: input, shape index: {}]
  %s1 = sld [smem:[%s0]]
  %s2 = scalar_lea.smem %s0, 1
  %s3 = sld [smem:[%s2]]
  %s4 = scalar_lea.smem %s0, 2
  %s5 = sld [smem:[%s4]]
  %s6 = scalar_lea.smem %s0, 3
  %s7 = sld [smem:[%s6]]
  %s8 = scalar_lea.smem %s0, 4
  %s9 = sld [smem:[%s8]]
  %s10 = scalar_lea.smem %s0, 5
  %s11 = sld [smem:[%s10]]
  %s12 = scalar_lea.smem %s0, 6
  %s13 = sld [smem:[%s12]]
  %s14 = scalar_lea.smem %s0, 7
  %s15 = sld [smem:[%s14]]
  %s16 = scalar_lea.smem %s0, 8
  %s17 = sld [smem:[%s16]]
  %s18 = scalar_lea.smem %s0, 9
  %s19 = sld [smem:[%s18]]
  %s20 = scalar_lea.smem %s0, 10
  %s21 = sld [smem:[%s20]]
  %s22 = scalar_lea.smem %s0, 11
  %s23 = sld [smem:[%s22]]
  %s24 = scalar_lea.smem %s0, 12
  %s25 = sld [smem:[%s24]]
  %s26 = scalar_lea.smem %s0, 13
  %s27 = sld [smem:[%s26]]
  %s28 = scalar_lea.smem %s0, 14
  %s29 = sld [smem:[%s28]]
  %s30 = scalar_lea.smem %s0, 15
  %s31 = sld [smem:[%s30]]
  %s32 = scalar_lea.smem %s0, 16
  %s33 = sld [smem:[%s32]]
  %s34 = scalar_lea.smem %s0, 17
  %s35 = sld [smem:[%s34]]
  %s36 = scalar_lea.smem %s0, 18
  %s37 = sld [smem:[%s36]]
  %s38 = scalar_lea.smem %s0, 19
  %s39 = sld [smem:[%s38]]
  %s40 = scalar_lea.smem %s0, 20
  %s41 = sld [smem:[%s40]]
  %s42 = scalar_lea.smem %s0, 21
  %s43 = sld [smem:[%s42]]
  %s44 = scalar_lea.smem %s0, 22
  %s45 = sld [smem:[%s44]]
  %s46 = scalar_lea.smem %s0, 23
  %s47 = sld [smem:[%s46]]
  %s48 = scalar_lea.smem %s0, 24
  %s49 = sld [smem:[%s48]]
  %s50 = scalar_lea.smem %s0, 25
  %s51 = sld [smem:[%s50]]
  %s52 = scalar_lea.smem %s0, 26
  %s53 = sld [smem:[%s52]]
  %s54 = scalar_lea.smem %s0, 27
  %s55 = sld [smem:[%s54]]
  %s56 = scalar_lea.smem %s0, 28
  %s57 = sld [smem:[%s56]]
  %s58 = scalar_lea.smem %s0, 29
  %s59 = sld [smem:[%s58]]
  %60 = xla_tuple %s57, %s59
  %s61 = sld [smem:[#allocation0]]
  $region189: #{decoder_forward.5} parent=0
    _
  %s63 = ssub.s32 1, %s61
  %s64 = scalar_select 0, %s63, %s61
  $region1: #{decoder_forward.5} parent=0
    #allocation6 [shape = 'u8[65536]{0}', space=vmem, size = 0x10000, scoped, tag = 'input window, operand 7, single buffered']
    #allocation7 [shape = 's32[2]{0}', space=sflag, size = 0x8, scoped, tag = 'scoped memory for decoder_forward.5']
    #allocation8 [shape = 's32[2]{0}', space=sflag, size = 0x8, scoped, tag = 'scoped memory for decoder_forward.5']
    #allocation9 [shape = 'u8[65536]{0}', space=vmem, size = 0x10000, scoped, tag = 'input window, operand 9, single buffered']
    #allocation10 [shape = 's32[1]{0}', space=sflag, size = 0x4, scoped, tag = 'scoped memory for decoder_forward.5']
    #allocation11 [shape = 'u8[262144]{0}', space=vmem, size = 0x40000, scoped, tag = 'input window, operand 13, single buffered']
    #allocation12 [shape = 'u8[262144]{0}', space=vmem, size = 0x40000, scoped, tag = 'input window, operand 16, single buffered']
    #allocation13 [shape = 's32[1]{0}', space=sflag, size = 0x4, scoped, tag = 'scoped memory for decoder_forward.5']
    #allocation14 [shape = 'u8[65536]{0}', space=vmem, size = 0x10000, scoped, tag = 'input window, operand 20, single buffered']
    #allocation15 [shape = 'u8[786432]{0}', space=vmem, size = 0xc0000, scoped, tag = 'input window, operand 23, single buffered']
    #allocation16 [shape = 's32[1]{0}', space=sflag, size = 0x4, scoped, tag = 'scoped memory for decoder_forward.5']
    #allocation17 [shape = 'u8[262144]{0}', space=vmem, size = 0x40000, scoped, tag = 'input window, operand 24, single buffered']
    #allocation18 [shape = 'u8[262144]{0}', space=vmem, size = 0x40000, scoped, tag = 'input window, operand 26, single buffered']
    #allocation19 [shape = 's32[1]{0}', space=sflag, size = 0x4, scoped, tag = 'scoped memory for decoder_forward.5']
    #allocation20 [shape = 'u8[8192]{0}', space=vmem, size = 0x2000, scoped, tag = 'output window, operand 0']
    #allocation21 [shape = 'u8[2048]{0}', space=vmem, size = 0x800, scoped, tag = 'output window, operand 1']
    #allocation22 [shape = 's32[2]{0}', space=sflag, size = 0x8, scoped, tag = 'scoped memory for decoder_forward.5']
    %65 = vsyncpa [#allocation7], 0
    %66 = vsyncpa [#allocation10], 0
    %67 = vsyncpa [#allocation13], 0
    %68 = vsyncpa [#allocation16], 0
    %69 = vsyncpa [#allocation19], 0
    %70 = vsyncpa [#allocation8], 0
    %s71 = scalar_lea.sflag [#allocation8], 1
    %72 = vsyncpa %s71, 0
    %73 = vsyncpa [#allocation22], 0
    %s74 = scalar_lea.sflag [#allocation22], 1
    %75 = vsyncpa %s74, 0
    loop: start=0, step=1, limit=7
    $region2: #{decoder_forward.5} parent=1 // loop_pre_header
      _
    $region3: #{decoder_forward.5} parent=1 // loop_header
      %s77 = sphi 0, %s81
      %p78 = scmp.ge.s32.totalorder %s77, 7
      %s85 = sphi 0, %s85
      %s87 = sphi 0, %s85
      %s88 = sphi 0, %s87
      %s102 = sphi 0, %s88
      %s108 = sphi 0, %s110
      %s111 = sphi 0, %s108
      %s112 = sphi 0, %s111
      %s128 = sphi 0, %s112
      %s132 = sphi 0, %s132
      %s134 = sphi 0, %s132
      %s135 = sphi 0, %s134
      %s149 = sphi 0, %s135
      %s153 = sphi 0, %s153
      %s155 = sphi 0, %s153
      %s156 = sphi 0, %s155
      %s170 = sphi 0, %s156
      %s174 = sphi 0, %s174
      %s176 = sphi 0, %s174
      %s177 = sphi 0, %s176
      %s191 = sphi 0, %s177
      %s195 = sphi 0, %s195
      %s197 = sphi 0, %s195
      %s198 = sphi 0, %s197
      %s212 = sphi 0, %s198
      %s216 = sphi 0, %s216
      %s218 = sphi 0, %s216
      %s219 = sphi 0, %s218
      %s233 = sphi 0, %s219
      %s237 = sphi 0, %s237
      %s239 = sphi 0, %s237
      %s240 = sphi 0, %s239
      %s254 = sphi 0, %s240
      %s258 = sphi 0, %s258
      %s260 = sphi 0, %s258
      %s261 = sphi 0, %s260
      %s275 = sphi 0, %s261
      %s279 = sphi 0, %s279
      %s281 = sphi 0, %s279
      %s282 = sphi 0, %s281
      %s296 = sphi 0, %s282
      %s300 = sphi 0, %s300
      %s302 = sphi 0, %s300
      %s303 = sphi 0, %s302
      %s317 = sphi 0, %s303
      %s321 = sphi 0, %s321
      %s323 = sphi 0, %s321
      %s324 = sphi 0, %s323
      %s338 = sphi 0, %s324
      %s342 = sphi 0, %s342
      %s344 = sphi 0, %s342
      %s345 = sphi 0, %s344
      %s359 = sphi 0, %s345
      %s363 = sphi 0, %s363
      %s365 = sphi 0, %s363
      %s366 = sphi 0, %s365
      %s380 = sphi 0, %s366
      %s384 = sphi 0, %s384
      %s386 = sphi 0, %s384
      %s387 = sphi 0, %s386
      %s401 = sphi 0, %s387
      %s405 = sphi 0, %s405
      %s407 = sphi 0, %s405
      %s408 = sphi 0, %s407
      %s422 = sphi 0, %s408
      %s426 = sphi 0, %s426
      %s428 = sphi 0, %s426
      %s429 = sphi 0, %s428
      %s443 = sphi 0, %s429
      %s447 = sphi 0, %s447
      %s449 = sphi 0, %s447
      %s450 = sphi 0, %s449
      %s464 = sphi 0, %s450
      %s468 = sphi 0, %s468
      %s470 = sphi 0, %s468
      %s471 = sphi 0, %s470
      %s485 = sphi 0, %s471
      %s489 = sphi 0, %s489
      %s491 = sphi 0, %s489
      %s492 = sphi 0, %s491
      %s506 = sphi 0, %s492
      %s510 = sphi 0, %s510
      %s512 = sphi 0, %s510
      %s513 = sphi 0, %s512
      %s527 = sphi 0, %s513
      %s531 = sphi 0, %s531
      %s533 = sphi 0, %s531
      %s534 = sphi 0, %s533
      %s548 = sphi 0, %s534
      %s552 = sphi 0, %s552
      %s554 = sphi 0, %s552
      %s555 = sphi 0, %s554
      %s569 = sphi 0, %s555
      %s573 = sphi 0, %s573
      %s575 = sphi 0, %s573
      %s576 = sphi 0, %s575
      %s590 = sphi 0, %s576
      %s594 = sphi 0, %s594
      %s596 = sphi 0, %s594
      %s597 = sphi 0, %s596
      %s611 = sphi 0, %s597
      %s615 = sphi 0, %s615
      %s617 = sphi 0, %s615
      %s618 = sphi 0, %s617
      %s632 = sphi 0, %s618
      %s636 = sphi 0, %s636
      %s638 = sphi 0, %s636
      %s639 = sphi 0, %s638
      %s653 = sphi 0, %s639
      %s657 = sphi 0, %s657
      %s659 = sphi 0, %s657
      %s660 = sphi 0, %s659
      %s674 = sphi 0, %s660
      %s680 = sphi 0, %s682
      %s683 = sphi 0, %s680
      %s684 = sphi 0, %s683
      %s700 = sphi 0, %s684
      %s706 = sphi 0, %s708
      %s709 = sphi 0, %s706
      %s710 = sphi 0, %s709
      %s726 = sphi 0, %s710
    $region4: #{decoder_forward.5} parent=1 // loop_header_branch
      %80 = sbr.rel (%p78) target = $region8
    $region5: #{decoder_forward.5} parent=1 // loop_body
      %s82 = ssub.s32 %s77, 1
      %s83 = ssub.s32 %s77, 2
      %s84 = sadd.s32 %s77, 1
      %s86 = sadd.s32 %s85, 1
      %p89 = scmp.eq.s32.totalorder %s77, 4
      %p90 = scmp.ne.s32.totalorder %s85, %s87
      %p91 = scmp.eq.s32.totalorder %s77, 0
      %p92 = por %p90, %p91
      %p93 = scmp.ne.s32.totalorder %s85, %s87
      %p94 = scmp.eq.s32.totalorder %s82, 4
      %p95 = por %p93, %p94
      %p96 = scmp.ne.s32.totalorder %s87, %s88
      %p97 = scmp.eq.s32.totalorder %s82, 0
      %p98 = por %p96, %p97
      %p99 = scmp.ne.s32.totalorder %s87, %s88
      %p100 = scmp.eq.s32.totalorder %s83, 4
      %p101 = por %p99, %p100
      %p103 = scmp.ne.s32.totalorder %s88, %s102
      %p104 = scmp.eq.s32.totalorder %s83, 0
      %p105 = por %p103, %p104
      %s106 = ssub.s32 %s77, %s84
      %p107 = scmp.eq.s32.totalorder %s106, 0
      %s109 = sadd.s32 %s108, 1
      %s110 = scalar_select %p107, %s108, %s109
      %p113 = pneg %p107
      %p114 = scmp.eq.s32.totalorder %s77, 4
      %p115 = por %p113, %p114
      %p116 = scmp.ne.s32.totalorder %s108, %s111
      %p117 = scmp.eq.s32.totalorder %s77, 0
      %p118 = por %p116, %p117
      %p119 = scmp.ne.s32.totalorder %s108, %s111
      %p120 = scmp.eq.s32.totalorder %s82, 4
      %p121 = por %p119, %p120
      %p122 = scmp.ne.s32.totalorder %s111, %s112
      %p123 = scmp.eq.s32.totalorder %s82, 0
      %p124 = por %p122, %p123
      %p125 = scmp.ne.s32.totalorder %s111, %s112
      %p126 = scmp.eq.s32.totalorder %s83, 4
      %p127 = por %p125, %p126
      %p129 = scmp.ne.s32.totalorder %s112, %s128
      %p130 = scmp.eq.s32.totalorder %s83, 0
      %p131 = por %p129, %p130
      %s133 = sadd.s32 %s132, 1
      %p136 = scmp.eq.s32.totalorder %s77, 4
      %p137 = scmp.ne.s32.totalorder %s132, %s134
      %p138 = scmp.eq.s32.totalorder %s77, 0
      %p139 = por %p137, %p138
      %p140 = scmp.ne.s32.totalorder %s132, %s134
      %p141 = scmp.eq.s32.totalorder %s82, 4
      %p142 = por %p140, %p141
      %p143 = scmp.ne.s32.totalorder %s134, %s135
      %p144 = scmp.eq.s32.totalorder %s82, 0
      %p145 = por %p143, %p144
      %p146 = scmp.ne.s32.totalorder %s134, %s135
      %p147 = scmp.eq.s32.totalorder %s83, 4
      %p148 = por %p146, %p147
      %p150 = scmp.ne.s32.totalorder %s135, %s149
      %p151 = scmp.eq.s32.totalorder %s83, 0
      %p152 = por %p150, %p151
      %s154 = sadd.s32 %s153, 1
      %p157 = scmp.eq.s32.totalorder %s77, 4
      %p158 = scmp.ne.s32.totalorder %s153, %s155
      %p159 = scmp.eq.s32.totalorder %s77, 0
      %p160 = por %p158, %p159
      %p161 = scmp.ne.s32.totalorder %s153, %s155
      %p162 = scmp.eq.s32.totalorder %s82, 4
      %p163 = por %p161, %p162
      %p164 = scmp.ne.s32.totalorder %s155, %s156
      %p165 = scmp.eq.s32.totalorder %s82, 0
      %p166 = por %p164, %p165
      %p167 = scmp.ne.s32.totalorder %s155, %s156
      %p168 = scmp.eq.s32.totalorder %s83, 4
      %p169 = por %p167, %p168
      %p171 = scmp.ne.s32.totalorder %s156, %s170
      %p172 = scmp.eq.s32.totalorder %s83, 0
      %p173 = por %p171, %p172
      %s175 = sadd.s32 %s174, 1
      %p178 = scmp.eq.s32.totalorder %s77, 4
      %p179 = scmp.ne.s32.totalorder %s174, %s176
      %p180 = scmp.eq.s32.totalorder %s77, 0
      %p181 = por %p179, %p180
      %p182 = scmp.ne.s32.totalorder %s174, %s176
      %p183 = scmp.eq.s32.totalorder %s82, 4
      %p184 = por %p182, %p183
      %p185 = scmp.ne.s32.totalorder %s176, %s177
      %p186 = scmp.eq.s32.totalorder %s82, 0
      %p187 = por %p185, %p186
      %p188 = scmp.ne.s32.totalorder %s176, %s177
      %p189 = scmp.eq.s32.totalorder %s83, 4
      %p190 = por %p188, %p189
      %p192 = scmp.ne.s32.totalorder %s177, %s191
      %p193 = scmp.eq.s32.totalorder %s83, 0
      %p194 = por %p192, %p193
      %s196 = sadd.s32 %s195, 1
      %p199 = scmp.eq.s32.totalorder %s77, 4
      %p200 = scmp.ne.s32.totalorder %s195, %s197
      %p201 = scmp.eq.s32.totalorder %s77, 0
      %p202 = por %p200, %p201
      %p203 = scmp.ne.s32.totalorder %s195, %s197
      %p204 = scmp.eq.s32.totalorder %s82, 4
      %p205 = por %p203, %p204
      %p206 = scmp.ne.s32.totalorder %s197, %s198
      %p207 = scmp.eq.s32.totalorder %s82, 0
      %p208 = por %p206, %p207
      %p209 = scmp.ne.s32.totalorder %s197, %s198
      %p210 = scmp.eq.s32.totalorder %s83, 4
      %p211 = por %p209, %p210
      %p213 = scmp.ne.s32.totalorder %s198, %s212
      %p214 = scmp.eq.s32.totalorder %s83, 0
      %p215 = por %p213, %p214
      %s217 = sadd.s32 %s216, 1
      %p220 = scmp.eq.s32.totalorder %s77, 4
      %p221 = scmp.ne.s32.totalorder %s216, %s218
      %p222 = scmp.eq.s32.totalorder %s77, 0
      %p223 = por %p221, %p222
      %p224 = scmp.ne.s32.totalorder %s216, %s218
      %p225 = scmp.eq.s32.totalorder %s82, 4
      %p226 = por %p224, %p225
      %p227 = scmp.ne.s32.totalorder %s218, %s219
      %p228 = scmp.eq.s32.totalorder %s82, 0
      %p229 = por %p227, %p228
      %p230 = scmp.ne.s32.totalorder %s218, %s219
      %p231 = scmp.eq.s32.totalorder %s83, 4
      %p232 = por %p230, %p231
      %p234 = scmp.ne.s32.totalorder %s219, %s233
      %p235 = scmp.eq.s32.totalorder %s83, 0
      %p236 = por %p234, %p235
      %s238 = sadd.s32 %s237, 1
      %p241 = scmp.eq.s32.totalorder %s77, 4
      %p242 = scmp.ne.s32.totalorder %s237, %s239
      %p243 = scmp.eq.s32.totalorder %s77, 0
      %p244 = por %p242, %p243
      %p245 = scmp.ne.s32.totalorder %s237, %s239
      %p246 = scmp.eq.s32.totalorder %s82, 4
      %p247 = por %p245, %p246
      %p248 = scmp.ne.s32.totalorder %s239, %s240
      %p249 = scmp.eq.s32.totalorder %s82, 0
      %p250 = por %p248, %p249
      %p251 = scmp.ne.s32.totalorder %s239, %s240
      %p252 = scmp.eq.s32.totalorder %s83, 4
      %p253 = por %p251, %p252
      %p255 = scmp.ne.s32.totalorder %s240, %s254
      %p256 = scmp.eq.s32.totalorder %s83, 0
      %p257 = por %p255, %p256
      %s259 = sadd.s32 %s258, 1
      %p262 = scmp.eq.s32.totalorder %s77, 4
      %p263 = scmp.ne.s32.totalorder %s258, %s260
      %p264 = scmp.eq.s32.totalorder %s77, 0
      %p265 = por %p263, %p264
      %p266 = scmp.ne.s32.totalorder %s258, %s260
      %p267 = scmp.eq.s32.totalorder %s82, 4
      %p268 = por %p266, %p267
      %p269 = scmp.ne.s32.totalorder %s260, %s261
      %p270 = scmp.eq.s32.totalorder %s82, 0
      %p271 = por %p269, %p270
      %p272 = scmp.ne.s32.totalorder %s260, %s261
      %p273 = scmp.eq.s32.totalorder %s83, 4
      %p274 = por %p272, %p273
      %p276 = scmp.ne.s32.totalorder %s261, %s275
      %p277 = scmp.eq.s32.totalorder %s83, 0
      %p278 = por %p276, %p277
      %s280 = sadd.s32 %s279, 1
      %p283 = scmp.eq.s32.totalorder %s77, 4
      %p284 = scmp.ne.s32.totalorder %s279, %s281
      %p285 = scmp.eq.s32.totalorder %s77, 0
      %p286 = por %p284, %p285
      %p287 = scmp.ne.s32.totalorder %s279, %s281
      %p288 = scmp.eq.s32.totalorder %s82, 4
      %p289 = por %p287, %p288
      %p290 = scmp.ne.s32.totalorder %s281, %s282
      %p291 = scmp.eq.s32.totalorder %s82, 0
      %p292 = por %p290, %p291
      %p293 = scmp.ne.s32.totalorder %s281, %s282
      %p294 = scmp.eq.s32.totalorder %s83, 4
      %p295 = por %p293, %p294
      %p297 = scmp.ne.s32.totalorder %s282, %s296
      %p298 = scmp.eq.s32.totalorder %s83, 0
      %p299 = por %p297, %p298
      %s301 = sadd.s32 %s300, 1
      %p304 = scmp.eq.s32.totalorder %s77, 4
      %p305 = scmp.ne.s32.totalorder %s300, %s302
      %p306 = scmp.eq.s32.totalorder %s77, 0
      %p307 = por %p305, %p306
      %p308 = scmp.ne.s32.totalorder %s300, %s302
      %p309 = scmp.eq.s32.totalorder %s82, 4
      %p310 = por %p308, %p309
      %p311 = scmp.ne.s32.totalorder %s302, %s303
      %p312 = scmp.eq.s32.totalorder %s82, 0
      %p313 = por %p311, %p312
      %p314 = scmp.ne.s32.totalorder %s302, %s303
      %p315 = scmp.eq.s32.totalorder %s83, 4
      %p316 = por %p314, %p315
      %p318 = scmp.ne.s32.totalorder %s303, %s317
      %p319 = scmp.eq.s32.totalorder %s83, 0
      %p320 = por %p318, %p319
      %s322 = sadd.s32 %s321, 1
      %p325 = scmp.eq.s32.totalorder %s77, 4
      %p326 = scmp.ne.s32.totalorder %s321, %s323
      %p327 = scmp.eq.s32.totalorder %s77, 0
      %p328 = por %p326, %p327
      %p329 = scmp.ne.s32.totalorder %s321, %s323
      %p330 = scmp.eq.s32.totalorder %s82, 4
      %p331 = por %p329, %p330
      %p332 = scmp.ne.s32.totalorder %s323, %s324
      %p333 = scmp.eq.s32.totalorder %s82, 0
      %p334 = por %p332, %p333
      %p335 = scmp.ne.s32.totalorder %s323, %s324
      %p336 = scmp.eq.s32.totalorder %s83, 4
      %p337 = por %p335, %p336
      %p339 = scmp.ne.s32.totalorder %s324, %s338
      %p340 = scmp.eq.s32.totalorder %s83, 0
      %p341 = por %p339, %p340
      %s343 = sadd.s32 %s342, 1
      %p346 = scmp.eq.s32.totalorder %s77, 4
      %p347 = scmp.ne.s32.totalorder %s342, %s344
      %p348 = scmp.eq.s32.totalorder %s77, 0
      %p349 = por %p347, %p348
      %p350 = scmp.ne.s32.totalorder %s342, %s344
      %p351 = scmp.eq.s32.totalorder %s82, 4
      %p352 = por %p350, %p351
      %p353 = scmp.ne.s32.totalorder %s344, %s345
      %p354 = scmp.eq.s32.totalorder %s82, 0
      %p355 = por %p353, %p354
      %p356 = scmp.ne.s32.totalorder %s344, %s345
      %p357 = scmp.eq.s32.totalorder %s83, 4
      %p358 = por %p356, %p357
      %p360 = scmp.ne.s32.totalorder %s345, %s359
      %p361 = scmp.eq.s32.totalorder %s83, 0
      %p362 = por %p360, %p361
      %s364 = sadd.s32 %s363, 1
      %p367 = scmp.eq.s32.totalorder %s77, 4
      %p368 = scmp.ne.s32.totalorder %s363, %s365
      %p369 = scmp.eq.s32.totalorder %s77, 0
      %p370 = por %p368, %p369
      %p371 = scmp.ne.s32.totalorder %s363, %s365
      %p372 = scmp.eq.s32.totalorder %s82, 4
      %p373 = por %p371, %p372
      %p374 = scmp.ne.s32.totalorder %s365, %s366
      %p375 = scmp.eq.s32.totalorder %s82, 0
      %p376 = por %p374, %p375
      %p377 = scmp.ne.s32.totalorder %s365, %s366
      %p378 = scmp.eq.s32.totalorder %s83, 4
      %p379 = por %p377, %p378
      %p381 = scmp.ne.s32.totalorder %s366, %s380
      %p382 = scmp.eq.s32.totalorder %s83, 0
      %p383 = por %p381, %p382
      %s385 = sadd.s32 %s384, 1
      %p388 = scmp.eq.s32.totalorder %s77, 4
      %p389 = scmp.ne.s32.totalorder %s384, %s386
      %p390 = scmp.eq.s32.totalorder %s77, 0
      %p391 = por %p389, %p390
      %p392 = scmp.ne.s32.totalorder %s384, %s386
      %p393 = scmp.eq.s32.totalorder %s82, 4
      %p394 = por %p392, %p393
      %p395 = scmp.ne.s32.totalorder %s386, %s387
      %p396 = scmp.eq.s32.totalorder %s82, 0
      %p397 = por %p395, %p396
      %p398 = scmp.ne.s32.totalorder %s386, %s387
      %p399 = scmp.eq.s32.totalorder %s83, 4
      %p400 = por %p398, %p399
      %p402 = scmp.ne.s32.totalorder %s387, %s401
      %p403 = scmp.eq.s32.totalorder %s83, 0
      %p404 = por %p402, %p403
      %s406 = sadd.s32 %s405, 1
      %p409 = scmp.eq.s32.totalorder %s77, 4
      %p410 = scmp.ne.s32.totalorder %s405, %s407
      %p411 = scmp.eq.s32.totalorder %s77, 0
      %p412 = por %p410, %p411
      %p413 = scmp.ne.s32.totalorder %s405, %s407
      %p414 = scmp.eq.s32.totalorder %s82, 4
      %p415 = por %p413, %p414
      %p416 = scmp.ne.s32.totalorder %s407, %s408
      %p417 = scmp.eq.s32.totalorder %s82, 0
      %p418 = por %p416, %p417
      %p419 = scmp.ne.s32.totalorder %s407, %s408
      %p420 = scmp.eq.s32.totalorder %s83, 4
      %p421 = por %p419, %p420
      %p423 = scmp.ne.s32.totalorder %s408, %s422
      %p424 = scmp.eq.s32.totalorder %s83, 0
      %p425 = por %p423, %p424
      %s427 = sadd.s32 %s426, 1
      %p430 = scmp.eq.s32.totalorder %s77, 4
      %p431 = scmp.ne.s32.totalorder %s426, %s428
      %p432 = scmp.eq.s32.totalorder %s77, 0
      %p433 = por %p431, %p432
      %p434 = scmp.ne.s32.totalorder %s426, %s428
      %p435 = scmp.eq.s32.totalorder %s82, 4
      %p436 = por %p434, %p435
      %p437 = scmp.ne.s32.totalorder %s428, %s429
      %p438 = scmp.eq.s32.totalorder %s82, 0
      %p439 = por %p437, %p438
      %p440 = scmp.ne.s32.totalorder %s428, %s429
      %p441 = scmp.eq.s32.totalorder %s83, 4
      %p442 = por %p440, %p441
      %p444 = scmp.ne.s32.totalorder %s429, %s443
      %p445 = scmp.eq.s32.totalorder %s83, 0
      %p446 = por %p444, %p445
      %s448 = sadd.s32 %s447, 1
      %p451 = scmp.eq.s32.totalorder %s77, 4
      %p452 = scmp.ne.s32.totalorder %s447, %s449
      %p453 = scmp.eq.s32.totalorder %s77, 0
      %p454 = por %p452, %p453
      %p455 = scmp.ne.s32.totalorder %s447, %s449
      %p456 = scmp.eq.s32.totalorder %s82, 4
      %p457 = por %p455, %p456
      %p458 = scmp.ne.s32.totalorder %s449, %s450
      %p459 = scmp.eq.s32.totalorder %s82, 0
      %p460 = por %p458, %p459
      %p461 = scmp.ne.s32.totalorder %s449, %s450
      %p462 = scmp.eq.s32.totalorder %s83, 4
      %p463 = por %p461, %p462
      %p465 = scmp.ne.s32.totalorder %s450, %s464
      %p466 = scmp.eq.s32.totalorder %s83, 0
      %p467 = por %p465, %p466
      %s469 = sadd.s32 %s468, 1
      %p472 = scmp.eq.s32.totalorder %s77, 4
      %p473 = scmp.ne.s32.totalorder %s468, %s470
      %p474 = scmp.eq.s32.totalorder %s77, 0
      %p475 = por %p473, %p474
      %p476 = scmp.ne.s32.totalorder %s468, %s470
      %p477 = scmp.eq.s32.totalorder %s82, 4
      %p478 = por %p476, %p477
      %p479 = scmp.ne.s32.totalorder %s470, %s471
      %p480 = scmp.eq.s32.totalorder %s82, 0
      %p481 = por %p479, %p480
      %p482 = scmp.ne.s32.totalorder %s470, %s471
      %p483 = scmp.eq.s32.totalorder %s83, 4
      %p484 = por %p482, %p483
      %p486 = scmp.ne.s32.totalorder %s471, %s485
      %p487 = scmp.eq.s32.totalorder %s83, 0
      %p488 = por %p486, %p487
      %s490 = sadd.s32 %s489, 1
      %p493 = scmp.eq.s32.totalorder %s77, 4
      %p494 = scmp.ne.s32.totalorder %s489, %s491
      %p495 = scmp.eq.s32.totalorder %s77, 0
      %p496 = por %p494, %p495
      %p497 = scmp.ne.s32.totalorder %s489, %s491
      %p498 = scmp.eq.s32.totalorder %s82, 4
      %p499 = por %p497, %p498
      %p500 = scmp.ne.s32.totalorder %s491, %s492
      %p501 = scmp.eq.s32.totalorder %s82, 0
      %p502 = por %p500, %p501
      %p503 = scmp.ne.s32.totalorder %s491, %s492
      %p504 = scmp.eq.s32.totalorder %s83, 4
      %p505 = por %p503, %p504
      %p507 = scmp.ne.s32.totalorder %s492, %s506
      %p508 = scmp.eq.s32.totalorder %s83, 0
      %p509 = por %p507, %p508
      %s511 = sadd.s32 %s510, 1
      %p514 = scmp.eq.s32.totalorder %s77, 4
      %p515 = scmp.ne.s32.totalorder %s510, %s512
      %p516 = scmp.eq.s32.totalorder %s77, 0
      %p517 = por %p515, %p516
      %p518 = scmp.ne.s32.totalorder %s510, %s512
      %p519 = scmp.eq.s32.totalorder %s82, 4
      %p520 = por %p518, %p519
      %p521 = scmp.ne.s32.totalorder %s512, %s513
      %p522 = scmp.eq.s32.totalorder %s82, 0
      %p523 = por %p521, %p522
      %p524 = scmp.ne.s32.totalorder %s512, %s513
      %p525 = scmp.eq.s32.totalorder %s83, 4
      %p526 = por %p524, %p525
      %p528 = scmp.ne.s32.totalorder %s513, %s527
      %p529 = scmp.eq.s32.totalorder %s83, 0
      %p530 = por %p528, %p529
      %s532 = sadd.s32 %s531, 1
      %p535 = scmp.eq.s32.totalorder %s77, 4
      %p536 = scmp.ne.s32.totalorder %s531, %s533
      %p537 = scmp.eq.s32.totalorder %s77, 0
      %p538 = por %p536, %p537
      %p539 = scmp.ne.s32.totalorder %s531, %s533
      %p540 = scmp.eq.s32.totalorder %s82, 4
      %p541 = por %p539, %p540
      %p542 = scmp.ne.s32.totalorder %s533, %s534
      %p543 = scmp.eq.s32.totalorder %s82, 0
      %p544 = por %p542, %p543
      %p545 = scmp.ne.s32.totalorder %s533, %s534
      %p546 = scmp.eq.s32.totalorder %s83, 4
      %p547 = por %p545, %p546
      %p549 = scmp.ne.s32.totalorder %s534, %s548
      %p550 = scmp.eq.s32.totalorder %s83, 0
      %p551 = por %p549, %p550
      %s553 = sadd.s32 %s552, 1
      %p556 = scmp.eq.s32.totalorder %s77, 4
      %p557 = scmp.ne.s32.totalorder %s552, %s554
      %p558 = scmp.eq.s32.totalorder %s77, 0
      %p559 = por %p557, %p558
      %p560 = scmp.ne.s32.totalorder %s552, %s554
      %p561 = scmp.eq.s32.totalorder %s82, 4
      %p562 = por %p560, %p561
      %p563 = scmp.ne.s32.totalorder %s554, %s555
      %p564 = scmp.eq.s32.totalorder %s82, 0
      %p565 = por %p563, %p564
      %p566 = scmp.ne.s32.totalorder %s554, %s555
      %p567 = scmp.eq.s32.totalorder %s83, 4
      %p568 = por %p566, %p567
      %p570 = scmp.ne.s32.totalorder %s555, %s569
      %p571 = scmp.eq.s32.totalorder %s83, 0
      %p572 = por %p570, %p571
      %s574 = sadd.s32 %s573, 1
      %p577 = scmp.eq.s32.totalorder %s77, 4
      %p578 = scmp.ne.s32.totalorder %s573, %s575
      %p579 = scmp.eq.s32.totalorder %s77, 0
      %p580 = por %p578, %p579
      %p581 = scmp.ne.s32.totalorder %s573, %s575
      %p582 = scmp.eq.s32.totalorder %s82, 4
      %p583 = por %p581, %p582
      %p584 = scmp.ne.s32.totalorder %s575, %s576
      %p585 = scmp.eq.s32.totalorder %s82, 0
      %p586 = por %p584, %p585
      %p587 = scmp.ne.s32.totalorder %s575, %s576
      %p588 = scmp.eq.s32.totalorder %s83, 4
      %p589 = por %p587, %p588
      %p591 = scmp.ne.s32.totalorder %s576, %s590
      %p592 = scmp.eq.s32.totalorder %s83, 0
      %p593 = por %p591, %p592
      %s595 = sadd.s32 %s594, 1
      %p598 = scmp.eq.s32.totalorder %s77, 4
      %p599 = scmp.ne.s32.totalorder %s594, %s596
      %p600 = scmp.eq.s32.totalorder %s77, 0
      %p601 = por %p599, %p600
      %p602 = scmp.ne.s32.totalorder %s594, %s596
      %p603 = scmp.eq.s32.totalorder %s82, 4
      %p604 = por %p602, %p603
      %p605 = scmp.ne.s32.totalorder %s596, %s597
      %p606 = scmp.eq.s32.totalorder %s82, 0
      %p607 = por %p605, %p606
      %p608 = scmp.ne.s32.totalorder %s596, %s597
      %p609 = scmp.eq.s32.totalorder %s83, 4
      %p610 = por %p608, %p609
      %p612 = scmp.ne.s32.totalorder %s597, %s611
      %p613 = scmp.eq.s32.totalorder %s83, 0
      %p614 = por %p612, %p613
      %s616 = sadd.s32 %s615, 1
      %p619 = scmp.eq.s32.totalorder %s77, 4
      %p620 = scmp.ne.s32.totalorder %s615, %s617
      %p621 = scmp.eq.s32.totalorder %s77, 0
      %p622 = por %p620, %p621
      %p623 = scmp.ne.s32.totalorder %s615, %s617
      %p624 = scmp.eq.s32.totalorder %s82, 4
      %p625 = por %p623, %p624
      %p626 = scmp.ne.s32.totalorder %s617, %s618
      %p627 = scmp.eq.s32.totalorder %s82, 0
      %p628 = por %p626, %p627
      %p629 = scmp.ne.s32.totalorder %s617, %s618
      %p630 = scmp.eq.s32.totalorder %s83, 4
      %p631 = por %p629, %p630
      %p633 = scmp.ne.s32.totalorder %s618, %s632
      %p634 = scmp.eq.s32.totalorder %s83, 0
      %p635 = por %p633, %p634
      %s637 = sadd.s32 %s636, 1
      %p640 = scmp.eq.s32.totalorder %s77, 4
      %p641 = scmp.ne.s32.totalorder %s636, %s638
      %p642 = scmp.eq.s32.totalorder %s77, 0
      %p643 = por %p641, %p642
      %p644 = scmp.ne.s32.totalorder %s636, %s638
      %p645 = scmp.eq.s32.totalorder %s82, 4
      %p646 = por %p644, %p645
      %p647 = scmp.ne.s32.totalorder %s638, %s639
      %p648 = scmp.eq.s32.totalorder %s82, 0
      %p649 = por %p647, %p648
      %p650 = scmp.ne.s32.totalorder %s638, %s639
      %p651 = scmp.eq.s32.totalorder %s83, 4
      %p652 = por %p650, %p651
      %p654 = scmp.ne.s32.totalorder %s639, %s653
      %p655 = scmp.eq.s32.totalorder %s83, 0
      %p656 = por %p654, %p655
      %s658 = sadd.s32 %s657, 1
      %p661 = scmp.eq.s32.totalorder %s77, 4
      %p662 = scmp.ne.s32.totalorder %s657, %s659
      %p663 = scmp.eq.s32.totalorder %s77, 0
      %p664 = por %p662, %p663
      %p665 = scmp.ne.s32.totalorder %s657, %s659
      %p666 = scmp.eq.s32.totalorder %s82, 4
      %p667 = por %p665, %p666
      %p668 = scmp.ne.s32.totalorder %s659, %s660
      %p669 = scmp.eq.s32.totalorder %s82, 0
      %p670 = por %p668, %p669
      %p671 = scmp.ne.s32.totalorder %s659, %s660
      %p672 = scmp.eq.s32.totalorder %s83, 4
      %p673 = por %p671, %p672
      %p675 = scmp.ne.s32.totalorder %s660, %s674
      %p676 = scmp.eq.s32.totalorder %s83, 0
      %p677 = por %p675, %p676
      %s678 = ssub.s32 %s77, %s84
      %p679 = scmp.eq.s32.totalorder %s678, 0
      %s681 = sadd.s32 %s680, 1
      %s682 = scalar_select %p679, %s680, %s681
      %p685 = pneg %p679
      %p686 = scmp.eq.s32.totalorder %s77, 4
      %p687 = por %p685, %p686
      %p688 = scmp.ne.s32.totalorder %s680, %s683
      %p689 = scmp.eq.s32.totalorder %s77, 0
      %p690 = por %p688, %p689
      %p691 = scmp.ne.s32.totalorder %s680, %s683
      %p692 = scmp.eq.s32.totalorder %s82, 4
      %p693 = por %p691, %p692
      %p694 = scmp.ne.s32.totalorder %s683, %s684
      %p695 = scmp.eq.s32.totalorder %s82, 0
      %p696 = por %p694, %p695
      %p697 = scmp.ne.s32.totalorder %s683, %s684
      %p698 = scmp.eq.s32.totalorder %s83, 4
      %p699 = por %p697, %p698
      %p701 = scmp.ne.s32.totalorder %s684, %s700
      %p702 = scmp.eq.s32.totalorder %s83, 0
      %p703 = por %p701, %p702
      %s704 = ssub.s32 %s77, %s84
      %p705 = scmp.eq.s32.totalorder %s704, 0
      %s707 = sadd.s32 %s706, 1
      %s708 = scalar_select %p705, %s706, %s707
      %p711 = pneg %p705
      %p712 = scmp.eq.s32.totalorder %s77, 4
      %p713 = por %p711, %p712
      %p714 = scmp.ne.s32.totalorder %s706, %s709
      %p715 = scmp.eq.s32.totalorder %s77, 0
      %p716 = por %p714, %p715
      %p717 = scmp.ne.s32.totalorder %s706, %s709
      %p718 = scmp.eq.s32.totalorder %s82, 4
      %p719 = por %p717, %p718
      %p720 = scmp.ne.s32.totalorder %s709, %s710
      %p721 = scmp.eq.s32.totalorder %s82, 0
      %p722 = por %p720, %p721
      %p723 = scmp.ne.s32.totalorder %s709, %s710
      %p724 = scmp.eq.s32.totalorder %s83, 4
      %p725 = por %p723, %p724
      %p727 = scmp.ne.s32.totalorder %s710, %s726
      %p728 = scmp.eq.s32.totalorder %s83, 0
      %p729 = por %p727, %p728
      %p730 = scmp.le.s32.totalorder 1, %s77
      %p731 = scmp.lt.s32.totalorder %s77, 6
      %p732 = pnand %p730, %p731
      %p733 = pneg %p732
      // Predicated region
      $region9: #{decoder_forward.5} parent=5 // pred_check
        _
      $region10: #{decoder_forward.5} parent=5 // pred_check_branch
        %735 = sbr.rel (%p732) target = $region12
      $region11: #{decoder_forward.5} parent=5 // pred_region
        %s736 = ssub.s32 %s77, 1
        // Predicated region
        $region13: #{decoder_forward.5} parent=11 // pred_check
          %p737 = pneg %p98
        $region14: #{decoder_forward.5} parent=11 // pred_check_branch
          %739 = sbr.rel (%p737) target = $region16
        $region15: #{decoder_forward.5} parent=11 // pred_region
          _
        $region16: #{decoder_forward.5} parent=11 // pred_fallthru
          _
        // Predicated region
        $region17: #{decoder_forward.5} parent=11 // pred_check
          %p740 = pneg %p145
        $region18: #{decoder_forward.5} parent=11 // pred_check_branch
          %742 = sbr.rel (%p740) target = $region20
        $region19: #{decoder_forward.5} parent=11 // pred_region
          _
        $region20: #{decoder_forward.5} parent=11 // pred_fallthru
          _
        // Predicated region
        $region21: #{decoder_forward.5} parent=11 // pred_check
          %p743 = pneg %p166
        $region22: #{decoder_forward.5} parent=11 // pred_check_branch
          %745 = sbr.rel (%p743) target = $region24
        $region23: #{decoder_forward.5} parent=11 // pred_region
          _
        $region24: #{decoder_forward.5} parent=11 // pred_fallthru
          _
        // Predicated region
        $region25: #{decoder_forward.5} parent=11 // pred_check
          %p746 = pneg %p187
        $region26: #{decoder_forward.5} parent=11 // pred_check_branch
          %748 = sbr.rel (%p746) target = $region28
        $region27: #{decoder_forward.5} parent=11 // pred_region
          _
        $region28: #{decoder_forward.5} parent=11 // pred_fallthru
          _
        // Predicated region
        $region29: #{decoder_forward.5} parent=11 // pred_check
          %p749 = pneg %p208
        $region30: #{decoder_forward.5} parent=11 // pred_check_branch
          %751 = sbr.rel (%p749) target = $region32
        $region31: #{decoder_forward.5} parent=11 // pred_region
          _
        $region32: #{decoder_forward.5} parent=11 // pred_fallthru
          _
        // Predicated region
        $region33: #{decoder_forward.5} parent=11 // pred_check
          %p752 = pneg %p229
        $region34: #{decoder_forward.5} parent=11 // pred_check_branch
          %754 = sbr.rel (%p752) target = $region36
        $region35: #{decoder_forward.5} parent=11 // pred_region
          _
        $region36: #{decoder_forward.5} parent=11 // pred_fallthru
          _
        // Predicated region
        $region37: #{decoder_forward.5} parent=11 // pred_check
          %p755 = pneg %p250
        $region38: #{decoder_forward.5} parent=11 // pred_check_branch
          %757 = sbr.rel (%p755) target = $region40
        $region39: #{decoder_forward.5} parent=11 // pred_region
          %s759 = ssub.s32 2048, 2048
          %760 = vsyncadd [#allocation7], %s759
          %s761 = sshll.u32 [#allocation6], 4
          %s762 = int_to_ptr.vmem [resolvable:$true] %s761
          %767 = dma.hbm_to_vmem [thread:$0]  %s15, 2048, %s762, [#allocation7], 128, 128, 8
        $region40: #{decoder_forward.5} parent=11 // pred_fallthru
          _
        // Predicated region
        $region41: #{decoder_forward.5} parent=11 // pred_check
          %p768 = pneg %p271
        $region42: #{decoder_forward.5} parent=11 // pred_check_branch
          %770 = sbr.rel (%p768) target = $region44
        $region43: #{decoder_forward.5} parent=11 // pred_region
          _
        $region44: #{decoder_forward.5} parent=11 // pred_fallthru
          _
        // Predicated region
        $region45: #{decoder_forward.5} parent=11 // pred_check
          %p771 = pneg %p292
        $region46: #{decoder_forward.5} parent=11 // pred_check_branch
          %773 = sbr.rel (%p771) target = $region48
        $region47: #{decoder_forward.5} parent=11 // pred_region
          %s775 = ssub.s32 2048, 2048
          %776 = vsyncadd [#allocation10], %s775
          %s777 = sshll.u32 [#allocation9], 4
          %s778 = int_to_ptr.vmem [resolvable:$true] %s777
          %783 = dma.hbm_to_vmem [thread:$0]  %s19, 2048, %s778, [#allocation10], 128, 128, 8
        $region48: #{decoder_forward.5} parent=11 // pred_fallthru
          _
        // Predicated region
        $region49: #{decoder_forward.5} parent=11 // pred_check
          %p784 = pneg %p313
        $region50: #{decoder_forward.5} parent=11 // pred_check_branch
          %786 = sbr.rel (%p784) target = $region52
        $region51: #{decoder_forward.5} parent=11 // pred_region
          _
        $region52: #{decoder_forward.5} parent=11 // pred_fallthru
          _
        // Predicated region
        $region53: #{decoder_forward.5} parent=11 // pred_check
          %p787 = pneg %p334
        $region54: #{decoder_forward.5} parent=11 // pred_check_branch
          %789 = sbr.rel (%p787) target = $region56
        $region55: #{decoder_forward.5} parent=11 // pred_region
          _
        $region56: #{decoder_forward.5} parent=11 // pred_fallthru
          _
        // Predicated region
        $region57: #{decoder_forward.5} parent=11 // pred_check
          %p790 = pneg %p355
        $region58: #{decoder_forward.5} parent=11 // pred_check_branch
          %792 = sbr.rel (%p790) target = $region60
        $region59: #{decoder_forward.5} parent=11 // pred_region
          _
        $region60: #{decoder_forward.5} parent=11 // pred_fallthru
          _
        // Predicated region
        $region61: #{decoder_forward.5} parent=11 // pred_check
          %p793 = pneg %p376
        $region62: #{decoder_forward.5} parent=11 // pred_check_branch
          %795 = sbr.rel (%p793) target = $region64
        $region63: #{decoder_forward.5} parent=11 // pred_region
          %s797 = ssub.s32 8192, 8192
          %798 = vsyncadd [#allocation10], %s797
          %s799 = sshll.u32 [#allocation11], 4
          %s800 = int_to_ptr.vmem [resolvable:$true] %s799
          %805 = dma.hbm_to_vmem [thread:$0]  %s27, 8192, %s800, [#allocation10], 256, 256, 16
        $region64: #{decoder_forward.5} parent=11 // pred_fallthru
          _
        // Predicated region
        $region65: #{decoder_forward.5} parent=11 // pred_check
          %p806 = pneg %p397
        $region66: #{decoder_forward.5} parent=11 // pred_check_branch
          %808 = sbr.rel (%p806) target = $region68
        $region67: #{decoder_forward.5} parent=11 // pred_region
          _
        $region68: #{decoder_forward.5} parent=11 // pred_fallthru
          _
        // Predicated region
        $region69: #{decoder_forward.5} parent=11 // pred_check
          %p809 = pneg %p418
        $region70: #{decoder_forward.5} parent=11 // pred_check_branch
          %811 = sbr.rel (%p809) target = $region72
        $region71: #{decoder_forward.5} parent=11 // pred_region
          _
        $region72: #{decoder_forward.5} parent=11 // pred_fallthru
          _
        // Predicated region
        $region73: #{decoder_forward.5} parent=11 // pred_check
          %p812 = pneg %p439
        $region74: #{decoder_forward.5} parent=11 // pred_check_branch
          %814 = sbr.rel (%p812) target = $region76
        $region75: #{decoder_forward.5} parent=11 // pred_region
          %s816 = ssub.s32 8192, 8192
          %817 = vsyncadd [#allocation13], %s816
          %s818 = sshll.u32 [#allocation12], 4
          %s819 = int_to_ptr.vmem [resolvable:$true] %s818
          %824 = dma.hbm_to_vmem [thread:$0]  %s33, 8192, %s819, [#allocation13], 512, 512, 32
        $region76: #{decoder_forward.5} parent=11 // pred_fallthru
          _
        // Predicated region
        $region77: #{decoder_forward.5} parent=11 // pred_check
          %p825 = pneg %p460
        $region78: #{decoder_forward.5} parent=11 // pred_check_branch
          %827 = sbr.rel (%p825) target = $region80
        $region79: #{decoder_forward.5} parent=11 // pred_region
          _
        $region80: #{decoder_forward.5} parent=11 // pred_fallthru
          _
        // Predicated region
        $region81: #{decoder_forward.5} parent=11 // pred_check
          %p828 = pneg %p481
        $region82: #{decoder_forward.5} parent=11 // pred_check_branch
          %830 = sbr.rel (%p828) target = $region84
        $region83: #{decoder_forward.5} parent=11 // pred_region
          _
        $region84: #{decoder_forward.5} parent=11 // pred_fallthru
          _
        // Predicated region
        $region85: #{decoder_forward.5} parent=11 // pred_check
          %p831 = pneg %p502
        $region86: #{decoder_forward.5} parent=11 // pred_check_branch
          %833 = sbr.rel (%p831) target = $region88
        $region87: #{decoder_forward.5} parent=11 // pred_region
          _
        $region88: #{decoder_forward.5} parent=11 // pred_fallthru
          _
        // Predicated region
        $region89: #{decoder_forward.5} parent=11 // pred_check
          %p834 = pneg %p523
        $region90: #{decoder_forward.5} parent=11 // pred_check_branch
          %836 = sbr.rel (%p834) target = $region92
        $region91: #{decoder_forward.5} parent=11 // pred_region
          %s838 = ssub.s32 2048, 2048
          %839 = vsyncadd [#allocation13], %s838
          %s840 = sshll.u32 [#allocation14], 4
          %s841 = int_to_ptr.vmem [resolvable:$true] %s840
          %846 = dma.hbm_to_vmem [thread:$0]  %s41, 2048, %s841, [#allocation13], 128, 128, 8
        $region92: #{decoder_forward.5} parent=11 // pred_fallthru
          _
        // Predicated region
        $region93: #{decoder_forward.5} parent=11 // pred_check
          %p847 = pneg %p544
        $region94: #{decoder_forward.5} parent=11 // pred_check_branch
          %849 = sbr.rel (%p847) target = $region96
        $region95: #{decoder_forward.5} parent=11 // pred_region
          _
        $region96: #{decoder_forward.5} parent=11 // pred_fallthru
          _
        // Predicated region
        $region97: #{decoder_forward.5} parent=11 // pred_check
          %p850 = pneg %p565
        $region98: #{decoder_forward.5} parent=11 // pred_check_branch
          %852 = sbr.rel (%p850) target = $region100
        $region99: #{decoder_forward.5} parent=11 // pred_region
          _
        $region100: #{decoder_forward.5} parent=11 // pred_fallthru
          _
        // Predicated region
        $region101: #{decoder_forward.5} parent=11 // pred_check
          %p853 = pneg %p586
        $region102: #{decoder_forward.5} parent=11 // pred_check_branch
          %855 = sbr.rel (%p853) target = $region104
        $region103: #{decoder_forward.5} parent=11 // pred_region
          %s857 = ssub.s32 24576, 24576
          %858 = vsyncadd [#allocation16], %s857
          %s859 = sshll.u32 [#allocation15], 4
          %s860 = int_to_ptr.vmem [resolvable:$true] %s859
          %865 = dma.hbm_to_vmem [thread:$0]  %s47, 24576, %s860, [#allocation16], 512, 512, 32
        $region104: #{decoder_forward.5} parent=11 // pred_fallthru
          _
        // Predicated region
        $region105: #{decoder_forward.5} parent=11 // pred_check
          %p866 = pneg %p607
        $region106: #{decoder_forward.5} parent=11 // pred_check_branch
          %868 = sbr.rel (%p866) target = $region108
        $region107: #{decoder_forward.5} parent=11 // pred_region
          %s870 = ssub.s32 8192, 8192
          %871 = vsyncadd [#allocation16], %s870
          %s872 = sshll.u32 [#allocation17], 4
          %s873 = int_to_ptr.vmem [resolvable:$true] %s872
          %878 = dma.hbm_to_vmem [thread:$0]  %s49, 8192, %s873, [#allocation16], 512, 512, 32
        $region108: #{decoder_forward.5} parent=11 // pred_fallthru
          _
        // Predicated region
        $region109: #{decoder_forward.5} parent=11 // pred_check
          %p879 = pneg %p628
        $region110: #{decoder_forward.5} parent=11 // pred_check_branch
          %881 = sbr.rel (%p879) target = $region112
        $region111: #{decoder_forward.5} parent=11 // pred_region
          _
        $region112: #{decoder_forward.5} parent=11 // pred_fallthru
          _
        // Predicated region
        $region113: #{decoder_forward.5} parent=11 // pred_check
          %p882 = pneg %p649
        $region114: #{decoder_forward.5} parent=11 // pred_check_branch
          %884 = sbr.rel (%p882) target = $region116
        $region115: #{decoder_forward.5} parent=11 // pred_region
          %s886 = ssub.s32 8192, 8192
          %887 = vsyncadd [#allocation19], %s886
          %s888 = sshll.u32 [#allocation18], 4
          %s889 = int_to_ptr.vmem [resolvable:$true] %s888
          %894 = dma.hbm_to_vmem [thread:$0]  %s53, 8192, %s889, [#allocation19], 512, 512, 32
        $region116: #{decoder_forward.5} parent=11 // pred_fallthru
          _
        // Predicated region
        $region117: #{decoder_forward.5} parent=11 // pred_check
          %p895 = pneg %p670
        $region118: #{decoder_forward.5} parent=11 // pred_check_branch
          %897 = sbr.rel (%p895) target = $region120
        $region119: #{decoder_forward.5} parent=11 // pred_region
          _
        $region120: #{decoder_forward.5} parent=11 // pred_fallthru
          _
      $region12: #{decoder_forward.5} parent=5 // pred_fallthru
        _
      %p898 = scmp.lt.s32.totalorder %s77, 5
      // Predicated region
      $region121: #{decoder_forward.5} parent=5 // pred_check
        %p899 = pneg %p898
      $region122: #{decoder_forward.5} parent=5 // pred_check_branch
        %901 = sbr.rel (%p899) target = $region124
      $region123: #{decoder_forward.5} parent=5 // pred_region
        // Predicated region
        $region125: #{decoder_forward.5} parent=123 // pred_check
          %p902 = pneg %p118
        $region126: #{decoder_forward.5} parent=123 // pred_check_branch
          %904 = sbr.rel (%p902) target = $region128
        $region127: #{decoder_forward.5} parent=123 // pred_region
          %p905 = scmp.lt.s32.totalorder %s77, 4
          %s906 = scalar_select %p905, %s77, 4
          %s907 = smul.addr %s906, 2
          %s908 = scalar_lea.vmem %s3, %s907
        $region128: #{decoder_forward.5} parent=123 // pred_fallthru
          _
      $region124: #{decoder_forward.5} parent=5 // pred_fallthru
        _
      %p909 = scmp.le.s32.totalorder 1, %s77
      %p910 = scmp.lt.s32.totalorder %s77, 6
      %p911 = pnand %p909, %p910
      %p912 = pneg %p911
      // Predicated region
      $region129: #{decoder_forward.5} parent=5 // pred_check
        _
      $region130: #{decoder_forward.5} parent=5 // pred_check_branch
        %914 = sbr.rel (%p911) target = $region132
      $region131: #{decoder_forward.5} parent=5 // pred_region
        %s915 = ssub.s32 %s77, 1
        // Predicated region
        $region133: #{decoder_forward.5} parent=131 // pred_check
          %p916 = pneg %p250
        $region134: #{decoder_forward.5} parent=131 // pred_check_branch
          %918 = sbr.rel (%p916) target = $region136
        $region135: #{decoder_forward.5} parent=131 // pred_region
          %919 = dma.done [#allocation7], 2048
        $region136: #{decoder_forward.5} parent=131 // pred_fallthru
          _
        // Predicated region
        $region137: #{decoder_forward.5} parent=131 // pred_check
          %p920 = pneg %p292
        $region138: #{decoder_forward.5} parent=131 // pred_check_branch
          %922 = sbr.rel (%p920) target = $region140
        $region139: #{decoder_forward.5} parent=131 // pred_region
          %923 = dma.done [#allocation10], 2048
        $region140: #{decoder_forward.5} parent=131 // pred_fallthru
          _
        // Predicated region
        $region141: #{decoder_forward.5} parent=131 // pred_check
          %p924 = pneg %p376
        $region142: #{decoder_forward.5} parent=131 // pred_check_branch
          %926 = sbr.rel (%p924) target = $region144
        $region143: #{decoder_forward.5} parent=131 // pred_region
          %927 = dma.done [#allocation10], 8192
        $region144: #{decoder_forward.5} parent=131 // pred_fallthru
          _
        // Predicated region
        $region145: #{decoder_forward.5} parent=131 // pred_check
          %p928 = pneg %p439
        $region146: #{decoder_forward.5} parent=131 // pred_check_branch
          %930 = sbr.rel (%p928) target = $region148
        $region147: #{decoder_forward.5} parent=131 // pred_region
          %931 = dma.done [#allocation13], 8192
        $region148: #{decoder_forward.5} parent=131 // pred_fallthru
          _
        // Predicated region
        $region149: #{decoder_forward.5} parent=131 // pred_check
          %p932 = pneg %p523
        $region150: #{decoder_forward.5} parent=131 // pred_check_branch
          %934 = sbr.rel (%p932) target = $region152
        $region151: #{decoder_forward.5} parent=131 // pred_region
          %935 = dma.done [#allocation13], 2048
        $region152: #{decoder_forward.5} parent=131 // pred_fallthru
          _
        // Predicated region
        $region153: #{decoder_forward.5} parent=131 // pred_check
          %p936 = pneg %p586
        $region154: #{decoder_forward.5} parent=131 // pred_check_branch
          %938 = sbr.rel (%p936) target = $region156
        $region155: #{decoder_forward.5} parent=131 // pred_region
          %939 = dma.done [#allocation16], 24576
        $region156: #{decoder_forward.5} parent=131 // pred_fallthru
          _
        // Predicated region
        $region157: #{decoder_forward.5} parent=131 // pred_check
          %p940 = pneg %p607
        $region158: #{decoder_forward.5} parent=131 // pred_check_branch
          %942 = sbr.rel (%p940) target = $region160
        $region159: #{decoder_forward.5} parent=131 // pred_region
          %943 = dma.done [#allocation16], 8192
        $region160: #{decoder_forward.5} parent=131 // pred_fallthru
          _
        // Predicated region
        $region161: #{decoder_forward.5} parent=131 // pred_check
          %p944 = pneg %p649
        $region162: #{decoder_forward.5} parent=131 // pred_check_branch
          %946 = sbr.rel (%p944) target = $region164
        $region163: #{decoder_forward.5} parent=131 // pred_region
          %947 = dma.done [#allocation19], 8192
        $region164: #{decoder_forward.5} parent=131 // pred_fallthru
          _
        %p948 = pneg %p98
        %p949 = pneg %p95
        %p950 = scmp.lt.s32.totalorder %s82, 4
        %s951 = scalar_select %p950, %s82, 4
        %s952 = smul.addr %s951, 2
        %s953 = scalar_lea.vmem %s3, %s952
        %p954 = pneg %p124
        %p955 = pneg %p121
        %p956 = pneg %p145
        %p957 = pneg %p142
        %p958 = pneg %p166
        %p959 = pneg %p163
        %p960 = pneg %p187
        %p961 = pneg %p184
        %p962 = pneg %p208
        %p963 = pneg %p205
        %p964 = pneg %p229
        %p965 = pneg %p226
        %p966 = pneg %p250
        %p967 = pneg %p247
        %p968 = pneg %p271
        %p969 = pneg %p268
        %p970 = pneg %p292
        %p971 = pneg %p289
        %p972 = pneg %p313
        %p973 = pneg %p310
        %p974 = pneg %p334
        %p975 = pneg %p331
        %p976 = pneg %p355
        %p977 = pneg %p352
        %p978 = pneg %p376
        %p979 = pneg %p373
        %p980 = pneg %p397
        %p981 = pneg %p394
        %p982 = pneg %p418
        %p983 = pneg %p415
        %p984 = pneg %p439
        %p985 = pneg %p436
        %p986 = pneg %p460
        %p987 = pneg %p457
        %p988 = pneg %p481
        %p989 = pneg %p478
        %p990 = pneg %p502
        %p991 = pneg %p499
        %p992 = pneg %p523
        %p993 = pneg %p520
        %p994 = pneg %p544
        %p995 = pneg %p541
        %p996 = pneg %p565
        %p997 = pneg %p562
        %p998 = pneg %p586
        %p999 = pneg %p583
        %p1000 = pneg %p607
        %p1001 = pneg %p604
        %p1002 = pneg %p628
        %p1003 = pneg %p625
        %p1004 = pneg %p649
        %p1005 = pneg %p646
        %p1006 = pneg %p670
        %p1007 = pneg %p667
        %p1008 = pneg %p696
        %p1009 = pneg %p693
        %s1010 = sand.u32 %s683, 1
        %s1011 = scalar_lea.sflag [#allocation8], %s1010
        %s1012 = sand.u32 %s683, 1
        %s1013 = smul.addr %s1012, 8
        %s1014 = scalar_lea.vmem [#allocation20], %s1013
        %p1015 = pneg %p722
        %p1016 = pneg %p719
        %s1017 = sand.u32 %s709, 1
        %s1018 = scalar_lea.sflag [#allocation22], %s1017
        %s1019 = sand.u32 %s709, 1
        %s1020 = smul.addr %s1019, 2
        %s1021 = scalar_lea.vmem [#allocation21], %s1020
        %p1022 = scmp.lt.s32.totalorder %s82, 4
        %s1023 = scalar_select %p1022, %s82, 4
        %s1024 = smul.addr %s1023, 2
        %s1025 = scalar_lea.vmem %s3, %s1024
        %p1026 = scmp.eq.s32.totalorder %s82, 0
        // Predicated region
        $region165: #{decoder_forward.5} parent=131 // pred_check
          %p1027 = pneg %p1026
        $region166: #{decoder_forward.5} parent=131 // pred_check_branch
          %1029 = sbr.rel (%p1027) target = $region168
        $region167: #{decoder_forward.5} parent=131 // pred_region
          %v1030 = vld [vmem:[%s7] sm:$0x3]
          %1031 = vst [vmem:[#allocation2] sm:$0x3] %v1030
          %v1032 = vld [vmem:[%s9] sm:$0x3]
          %1033 = vst [vmem:[#allocation3] sm:$0x3] %v1032
          %v1034 = vld [vmem:[%s7] sm:$0x3]
          %1035 = vst [vmem:[#allocation4] sm:$0x3] %v1034
          %v1036 = vld [vmem:[%s9] sm:$0x3]
          %1037 = vst [vmem:[#allocation5] sm:$0x3] %v1036
        $region168: #{decoder_forward.5} parent=131 // pred_fallthru
          _
        %v1038 = vld [vmem:[%s1] sm:$0xff]
        %v1039 = vld [vmem:[%s1 + $0x8] sm:$0xff]
        %v1040 = vld [vmem:[%s1 + $0x10] sm:$0xff]
        %v1041 = vld [vmem:[%s1 + $0x18] sm:$0xff]
        %v1042 = vld [vmem:[%s1 + $0x20] sm:$0xff]
        %v1043 = vld [vmem:[%s1 + $0x28] sm:$0xff]
        %v1044 = vld [vmem:[%s1 + $0x30] sm:$0xff]
        %v1045 = vld [vmem:[%s1 + $0x38] sm:$0xff]
        %v1046 = vld [vmem:[%s1025] sm:$0x3]
        %v1047 = vld [vmem:[#allocation2] sm:$0x3]
        %v1048 = vld [vmem:[#allocation3] sm:$0x3]
        %v1049 = vld [vmem:[#allocation4] sm:$0x3]
        %v1050 = vld [vmem:[#allocation5] sm:$0x3]
        %v1051 = vld [vmem:[%s11] sm:$0xff]
        %v1052 = vld [vmem:[%s11 + $0x8] sm:$0xff]
        %v1053 = vld [vmem:[%s11 + $0x10] sm:$0xff]
        %v1054 = vld [vmem:[%s11 + $0x18] sm:$0xff]
        %v1055 = vld [vmem:[%s11 + $0x20] sm:$0xff]
        %v1056 = vld [vmem:[%s11 + $0x28] sm:$0xff]
        %v1057 = vld [vmem:[%s11 + $0x30] sm:$0xff]
        %v1058 = vld [vmem:[%s11 + $0x38] sm:$0xff]
        %v1059 = vld [vmem:[%s11 + $0x40] sm:$0xff]
        %v1060 = vld [vmem:[%s11 + $0x48] sm:$0xff]
        %v1061 = vld [vmem:[%s11 + $0x50] sm:$0xff]
        %v1062 = vld [vmem:[%s11 + $0x58] sm:$0xff]
        %v1063 = vld [vmem:[%s11 + $0x60] sm:$0xff]
        %v1064 = vld [vmem:[%s11 + $0x68] sm:$0xff]
        %v1065 = vld [vmem:[%s11 + $0x70] sm:$0xff]
        %v1066 = vld [vmem:[%s11 + $0x78] sm:$0xff]
        %v1067 = vld [vmem:[%s13] sm:$0x1]
        %v1069 = vlaneseq
        %v1070 = vshrl.u32 %v1069, 7
        %v1071 = vsub.s32 0, %v1070
        %v1072 = vrot.slane %v1067, %v1071
        %1074 = vmatprep.subr.mxu0 0.0
        %1075 = vmatpush1.msra.mxu0 %v1066
        %1076 = vmatprep.subr.mxu0 0.0
        %1077 = vmatpush1.msra.mxu0 %v1065
        %1078 = vmatprep.subr.mxu0 0.0
        %1079 = vmatpush1.msra.mxu0 %v1064
        %1080 = vmatprep.subr.mxu0 0.0
        %1081 = vmatpush1.msra.mxu0 %v1063
        %1082 = vmatprep.subr.mxu0 0.0
        %1083 = vmatpush1.msra.mxu0 %v1062
        %1084 = vmatprep.subr.mxu0 0.0
        %1085 = vmatpush1.msra.mxu0 %v1061
        %1086 = vmatprep.subr.mxu0 0.0
        %1087 = vmatpush1.msra.mxu0 %v1060
        %1088 = vmatprep.subr.mxu0 0.0
        %1089 = vmatpush1.msra.mxu0 %v1059
        %1090 = vmatprep.subr.mxu0 0.0
        %1091 = vmatpush1.msra.mxu0 %v1058
        %1092 = vmatprep.subr.mxu0 0.0
        %1093 = vmatpush1.msra.mxu0 %v1057
        %1094 = vmatprep.subr.mxu0 0.0
        %1095 = vmatpush1.msra.mxu0 %v1056
        %1096 = vmatprep.subr.mxu0 0.0
        %1097 = vmatpush1.msra.mxu0 %v1055
        %1098 = vmatprep.subr.mxu0 0.0
        %1099 = vmatpush1.msra.mxu0 %v1054
        %1100 = vmatprep.subr.mxu0 0.0
        %1101 = vmatpush1.msra.mxu0 %v1053
        %1102 = vmatprep.subr.mxu0 0.0
        %1103 = vmatpush1.msra.mxu0 %v1052
        %1104 = vmatprep.subr.mxu0 0.0
        %1105 = vmatpush1.msra.mxu0 %v1051
        %1106 = vmatprep.subr.mxu0 0.0
        %1107 = vmatpush2.msra.mxu0 0.0
        %1108 = vmatprep.subr.mxu0 0.0
        %1109 = vmatpush2.msra.mxu0 0.0
        %1110 = vmatprep.subr.mxu0 0.0
        %1111 = vmatpush2.msra.mxu0 0.0
        %1112 = vmatprep.subr.mxu0 0.0
        %1113 = vmatpush2.msra.mxu0 0.0
        %1114 = vmatprep.subr.mxu0 0.0
        %1115 = vmatpush2.msra.mxu0 0.0
        %1116 = vmatprep.subr.mxu0 0.0
        %1117 = vmatpush2.msra.mxu0 0.0
        %1118 = vmatprep.subr.mxu0 0.0
        %1119 = vmatpush2.msra.mxu0 0.0
        %1120 = vmatprep.subr.mxu0 0.0
        %1121 = vmatpush2.msra.mxu0 0.0
        %1122 = vmatprep.subr.mxu0 0.0
        %1123 = vmatpush2.msra.mxu0 0.0
        %1124 = vmatprep.subr.mxu0 0.0
        %1125 = vmatpush2.msra.mxu0 0.0
        %1126 = vmatprep.subr.mxu0 0.0
        %1127 = vmatpush2.msra.mxu0 0.0
        %1128 = vmatprep.subr.mxu0 0.0
        %1129 = vmatpush2.msra.mxu0 0.0
        %1130 = vmatprep.subr.mxu0 0.0
        %1131 = vmatpush2.msra.mxu0 0.0
        %1132 = vmatprep.subr.mxu0 0.0
        %1133 = vmatpush2.msra.mxu0 0.0
        %1134 = vmatprep.subr.mxu0 0.0
        %1135 = vmatpush2.msra.mxu0 0.0
        %1136 = vmatprep.subr.mxu0 0.0
        %1137 = vmatpush2.msra.mxu0 0.0
        %1138 = vmatprep.mubr.f32.mxu0 0.0
        %1139 = vmatmul.mubr.f32.gmra.mxu0 %v1049
        %v1140 = vpop.f32.mrf.mxu0
        %v1141 = vadd.f32 %v1072, %v1140
        %v1142 = vpop.f32.mrf.mxu0
        %1143 = vdwg.mxu0
        %v1146 = vunpack.c.l.s4 1966171168
        %v1147 = vunpack.c.0.s8 %v1146
        %v1148 = vlaneseq
        %v1149 = vshrl.u32 %v1148, 7
        %v1150 = vsub.s32 %v1147, %v1149
        %v1151 = vrot.slane %v1141, %v1150
        %v1152 = vcombine.high %v1151, %v1151
        %v1154 = vunpack.c.l.s4 1966171168
        %v1155 = vunpack.c.0.s8 %v1154
        %v1156 = vlaneseq
        %v1157 = vshrl.u32 %v1156, 7
        %v1158 = vsub.s32 %v1155, %v1157
        %v1159 = vrot.slane %v1151, %v1158
        %v1161 = vunpack.c.l.s4 1966171168
        %v1162 = vunpack.c.0.s8 %v1161
        %v1163 = vlaneseq
        %v1164 = vshrl.u32 %v1163, 7
        %v1165 = vsub.s32 %v1162, %v1164
        %v1166 = vrot.slane %v1152, %v1165
        %v1167 = vlaneseq
        %v1168 = vshrl.u32 %v1167, 7
        %v1169 = vsub.s32 0, %v1168
        %v1170 = vrot.slane %v1159, %v1169
        %v1171 = vlaneseq
        %v1172 = vshrl.u32 %v1171, 7
        %v1173 = vsub.s32 0, %v1172
        %v1174 = vrot.slane %v1166, %v1173
        %v1177 = vmul.f32 %v1038, %v1170
        %v1178 = vmul.f32 %v1040, %v1170
        %v1179 = vmul.f32 %v1042, %v1174
        %v1180 = vmul.f32 %v1044, %v1174
        %v1181 = vmax.f32 %v1177, %v1178
        %v1182 = vrot.slane %v1181, 4
        %v1183 = vmax.f32 %v1181, %v1182
        %v1184 = vrot.slane %v1183, 2
        %v1185 = vmax.f32 %v1183, %v1184
        %v1186 = vrot.slane %v1185, 1
        %v1187 = vmax.f32 %v1185, %v1186
        %v1188 = vmax.f32 %v1179, %v1180
        %v1189 = vrot.slane %v1188, 4
        %v1190 = vmax.f32 %v1188, %v1189
        %v1191 = vrot.slane %v1190, 2
        %v1192 = vmax.f32 %v1190, %v1191
        %v1193 = vrot.slane %v1192, 1
        %v1194 = vmax.f32 %v1192, %v1193
        %v1195 = vsub.f32 %v1177, %v1187
        %v1196 = vsub.f32 %v1178, %v1187
        %v1197 = vsub.f32 %v1179, %v1194
        %v1198 = vsub.f32 %v1180, %v1194
        %v1199 = vmul.f32 %v1195, 1.442695
        %v1200 = vpow.pop %v1199
        %v1201 = vmul.f32 %v1196, 1.442695
        %v1202 = vpow.pop %v1201
        %v1203 = vmul.f32 %v1197, 1.442695
        %v1204 = vpow.pop %v1203
        %v1205 = vmul.f32 %v1198, 1.442695
        %v1206 = vpow.pop %v1205
        %v1207 = vadd.f32 %v1200, %v1202
        %v1208 = vrot.slane %v1207, 4
        %v1209 = vadd.f32 %v1207, %v1208
        %v1210 = vrot.slane %v1209, 2
        %v1211 = vadd.f32 %v1209, %v1210
        %v1212 = vrot.slane %v1211, 1
        %v1213 = vadd.f32 %v1211, %v1212
        %v1214 = vadd.f32 %v1204, %v1206
        %v1215 = vrot.slane %v1214, 4
        %v1216 = vadd.f32 %v1214, %v1215
        %v1217 = vrot.slane %v1216, 2
        %v1218 = vadd.f32 %v1216, %v1217
        %v1219 = vrot.slane %v1218, 1
        %v1220 = vadd.f32 %v1218, %v1219
        %v1221 = vrcp.pop %v1213
        %v1222 = vmul.f32 %v1200, %v1221
        %v1223 = vmul.f32 %v1202, %v1221
        %v1224 = vrcp.pop %v1220
        %v1225 = vmul.f32 %v1204, %v1224
        %v1226 = vmul.f32 %v1206, %v1224
        %v1227 = vmul.f32 %v1038, %v1222
        %v1228 = vmul.f32 %v1040, %v1223
        %v1229 = vmul.f32 %v1042, %v1225
        %v1230 = vmul.f32 %v1044, %v1226
        %v1231 = vadd.f32 %v1227, %v1038
        %v1232 = vadd.f32 %v1228, %v1040
        %v1233 = vadd.f32 %v1229, %v1042
        %v1234 = vadd.f32 %v1230, %v1044
        %v1235 = vld [vmem:[#allocation6] sm:$0xff]
        %v1236 = vld [vmem:[#allocation6 + $0x8] sm:$0xff]
        %v1237 = vld [vmem:[#allocation6 + $0x10] sm:$0xff]
        %v1238 = vld [vmem:[#allocation6 + $0x18] sm:$0xff]
        %v1239 = vld [vmem:[#allocation6 + $0x20] sm:$0xff]
        %v1240 = vld [vmem:[#allocation6 + $0x28] sm:$0xff]
        %v1241 = vld [vmem:[#allocation6 + $0x30] sm:$0xff]
        %v1242 = vld [vmem:[#allocation6 + $0x38] sm:$0xff]
        %v1243 = vld [vmem:[#allocation6 + $0x40] sm:$0xff]
        %v1244 = vld [vmem:[#allocation6 + $0x48] sm:$0xff]
        %v1245 = vld [vmem:[#allocation6 + $0x50] sm:$0xff]
        %v1246 = vld [vmem:[#allocation6 + $0x58] sm:$0xff]
        %v1247 = vld [vmem:[#allocation6 + $0x60] sm:$0xff]
        %v1248 = vld [vmem:[#allocation6 + $0x68] sm:$0xff]
        %v1249 = vld [vmem:[#allocation6 + $0x70] sm:$0xff]
        %v1250 = vld [vmem:[#allocation6 + $0x78] sm:$0xff]
        %v1251 = vld [vmem:[%s17] sm:$0x1]
        %v1253 = vlaneseq
        %v1254 = vshrl.u32 %v1253, 7
        %v1255 = vsub.s32 0, %v1254
        %v1256 = vrot.slane %v1251, %v1255
        %1258 = vmatprep.subr.mxu0 0.0
        %1259 = vmatpush1.msra.mxu0 %v1250
        %1260 = vmatprep.subr.mxu0 0.0
        %1261 = vmatpush1.msra.mxu0 %v1249
        %1262 = vmatprep.subr.mxu0 0.0
        %1263 = vmatpush1.msra.mxu0 %v1248
        %1264 = vmatprep.subr.mxu0 0.0
        %1265 = vmatpush1.msra.mxu0 %v1247
        %1266 = vmatprep.subr.mxu0 0.0
        %1267 = vmatpush1.msra.mxu0 %v1246
        %1268 = vmatprep.subr.mxu0 0.0
        %1269 = vmatpush1.msra.mxu0 %v1245
        %1270 = vmatprep.subr.mxu0 0.0
        %1271 = vmatpush1.msra.mxu0 %v1244
        %1272 = vmatprep.subr.mxu0 0.0
        %1273 = vmatpush1.msra.mxu0 %v1243
        %1274 = vmatprep.subr.mxu0 0.0
        %1275 = vmatpush1.msra.mxu0 %v1242
        %1276 = vmatprep.subr.mxu0 0.0
        %1277 = vmatpush1.msra.mxu0 %v1241
        %1278 = vmatprep.subr.mxu0 0.0
        %1279 = vmatpush1.msra.mxu0 %v1240
        %1280 = vmatprep.subr.mxu0 0.0
        %1281 = vmatpush1.msra.mxu0 %v1239
        %1282 = vmatprep.subr.mxu0 0.0
        %1283 = vmatpush1.msra.mxu0 %v1238
        %1284 = vmatprep.subr.mxu0 0.0
        %1285 = vmatpush1.msra.mxu0 %v1237
        %1286 = vmatprep.subr.mxu0 0.0
        %1287 = vmatpush1.msra.mxu0 %v1236
        %1288 = vmatprep.subr.mxu0 0.0
        %1289 = vmatpush1.msra.mxu0 %v1235
        %1290 = vmatprep.subr.mxu0 0.0
        %1291 = vmatpush2.msra.mxu0 0.0
        %1292 = vmatprep.subr.mxu0 0.0
        %1293 = vmatpush2.msra.mxu0 0.0
        %1294 = vmatprep.subr.mxu0 0.0
        %1295 = vmatpush2.msra.mxu0 0.0
        %1296 = vmatprep.subr.mxu0 0.0
        %1297 = vmatpush2.msra.mxu0 0.0
        %1298 = vmatprep.subr.mxu0 0.0
        %1299 = vmatpush2.msra.mxu0 0.0
        %1300 = vmatprep.subr.mxu0 0.0
        %1301 = vmatpush2.msra.mxu0 0.0
        %1302 = vmatprep.subr.mxu0 0.0
        %1303 = vmatpush2.msra.mxu0 0.0
        %1304 = vmatprep.subr.mxu0 0.0
        %1305 = vmatpush2.msra.mxu0 0.0
        %1306 = vmatprep.subr.mxu0 0.0
        %1307 = vmatpush2.msra.mxu0 0.0
        %1308 = vmatprep.subr.mxu0 0.0
        %1309 = vmatpush2.msra.mxu0 0.0
        %1310 = vmatprep.subr.mxu0 0.0
        %1311 = vmatpush2.msra.mxu0 0.0
        %1312 = vmatprep.subr.mxu0 0.0
        %1313 = vmatpush2.msra.mxu0 0.0
        %1314 = vmatprep.subr.mxu0 0.0
        %1315 = vmatpush2.msra.mxu0 0.0
        %1316 = vmatprep.subr.mxu0 0.0
        %1317 = vmatpush2.msra.mxu0 0.0
        %1318 = vmatprep.subr.mxu0 0.0
        %1319 = vmatpush2.msra.mxu0 0.0
        %1320 = vmatprep.subr.mxu0 0.0
        %1321 = vmatpush2.msra.mxu0 0.0
        %1322 = vmatprep.mubr.f32.mxu0 0.0
        %1323 = vmatmul.mubr.f32.gmra.mxu0 %v1046
        %v1324 = vpop.f32.mrf.mxu0
        %v1325 = vadd.f32 %v1256, %v1324
        %v1326 = vpop.f32.mrf.mxu0
        %1327 = vdwg.mxu0
        %v1328 = vld [vmem:[#allocation9] sm:$0xff]
        %v1329 = vld [vmem:[#allocation9 + $0x8] sm:$0xff]
        %v1330 = vld [vmem:[#allocation9 + $0x10] sm:$0xff]
        %v1331 = vld [vmem:[#allocation9 + $0x18] sm:$0xff]
        %v1332 = vld [vmem:[#allocation9 + $0x20] sm:$0xff]
        %v1333 = vld [vmem:[#allocation9 + $0x28] sm:$0xff]
        %v1334 = vld [vmem:[#allocation9 + $0x30] sm:$0xff]
        %v1335 = vld [vmem:[#allocation9 + $0x38] sm:$0xff]
        %v1336 = vld [vmem:[#allocation9 + $0x40] sm:$0xff]
        %v1337 = vld [vmem:[#allocation9 + $0x48] sm:$0xff]
        %v1338 = vld [vmem:[#allocation9 + $0x50] sm:$0xff]
        %v1339 = vld [vmem:[#allocation9 + $0x58] sm:$0xff]
        %v1340 = vld [vmem:[#allocation9 + $0x60] sm:$0xff]
        %v1341 = vld [vmem:[#allocation9 + $0x68] sm:$0xff]
        %v1342 = vld [vmem:[#allocation9 + $0x70] sm:$0xff]
        %v1343 = vld [vmem:[#allocation9 + $0x78] sm:$0xff]
        %v1344 = vld [vmem:[%s21] sm:$0x1]
        %v1346 = vlaneseq
        %v1347 = vshrl.u32 %v1346, 7
        %v1348 = vsub.s32 0, %v1347
        %v1349 = vrot.slane %v1344, %v1348
        %1351 = vmatprep.subr.mxu0 0.0
        %1352 = vmatpush1.msra.mxu0 %v1343
        %1353 = vmatprep.subr.mxu0 0.0
        %1354 = vmatpush1.msra.mxu0 %v1342
        %1355 = vmatprep.subr.mxu0 0.0
        %1356 = vmatpush1.msra.mxu0 %v1341
        %1357 = vmatprep.subr.mxu0 0.0
        %1358 = vmatpush1.msra.mxu0 %v1340
        %1359 = vmatprep.subr.mxu0 0.0
        %1360 = vmatpush1.msra.mxu0 %v1339
        %1361 = vmatprep.subr.mxu0 0.0
        %1362 = vmatpush1.msra.mxu0 %v1338
        %1363 = vmatprep.subr.mxu0 0.0
        %1364 = vmatpush1.msra.mxu0 %v1337
        %1365 = vmatprep.subr.mxu0 0.0
        %1366 = vmatpush1.msra.mxu0 %v1336
        %1367 = vmatprep.subr.mxu0 0.0
        %1368 = vmatpush1.msra.mxu0 %v1335
        %1369 = vmatprep.subr.mxu0 0.0
        %1370 = vmatpush1.msra.mxu0 %v1334
        %1371 = vmatprep.subr.mxu0 0.0
        %1372 = vmatpush1.msra.mxu0 %v1333
        %1373 = vmatprep.subr.mxu0 0.0
        %1374 = vmatpush1.msra.mxu0 %v1332
        %1375 = vmatprep.subr.mxu0 0.0
        %1376 = vmatpush1.msra.mxu0 %v1331
        %1377 = vmatprep.subr.mxu0 0.0
        %1378 = vmatpush1.msra.mxu0 %v1330
        %1379 = vmatprep.subr.mxu0 0.0
        %1380 = vmatpush1.msra.mxu0 %v1329
        %1381 = vmatprep.subr.mxu0 0.0
        %1382 = vmatpush1.msra.mxu0 %v1328
        %1383 = vmatprep.subr.mxu0 0.0
        %1384 = vmatpush2.msra.mxu0 0.0
        %1385 = vmatprep.subr.mxu0 0.0
        %1386 = vmatpush2.msra.mxu0 0.0
        %1387 = vmatprep.subr.mxu0 0.0
        %1388 = vmatpush2.msra.mxu0 0.0
        %1389 = vmatprep.subr.mxu0 0.0
        %1390 = vmatpush2.msra.mxu0 0.0
        %1391 = vmatprep.subr.mxu0 0.0
        %1392 = vmatpush2.msra.mxu0 0.0
        %1393 = vmatprep.subr.mxu0 0.0
        %1394 = vmatpush2.msra.mxu0 0.0
        %1395 = vmatprep.subr.mxu0 0.0
        %1396 = vmatpush2.msra.mxu0 0.0
        %1397 = vmatprep.subr.mxu0 0.0
        %1398 = vmatpush2.msra.mxu0 0.0
        %1399 = vmatprep.subr.mxu0 0.0
        %1400 = vmatpush2.msra.mxu0 0.0
        %1401 = vmatprep.subr.mxu0 0.0
        %1402 = vmatpush2.msra.mxu0 0.0
        %1403 = vmatprep.subr.mxu0 0.0
        %1404 = vmatpush2.msra.mxu0 0.0
        %1405 = vmatprep.subr.mxu0 0.0
        %1406 = vmatpush2.msra.mxu0 0.0
        %1407 = vmatprep.subr.mxu0 0.0
        %1408 = vmatpush2.msra.mxu0 0.0
        %1409 = vmatprep.subr.mxu0 0.0
        %1410 = vmatpush2.msra.mxu0 0.0
        %1411 = vmatprep.subr.mxu0 0.0
        %1412 = vmatpush2.msra.mxu0 0.0
        %1413 = vmatprep.subr.mxu0 0.0
        %1414 = vmatpush2.msra.mxu0 0.0
        %1415 = vmatprep.mubr.f32.mxu0 0.0
        %1416 = vmatmul.mubr.f32.gmra.mxu0 %v1325
        %v1417 = vpop.f32.mrf.mxu0
        %v1418 = vadd.f32 %v1349, %v1417
        %v1419 = vpop.f32.mrf.mxu0
        %1420 = vdwg.mxu0
        %v1423 = vunpack.c.l.s4 1966171168
        %v1424 = vunpack.c.0.s8 %v1423
        %v1425 = vlaneseq
        %v1426 = vshrl.u32 %v1425, 7
        %v1427 = vsub.s32 %v1424, %v1426
        %v1428 = vrot.slane %v1418, %v1427
        %v1429 = vcombine.high %v1428, %v1428
        %v1431 = vunpack.c.l.s4 1966171168
        %v1432 = vunpack.c.0.s8 %v1431
        %v1433 = vlaneseq
        %v1434 = vshrl.u32 %v1433, 7
        %v1435 = vsub.s32 %v1432, %v1434
        %v1436 = vrot.slane %v1428, %v1435
        %v1438 = vunpack.c.l.s4 1966171168
        %v1439 = vunpack.c.0.s8 %v1438
        %v1440 = vlaneseq
        %v1441 = vshrl.u32 %v1440, 7
        %v1442 = vsub.s32 %v1439, %v1441
        %v1443 = vrot.slane %v1429, %v1442
        %v1444 = vlaneseq
        %v1445 = vshrl.u32 %v1444, 7
        %v1446 = vsub.s32 0, %v1445
        %v1447 = vrot.slane %v1436, %v1446
        %v1448 = vlaneseq
        %v1449 = vshrl.u32 %v1448, 7
        %v1450 = vsub.s32 0, %v1449
        %v1451 = vrot.slane %v1443, %v1450
        %v1454 = vadd.f32 %v1039, %v1447
        %v1455 = vadd.f32 %v1041, %v1447
        %v1456 = vadd.f32 %v1043, %v1451
        %v1457 = vadd.f32 %v1045, %v1451
        %1458 = vadd.xlane.f32.xlu0 %v1454
        %v1459 = vpop.xlane.xlu0 %1458
        %1460 = vadd.xlane.f32.xlu0 %v1455
        %v1461 = vpop.xlane.xlu0 %1460
        %1462 = vadd.xlane.f32.xlu0 %v1456
        %v1463 = vpop.xlane.xlu0 %1462
        %1464 = vadd.xlane.f32.xlu0 %v1457
        %v1465 = vpop.xlane.xlu0 %1464
        %v1466 = vrcp.pop 128.0
        %v1467 = vmul.f32 %v1459, %v1466
        %v1468 = vmul.f32 %v1461, %v1466
        %v1469 = vmul.f32 %v1463, %v1466
        %v1470 = vmul.f32 %v1465, %v1466
        %v1471 = vsub.f32 %v1454, %v1467
        %v1472 = vsub.f32 %v1455, %v1468
        %v1473 = vsub.f32 %v1456, %v1469
        %v1474 = vsub.f32 %v1457, %v1470
        %v1475 = vmul.f32 %v1471, %v1471
        %v1476 = vmul.f32 %v1472, %v1472
        %v1477 = vmul.f32 %v1473, %v1473
        %v1478 = vmul.f32 %v1474, %v1474
        %1479 = vadd.xlane.f32.xlu0 %v1475
        %v1480 = vpop.xlane.xlu0 %1479
        %1481 = vadd.xlane.f32.xlu0 %v1476
        %v1482 = vpop.xlane.xlu0 %1481
        %1483 = vadd.xlane.f32.xlu0 %v1477
        %v1484 = vpop.xlane.xlu0 %1483
        %1485 = vadd.xlane.f32.xlu0 %v1478
        %v1486 = vpop.xlane.xlu0 %1485
        %v1487 = vmul.f32 %v1480, %v1466
        %v1488 = vmul.f32 %v1482, %v1466
        %v1489 = vmul.f32 %v1484, %v1466
        %v1490 = vmul.f32 %v1486, %v1466
        %v1491 = vadd.f32 %v1487, 1e-05
        %v1492 = vadd.f32 %v1488, 1e-05
        %v1493 = vadd.f32 %v1489, 1e-05
        %v1494 = vadd.f32 %v1490, 1e-05
        %v1495 = vrsqrt.pop %v1491
        %v1496 = vrsqrt.pop %v1492
        %v1497 = vrsqrt.pop %v1493
        %v1498 = vrsqrt.pop %v1494
        %v1499 = vmul.f32 %v1471, %v1495
        %v1500 = vmul.f32 %v1472, %v1496
        %v1501 = vmul.f32 %v1473, %v1497
        %v1502 = vmul.f32 %v1474, %v1498
        %v1503 = vld [vmem:[%s23] sm:$0x1]
        %v1505 = vlaneseq
        %v1506 = vshrl.u32 %v1505, 7
        %v1507 = vsub.s32 0, %v1506
        %v1508 = vrot.slane %v1503, %v1507
        %v1510 = vmul.f32 %v1499, %v1508
        %v1511 = vmul.f32 %v1500, %v1508
        %v1512 = vmul.f32 %v1501, %v1508
        %v1513 = vmul.f32 %v1502, %v1508
        %v1514 = vld [vmem:[%s25] sm:$0x1]
        %v1516 = vlaneseq
        %v1517 = vshrl.u32 %v1516, 7
        %v1518 = vsub.s32 0, %v1517
        %v1519 = vrot.slane %v1514, %v1518
        %v1521 = vadd.f32 %v1510, %v1519
        %v1522 = vadd.f32 %v1511, %v1519
        %v1523 = vadd.f32 %v1512, %v1519
        %v1524 = vadd.f32 %v1513, %v1519
        %v1525 = vmax.f32 %v1521, 0.0
        %v1526 = vmax.f32 %v1522, 0.0
        %v1527 = vmax.f32 %v1523, 0.0
        %v1528 = vmax.f32 %v1524, 0.0
        %v1529 = vadd.f32 %v1525, %v1039
        %v1530 = vadd.f32 %v1526, %v1041
        %v1531 = vadd.f32 %v1527, %v1043
        %v1532 = vadd.f32 %v1528, %v1045
        %v1533 = vld [vmem:[#allocation11] sm:$0xff]
        %v1534 = vld [vmem:[#allocation11 + $0x8] sm:$0xff]
        %v1535 = vld [vmem:[#allocation11 + $0x10] sm:$0xff]
        %v1536 = vld [vmem:[#allocation11 + $0x18] sm:$0xff]
        %v1537 = vld [vmem:[#allocation11 + $0x20] sm:$0xff]
        %v1538 = vld [vmem:[#allocation11 + $0x28] sm:$0xff]
        %v1539 = vld [vmem:[#allocation11 + $0x30] sm:$0xff]
        %v1540 = vld [vmem:[#allocation11 + $0x38] sm:$0xff]
        %v1541 = vld [vmem:[#allocation11 + $0x40] sm:$0xff]
        %v1542 = vld [vmem:[#allocation11 + $0x48] sm:$0xff]
        %v1543 = vld [vmem:[#allocation11 + $0x50] sm:$0xff]
        %v1544 = vld [vmem:[#allocation11 + $0x58] sm:$0xff]
        %v1545 = vld [vmem:[#allocation11 + $0x60] sm:$0xff]
        %v1546 = vld [vmem:[#allocation11 + $0x68] sm:$0xff]
        %v1547 = vld [vmem:[#allocation11 + $0x70] sm:$0xff]
        %v1548 = vld [vmem:[#allocation11 + $0x78] sm:$0xff]
        %v1549 = vld [vmem:[#allocation11 + $0x80] sm:$0xff]
        %v1550 = vld [vmem:[#allocation11 + $0x88] sm:$0xff]
        %v1551 = vld [vmem:[#allocation11 + $0x90] sm:$0xff]
        %v1552 = vld [vmem:[#allocation11 + $0x98] sm:$0xff]
        %v1553 = vld [vmem:[#allocation11 + $0xa0] sm:$0xff]
        %v1554 = vld [vmem:[#allocation11 + $0xa8] sm:$0xff]
        %v1555 = vld [vmem:[#allocation11 + $0xb0] sm:$0xff]
        %v1556 = vld [vmem:[#allocation11 + $0xb8] sm:$0xff]
        %v1557 = vld [vmem:[#allocation11 + $0xc0] sm:$0xff]
        %v1558 = vld [vmem:[#allocation11 + $0xc8] sm:$0xff]
        %v1559 = vld [vmem:[#allocation11 + $0xd0] sm:$0xff]
        %v1560 = vld [vmem:[#allocation11 + $0xd8] sm:$0xff]
        %v1561 = vld [vmem:[#allocation11 + $0xe0] sm:$0xff]
        %v1562 = vld [vmem:[#allocation11 + $0xe8] sm:$0xff]
        %v1563 = vld [vmem:[#allocation11 + $0xf0] sm:$0xff]
        %v1564 = vld [vmem:[#allocation11 + $0xf8] sm:$0xff]
        %v1565 = vld [vmem:[#allocation11 + $0x100] sm:$0xff]
        %v1566 = vld [vmem:[#allocation11 + $0x108] sm:$0xff]
        %v1567 = vld [vmem:[#allocation11 + $0x110] sm:$0xff]
        %v1568 = vld [vmem:[#allocation11 + $0x118] sm:$0xff]
        %v1569 = vld [vmem:[#allocation11 + $0x120] sm:$0xff]
        %v1570 = vld [vmem:[#allocation11 + $0x128] sm:$0xff]
        %v1571 = vld [vmem:[#allocation11 + $0x130] sm:$0xff]
        %v1572 = vld [vmem:[#allocation11 + $0x138] sm:$0xff]
        %v1573 = vld [vmem:[#allocation11 + $0x140] sm:$0xff]
        %v1574 = vld [vmem:[#allocation11 + $0x148] sm:$0xff]
        %v1575 = vld [vmem:[#allocation11 + $0x150] sm:$0xff]
        %v1576 = vld [vmem:[#allocation11 + $0x158] sm:$0xff]
        %v1577 = vld [vmem:[#allocation11 + $0x160] sm:$0xff]
        %v1578 = vld [vmem:[#allocation11 + $0x168] sm:$0xff]
        %v1579 = vld [vmem:[#allocation11 + $0x170] sm:$0xff]
        %v1580 = vld [vmem:[#allocation11 + $0x178] sm:$0xff]
        %v1581 = vld [vmem:[#allocation11 + $0x180] sm:$0xff]
        %v1582 = vld [vmem:[#allocation11 + $0x188] sm:$0xff]
        %v1583 = vld [vmem:[#allocation11 + $0x190] sm:$0xff]
        %v1584 = vld [vmem:[#allocation11 + $0x198] sm:$0xff]
        %v1585 = vld [vmem:[#allocation11 + $0x1a0] sm:$0xff]
        %v1586 = vld [vmem:[#allocation11 + $0x1a8] sm:$0xff]
        %v1587 = vld [vmem:[#allocation11 + $0x1b0] sm:$0xff]
        %v1588 = vld [vmem:[#allocation11 + $0x1b8] sm:$0xff]
        %v1589 = vld [vmem:[#allocation11 + $0x1c0] sm:$0xff]
        %v1590 = vld [vmem:[#allocation11 + $0x1c8] sm:$0xff]
        %v1591 = vld [vmem:[#allocation11 + $0x1d0] sm:$0xff]
        %v1592 = vld [vmem:[#allocation11 + $0x1d8] sm:$0xff]
        %v1593 = vld [vmem:[#allocation11 + $0x1e0] sm:$0xff]
        %v1594 = vld [vmem:[#allocation11 + $0x1e8] sm:$0xff]
        %v1595 = vld [vmem:[#allocation11 + $0x1f0] sm:$0xff]
        %v1596 = vld [vmem:[#allocation11 + $0x1f8] sm:$0xff]
        %v1597 = vld [vmem:[%s29] sm:$0x3]
        %v1599 = vlaneseq
        %v1600 = vshrl.u32 %v1599, 7
        %v1601 = vsub.s32 0, %v1600
        %v1602 = vrot.slane %v1597, %v1601
        %v1603 = vlaneseq
        %v1604 = vshrl.u32 %v1603, 7
        %v1605 = vsub.s32 1, %v1604
        %v1606 = vrot.slane %v1597, %v1605
        %1609 = vmatprep.subr.mxu0 %v1564
        %1610 = vmatpush1.msra.mxu0 %v1563
        %1611 = vmatprep.subr.mxu0 %v1562
        %1612 = vmatpush1.msra.mxu0 %v1561
        %1613 = vmatprep.subr.mxu0 %v1560
        %1614 = vmatpush1.msra.mxu0 %v1559
        %1615 = vmatprep.subr.mxu0 %v1558
        %1616 = vmatpush1.msra.mxu0 %v1557
        %1617 = vmatprep.subr.mxu0 %v1556
        %1618 = vmatpush1.msra.mxu0 %v1555
        %1619 = vmatprep.subr.mxu0 %v1554
        %1620 = vmatpush1.msra.mxu0 %v1553
        %1621 = vmatprep.subr.mxu0 %v1552
        %1622 = vmatpush1.msra.mxu0 %v1551
        %1623 = vmatprep.subr.mxu0 %v1550
        %1624 = vmatpush1.msra.mxu0 %v1549
        %1625 = vmatprep.subr.mxu0 %v1548
        %1626 = vmatpush1.msra.mxu0 %v1547
        %1627 = vmatprep.subr.mxu0 %v1546
        %1628 = vmatpush1.msra.mxu0 %v1545
        %1629 = vmatprep.subr.mxu0 %v1544
        %1630 = vmatpush1.msra.mxu0 %v1543
        %1631 = vmatprep.subr.mxu0 %v1542
        %1632 = vmatpush1.msra.mxu0 %v1541
        %1633 = vmatprep.subr.mxu0 %v1540
        %1634 = vmatpush1.msra.mxu0 %v1539
        %1635 = vmatprep.subr.mxu0 %v1538
        %1636 = vmatpush1.msra.mxu0 %v1537
        %1637 = vmatprep.subr.mxu0 %v1536
        %1638 = vmatpush1.msra.mxu0 %v1535
        %1639 = vmatprep.subr.mxu0 %v1534
        %1640 = vmatpush1.msra.mxu0 %v1533
        %1641 = vmatprep.subr.mxu0 %v1596
        %1642 = vmatpush2.msra.mxu0 %v1595
        %1643 = vmatprep.subr.mxu0 %v1594
        %1644 = vmatpush2.msra.mxu0 %v1593
        %1645 = vmatprep.subr.mxu0 %v1592
        %1646 = vmatpush2.msra.mxu0 %v1591
        %1647 = vmatprep.subr.mxu0 %v1590
        %1648 = vmatpush2.msra.mxu0 %v1589
        %1649 = vmatprep.subr.mxu0 %v1588
        %1650 = vmatpush2.msra.mxu0 %v1587
        %1651 = vmatprep.subr.mxu0 %v1586
        %1652 = vmatpush2.msra.mxu0 %v1585
        %1653 = vmatprep.subr.mxu0 %v1584
        %1654 = vmatpush2.msra.mxu0 %v1583
        %1655 = vmatprep.subr.mxu0 %v1582
        %1656 = vmatpush2.msra.mxu0 %v1581
        %1657 = vmatprep.subr.mxu0 %v1580
        %1658 = vmatpush2.msra.mxu0 %v1579
        %1659 = vmatprep.subr.mxu0 %v1578
        %1660 = vmatpush2.msra.mxu0 %v1577
        %1661 = vmatprep.subr.mxu0 %v1576
        %1662 = vmatpush2.msra.mxu0 %v1575
        %1663 = vmatprep.subr.mxu0 %v1574
        %1664 = vmatpush2.msra.mxu0 %v1573
        %1665 = vmatprep.subr.mxu0 %v1572
        %1666 = vmatpush2.msra.mxu0 %v1571
        %1667 = vmatprep.subr.mxu0 %v1570
        %1668 = vmatpush2.msra.mxu0 %v1569
        %1669 = vmatprep.subr.mxu0 %v1568
        %1670 = vmatpush2.msra.mxu0 %v1567
        %1671 = vmatprep.subr.mxu0 %v1566
        %1672 = vmatpush2.msra.mxu0 %v1565
        %1673 = vmatprep.mubr.f32.mxu0 %v1529
        %1674 = vmatmul.mubr.f32.gmra.mxu0 %v1231
        %v1675 = vpop.f32.mrf.mxu0
        %v1676 = vadd.f32 %v1602, %v1675
        %v1677 = vpop.f32.mrf.mxu0
        %v1678 = vadd.f32 %v1606, %v1677
        %1679 = vmatprep.mubr.f32.mxu0 %v1530
        %1680 = vmatmul.mubr.f32.gmra.mxu0 %v1232
        %v1681 = vpop.f32.mrf.mxu0
        %v1682 = vadd.f32 %v1602, %v1681
        %v1683 = vpop.f32.mrf.mxu0
        %v1684 = vadd.f32 %v1606, %v1683
        %1685 = vmatprep.mubr.f32.mxu0 %v1531
        %1686 = vmatmul.mubr.f32.gmra.mxu0 %v1233
        %v1687 = vpop.f32.mrf.mxu0
        %v1688 = vadd.f32 %v1602, %v1687
        %v1689 = vpop.f32.mrf.mxu0
        %v1690 = vadd.f32 %v1606, %v1689
        %1691 = vmatprep.mubr.f32.mxu0 %v1532
        %1692 = vmatmul.mubr.f32.gmra.mxu0 %v1234
        %v1693 = vpop.f32.mrf.mxu0
        %v1694 = vadd.f32 %v1602, %v1693
        %v1695 = vpop.f32.mrf.mxu0
        %v1696 = vadd.f32 %v1606, %v1695
        %1697 = vdwg.mxu0
        %v1698 = vadd.f32 %v1676, %v1682
        %v1699 = vrot.slane %v1698, 4
        %v1700 = vadd.f32 %v1698, %v1699
        %v1701 = vrot.slane %v1700, 2
        %v1702 = vadd.f32 %v1700, %v1701
        %v1703 = vrot.slane %v1702, 1
        %v1704 = vadd.f32 %v1702, %v1703
        %v1705 = vadd.f32 %v1678, %v1684
        %v1706 = vrot.slane %v1705, 4
        %v1707 = vadd.f32 %v1705, %v1706
        %v1708 = vrot.slane %v1707, 2
        %v1709 = vadd.f32 %v1707, %v1708
        %v1710 = vrot.slane %v1709, 1
        %v1711 = vadd.f32 %v1709, %v1710
        %v1712 = vadd.f32 %v1688, %v1694
        %v1713 = vrot.slane %v1712, 4
        %v1714 = vadd.f32 %v1712, %v1713
        %v1715 = vrot.slane %v1714, 2
        %v1716 = vadd.f32 %v1714, %v1715
        %v1717 = vrot.slane %v1716, 1
        %v1718 = vadd.f32 %v1716, %v1717
        %v1719 = vadd.f32 %v1690, %v1696
        %v1720 = vrot.slane %v1719, 4
        %v1721 = vadd.f32 %v1719, %v1720
        %v1722 = vrot.slane %v1721, 2
        %v1723 = vadd.f32 %v1721, %v1722
        %v1724 = vrot.slane %v1723, 1
        %v1725 = vadd.f32 %v1723, %v1724
        %v1726 = vrcp.pop 16.0
        %v1727 = vmul.f32 %v1704, %v1726
        %v1728 = vmul.f32 %v1711, %v1726
        %v1729 = vmul.f32 %v1718, %v1726
        %v1730 = vmul.f32 %v1725, %v1726
        %vm1735 = vcmask 1041409
        %v1736 = vsel %vm1735, %v1729, %v1727
        %v1737 = vsel %vm1735, %v1730, %v1728
        %v1740 = vld [vmem:[%s31] sm:$0xff]
        %v1741 = vld [vmem:[%s31 + $0x8] sm:$0xff]
        %v1742 = vld [vmem:[%s31 + $0x10] sm:$0xff]
        %v1743 = vld [vmem:[%s31 + $0x18] sm:$0xff]
        %v1744 = vld [vmem:[%s31 + $0x20] sm:$0xff]
        %v1745 = vld [vmem:[%s31 + $0x28] sm:$0xff]
        %v1746 = vld [vmem:[%s31 + $0x30] sm:$0xff]
        %v1747 = vld [vmem:[%s31 + $0x38] sm:$0xff]
        %v1748 = vld [vmem:[%s31 + $0x40] sm:$0xff]
        %v1749 = vld [vmem:[%s31 + $0x48] sm:$0xff]
        %v1750 = vld [vmem:[%s31 + $0x50] sm:$0xff]
        %v1751 = vld [vmem:[%s31 + $0x58] sm:$0xff]
        %v1752 = vld [vmem:[%s31 + $0x60] sm:$0xff]
        %v1753 = vld [vmem:[%s31 + $0x68] sm:$0xff]
        %v1754 = vld [vmem:[%s31 + $0x70] sm:$0xff]
        %v1755 = vld [vmem:[%s31 + $0x78] sm:$0xff]
        %v1756 = vld [vmem:[%s31 + $0x80] sm:$0xff]
        %v1757 = vld [vmem:[%s31 + $0x88] sm:$0xff]
        %v1758 = vld [vmem:[%s31 + $0x90] sm:$0xff]
        %v1759 = vld [vmem:[%s31 + $0x98] sm:$0xff]
        %v1760 = vld [vmem:[%s31 + $0xa0] sm:$0xff]
        %v1761 = vld [vmem:[%s31 + $0xa8] sm:$0xff]
        %v1762 = vld [vmem:[%s31 + $0xb0] sm:$0xff]
        %v1763 = vld [vmem:[%s31 + $0xb8] sm:$0xff]
        %v1764 = vld [vmem:[%s31 + $0xc0] sm:$0xff]
        %v1765 = vld [vmem:[%s31 + $0xc8] sm:$0xff]
        %v1766 = vld [vmem:[%s31 + $0xd0] sm:$0xff]
        %v1767 = vld [vmem:[%s31 + $0xd8] sm:$0xff]
        %v1768 = vld [vmem:[%s31 + $0xe0] sm:$0xff]
        %v1769 = vld [vmem:[%s31 + $0xe8] sm:$0xff]
        %v1770 = vld [vmem:[%s31 + $0xf0] sm:$0xff]
        %v1771 = vld [vmem:[%s31 + $0xf8] sm:$0xff]
        %v1772 = vld [vmem:[%s31 + $0x100] sm:$0xff]
        %v1773 = vld [vmem:[%s31 + $0x108] sm:$0xff]
        %v1774 = vld [vmem:[%s31 + $0x110] sm:$0xff]
        %v1775 = vld [vmem:[%s31 + $0x118] sm:$0xff]
        %v1776 = vld [vmem:[%s31 + $0x120] sm:$0xff]
        %v1777 = vld [vmem:[%s31 + $0x128] sm:$0xff]
        %v1778 = vld [vmem:[%s31 + $0x130] sm:$0xff]
        %v1779 = vld [vmem:[%s31 + $0x138] sm:$0xff]
        %v1780 = vld [vmem:[%s31 + $0x140] sm:$0xff]
        %v1781 = vld [vmem:[%s31 + $0x148] sm:$0xff]
        %v1782 = vld [vmem:[%s31 + $0x150] sm:$0xff]
        %v1783 = vld [vmem:[%s31 + $0x158] sm:$0xff]
        %v1784 = vld [vmem:[%s31 + $0x160] sm:$0xff]
        %v1785 = vld [vmem:[%s31 + $0x168] sm:$0xff]
        %v1786 = vld [vmem:[%s31 + $0x170] sm:$0xff]
        %v1787 = vld [vmem:[%s31 + $0x178] sm:$0xff]
        %v1788 = vld [vmem:[%s31 + $0x180] sm:$0xff]
        %v1789 = vld [vmem:[%s31 + $0x188] sm:$0xff]
        %v1790 = vld [vmem:[%s31 + $0x190] sm:$0xff]
        %v1791 = vld [vmem:[%s31 + $0x198] sm:$0xff]
        %v1792 = vld [vmem:[%s31 + $0x1a0] sm:$0xff]
        %v1793 = vld [vmem:[%s31 + $0x1a8] sm:$0xff]
        %v1794 = vld [vmem:[%s31 + $0x1b0] sm:$0xff]
        %v1795 = vld [vmem:[%s31 + $0x1b8] sm:$0xff]
        %v1796 = vld [vmem:[%s31 + $0x1c0] sm:$0xff]
        %v1797 = vld [vmem:[%s31 + $0x1c8] sm:$0xff]
        %v1798 = vld [vmem:[%s31 + $0x1d0] sm:$0xff]
        %v1799 = vld [vmem:[%s31 + $0x1d8] sm:$0xff]
        %v1800 = vld [vmem:[%s31 + $0x1e0] sm:$0xff]
        %v1801 = vld [vmem:[%s31 + $0x1e8] sm:$0xff]
        %v1802 = vld [vmem:[%s31 + $0x1f0] sm:$0xff]
        %v1803 = vld [vmem:[%s31 + $0x1f8] sm:$0xff]
        %v1804 = vld [vmem:[%s31 + $0x200] sm:$0xff]
        %v1805 = vld [vmem:[%s31 + $0x208] sm:$0xff]
        %v1806 = vld [vmem:[%s31 + $0x210] sm:$0xff]
        %v1807 = vld [vmem:[%s31 + $0x218] sm:$0xff]
        %v1808 = vld [vmem:[%s31 + $0x220] sm:$0xff]
        %v1809 = vld [vmem:[%s31 + $0x228] sm:$0xff]
        %v1810 = vld [vmem:[%s31 + $0x230] sm:$0xff]
        %v1811 = vld [vmem:[%s31 + $0x238] sm:$0xff]
        %v1812 = vld [vmem:[%s31 + $0x240] sm:$0xff]
        %v1813 = vld [vmem:[%s31 + $0x248] sm:$0xff]
        %v1814 = vld [vmem:[%s31 + $0x250] sm:$0xff]
        %v1815 = vld [vmem:[%s31 + $0x258] sm:$0xff]
        %v1816 = vld [vmem:[%s31 + $0x260] sm:$0xff]
        %v1817 = vld [vmem:[%s31 + $0x268] sm:$0xff]
        %v1818 = vld [vmem:[%s31 + $0x270] sm:$0xff]
        %v1819 = vld [vmem:[%s31 + $0x278] sm:$0xff]
        %v1820 = vld [vmem:[%s31 + $0x280] sm:$0xff]
        %v1821 = vld [vmem:[%s31 + $0x288] sm:$0xff]
        %v1822 = vld [vmem:[%s31 + $0x290] sm:$0xff]
        %v1823 = vld [vmem:[%s31 + $0x298] sm:$0xff]
        %v1824 = vld [vmem:[%s31 + $0x2a0] sm:$0xff]
        %v1825 = vld [vmem:[%s31 + $0x2a8] sm:$0xff]
        %v1826 = vld [vmem:[%s31 + $0x2b0] sm:$0xff]
        %v1827 = vld [vmem:[%s31 + $0x2b8] sm:$0xff]
        %v1828 = vld [vmem:[%s31 + $0x2c0] sm:$0xff]
        %v1829 = vld [vmem:[%s31 + $0x2c8] sm:$0xff]
        %v1830 = vld [vmem:[%s31 + $0x2d0] sm:$0xff]
        %v1831 = vld [vmem:[%s31 + $0x2d8] sm:$0xff]
        %v1832 = vld [vmem:[%s31 + $0x2e0] sm:$0xff]
        %v1833 = vld [vmem:[%s31 + $0x2e8] sm:$0xff]
        %v1834 = vld [vmem:[%s31 + $0x2f0] sm:$0xff]
        %v1835 = vld [vmem:[%s31 + $0x2f8] sm:$0xff]
        %v1836 = vld [vmem:[%s31 + $0x300] sm:$0xff]
        %v1837 = vld [vmem:[%s31 + $0x308] sm:$0xff]
        %v1838 = vld [vmem:[%s31 + $0x310] sm:$0xff]
        %v1839 = vld [vmem:[%s31 + $0x318] sm:$0xff]
        %v1840 = vld [vmem:[%s31 + $0x320] sm:$0xff]
        %v1841 = vld [vmem:[%s31 + $0x328] sm:$0xff]
        %v1842 = vld [vmem:[%s31 + $0x330] sm:$0xff]
        %v1843 = vld [vmem:[%s31 + $0x338] sm:$0xff]
        %v1844 = vld [vmem:[%s31 + $0x340] sm:$0xff]
        %v1845 = vld [vmem:[%s31 + $0x348] sm:$0xff]
        %v1846 = vld [vmem:[%s31 + $0x350] sm:$0xff]
        %v1847 = vld [vmem:[%s31 + $0x358] sm:$0xff]
        %v1848 = vld [vmem:[%s31 + $0x360] sm:$0xff]
        %v1849 = vld [vmem:[%s31 + $0x368] sm:$0xff]
        %v1850 = vld [vmem:[%s31 + $0x370] sm:$0xff]
        %v1851 = vld [vmem:[%s31 + $0x378] sm:$0xff]
        %v1852 = vld [vmem:[%s31 + $0x380] sm:$0xff]
        %v1853 = vld [vmem:[%s31 + $0x388] sm:$0xff]
        %v1854 = vld [vmem:[%s31 + $0x390] sm:$0xff]
        %v1855 = vld [vmem:[%s31 + $0x398] sm:$0xff]
        %v1856 = vld [vmem:[%s31 + $0x3a0] sm:$0xff]
        %v1857 = vld [vmem:[%s31 + $0x3a8] sm:$0xff]
        %v1858 = vld [vmem:[%s31 + $0x3b0] sm:$0xff]
        %v1859 = vld [vmem:[%s31 + $0x3b8] sm:$0xff]
        %v1860 = vld [vmem:[%s31 + $0x3c0] sm:$0xff]
        %v1861 = vld [vmem:[%s31 + $0x3c8] sm:$0xff]
        %v1862 = vld [vmem:[%s31 + $0x3d0] sm:$0xff]
        %v1863 = vld [vmem:[%s31 + $0x3d8] sm:$0xff]
        %v1864 = vld [vmem:[%s31 + $0x3e0] sm:$0xff]
        %v1865 = vld [vmem:[%s31 + $0x3e8] sm:$0xff]
        %v1866 = vld [vmem:[%s31 + $0x3f0] sm:$0xff]
        %v1867 = vld [vmem:[%s31 + $0x3f8] sm:$0xff]
        %v1868 = vld [vmem:[%s31 + $0x400] sm:$0xff]
        %v1869 = vld [vmem:[%s31 + $0x408] sm:$0xff]
        %v1870 = vld [vmem:[%s31 + $0x410] sm:$0xff]
        %v1871 = vld [vmem:[%s31 + $0x418] sm:$0xff]
        %v1872 = vld [vmem:[%s31 + $0x420] sm:$0xff]
        %v1873 = vld [vmem:[%s31 + $0x428] sm:$0xff]
        %v1874 = vld [vmem:[%s31 + $0x430] sm:$0xff]
        %v1875 = vld [vmem:[%s31 + $0x438] sm:$0xff]
        %v1876 = vld [vmem:[%s31 + $0x440] sm:$0xff]
        %v1877 = vld [vmem:[%s31 + $0x448] sm:$0xff]
        %v1878 = vld [vmem:[%s31 + $0x450] sm:$0xff]
        %v1879 = vld [vmem:[%s31 + $0x458] sm:$0xff]
        %v1880 = vld [vmem:[%s31 + $0x460] sm:$0xff]
        %v1881 = vld [vmem:[%s31 + $0x468] sm:$0xff]
        %v1882 = vld [vmem:[%s31 + $0x470] sm:$0xff]
        %v1883 = vld [vmem:[%s31 + $0x478] sm:$0xff]
        %v1884 = vld [vmem:[%s31 + $0x480] sm:$0xff]
        %v1885 = vld [vmem:[%s31 + $0x488] sm:$0xff]
        %v1886 = vld [vmem:[%s31 + $0x490] sm:$0xff]
        %v1887 = vld [vmem:[%s31 + $0x498] sm:$0xff]
        %v1888 = vld [vmem:[%s31 + $0x4a0] sm:$0xff]
        %v1889 = vld [vmem:[%s31 + $0x4a8] sm:$0xff]
        %v1890 = vld [vmem:[%s31 + $0x4b0] sm:$0xff]
        %v1891 = vld [vmem:[%s31 + $0x4b8] sm:$0xff]
        %v1892 = vld [vmem:[%s31 + $0x4c0] sm:$0xff]
        %v1893 = vld [vmem:[%s31 + $0x4c8] sm:$0xff]
        %v1894 = vld [vmem:[%s31 + $0x4d0] sm:$0xff]
        %v1895 = vld [vmem:[%s31 + $0x4d8] sm:$0xff]
        %v1896 = vld [vmem:[%s31 + $0x4e0] sm:$0xff]
        %v1897 = vld [vmem:[%s31 + $0x4e8] sm:$0xff]
        %v1898 = vld [vmem:[%s31 + $0x4f0] sm:$0xff]
        %v1899 = vld [vmem:[%s31 + $0x4f8] sm:$0xff]
        %v1900 = vld [vmem:[%s31 + $0x500] sm:$0xff]
        %v1901 = vld [vmem:[%s31 + $0x508] sm:$0xff]
        %v1902 = vld [vmem:[%s31 + $0x510] sm:$0xff]
        %v1903 = vld [vmem:[%s31 + $0x518] sm:$0xff]
        %v1904 = vld [vmem:[%s31 + $0x520] sm:$0xff]
        %v1905 = vld [vmem:[%s31 + $0x528] sm:$0xff]
        %v1906 = vld [vmem:[%s31 + $0x530] sm:$0xff]
        %v1907 = vld [vmem:[%s31 + $0x538] sm:$0xff]
        %v1908 = vld [vmem:[%s31 + $0x540] sm:$0xff]
        %v1909 = vld [vmem:[%s31 + $0x548] sm:$0xff]
        %v1910 = vld [vmem:[%s31 + $0x550] sm:$0xff]
        %v1911 = vld [vmem:[%s31 + $0x558] sm:$0xff]
        %v1912 = vld [vmem:[%s31 + $0x560] sm:$0xff]
        %v1913 = vld [vmem:[%s31 + $0x568] sm:$0xff]
        %v1914 = vld [vmem:[%s31 + $0x570] sm:$0xff]
        %v1915 = vld [vmem:[%s31 + $0x578] sm:$0xff]
        %v1916 = vld [vmem:[%s31 + $0x580] sm:$0xff]
        %v1917 = vld [vmem:[%s31 + $0x588] sm:$0xff]
        %v1918 = vld [vmem:[%s31 + $0x590] sm:$0xff]
        %v1919 = vld [vmem:[%s31 + $0x598] sm:$0xff]
        %v1920 = vld [vmem:[%s31 + $0x5a0] sm:$0xff]
        %v1921 = vld [vmem:[%s31 + $0x5a8] sm:$0xff]
        %v1922 = vld [vmem:[%s31 + $0x5b0] sm:$0xff]
        %v1923 = vld [vmem:[%s31 + $0x5b8] sm:$0xff]
        %v1924 = vld [vmem:[%s31 + $0x5c0] sm:$0xff]
        %v1925 = vld [vmem:[%s31 + $0x5c8] sm:$0xff]
        %v1926 = vld [vmem:[%s31 + $0x5d0] sm:$0xff]
        %v1927 = vld [vmem:[%s31 + $0x5d8] sm:$0xff]
        %v1928 = vld [vmem:[%s31 + $0x5e0] sm:$0xff]
        %v1929 = vld [vmem:[%s31 + $0x5e8] sm:$0xff]
        %v1930 = vld [vmem:[%s31 + $0x5f0] sm:$0xff]
        %v1931 = vld [vmem:[%s31 + $0x5f8] sm:$0xff]
        %v1932 = vld [vmem:[%s31 + $0x600] sm:$0xff]
        %v1933 = vld [vmem:[%s31 + $0x608] sm:$0xff]
        %v1934 = vld [vmem:[%s31 + $0x610] sm:$0xff]
        %v1935 = vld [vmem:[%s31 + $0x618] sm:$0xff]
        %v1936 = vld [vmem:[%s31 + $0x620] sm:$0xff]
        %v1937 = vld [vmem:[%s31 + $0x628] sm:$0xff]
        %v1938 = vld [vmem:[%s31 + $0x630] sm:$0xff]
        %v1939 = vld [vmem:[%s31 + $0x638] sm:$0xff]
        %v1940 = vld [vmem:[%s31 + $0x640] sm:$0xff]
        %v1941 = vld [vmem:[%s31 + $0x648] sm:$0xff]
        %v1942 = vld [vmem:[%s31 + $0x650] sm:$0xff]
        %v1943 = vld [vmem:[%s31 + $0x658] sm:$0xff]
        %v1944 = vld [vmem:[%s31 + $0x660] sm:$0xff]
        %v1945 = vld [vmem:[%s31 + $0x668] sm:$0xff]
        %v1946 = vld [vmem:[%s31 + $0x670] sm:$0xff]
        %v1947 = vld [vmem:[%s31 + $0x678] sm:$0xff]
        %v1948 = vld [vmem:[%s31 + $0x680] sm:$0xff]
        %v1949 = vld [vmem:[%s31 + $0x688] sm:$0xff]
        %v1950 = vld [vmem:[%s31 + $0x690] sm:$0xff]
        %v1951 = vld [vmem:[%s31 + $0x698] sm:$0xff]
        %v1952 = vld [vmem:[%s31 + $0x6a0] sm:$0xff]
        %v1953 = vld [vmem:[%s31 + $0x6a8] sm:$0xff]
        %v1954 = vld [vmem:[%s31 + $0x6b0] sm:$0xff]
        %v1955 = vld [vmem:[%s31 + $0x6b8] sm:$0xff]
        %v1956 = vld [vmem:[%s31 + $0x6c0] sm:$0xff]
        %v1957 = vld [vmem:[%s31 + $0x6c8] sm:$0xff]
        %v1958 = vld [vmem:[%s31 + $0x6d0] sm:$0xff]
        %v1959 = vld [vmem:[%s31 + $0x6d8] sm:$0xff]
        %v1960 = vld [vmem:[%s31 + $0x6e0] sm:$0xff]
        %v1961 = vld [vmem:[%s31 + $0x6e8] sm:$0xff]
        %v1962 = vld [vmem:[%s31 + $0x6f0] sm:$0xff]
        %v1963 = vld [vmem:[%s31 + $0x6f8] sm:$0xff]
        %v1964 = vld [vmem:[%s31 + $0x700] sm:$0xff]
        %v1965 = vld [vmem:[%s31 + $0x708] sm:$0xff]
        %v1966 = vld [vmem:[%s31 + $0x710] sm:$0xff]
        %v1967 = vld [vmem:[%s31 + $0x718] sm:$0xff]
        %v1968 = vld [vmem:[%s31 + $0x720] sm:$0xff]
        %v1969 = vld [vmem:[%s31 + $0x728] sm:$0xff]
        %v1970 = vld [vmem:[%s31 + $0x730] sm:$0xff]
        %v1971 = vld [vmem:[%s31 + $0x738] sm:$0xff]
        %v1972 = vld [vmem:[%s31 + $0x740] sm:$0xff]
        %v1973 = vld [vmem:[%s31 + $0x748] sm:$0xff]
        %v1974 = vld [vmem:[%s31 + $0x750] sm:$0xff]
        %v1975 = vld [vmem:[%s31 + $0x758] sm:$0xff]
        %v1976 = vld [vmem:[%s31 + $0x760] sm:$0xff]
        %v1977 = vld [vmem:[%s31 + $0x768] sm:$0xff]
        %v1978 = vld [vmem:[%s31 + $0x770] sm:$0xff]
        %v1979 = vld [vmem:[%s31 + $0x778] sm:$0xff]
        %v1980 = vld [vmem:[%s31 + $0x780] sm:$0xff]
        %v1981 = vld [vmem:[%s31 + $0x788] sm:$0xff]
        %v1982 = vld [vmem:[%s31 + $0x790] sm:$0xff]
        %v1983 = vld [vmem:[%s31 + $0x798] sm:$0xff]
        %v1984 = vld [vmem:[%s31 + $0x7a0] sm:$0xff]
        %v1985 = vld [vmem:[%s31 + $0x7a8] sm:$0xff]
        %v1986 = vld [vmem:[%s31 + $0x7b0] sm:$0xff]
        %v1987 = vld [vmem:[%s31 + $0x7b8] sm:$0xff]
        %v1988 = vld [vmem:[%s31 + $0x7c0] sm:$0xff]
        %v1989 = vld [vmem:[%s31 + $0x7c8] sm:$0xff]
        %v1990 = vld [vmem:[%s31 + $0x7d0] sm:$0xff]
        %v1991 = vld [vmem:[%s31 + $0x7d8] sm:$0xff]
        %v1992 = vld [vmem:[%s31 + $0x7e0] sm:$0xff]
        %v1993 = vld [vmem:[%s31 + $0x7e8] sm:$0xff]
        %v1994 = vld [vmem:[%s31 + $0x7f0] sm:$0xff]
        %v1995 = vld [vmem:[%s31 + $0x7f8] sm:$0xff]
        %v1996 = vld [vmem:[#allocation12] sm:$0xff]
        %v1997 = vld [vmem:[#allocation12 + $0x8] sm:$0xff]
        %v1998 = vld [vmem:[#allocation12 + $0x10] sm:$0xff]
        %v1999 = vld [vmem:[#allocation12 + $0x18] sm:$0xff]
        %v2000 = vld [vmem:[#allocation12 + $0x20] sm:$0xff]
        %v2001 = vld [vmem:[#allocation12 + $0x28] sm:$0xff]
        %v2002 = vld [vmem:[#allocation12 + $0x30] sm:$0xff]
        %v2003 = vld [vmem:[#allocation12 + $0x38] sm:$0xff]
        %v2004 = vld [vmem:[#allocation12 + $0x40] sm:$0xff]
        %v2005 = vld [vmem:[#allocation12 + $0x48] sm:$0xff]
        %v2006 = vld [vmem:[#allocation12 + $0x50] sm:$0xff]
        %v2007 = vld [vmem:[#allocation12 + $0x58] sm:$0xff]
        %v2008 = vld [vmem:[#allocation12 + $0x60] sm:$0xff]
        %v2009 = vld [vmem:[#allocation12 + $0x68] sm:$0xff]
        %v2010 = vld [vmem:[#allocation12 + $0x70] sm:$0xff]
        %v2011 = vld [vmem:[#allocation12 + $0x78] sm:$0xff]
        %v2012 = vld [vmem:[#allocation12 + $0x80] sm:$0xff]
        %v2013 = vld [vmem:[#allocation12 + $0x88] sm:$0xff]
        %v2014 = vld [vmem:[#allocation12 + $0x90] sm:$0xff]
        %v2015 = vld [vmem:[#allocation12 + $0x98] sm:$0xff]
        %v2016 = vld [vmem:[#allocation12 + $0xa0] sm:$0xff]
        %v2017 = vld [vmem:[#allocation12 + $0xa8] sm:$0xff]
        %v2018 = vld [vmem:[#allocation12 + $0xb0] sm:$0xff]
        %v2019 = vld [vmem:[#allocation12 + $0xb8] sm:$0xff]
        %v2020 = vld [vmem:[#allocation12 + $0xc0] sm:$0xff]
        %v2021 = vld [vmem:[#allocation12 + $0xc8] sm:$0xff]
        %v2022 = vld [vmem:[#allocation12 + $0xd0] sm:$0xff]
        %v2023 = vld [vmem:[#allocation12 + $0xd8] sm:$0xff]
        %v2024 = vld [vmem:[#allocation12 + $0xe0] sm:$0xff]
        %v2025 = vld [vmem:[#allocation12 + $0xe8] sm:$0xff]
        %v2026 = vld [vmem:[#allocation12 + $0xf0] sm:$0xff]
        %v2027 = vld [vmem:[#allocation12 + $0xf8] sm:$0xff]
        %v2028 = vld [vmem:[#allocation12 + $0x100] sm:$0xff]
        %v2029 = vld [vmem:[#allocation12 + $0x108] sm:$0xff]
        %v2030 = vld [vmem:[#allocation12 + $0x110] sm:$0xff]
        %v2031 = vld [vmem:[#allocation12 + $0x118] sm:$0xff]
        %v2032 = vld [vmem:[#allocation12 + $0x120] sm:$0xff]
        %v2033 = vld [vmem:[#allocation12 + $0x128] sm:$0xff]
        %v2034 = vld [vmem:[#allocation12 + $0x130] sm:$0xff]
        %v2035 = vld [vmem:[#allocation12 + $0x138] sm:$0xff]
        %v2036 = vld [vmem:[#allocation12 + $0x140] sm:$0xff]
        %v2037 = vld [vmem:[#allocation12 + $0x148] sm:$0xff]
        %v2038 = vld [vmem:[#allocation12 + $0x150] sm:$0xff]
        %v2039 = vld [vmem:[#allocation12 + $0x158] sm:$0xff]
        %v2040 = vld [vmem:[#allocation12 + $0x160] sm:$0xff]
        %v2041 = vld [vmem:[#allocation12 + $0x168] sm:$0xff]
        %v2042 = vld [vmem:[#allocation12 + $0x170] sm:$0xff]
        %v2043 = vld [vmem:[#allocation12 + $0x178] sm:$0xff]
        %v2044 = vld [vmem:[#allocation12 + $0x180] sm:$0xff]
        %v2045 = vld [vmem:[#allocation12 + $0x188] sm:$0xff]
        %v2046 = vld [vmem:[#allocation12 + $0x190] sm:$0xff]
        %v2047 = vld [vmem:[#allocation12 + $0x198] sm:$0xff]
        %v2048 = vld [vmem:[#allocation12 + $0x1a0] sm:$0xff]
        %v2049 = vld [vmem:[#allocation12 + $0x1a8] sm:$0xff]
        %v2050 = vld [vmem:[#allocation12 + $0x1b0] sm:$0xff]
        %v2051 = vld [vmem:[#allocation12 + $0x1b8] sm:$0xff]
        %v2052 = vld [vmem:[#allocation12 + $0x1c0] sm:$0xff]
        %v2053 = vld [vmem:[#allocation12 + $0x1c8] sm:$0xff]
        %v2054 = vld [vmem:[#allocation12 + $0x1d0] sm:$0xff]
        %v2055 = vld [vmem:[#allocation12 + $0x1d8] sm:$0xff]
        %v2056 = vld [vmem:[#allocation12 + $0x1e0] sm:$0xff]
        %v2057 = vld [vmem:[#allocation12 + $0x1e8] sm:$0xff]
        %v2058 = vld [vmem:[#allocation12 + $0x1f0] sm:$0xff]
        %v2059 = vld [vmem:[#allocation12 + $0x1f8] sm:$0xff]
        %2060 = vmatprep.subr.mxu0 %v2057
        %2061 = vmatpush1.msra.mxu0 %v2056
        %2062 = vmatprep.subr.mxu0 %v2053
        %2063 = vmatpush1.msra.mxu0 %v2052
        %2064 = vmatprep.subr.mxu0 %v2049
        %2065 = vmatpush1.msra.mxu0 %v2048
        %2066 = vmatprep.subr.mxu0 %v2045
        %2067 = vmatpush1.msra.mxu0 %v2044
        %2068 = vmatprep.subr.mxu0 %v2041
        %2069 = vmatpush1.msra.mxu0 %v2040
        %2070 = vmatprep.subr.mxu0 %v2037
        %2071 = vmatpush1.msra.mxu0 %v2036
        %2072 = vmatprep.subr.mxu0 %v2033
        %2073 = vmatpush1.msra.mxu0 %v2032
        %2074 = vmatprep.subr.mxu0 %v2029
        %2075 = vmatpush1.msra.mxu0 %v2028
        %2076 = vmatprep.subr.mxu0 %v2025
        %2077 = vmatpush1.msra.mxu0 %v2024
        %2078 = vmatprep.subr.mxu0 %v2021
        %2079 = vmatpush1.msra.mxu0 %v2020
        %2080 = vmatprep.subr.mxu0 %v2017
        %2081 = vmatpush1.msra.mxu0 %v2016
        %2082 = vmatprep.subr.mxu0 %v2013
        %2083 = vmatpush1.msra.mxu0 %v2012
        %2084 = vmatprep.subr.mxu0 %v2009
        %2085 = vmatpush1.msra.mxu0 %v2008
        %2086 = vmatprep.subr.mxu0 %v2005
        %2087 = vmatpush1.msra.mxu0 %v2004
        %2088 = vmatprep.subr.mxu0 %v2001
        %2089 = vmatpush1.msra.mxu0 %v2000
        %2090 = vmatprep.subr.mxu0 %v1997
        %2091 = vmatpush1.msra.mxu0 %v1996
        %2092 = vmatprep.subr.mxu0 0.0
        %2093 = vmatpush2.msra.mxu0 0.0
        %2094 = vmatprep.subr.mxu0 0.0
        %2095 = vmatpush2.msra.mxu0 0.0
        %2096 = vmatprep.subr.mxu0 0.0
        %2097 = vmatpush2.msra.mxu0 0.0
        %2098 = vmatprep.subr.mxu0 0.0
        %2099 = vmatpush2.msra.mxu0 0.0
        %2100 = vmatprep.subr.mxu0 0.0
        %2101 = vmatpush2.msra.mxu0 0.0
        %2102 = vmatprep.subr.mxu0 0.0
        %2103 = vmatpush2.msra.mxu0 0.0
        %2104 = vmatprep.subr.mxu0 0.0
        %2105 = vmatpush2.msra.mxu0 0.0
        %2106 = vmatprep.subr.mxu0 0.0
        %2107 = vmatpush2.msra.mxu0 0.0
        %2108 = vmatprep.subr.mxu0 0.0
        %2109 = vmatpush2.msra.mxu0 0.0
        %2110 = vmatprep.subr.mxu0 0.0
        %2111 = vmatpush2.msra.mxu0 0.0
        %2112 = vmatprep.subr.mxu0 0.0
        %2113 = vmatpush2.msra.mxu0 0.0
        %2114 = vmatprep.subr.mxu0 0.0
        %2115 = vmatpush2.msra.mxu0 0.0
        %2116 = vmatprep.subr.mxu0 0.0
        %2117 = vmatpush2.msra.mxu0 0.0
        %2118 = vmatprep.subr.mxu0 0.0
        %2119 = vmatpush2.msra.mxu0 0.0
        %2120 = vmatprep.subr.mxu0 0.0
        %2121 = vmatpush2.msra.mxu0 0.0
        %2122 = vmatprep.subr.mxu0 0.0
        %2123 = vmatpush2.msra.mxu0 0.0
        %2124 = vmatprep.mubr.f32.mxu0 0.0
        %2125 = vmatmul.mubr.f32.gmra.mxu0 %v1047
        %v2126 = vpop.f32.mrf.mxu0
        %v2127 = vadd.f32 0.0, %v2126
        %v2128 = vpop.f32.mrf.mxu0
        %v2129 = vadd.f32 0.0, %v2128
        %2130 = vdwg.mxu0
        %2131 = vmatprep.subr.mxu0 %v2059
        %2132 = vmatpush1.msra.mxu0 %v2058
        %2133 = vmatprep.subr.mxu0 %v2055
        %2134 = vmatpush1.msra.mxu0 %v2054
        %2135 = vmatprep.subr.mxu0 %v2051
        %2136 = vmatpush1.msra.mxu0 %v2050
        %2137 = vmatprep.subr.mxu0 %v2047
        %2138 = vmatpush1.msra.mxu0 %v2046
        %2139 = vmatprep.subr.mxu0 %v2043
        %2140 = vmatpush1.msra.mxu0 %v2042
        %2141 = vmatprep.subr.mxu0 %v2039
        %2142 = vmatpush1.msra.mxu0 %v2038
        %2143 = vmatprep.subr.mxu0 %v2035
        %2144 = vmatpush1.msra.mxu0 %v2034
        %2145 = vmatprep.subr.mxu0 %v2031
        %2146 = vmatpush1.msra.mxu0 %v2030
        %2147 = vmatprep.subr.mxu0 %v2027
        %2148 = vmatpush1.msra.mxu0 %v2026
        %2149 = vmatprep.subr.mxu0 %v2023
        %2150 = vmatpush1.msra.mxu0 %v2022
        %2151 = vmatprep.subr.mxu0 %v2019
        %2152 = vmatpush1.msra.mxu0 %v2018
        %2153 = vmatprep.subr.mxu0 %v2015
        %2154 = vmatpush1.msra.mxu0 %v2014
        %2155 = vmatprep.subr.mxu0 %v2011
        %2156 = vmatpush1.msra.mxu0 %v2010
        %2157 = vmatprep.subr.mxu0 %v2007
        %2158 = vmatpush1.msra.mxu0 %v2006
        %2159 = vmatprep.subr.mxu0 %v2003
        %2160 = vmatpush1.msra.mxu0 %v2002
        %2161 = vmatprep.subr.mxu0 %v1999
        %2162 = vmatpush1.msra.mxu0 %v1998
        %2163 = vmatprep.subr.mxu0 0.0
        %2164 = vmatpush2.msra.mxu0 0.0
        %2165 = vmatprep.subr.mxu0 0.0
        %2166 = vmatpush2.msra.mxu0 0.0
        %2167 = vmatprep.subr.mxu0 0.0
        %2168 = vmatpush2.msra.mxu0 0.0
        %2169 = vmatprep.subr.mxu0 0.0
        %2170 = vmatpush2.msra.mxu0 0.0
        %2171 = vmatprep.subr.mxu0 0.0
        %2172 = vmatpush2.msra.mxu0 0.0
        %2173 = vmatprep.subr.mxu0 0.0
        %2174 = vmatpush2.msra.mxu0 0.0
        %2175 = vmatprep.subr.mxu0 0.0
        %2176 = vmatpush2.msra.mxu0 0.0
        %2177 = vmatprep.subr.mxu0 0.0
        %2178 = vmatpush2.msra.mxu0 0.0
        %2179 = vmatprep.subr.mxu0 0.0
        %2180 = vmatpush2.msra.mxu0 0.0
        %2181 = vmatprep.subr.mxu0 0.0
        %2182 = vmatpush2.msra.mxu0 0.0
        %2183 = vmatprep.subr.mxu0 0.0
        %2184 = vmatpush2.msra.mxu0 0.0
        %2185 = vmatprep.subr.mxu0 0.0
        %2186 = vmatpush2.msra.mxu0 0.0
        %2187 = vmatprep.subr.mxu0 0.0
        %2188 = vmatpush2.msra.mxu0 0.0
        %2189 = vmatprep.subr.mxu0 0.0
        %2190 = vmatpush2.msra.mxu0 0.0
        %2191 = vmatprep.subr.mxu0 0.0
        %2192 = vmatpush2.msra.mxu0 0.0
        %2193 = vmatprep.subr.mxu0 0.0
        %2194 = vmatpush2.msra.mxu0 0.0
        %2195 = vmatprep.mubr.f32.mxu0 0.0
        %2196 = vmatmul.mubr.f32.gmra.mxu0 %v1047
        %v2197 = vpop.f32.mrf.mxu0
        %v2198 = vadd.f32 0.0, %v2197
        %v2199 = vpop.f32.mrf.mxu0
        %v2200 = vadd.f32 0.0, %v2199
        %2201 = vdwg.mxu0
        %2202 = vmatprep.subr.mxu0 %v1801
        %2203 = vmatpush1.msra.mxu0 %v1800
        %2204 = vmatprep.subr.mxu0 %v1797
        %2205 = vmatpush1.msra.mxu0 %v1796
        %2206 = vmatprep.subr.mxu0 %v1793
        %2207 = vmatpush1.msra.mxu0 %v1792
        %2208 = vmatprep.subr.mxu0 %v1789
        %2209 = vmatpush1.msra.mxu0 %v1788
        %2210 = vmatprep.subr.mxu0 %v1785
        %2211 = vmatpush1.msra.mxu0 %v1784
        %2212 = vmatprep.subr.mxu0 %v1781
        %2213 = vmatpush1.msra.mxu0 %v1780
        %2214 = vmatprep.subr.mxu0 %v1777
        %2215 = vmatpush1.msra.mxu0 %v1776
        %2216 = vmatprep.subr.mxu0 %v1773
        %2217 = vmatpush1.msra.mxu0 %v1772
        %2218 = vmatprep.subr.mxu0 %v1769
        %2219 = vmatpush1.msra.mxu0 %v1768
        %2220 = vmatprep.subr.mxu0 %v1765
        %2221 = vmatpush1.msra.mxu0 %v1764
        %2222 = vmatprep.subr.mxu0 %v1761
        %2223 = vmatpush1.msra.mxu0 %v1760
        %2224 = vmatprep.subr.mxu0 %v1757
        %2225 = vmatpush1.msra.mxu0 %v1756
        %2226 = vmatprep.subr.mxu0 %v1753
        %2227 = vmatpush1.msra.mxu0 %v1752
        %2228 = vmatprep.subr.mxu0 %v1749
        %2229 = vmatpush1.msra.mxu0 %v1748
        %2230 = vmatprep.subr.mxu0 %v1745
        %2231 = vmatpush1.msra.mxu0 %v1744
        %2232 = vmatprep.subr.mxu0 %v1741
        %2233 = vmatpush1.msra.mxu0 %v1740
        %2234 = vmatprep.subr.mxu0 %v1865
        %2235 = vmatpush2.msra.mxu0 %v1864
        %2236 = vmatprep.subr.mxu0 %v1861
        %2237 = vmatpush2.msra.mxu0 %v1860
        %2238 = vmatprep.subr.mxu0 %v1857
        %2239 = vmatpush2.msra.mxu0 %v1856
        %2240 = vmatprep.subr.mxu0 %v1853
        %2241 = vmatpush2.msra.mxu0 %v1852
        %2242 = vmatprep.subr.mxu0 %v1849
        %2243 = vmatpush2.msra.mxu0 %v1848
        %2244 = vmatprep.subr.mxu0 %v1845
        %2245 = vmatpush2.msra.mxu0 %v1844
        %2246 = vmatprep.subr.mxu0 %v1841
        %2247 = vmatpush2.msra.mxu0 %v1840
        %2248 = vmatprep.subr.mxu0 %v1837
        %2249 = vmatpush2.msra.mxu0 %v1836
        %2250 = vmatprep.subr.mxu0 %v1833
        %2251 = vmatpush2.msra.mxu0 %v1832
        %2252 = vmatprep.subr.mxu0 %v1829
        %2253 = vmatpush2.msra.mxu0 %v1828
        %2254 = vmatprep.subr.mxu0 %v1825
        %2255 = vmatpush2.msra.mxu0 %v1824
        %2256 = vmatprep.subr.mxu0 %v1821
        %2257 = vmatpush2.msra.mxu0 %v1820
        %2258 = vmatprep.subr.mxu0 %v1817
        %2259 = vmatpush2.msra.mxu0 %v1816
        %2260 = vmatprep.subr.mxu0 %v1813
        %2261 = vmatpush2.msra.mxu0 %v1812
        %2262 = vmatprep.subr.mxu0 %v1809
        %2263 = vmatpush2.msra.mxu0 %v1808
        %2264 = vmatprep.subr.mxu0 %v1805
        %2265 = vmatpush2.msra.mxu0 %v1804
        %2266 = vmatprep.mubr.f32.mxu0 %v1736
        %2267 = vmatmul.mubr.f32.gmra.mxu0 %v1049
        %v2268 = vpop.f32.mrf.mxu0
        %v2269 = vadd.f32 %v2127, %v2268
        %v2270 = vpop.f32.mrf.mxu0
        %v2271 = vadd.f32 %v2129, %v2270
        %2272 = vdwg.mxu0
        %2273 = vmatprep.subr.mxu0 %v1929
        %2274 = vmatpush1.msra.mxu0 %v1928
        %2275 = vmatprep.subr.mxu0 %v1925
        %2276 = vmatpush1.msra.mxu0 %v1924
        %2277 = vmatprep.subr.mxu0 %v1921
        %2278 = vmatpush1.msra.mxu0 %v1920
        %2279 = vmatprep.subr.mxu0 %v1917
        %2280 = vmatpush1.msra.mxu0 %v1916
        %2281 = vmatprep.subr.mxu0 %v1913
        %2282 = vmatpush1.msra.mxu0 %v1912
        %2283 = vmatprep.subr.mxu0 %v1909
        %2284 = vmatpush1.msra.mxu0 %v1908
        %2285 = vmatprep.subr.mxu0 %v1905
        %2286 = vmatpush1.msra.mxu0 %v1904
        %2287 = vmatprep.subr.mxu0 %v1901
        %2288 = vmatpush1.msra.mxu0 %v1900
        %2289 = vmatprep.subr.mxu0 %v1897
        %2290 = vmatpush1.msra.mxu0 %v1896
        %2291 = vmatprep.subr.mxu0 %v1893
        %2292 = vmatpush1.msra.mxu0 %v1892
        %2293 = vmatprep.subr.mxu0 %v1889
        %2294 = vmatpush1.msra.mxu0 %v1888
        %2295 = vmatprep.subr.mxu0 %v1885
        %2296 = vmatpush1.msra.mxu0 %v1884
        %2297 = vmatprep.subr.mxu0 %v1881
        %2298 = vmatpush1.msra.mxu0 %v1880
        %2299 = vmatprep.subr.mxu0 %v1877
        %2300 = vmatpush1.msra.mxu0 %v1876
        %2301 = vmatprep.subr.mxu0 %v1873
        %2302 = vmatpush1.msra.mxu0 %v1872
        %2303 = vmatprep.subr.mxu0 %v1869
        %2304 = vmatpush1.msra.mxu0 %v1868
        %2305 = vmatprep.subr.mxu0 %v1993
        %2306 = vmatpush2.msra.mxu0 %v1992
        %2307 = vmatprep.subr.mxu0 %v1989
        %2308 = vmatpush2.msra.mxu0 %v1988
        %2309 = vmatprep.subr.mxu0 %v1985
        %2310 = vmatpush2.msra.mxu0 %v1984
        %2311 = vmatprep.subr.mxu0 %v1981
        %2312 = vmatpush2.msra.mxu0 %v1980
        %2313 = vmatprep.subr.mxu0 %v1977
        %2314 = vmatpush2.msra.mxu0 %v1976
        %2315 = vmatprep.subr.mxu0 %v1973
        %2316 = vmatpush2.msra.mxu0 %v1972
        %2317 = vmatprep.subr.mxu0 %v1969
        %2318 = vmatpush2.msra.mxu0 %v1968
        %2319 = vmatprep.subr.mxu0 %v1965
        %2320 = vmatpush2.msra.mxu0 %v1964
        %2321 = vmatprep.subr.mxu0 %v1961
        %2322 = vmatpush2.msra.mxu0 %v1960
        %2323 = vmatprep.subr.mxu0 %v1957
        %2324 = vmatpush2.msra.mxu0 %v1956
        %2325 = vmatprep.subr.mxu0 %v1953
        %2326 = vmatpush2.msra.mxu0 %v1952
        %2327 = vmatprep.subr.mxu0 %v1949
        %2328 = vmatpush2.msra.mxu0 %v1948
        %2329 = vmatprep.subr.mxu0 %v1945
        %2330 = vmatpush2.msra.mxu0 %v1944
        %2331 = vmatprep.subr.mxu0 %v1941
        %2332 = vmatpush2.msra.mxu0 %v1940
        %2333 = vmatprep.subr.mxu0 %v1937
        %2334 = vmatpush2.msra.mxu0 %v1936
        %2335 = vmatprep.subr.mxu0 %v1933
        %2336 = vmatpush2.msra.mxu0 %v1932
        %2337 = vmatprep.mubr.f32.mxu0 %v1046
        %2338 = vmatmul.mubr.f32.gmra.mxu0 %v1737
        %v2339 = vpop.f32.mrf.mxu0
        %v2340 = vadd.f32 %v2269, %v2339
        %v2341 = vpop.f32.mrf.mxu0
        %v2342 = vadd.f32 %v2271, %v2341
        %2343 = vdwg.mxu0
        %2344 = vmatprep.subr.mxu0 %v1803
        %2345 = vmatpush1.msra.mxu0 %v1802
        %2346 = vmatprep.subr.mxu0 %v1799
        %2347 = vmatpush1.msra.mxu0 %v1798
        %2348 = vmatprep.subr.mxu0 %v1795
        %2349 = vmatpush1.msra.mxu0 %v1794
        %2350 = vmatprep.subr.mxu0 %v1791
        %2351 = vmatpush1.msra.mxu0 %v1790
        %2352 = vmatprep.subr.mxu0 %v1787
        %2353 = vmatpush1.msra.mxu0 %v1786
        %2354 = vmatprep.subr.mxu0 %v1783
        %2355 = vmatpush1.msra.mxu0 %v1782
        %2356 = vmatprep.subr.mxu0 %v1779
        %2357 = vmatpush1.msra.mxu0 %v1778
        %2358 = vmatprep.subr.mxu0 %v1775
        %2359 = vmatpush1.msra.mxu0 %v1774
        %2360 = vmatprep.subr.mxu0 %v1771
        %2361 = vmatpush1.msra.mxu0 %v1770
        %2362 = vmatprep.subr.mxu0 %v1767
        %2363 = vmatpush1.msra.mxu0 %v1766
        %2364 = vmatprep.subr.mxu0 %v1763
        %2365 = vmatpush1.msra.mxu0 %v1762
        %2366 = vmatprep.subr.mxu0 %v1759
        %2367 = vmatpush1.msra.mxu0 %v1758
        %2368 = vmatprep.subr.mxu0 %v1755
        %2369 = vmatpush1.msra.mxu0 %v1754
        %2370 = vmatprep.subr.mxu0 %v1751
        %2371 = vmatpush1.msra.mxu0 %v1750
        %2372 = vmatprep.subr.mxu0 %v1747
        %2373 = vmatpush1.msra.mxu0 %v1746
        %2374 = vmatprep.subr.mxu0 %v1743
        %2375 = vmatpush1.msra.mxu0 %v1742
        %2376 = vmatprep.subr.mxu0 %v1867
        %2377 = vmatpush2.msra.mxu0 %v1866
        %2378 = vmatprep.subr.mxu0 %v1863
        %2379 = vmatpush2.msra.mxu0 %v1862
        %2380 = vmatprep.subr.mxu0 %v1859
        %2381 = vmatpush2.msra.mxu0 %v1858
        %2382 = vmatprep.subr.mxu0 %v1855
        %2383 = vmatpush2.msra.mxu0 %v1854
        %2384 = vmatprep.subr.mxu0 %v1851
        %2385 = vmatpush2.msra.mxu0 %v1850
        %2386 = vmatprep.subr.mxu0 %v1847
        %2387 = vmatpush2.msra.mxu0 %v1846
        %2388 = vmatprep.subr.mxu0 %v1843
        %2389 = vmatpush2.msra.mxu0 %v1842
        %2390 = vmatprep.subr.mxu0 %v1839
        %2391 = vmatpush2.msra.mxu0 %v1838
        %2392 = vmatprep.subr.mxu0 %v1835
        %2393 = vmatpush2.msra.mxu0 %v1834
        %2394 = vmatprep.subr.mxu0 %v1831
        %2395 = vmatpush2.msra.mxu0 %v1830
        %2396 = vmatprep.subr.mxu0 %v1827
        %2397 = vmatpush2.msra.mxu0 %v1826
        %2398 = vmatprep.subr.mxu0 %v1823
        %2399 = vmatpush2.msra.mxu0 %v1822
        %2400 = vmatprep.subr.mxu0 %v1819
        %2401 = vmatpush2.msra.mxu0 %v1818
        %2402 = vmatprep.subr.mxu0 %v1815
        %2403 = vmatpush2.msra.mxu0 %v1814
        %2404 = vmatprep.subr.mxu0 %v1811
        %2405 = vmatpush2.msra.mxu0 %v1810
        %2406 = vmatprep.subr.mxu0 %v1807
        %2407 = vmatpush2.msra.mxu0 %v1806
        %2408 = vmatprep.mubr.f32.mxu0 %v1736
        %2409 = vmatmul.mubr.f32.gmra.mxu0 %v1049
        %v2410 = vpop.f32.mrf.mxu0
        %v2411 = vadd.f32 %v2198, %v2410
        %v2412 = vpop.f32.mrf.mxu0
        %v2413 = vadd.f32 %v2200, %v2412
        %2414 = vdwg.mxu0
        %2415 = vmatprep.subr.mxu0 %v1931
        %2416 = vmatpush1.msra.mxu0 %v1930
        %2417 = vmatprep.subr.mxu0 %v1927
        %2418 = vmatpush1.msra.mxu0 %v1926
        %2419 = vmatprep.subr.mxu0 %v1923
        %2420 = vmatpush1.msra.mxu0 %v1922
        %2421 = vmatprep.subr.mxu0 %v1919
        %2422 = vmatpush1.msra.mxu0 %v1918
        %2423 = vmatprep.subr.mxu0 %v1915
        %2424 = vmatpush1.msra.mxu0 %v1914
        %2425 = vmatprep.subr.mxu0 %v1911
        %2426 = vmatpush1.msra.mxu0 %v1910
        %2427 = vmatprep.subr.mxu0 %v1907
        %2428 = vmatpush1.msra.mxu0 %v1906
        %2429 = vmatprep.subr.mxu0 %v1903
        %2430 = vmatpush1.msra.mxu0 %v1902
        %2431 = vmatprep.subr.mxu0 %v1899
        %2432 = vmatpush1.msra.mxu0 %v1898
        %2433 = vmatprep.subr.mxu0 %v1895
        %2434 = vmatpush1.msra.mxu0 %v1894
        %2435 = vmatprep.subr.mxu0 %v1891
        %2436 = vmatpush1.msra.mxu0 %v1890
        %2437 = vmatprep.subr.mxu0 %v1887
        %2438 = vmatpush1.msra.mxu0 %v1886
        %2439 = vmatprep.subr.mxu0 %v1883
        %2440 = vmatpush1.msra.mxu0 %v1882
        %2441 = vmatprep.subr.mxu0 %v1879
        %2442 = vmatpush1.msra.mxu0 %v1878
        %2443 = vmatprep.subr.mxu0 %v1875
        %2444 = vmatpush1.msra.mxu0 %v1874
        %2445 = vmatprep.subr.mxu0 %v1871
        %2446 = vmatpush1.msra.mxu0 %v1870
        %2447 = vmatprep.subr.mxu0 %v1995
        %2448 = vmatpush2.msra.mxu0 %v1994
        %2449 = vmatprep.subr.mxu0 %v1991
        %2450 = vmatpush2.msra.mxu0 %v1990
        %2451 = vmatprep.subr.mxu0 %v1987
        %2452 = vmatpush2.msra.mxu0 %v1986
        %2453 = vmatprep.subr.mxu0 %v1983
        %2454 = vmatpush2.msra.mxu0 %v1982
        %2455 = vmatprep.subr.mxu0 %v1979
        %2456 = vmatpush2.msra.mxu0 %v1978
        %2457 = vmatprep.subr.mxu0 %v1975
        %2458 = vmatpush2.msra.mxu0 %v1974
        %2459 = vmatprep.subr.mxu0 %v1971
        %2460 = vmatpush2.msra.mxu0 %v1970
        %2461 = vmatprep.subr.mxu0 %v1967
        %2462 = vmatpush2.msra.mxu0 %v1966
        %2463 = vmatprep.subr.mxu0 %v1963
        %2464 = vmatpush2.msra.mxu0 %v1962
        %2465 = vmatprep.subr.mxu0 %v1959
        %2466 = vmatpush2.msra.mxu0 %v1958
        %2467 = vmatprep.subr.mxu0 %v1955
        %2468 = vmatpush2.msra.mxu0 %v1954
        %2469 = vmatprep.subr.mxu0 %v1951
        %2470 = vmatpush2.msra.mxu0 %v1950
        %2471 = vmatprep.subr.mxu0 %v1947
        %2472 = vmatpush2.msra.mxu0 %v1946
        %2473 = vmatprep.subr.mxu0 %v1943
        %2474 = vmatpush2.msra.mxu0 %v1942
        %2475 = vmatprep.subr.mxu0 %v1939
        %2476 = vmatpush2.msra.mxu0 %v1938
        %2477 = vmatprep.subr.mxu0 %v1935
        %2478 = vmatpush2.msra.mxu0 %v1934
        %2479 = vmatprep.mubr.f32.mxu0 %v1046
        %2480 = vmatmul.mubr.f32.gmra.mxu0 %v1737
        %v2481 = vpop.f32.mrf.mxu0
        %v2482 = vadd.f32 %v2411, %v2481
        %v2483 = vpop.f32.mrf.mxu0
        %v2484 = vadd.f32 %v2413, %v2483
        %2485 = vdwg.mxu0
        %v2486 = vld [vmem:[%s35] sm:$0xf]
        %v2488 = vlaneseq
        %v2489 = vshrl.u32 %v2488, 7
        %v2490 = vsub.s32 0, %v2489
        %v2491 = vrot.slane %v2486, %v2490
        %v2492 = vlaneseq
        %v2493 = vshrl.u32 %v2492, 7
        %v2494 = vsub.s32 1, %v2493
        %v2495 = vrot.slane %v2486, %v2494
        %v2496 = vlaneseq
        %v2497 = vshrl.u32 %v2496, 7
        %v2498 = vsub.s32 2, %v2497
        %v2499 = vrot.slane %v2486, %v2498
        %v2500 = vlaneseq
        %v2501 = vshrl.u32 %v2500, 7
        %v2502 = vsub.s32 3, %v2501
        %v2503 = vrot.slane %v2486, %v2502
        %v2508 = vadd.f32 %v2340, %v2491
        %v2509 = vadd.f32 %v2342, %v2495
        %v2510 = vadd.f32 %v2482, %v2499
        %v2511 = vadd.f32 %v2484, %v2503
        %v2512 = vsub.f32 0.0, %v2508
        %v2513 = vmul.f32 %v2512, 1.442695
        %v2514 = vpow.pop %v2513
        %v2515 = vadd.f32 %v2514, 1.0
        %v2516 = vrcp.pop %v2515
        %v2517 = vmul.f32 1.0, %v2516
        %v2518 = vsub.f32 0.0, %v2509
        %v2519 = vmul.f32 %v2518, 1.442695
        %v2520 = vpow.pop %v2519
        %v2521 = vadd.f32 %v2520, 1.0
        %v2522 = vrcp.pop %v2521
        %v2523 = vmul.f32 1.0, %v2522
        %v2524 = vtanh.pop %v2510
        %v2525 = vsub.f32 0.0, %v2511
        %v2526 = vmul.f32 %v2525, 1.442695
        %v2527 = vpow.pop %v2526
        %v2528 = vadd.f32 %v2527, 1.0
        %v2529 = vrcp.pop %v2528
        %v2530 = vmul.f32 1.0, %v2529
        %v2531 = vmul.f32 %v2523, %v1048
        %v2532 = vmul.f32 %v2517, %v2524
        %v2533 = vadd.f32 %v2531, %v2532
        %v2534 = vtanh.pop %v2533
        %v2535 = vmul.f32 %v2530, %v2534
        %v2536 = vld [vmem:[%s37] sm:$0xff]
        %v2537 = vld [vmem:[%s37 + $0x8] sm:$0xff]
        %v2538 = vld [vmem:[%s37 + $0x10] sm:$0xff]
        %v2539 = vld [vmem:[%s37 + $0x18] sm:$0xff]
        %v2540 = vld [vmem:[%s37 + $0x20] sm:$0xff]
        %v2541 = vld [vmem:[%s37 + $0x28] sm:$0xff]
        %v2542 = vld [vmem:[%s37 + $0x30] sm:$0xff]
        %v2543 = vld [vmem:[%s37 + $0x38] sm:$0xff]
        %v2544 = vld [vmem:[%s37 + $0x40] sm:$0xff]
        %v2545 = vld [vmem:[%s37 + $0x48] sm:$0xff]
        %v2546 = vld [vmem:[%s37 + $0x50] sm:$0xff]
        %v2547 = vld [vmem:[%s37 + $0x58] sm:$0xff]
        %v2548 = vld [vmem:[%s37 + $0x60] sm:$0xff]
        %v2549 = vld [vmem:[%s37 + $0x68] sm:$0xff]
        %v2550 = vld [vmem:[%s37 + $0x70] sm:$0xff]
        %v2551 = vld [vmem:[%s37 + $0x78] sm:$0xff]
        %v2552 = vld [vmem:[%s37 + $0x80] sm:$0xff]
        %v2553 = vld [vmem:[%s37 + $0x88] sm:$0xff]
        %v2554 = vld [vmem:[%s37 + $0x90] sm:$0xff]
        %v2555 = vld [vmem:[%s37 + $0x98] sm:$0xff]
        %v2556 = vld [vmem:[%s37 + $0xa0] sm:$0xff]
        %v2557 = vld [vmem:[%s37 + $0xa8] sm:$0xff]
        %v2558 = vld [vmem:[%s37 + $0xb0] sm:$0xff]
        %v2559 = vld [vmem:[%s37 + $0xb8] sm:$0xff]
        %v2560 = vld [vmem:[%s37 + $0xc0] sm:$0xff]
        %v2561 = vld [vmem:[%s37 + $0xc8] sm:$0xff]
        %v2562 = vld [vmem:[%s37 + $0xd0] sm:$0xff]
        %v2563 = vld [vmem:[%s37 + $0xd8] sm:$0xff]
        %v2564 = vld [vmem:[%s37 + $0xe0] sm:$0xff]
        %v2565 = vld [vmem:[%s37 + $0xe8] sm:$0xff]
        %v2566 = vld [vmem:[%s37 + $0xf0] sm:$0xff]
        %v2567 = vld [vmem:[%s37 + $0xf8] sm:$0xff]
        %v2568 = vld [vmem:[%s39] sm:$0x1]
        %v2570 = vlaneseq
        %v2571 = vshrl.u32 %v2570, 7
        %v2572 = vsub.s32 0, %v2571
        %v2573 = vrot.slane %v2568, %v2572
        %2575 = vmatprep.subr.mxu0 0.0
        %2576 = vmatpush1.msra.mxu0 %v2551
        %2577 = vmatprep.subr.mxu0 0.0
        %2578 = vmatpush1.msra.mxu0 %v2550
        %2579 = vmatprep.subr.mxu0 0.0
        %2580 = vmatpush1.msra.mxu0 %v2549
        %2581 = vmatprep.subr.mxu0 0.0
        %2582 = vmatpush1.msra.mxu0 %v2548
        %2583 = vmatprep.subr.mxu0 0.0
        %2584 = vmatpush1.msra.mxu0 %v2547
        %2585 = vmatprep.subr.mxu0 0.0
        %2586 = vmatpush1.msra.mxu0 %v2546
        %2587 = vmatprep.subr.mxu0 0.0
        %2588 = vmatpush1.msra.mxu0 %v2545
        %2589 = vmatprep.subr.mxu0 0.0
        %2590 = vmatpush1.msra.mxu0 %v2544
        %2591 = vmatprep.subr.mxu0 0.0
        %2592 = vmatpush1.msra.mxu0 %v2543
        %2593 = vmatprep.subr.mxu0 0.0
        %2594 = vmatpush1.msra.mxu0 %v2542
        %2595 = vmatprep.subr.mxu0 0.0
        %2596 = vmatpush1.msra.mxu0 %v2541
        %2597 = vmatprep.subr.mxu0 0.0
        %2598 = vmatpush1.msra.mxu0 %v2540
        %2599 = vmatprep.subr.mxu0 0.0
        %2600 = vmatpush1.msra.mxu0 %v2539
        %2601 = vmatprep.subr.mxu0 0.0
        %2602 = vmatpush1.msra.mxu0 %v2538
        %2603 = vmatprep.subr.mxu0 0.0
        %2604 = vmatpush1.msra.mxu0 %v2537
        %2605 = vmatprep.subr.mxu0 0.0
        %2606 = vmatpush1.msra.mxu0 %v2536
        %2607 = vmatprep.subr.mxu0 0.0
        %2608 = vmatpush2.msra.mxu0 %v2567
        %2609 = vmatprep.subr.mxu0 0.0
        %2610 = vmatpush2.msra.mxu0 %v2566
        %2611 = vmatprep.subr.mxu0 0.0
        %2612 = vmatpush2.msra.mxu0 %v2565
        %2613 = vmatprep.subr.mxu0 0.0
        %2614 = vmatpush2.msra.mxu0 %v2564
        %2615 = vmatprep.subr.mxu0 0.0
        %2616 = vmatpush2.msra.mxu0 %v2563
        %2617 = vmatprep.subr.mxu0 0.0
        %2618 = vmatpush2.msra.mxu0 %v2562
        %2619 = vmatprep.subr.mxu0 0.0
        %2620 = vmatpush2.msra.mxu0 %v2561
        %2621 = vmatprep.subr.mxu0 0.0
        %2622 = vmatpush2.msra.mxu0 %v2560
        %2623 = vmatprep.subr.mxu0 0.0
        %2624 = vmatpush2.msra.mxu0 %v2559
        %2625 = vmatprep.subr.mxu0 0.0
        %2626 = vmatpush2.msra.mxu0 %v2558
        %2627 = vmatprep.subr.mxu0 0.0
        %2628 = vmatpush2.msra.mxu0 %v2557
        %2629 = vmatprep.subr.mxu0 0.0
        %2630 = vmatpush2.msra.mxu0 %v2556
        %2631 = vmatprep.subr.mxu0 0.0
        %2632 = vmatpush2.msra.mxu0 %v2555
        %2633 = vmatprep.subr.mxu0 0.0
        %2634 = vmatpush2.msra.mxu0 %v2554
        %2635 = vmatprep.subr.mxu0 0.0
        %2636 = vmatpush2.msra.mxu0 %v2553
        %2637 = vmatprep.subr.mxu0 0.0
        %2638 = vmatpush2.msra.mxu0 %v2552
        %2639 = vmatprep.mubr.f32.mxu0 %v1039
        %2640 = vmatmul.mubr.f32.gmra.mxu0 %v1038
        %v2641 = vpop.f32.mrf.mxu0
        %v2642 = vadd.f32 %v2573, %v2641
        %v2643 = vpop.f32.mrf.mxu0
        %2644 = vmatprep.mubr.f32.mxu0 %v1041
        %2645 = vmatmul.mubr.f32.gmra.mxu0 %v1040
        %v2646 = vpop.f32.mrf.mxu0
        %v2647 = vadd.f32 %v2573, %v2646
        %v2648 = vpop.f32.mrf.mxu0
        %2649 = vmatprep.mubr.f32.mxu0 %v1043
        %2650 = vmatmul.mubr.f32.gmra.mxu0 %v1042
        %v2651 = vpop.f32.mrf.mxu0
        %v2652 = vadd.f32 %v2573, %v2651
        %v2653 = vpop.f32.mrf.mxu0
        %2654 = vmatprep.mubr.f32.mxu0 %v1045
        %2655 = vmatmul.mubr.f32.gmra.mxu0 %v1044
        %v2656 = vpop.f32.mrf.mxu0
        %v2657 = vadd.f32 %v2573, %v2656
        %v2658 = vpop.f32.mrf.mxu0
        %2659 = vdwg.mxu0
        %v2660 = vld [vmem:[#allocation14] sm:$0xff]
        %v2661 = vld [vmem:[#allocation14 + $0x8] sm:$0xff]
        %v2662 = vld [vmem:[#allocation14 + $0x10] sm:$0xff]
        %v2663 = vld [vmem:[#allocation14 + $0x18] sm:$0xff]
        %v2664 = vld [vmem:[#allocation14 + $0x20] sm:$0xff]
        %v2665 = vld [vmem:[#allocation14 + $0x28] sm:$0xff]
        %v2666 = vld [vmem:[#allocation14 + $0x30] sm:$0xff]
        %v2667 = vld [vmem:[#allocation14 + $0x38] sm:$0xff]
        %v2668 = vld [vmem:[#allocation14 + $0x40] sm:$0xff]
        %v2669 = vld [vmem:[#allocation14 + $0x48] sm:$0xff]
        %v2670 = vld [vmem:[#allocation14 + $0x50] sm:$0xff]
        %v2671 = vld [vmem:[#allocation14 + $0x58] sm:$0xff]
        %v2672 = vld [vmem:[#allocation14 + $0x60] sm:$0xff]
        %v2673 = vld [vmem:[#allocation14 + $0x68] sm:$0xff]
        %v2674 = vld [vmem:[#allocation14 + $0x70] sm:$0xff]
        %v2675 = vld [vmem:[#allocation14 + $0x78] sm:$0xff]
        %v2676 = vld [vmem:[%s43] sm:$0x1]
        %v2678 = vlaneseq
        %v2679 = vshrl.u32 %v2678, 7
        %v2680 = vsub.s32 0, %v2679
        %v2681 = vrot.slane %v2676, %v2680
        %2683 = vmatprep.subr.mxu0 0.0
        %2684 = vmatpush1.msra.mxu0 %v2675
        %2685 = vmatprep.subr.mxu0 0.0
        %2686 = vmatpush1.msra.mxu0 %v2674
        %2687 = vmatprep.subr.mxu0 0.0
        %2688 = vmatpush1.msra.mxu0 %v2673
        %2689 = vmatprep.subr.mxu0 0.0
        %2690 = vmatpush1.msra.mxu0 %v2672
        %2691 = vmatprep.subr.mxu0 0.0
        %2692 = vmatpush1.msra.mxu0 %v2671
        %2693 = vmatprep.subr.mxu0 0.0
        %2694 = vmatpush1.msra.mxu0 %v2670
        %2695 = vmatprep.subr.mxu0 0.0
        %2696 = vmatpush1.msra.mxu0 %v2669
        %2697 = vmatprep.subr.mxu0 0.0
        %2698 = vmatpush1.msra.mxu0 %v2668
        %2699 = vmatprep.subr.mxu0 0.0
        %2700 = vmatpush1.msra.mxu0 %v2667
        %2701 = vmatprep.subr.mxu0 0.0
        %2702 = vmatpush1.msra.mxu0 %v2666
        %2703 = vmatprep.subr.mxu0 0.0
        %2704 = vmatpush1.msra.mxu0 %v2665
        %2705 = vmatprep.subr.mxu0 0.0
        %2706 = vmatpush1.msra.mxu0 %v2664
        %2707 = vmatprep.subr.mxu0 0.0
        %2708 = vmatpush1.msra.mxu0 %v2663
        %2709 = vmatprep.subr.mxu0 0.0
        %2710 = vmatpush1.msra.mxu0 %v2662
        %2711 = vmatprep.subr.mxu0 0.0
        %2712 = vmatpush1.msra.mxu0 %v2661
        %2713 = vmatprep.subr.mxu0 0.0
        %2714 = vmatpush1.msra.mxu0 %v2660
        %2715 = vmatprep.subr.mxu0 0.0
        %2716 = vmatpush2.msra.mxu0 0.0
        %2717 = vmatprep.subr.mxu0 0.0
        %2718 = vmatpush2.msra.mxu0 0.0
        %2719 = vmatprep.subr.mxu0 0.0
        %2720 = vmatpush2.msra.mxu0 0.0
        %2721 = vmatprep.subr.mxu0 0.0
        %2722 = vmatpush2.msra.mxu0 0.0
        %2723 = vmatprep.subr.mxu0 0.0
        %2724 = vmatpush2.msra.mxu0 0.0
        %2725 = vmatprep.subr.mxu0 0.0
        %2726 = vmatpush2.msra.mxu0 0.0
        %2727 = vmatprep.subr.mxu0 0.0
        %2728 = vmatpush2.msra.mxu0 0.0
        %2729 = vmatprep.subr.mxu0 0.0
        %2730 = vmatpush2.msra.mxu0 0.0
        %2731 = vmatprep.subr.mxu0 0.0
        %2732 = vmatpush2.msra.mxu0 0.0
        %2733 = vmatprep.subr.mxu0 0.0
        %2734 = vmatpush2.msra.mxu0 0.0
        %2735 = vmatprep.subr.mxu0 0.0
        %2736 = vmatpush2.msra.mxu0 0.0
        %2737 = vmatprep.subr.mxu0 0.0
        %2738 = vmatpush2.msra.mxu0 0.0
        %2739 = vmatprep.subr.mxu0 0.0
        %2740 = vmatpush2.msra.mxu0 0.0
        %2741 = vmatprep.subr.mxu0 0.0
        %2742 = vmatpush2.msra.mxu0 0.0
        %2743 = vmatprep.subr.mxu0 0.0
        %2744 = vmatpush2.msra.mxu0 0.0
        %2745 = vmatprep.subr.mxu0 0.0
        %2746 = vmatpush2.msra.mxu0 0.0
        %2747 = vmatprep.mubr.f32.mxu0 0.0
        %2748 = vmatmul.mubr.f32.gmra.mxu0 %v2535
        %v2749 = vpop.f32.mrf.mxu0
        %v2750 = vadd.f32 %v2681, %v2749
        %v2751 = vpop.f32.mrf.mxu0
        %2752 = vdwg.mxu0
        %v2755 = vunpack.c.l.s4 1966171168
        %v2756 = vunpack.c.0.s8 %v2755
        %v2757 = vlaneseq
        %v2758 = vshrl.u32 %v2757, 7
        %v2759 = vsub.s32 %v2756, %v2758
        %v2760 = vrot.slane %v2750, %v2759
        %v2761 = vcombine.high %v2760, %v2760
        %v2763 = vunpack.c.l.s4 1966171168
        %v2764 = vunpack.c.0.s8 %v2763
        %v2765 = vlaneseq
        %v2766 = vshrl.u32 %v2765, 7
        %v2767 = vsub.s32 %v2764, %v2766
        %v2768 = vrot.slane %v2760, %v2767
        %v2770 = vunpack.c.l.s4 1966171168
        %v2771 = vunpack.c.0.s8 %v2770
        %v2772 = vlaneseq
        %v2773 = vshrl.u32 %v2772, 7
        %v2774 = vsub.s32 %v2771, %v2773
        %v2775 = vrot.slane %v2761, %v2774
        %v2776 = vlaneseq
        %v2777 = vshrl.u32 %v2776, 7
        %v2778 = vsub.s32 0, %v2777
        %v2779 = vrot.slane %v2768, %v2778
        %v2780 = vlaneseq
        %v2781 = vshrl.u32 %v2780, 7
        %v2782 = vsub.s32 0, %v2781
        %v2783 = vrot.slane %v2775, %v2782
        %v2786 = vadd.f32 %v2642, %v2779
        %v2787 = vadd.f32 %v2647, %v2779
        %v2788 = vadd.f32 %v2652, %v2783
        %v2789 = vadd.f32 %v2657, %v2783
        %v2790 = vmax.f32 %v2786, 0.0
        %v2791 = vmax.f32 %v2787, 0.0
        %v2792 = vmax.f32 %v2788, 0.0
        %v2793 = vmax.f32 %v2789, 0.0
        %v2794 = vld [vmem:[%s45] sm:$0x1]
        %v2796 = vlaneseq
        %v2797 = vshrl.u32 %v2796, 7
        %v2798 = vsub.s32 0, %v2797
        %v2799 = vrot.slane %v2794, %v2798
        %v2801 = vmul.f32 %v2790, %v2799
        %v2802 = vmul.f32 %v2791, %v2799
        %v2803 = vmul.f32 %v2792, %v2799
        %v2804 = vmul.f32 %v2793, %v2799
        %2805 = vadd.xlane.f32.xlu0 %v2801
        %v2806 = vpop.xlane.xlu0 %2805
        %2807 = vadd.xlane.f32.xlu0 %v2802
        %v2808 = vpop.xlane.xlu0 %2807
        %2809 = vadd.xlane.f32.xlu0 %v2803
        %v2810 = vpop.xlane.xlu0 %2809
        %2811 = vadd.xlane.f32.xlu0 %v2804
        %v2812 = vpop.xlane.xlu0 %2811
        %v2817 = vlaneseq
        %v2818 = vand.u32 %v2817, 127
        %v2819 = vlaneseq
        %v2820 = vshrl.u32 %v2819, 7
        %v2821 = vsub.s32 %v2818, %v2820
        %v2822 = vrot.slane %v2806, %v2821
        %v2823 = vadd.s32 %v2818, 4294967288
        %v2824 = vlaneseq
        %v2825 = vshrl.u32 %v2824, 7
        %v2826 = vsub.s32 %v2823, %v2825
        %v2827 = vrot.slane %v2808, %v2826
        %vm2828 = vcmask 130112
        %v2829 = vsel %vm2828, %v2827, %v2822
        %v2830 = vlaneseq
        %v2831 = vshrl.u32 %v2830, 7
        %v2832 = vsub.s32 %v2818, %v2831
        %v2833 = vrot.slane %v2810, %v2832
        %v2834 = vlaneseq
        %v2835 = vshrl.u32 %v2834, 7
        %v2836 = vsub.s32 %v2823, %v2835
        %v2837 = vrot.slane %v2812, %v2836
        %v2838 = vsel %vm2828, %v2837, %v2833
        %v2839 = vsel %vm1735, %v2838, %v2829
        %vm2841 = vcmask 123904
        %v2842 = vsel %vm2841, %v2839, -inf
        %2843 = vmax.xlane.f32.xlu0 %v2842
        %v2844 = vpop.xlane.xlu0 %2843
        %v2846 = vlaneseq
        %v2847 = vshrl.u32 %v2846, 7
        %v2848 = vsub.s32 0, %v2847
        %v2849 = vrot.slane %v2844, %v2848
        %v2850 = vlaneseq
        %v2851 = vshrl.u32 %v2850, 7
        %v2852 = vsub.s32 1, %v2851
        %v2853 = vrot.slane %v2844, %v2852
        %v2856 = vsub.f32 %v2806, %v2849
        %v2857 = vsub.f32 %v2808, %v2849
        %v2858 = vsub.f32 %v2810, %v2853
        %v2859 = vsub.f32 %v2812, %v2853
        %v2860 = vmul.f32 %v2856, 1.442695
        %v2861 = vpow.pop %v2860
        %v2862 = vmul.f32 %v2857, 1.442695
        %v2863 = vpow.pop %v2862
        %v2864 = vmul.f32 %v2858, 1.442695
        %v2865 = vpow.pop %v2864
        %v2866 = vmul.f32 %v2859, 1.442695
        %v2867 = vpow.pop %v2866
        %2872 = vset.pattern.permute.xlu0 0
        %2873 = vperm.xlu0 %2872, %v2861
        %v2874 = vpop.permute.xlu0 %2873
        %2875 = vset.pattern.permute.xlu0 0
        %2876 = vperm.xlu0 %2875, %v2863
        %v2877 = vpop.permute.xlu0 %2876
        %2878 = vset.pattern.permute.xlu0 0
        %2879 = vperm.xlu0 %2878, %v2865
        %v2880 = vpop.permute.xlu0 %2879
        %2881 = vset.pattern.permute.xlu0 0
        %2882 = vperm.xlu0 %2881, %v2867
        %v2883 = vpop.permute.xlu0 %2882
        %v2884 = vlaneseq
        %v2885 = vshrl.u32 %v2884, 7
        %v2886 = vsub.s32 %v2818, %v2885
        %v2887 = vrot.slane %v2874, %v2886
        %v2888 = vlaneseq
        %v2889 = vshrl.u32 %v2888, 7
        %v2890 = vsub.s32 %v2823, %v2889
        %v2891 = vrot.slane %v2877, %v2890
        %v2892 = vsel %vm2828, %v2891, %v2887
        %v2893 = vlaneseq
        %v2894 = vshrl.u32 %v2893, 7
        %v2895 = vsub.s32 %v2818, %v2894
        %v2896 = vrot.slane %v2880, %v2895
        %v2897 = vlaneseq
        %v2898 = vshrl.u32 %v2897, 7
        %v2899 = vsub.s32 %v2823, %v2898
        %v2900 = vrot.slane %v2883, %v2899
        %v2901 = vsel %vm2828, %v2900, %v2896
        %v2902 = vsel %vm1735, %v2901, %v2892
        %v2904 = vsel %vm2841, %v2902, 0.0
        %2905 = vadd.xlane.f32.xlu0 %v2904
        %v2906 = vpop.xlane.xlu0 %2905
        %v2908 = vlaneseq
        %v2909 = vshrl.u32 %v2908, 7
        %v2910 = vsub.s32 0, %v2909
        %v2911 = vrot.slane %v2906, %v2910
        %v2912 = vlaneseq
        %v2913 = vshrl.u32 %v2912, 7
        %v2914 = vsub.s32 1, %v2913
        %v2915 = vrot.slane %v2906, %v2914
        %v2918 = vrcp.pop %v2911
        %v2919 = vmul.f32 %v2861, %v2918
        %v2920 = vmul.f32 %v2863, %v2918
        %v2921 = vrcp.pop %v2915
        %v2922 = vmul.f32 %v2865, %v2921
        %v2923 = vmul.f32 %v2867, %v2921
        %2925 = vset.pattern.permute.xlu0 0
        %2926 = vperm.xlu0 %2925, %v2919
        %v2927 = vpop.permute.xlu0 %2926
        %2930 = vset.pattern.permute.xlu0 0
        %2931 = vperm.xlu0 %2930, %v2920
        %v2932 = vpop.permute.xlu0 %2931
        %2935 = vset.pattern.permute.xlu0 0
        %2936 = vperm.xlu0 %2935, %v2922
        %v2937 = vpop.permute.xlu0 %2936
        %2940 = vset.pattern.permute.xlu0 0
        %2941 = vperm.xlu0 %2940, %v2923
        %v2942 = vpop.permute.xlu0 %2941
        %v2944 = vmul.f32 %v1038, %v2927
        %v2945 = vmul.f32 %v1039, %v2927
        %v2946 = vmul.f32 %v1040, %v2932
        %v2947 = vmul.f32 %v1041, %v2932
        %v2948 = vmul.f32 %v1042, %v2937
        %v2949 = vmul.f32 %v1043, %v2937
        %v2950 = vmul.f32 %v1044, %v2942
        %v2951 = vmul.f32 %v1045, %v2942
        %v2952 = vadd.f32 %v2944, %v2946
        %v2953 = vrot.slane %v2952, 4
        %v2954 = vadd.f32 %v2952, %v2953
        %v2955 = vrot.slane %v2954, 2
        %v2956 = vadd.f32 %v2954, %v2955
        %v2957 = vrot.slane %v2956, 1
        %v2958 = vadd.f32 %v2956, %v2957
        %v2959 = vadd.f32 %v2945, %v2947
        %v2960 = vrot.slane %v2959, 4
        %v2961 = vadd.f32 %v2959, %v2960
        %v2962 = vrot.slane %v2961, 2
        %v2963 = vadd.f32 %v2961, %v2962
        %v2964 = vrot.slane %v2963, 1
        %v2965 = vadd.f32 %v2963, %v2964
        %v2966 = vadd.f32 %v2948, %v2950
        %v2967 = vrot.slane %v2966, 4
        %v2968 = vadd.f32 %v2966, %v2967
        %v2969 = vrot.slane %v2968, 2
        %v2970 = vadd.f32 %v2968, %v2969
        %v2971 = vrot.slane %v2970, 1
        %v2972 = vadd.f32 %v2970, %v2971
        %v2973 = vadd.f32 %v2949, %v2951
        %v2974 = vrot.slane %v2973, 4
        %v2975 = vadd.f32 %v2973, %v2974
        %v2976 = vrot.slane %v2975, 2
        %v2977 = vadd.f32 %v2975, %v2976
        %v2978 = vrot.slane %v2977, 1
        %v2979 = vadd.f32 %v2977, %v2978
        %v2984 = vsel %vm1735, %v2972, %v2958
        %v2985 = vsel %vm1735, %v2979, %v2965
        %v2988 = vld [vmem:[#allocation15] sm:$0xff]
        %v2989 = vld [vmem:[#allocation15 + $0x8] sm:$0xff]
        %v2990 = vld [vmem:[#allocation15 + $0x10] sm:$0xff]
        %v2991 = vld [vmem:[#allocation15 + $0x18] sm:$0xff]
        %v2992 = vld [vmem:[#allocation15 + $0x20] sm:$0xff]
        %v2993 = vld [vmem:[#allocation15 + $0x28] sm:$0xff]
        %v2994 = vld [vmem:[#allocation15 + $0x30] sm:$0xff]
        %v2995 = vld [vmem:[#allocation15 + $0x38] sm:$0xff]
        %v2996 = vld [vmem:[#allocation15 + $0x40] sm:$0xff]
        %v2997 = vld [vmem:[#allocation15 + $0x48] sm:$0xff]
        %v2998 = vld [vmem:[#allocation15 + $0x50] sm:$0xff]
        %v2999 = vld [vmem:[#allocation15 + $0x58] sm:$0xff]
        %v3000 = vld [vmem:[#allocation15 + $0x60] sm:$0xff]
        %v3001 = vld [vmem:[#allocation15 + $0x68] sm:$0xff]
        %v3002 = vld [vmem:[#allocation15 + $0x70] sm:$0xff]
        %v3003 = vld [vmem:[#allocation15 + $0x78] sm:$0xff]
        %v3004 = vld [vmem:[#allocation15 + $0x80] sm:$0xff]
        %v3005 = vld [vmem:[#allocation15 + $0x88] sm:$0xff]
        %v3006 = vld [vmem:[#allocation15 + $0x90] sm:$0xff]
        %v3007 = vld [vmem:[#allocation15 + $0x98] sm:$0xff]
        %v3008 = vld [vmem:[#allocation15 + $0xa0] sm:$0xff]
        %v3009 = vld [vmem:[#allocation15 + $0xa8] sm:$0xff]
        %v3010 = vld [vmem:[#allocation15 + $0xb0] sm:$0xff]
        %v3011 = vld [vmem:[#allocation15 + $0xb8] sm:$0xff]
        %v3012 = vld [vmem:[#allocation15 + $0xc0] sm:$0xff]
        %v3013 = vld [vmem:[#allocation15 + $0xc8] sm:$0xff]
        %v3014 = vld [vmem:[#allocation15 + $0xd0] sm:$0xff]
        %v3015 = vld [vmem:[#allocation15 + $0xd8] sm:$0xff]
        %v3016 = vld [vmem:[#allocation15 + $0xe0] sm:$0xff]
        %v3017 = vld [vmem:[#allocation15 + $0xe8] sm:$0xff]
        %v3018 = vld [vmem:[#allocation15 + $0xf0] sm:$0xff]
        %v3019 = vld [vmem:[#allocation15 + $0xf8] sm:$0xff]
        %v3020 = vld [vmem:[#allocation15 + $0x100] sm:$0xff]
        %v3021 = vld [vmem:[#allocation15 + $0x108] sm:$0xff]
        %v3022 = vld [vmem:[#allocation15 + $0x110] sm:$0xff]
        %v3023 = vld [vmem:[#allocation15 + $0x118] sm:$0xff]
        %v3024 = vld [vmem:[#allocation15 + $0x120] sm:$0xff]
        %v3025 = vld [vmem:[#allocation15 + $0x128] sm:$0xff]
        %v3026 = vld [vmem:[#allocation15 + $0x130] sm:$0xff]
        %v3027 = vld [vmem:[#allocation15 + $0x138] sm:$0xff]
        %v3028 = vld [vmem:[#allocation15 + $0x140] sm:$0xff]
        %v3029 = vld [vmem:[#allocation15 + $0x148] sm:$0xff]
        %v3030 = vld [vmem:[#allocation15 + $0x150] sm:$0xff]
        %v3031 = vld [vmem:[#allocation15 + $0x158] sm:$0xff]
        %v3032 = vld [vmem:[#allocation15 + $0x160] sm:$0xff]
        %v3033 = vld [vmem:[#allocation15 + $0x168] sm:$0xff]
        %v3034 = vld [vmem:[#allocation15 + $0x170] sm:$0xff]
        %v3035 = vld [vmem:[#allocation15 + $0x178] sm:$0xff]
        %v3036 = vld [vmem:[#allocation15 + $0x180] sm:$0xff]
        %v3037 = vld [vmem:[#allocation15 + $0x188] sm:$0xff]
        %v3038 = vld [vmem:[#allocation15 + $0x190] sm:$0xff]
        %v3039 = vld [vmem:[#allocation15 + $0x198] sm:$0xff]
        %v3040 = vld [vmem:[#allocation15 + $0x1a0] sm:$0xff]
        %v3041 = vld [vmem:[#allocation15 + $0x1a8] sm:$0xff]
        %v3042 = vld [vmem:[#allocation15 + $0x1b0] sm:$0xff]
        %v3043 = vld [vmem:[#allocation15 + $0x1b8] sm:$0xff]
        %v3044 = vld [vmem:[#allocation15 + $0x1c0] sm:$0xff]
        %v3045 = vld [vmem:[#allocation15 + $0x1c8] sm:$0xff]
        %v3046 = vld [vmem:[#allocation15 + $0x1d0] sm:$0xff]
        %v3047 = vld [vmem:[#allocation15 + $0x1d8] sm:$0xff]
        %v3048 = vld [vmem:[#allocation15 + $0x1e0] sm:$0xff]
        %v3049 = vld [vmem:[#allocation15 + $0x1e8] sm:$0xff]
        %v3050 = vld [vmem:[#allocation15 + $0x1f0] sm:$0xff]
        %v3051 = vld [vmem:[#allocation15 + $0x1f8] sm:$0xff]
        %v3052 = vld [vmem:[#allocation15 + $0x200] sm:$0xff]
        %v3053 = vld [vmem:[#allocation15 + $0x208] sm:$0xff]
        %v3054 = vld [vmem:[#allocation15 + $0x210] sm:$0xff]
        %v3055 = vld [vmem:[#allocation15 + $0x218] sm:$0xff]
        %v3056 = vld [vmem:[#allocation15 + $0x220] sm:$0xff]
        %v3057 = vld [vmem:[#allocation15 + $0x228] sm:$0xff]
        %v3058 = vld [vmem:[#allocation15 + $0x230] sm:$0xff]
        %v3059 = vld [vmem:[#allocation15 + $0x238] sm:$0xff]
        %v3060 = vld [vmem:[#allocation15 + $0x240] sm:$0xff]
        %v3061 = vld [vmem:[#allocation15 + $0x248] sm:$0xff]
        %v3062 = vld [vmem:[#allocation15 + $0x250] sm:$0xff]
        %v3063 = vld [vmem:[#allocation15 + $0x258] sm:$0xff]
        %v3064 = vld [vmem:[#allocation15 + $0x260] sm:$0xff]
        %v3065 = vld [vmem:[#allocation15 + $0x268] sm:$0xff]
        %v3066 = vld [vmem:[#allocation15 + $0x270] sm:$0xff]
        %v3067 = vld [vmem:[#allocation15 + $0x278] sm:$0xff]
        %v3068 = vld [vmem:[#allocation15 + $0x280] sm:$0xff]
        %v3069 = vld [vmem:[#allocation15 + $0x288] sm:$0xff]
        %v3070 = vld [vmem:[#allocation15 + $0x290] sm:$0xff]
        %v3071 = vld [vmem:[#allocation15 + $0x298] sm:$0xff]
        %v3072 = vld [vmem:[#allocation15 + $0x2a0] sm:$0xff]
        %v3073 = vld [vmem:[#allocation15 + $0x2a8] sm:$0xff]
        %v3074 = vld [vmem:[#allocation15 + $0x2b0] sm:$0xff]
        %v3075 = vld [vmem:[#allocation15 + $0x2b8] sm:$0xff]
        %v3076 = vld [vmem:[#allocation15 + $0x2c0] sm:$0xff]
        %v3077 = vld [vmem:[#allocation15 + $0x2c8] sm:$0xff]
        %v3078 = vld [vmem:[#allocation15 + $0x2d0] sm:$0xff]
        %v3079 = vld [vmem:[#allocation15 + $0x2d8] sm:$0xff]
        %v3080 = vld [vmem:[#allocation15 + $0x2e0] sm:$0xff]
        %v3081 = vld [vmem:[#allocation15 + $0x2e8] sm:$0xff]
        %v3082 = vld [vmem:[#allocation15 + $0x2f0] sm:$0xff]
        %v3083 = vld [vmem:[#allocation15 + $0x2f8] sm:$0xff]
        %v3084 = vld [vmem:[#allocation15 + $0x300] sm:$0xff]
        %v3085 = vld [vmem:[#allocation15 + $0x308] sm:$0xff]
        %v3086 = vld [vmem:[#allocation15 + $0x310] sm:$0xff]
        %v3087 = vld [vmem:[#allocation15 + $0x318] sm:$0xff]
        %v3088 = vld [vmem:[#allocation15 + $0x320] sm:$0xff]
        %v3089 = vld [vmem:[#allocation15 + $0x328] sm:$0xff]
        %v3090 = vld [vmem:[#allocation15 + $0x330] sm:$0xff]
        %v3091 = vld [vmem:[#allocation15 + $0x338] sm:$0xff]
        %v3092 = vld [vmem:[#allocation15 + $0x340] sm:$0xff]
        %v3093 = vld [vmem:[#allocation15 + $0x348] sm:$0xff]
        %v3094 = vld [vmem:[#allocation15 + $0x350] sm:$0xff]
        %v3095 = vld [vmem:[#allocation15 + $0x358] sm:$0xff]
        %v3096 = vld [vmem:[#allocation15 + $0x360] sm:$0xff]
        %v3097 = vld [vmem:[#allocation15 + $0x368] sm:$0xff]
        %v3098 = vld [vmem:[#allocation15 + $0x370] sm:$0xff]
        %v3099 = vld [vmem:[#allocation15 + $0x378] sm:$0xff]
        %v3100 = vld [vmem:[#allocation15 + $0x380] sm:$0xff]
        %v3101 = vld [vmem:[#allocation15 + $0x388] sm:$0xff]
        %v3102 = vld [vmem:[#allocation15 + $0x390] sm:$0xff]
        %v3103 = vld [vmem:[#allocation15 + $0x398] sm:$0xff]
        %v3104 = vld [vmem:[#allocation15 + $0x3a0] sm:$0xff]
        %v3105 = vld [vmem:[#allocation15 + $0x3a8] sm:$0xff]
        %v3106 = vld [vmem:[#allocation15 + $0x3b0] sm:$0xff]
        %v3107 = vld [vmem:[#allocation15 + $0x3b8] sm:$0xff]
        %v3108 = vld [vmem:[#allocation15 + $0x3c0] sm:$0xff]
        %v3109 = vld [vmem:[#allocation15 + $0x3c8] sm:$0xff]
        %v3110 = vld [vmem:[#allocation15 + $0x3d0] sm:$0xff]
        %v3111 = vld [vmem:[#allocation15 + $0x3d8] sm:$0xff]
        %v3112 = vld [vmem:[#allocation15 + $0x3e0] sm:$0xff]
        %v3113 = vld [vmem:[#allocation15 + $0x3e8] sm:$0xff]
        %v3114 = vld [vmem:[#allocation15 + $0x3f0] sm:$0xff]
        %v3115 = vld [vmem:[#allocation15 + $0x3f8] sm:$0xff]
        %v3116 = vld [vmem:[#allocation15 + $0x400] sm:$0xff]
        %v3117 = vld [vmem:[#allocation15 + $0x408] sm:$0xff]
        %v3118 = vld [vmem:[#allocation15 + $0x410] sm:$0xff]
        %v3119 = vld [vmem:[#allocation15 + $0x418] sm:$0xff]
        %v3120 = vld [vmem:[#allocation15 + $0x420] sm:$0xff]
        %v3121 = vld [vmem:[#allocation15 + $0x428] sm:$0xff]
        %v3122 = vld [vmem:[#allocation15 + $0x430] sm:$0xff]
        %v3123 = vld [vmem:[#allocation15 + $0x438] sm:$0xff]
        %v3124 = vld [vmem:[#allocation15 + $0x440] sm:$0xff]
        %v3125 = vld [vmem:[#allocation15 + $0x448] sm:$0xff]
        %v3126 = vld [vmem:[#allocation15 + $0x450] sm:$0xff]
        %v3127 = vld [vmem:[#allocation15 + $0x458] sm:$0xff]
        %v3128 = vld [vmem:[#allocation15 + $0x460] sm:$0xff]
        %v3129 = vld [vmem:[#allocation15 + $0x468] sm:$0xff]
        %v3130 = vld [vmem:[#allocation15 + $0x470] sm:$0xff]
        %v3131 = vld [vmem:[#allocation15 + $0x478] sm:$0xff]
        %v3132 = vld [vmem:[#allocation15 + $0x480] sm:$0xff]
        %v3133 = vld [vmem:[#allocation15 + $0x488] sm:$0xff]
        %v3134 = vld [vmem:[#allocation15 + $0x490] sm:$0xff]
        %v3135 = vld [vmem:[#allocation15 + $0x498] sm:$0xff]
        %v3136 = vld [vmem:[#allocation15 + $0x4a0] sm:$0xff]
        %v3137 = vld [vmem:[#allocation15 + $0x4a8] sm:$0xff]
        %v3138 = vld [vmem:[#allocation15 + $0x4b0] sm:$0xff]
        %v3139 = vld [vmem:[#allocation15 + $0x4b8] sm:$0xff]
        %v3140 = vld [vmem:[#allocation15 + $0x4c0] sm:$0xff]
        %v3141 = vld [vmem:[#allocation15 + $0x4c8] sm:$0xff]
        %v3142 = vld [vmem:[#allocation15 + $0x4d0] sm:$0xff]
        %v3143 = vld [vmem:[#allocation15 + $0x4d8] sm:$0xff]
        %v3144 = vld [vmem:[#allocation15 + $0x4e0] sm:$0xff]
        %v3145 = vld [vmem:[#allocation15 + $0x4e8] sm:$0xff]
        %v3146 = vld [vmem:[#allocation15 + $0x4f0] sm:$0xff]
        %v3147 = vld [vmem:[#allocation15 + $0x4f8] sm:$0xff]
        %v3148 = vld [vmem:[#allocation15 + $0x500] sm:$0xff]
        %v3149 = vld [vmem:[#allocation15 + $0x508] sm:$0xff]
        %v3150 = vld [vmem:[#allocation15 + $0x510] sm:$0xff]
        %v3151 = vld [vmem:[#allocation15 + $0x518] sm:$0xff]
        %v3152 = vld [vmem:[#allocation15 + $0x520] sm:$0xff]
        %v3153 = vld [vmem:[#allocation15 + $0x528] sm:$0xff]
        %v3154 = vld [vmem:[#allocation15 + $0x530] sm:$0xff]
        %v3155 = vld [vmem:[#allocation15 + $0x538] sm:$0xff]
        %v3156 = vld [vmem:[#allocation15 + $0x540] sm:$0xff]
        %v3157 = vld [vmem:[#allocation15 + $0x548] sm:$0xff]
        %v3158 = vld [vmem:[#allocation15 + $0x550] sm:$0xff]
        %v3159 = vld [vmem:[#allocation15 + $0x558] sm:$0xff]
        %v3160 = vld [vmem:[#allocation15 + $0x560] sm:$0xff]
        %v3161 = vld [vmem:[#allocation15 + $0x568] sm:$0xff]
        %v3162 = vld [vmem:[#allocation15 + $0x570] sm:$0xff]
        %v3163 = vld [vmem:[#allocation15 + $0x578] sm:$0xff]
        %v3164 = vld [vmem:[#allocation15 + $0x580] sm:$0xff]
        %v3165 = vld [vmem:[#allocation15 + $0x588] sm:$0xff]
        %v3166 = vld [vmem:[#allocation15 + $0x590] sm:$0xff]
        %v3167 = vld [vmem:[#allocation15 + $0x598] sm:$0xff]
        %v3168 = vld [vmem:[#allocation15 + $0x5a0] sm:$0xff]
        %v3169 = vld [vmem:[#allocation15 + $0x5a8] sm:$0xff]
        %v3170 = vld [vmem:[#allocation15 + $0x5b0] sm:$0xff]
        %v3171 = vld [vmem:[#allocation15 + $0x5b8] sm:$0xff]
        %v3172 = vld [vmem:[#allocation15 + $0x5c0] sm:$0xff]
        %v3173 = vld [vmem:[#allocation15 + $0x5c8] sm:$0xff]
        %v3174 = vld [vmem:[#allocation15 + $0x5d0] sm:$0xff]
        %v3175 = vld [vmem:[#allocation15 + $0x5d8] sm:$0xff]
        %v3176 = vld [vmem:[#allocation15 + $0x5e0] sm:$0xff]
        %v3177 = vld [vmem:[#allocation15 + $0x5e8] sm:$0xff]
        %v3178 = vld [vmem:[#allocation15 + $0x5f0] sm:$0xff]
        %v3179 = vld [vmem:[#allocation15 + $0x5f8] sm:$0xff]
        %v3180 = vld [vmem:[#allocation17] sm:$0xff]
        %v3181 = vld [vmem:[#allocation17 + $0x8] sm:$0xff]
        %v3182 = vld [vmem:[#allocation17 + $0x10] sm:$0xff]
        %v3183 = vld [vmem:[#allocation17 + $0x18] sm:$0xff]
        %v3184 = vld [vmem:[#allocation17 + $0x20] sm:$0xff]
        %v3185 = vld [vmem:[#allocation17 + $0x28] sm:$0xff]
        %v3186 = vld [vmem:[#allocation17 + $0x30] sm:$0xff]
        %v3187 = vld [vmem:[#allocation17 + $0x38] sm:$0xff]
        %v3188 = vld [vmem:[#allocation17 + $0x40] sm:$0xff]
        %v3189 = vld [vmem:[#allocation17 + $0x48] sm:$0xff]
        %v3190 = vld [vmem:[#allocation17 + $0x50] sm:$0xff]
        %v3191 = vld [vmem:[#allocation17 + $0x58] sm:$0xff]
        %v3192 = vld [vmem:[#allocation17 + $0x60] sm:$0xff]
        %v3193 = vld [vmem:[#allocation17 + $0x68] sm:$0xff]
        %v3194 = vld [vmem:[#allocation17 + $0x70] sm:$0xff]
        %v3195 = vld [vmem:[#allocation17 + $0x78] sm:$0xff]
        %v3196 = vld [vmem:[#allocation17 + $0x80] sm:$0xff]
        %v3197 = vld [vmem:[#allocation17 + $0x88] sm:$0xff]
        %v3198 = vld [vmem:[#allocation17 + $0x90] sm:$0xff]
        %v3199 = vld [vmem:[#allocation17 + $0x98] sm:$0xff]
        %v3200 = vld [vmem:[#allocation17 + $0xa0] sm:$0xff]
        %v3201 = vld [vmem:[#allocation17 + $0xa8] sm:$0xff]
        %v3202 = vld [vmem:[#allocation17 + $0xb0] sm:$0xff]
        %v3203 = vld [vmem:[#allocation17 + $0xb8] sm:$0xff]
        %v3204 = vld [vmem:[#allocation17 + $0xc0] sm:$0xff]
        %v3205 = vld [vmem:[#allocation17 + $0xc8] sm:$0xff]
        %v3206 = vld [vmem:[#allocation17 + $0xd0] sm:$0xff]
        %v3207 = vld [vmem:[#allocation17 + $0xd8] sm:$0xff]
        %v3208 = vld [vmem:[#allocation17 + $0xe0] sm:$0xff]
        %v3209 = vld [vmem:[#allocation17 + $0xe8] sm:$0xff]
        %v3210 = vld [vmem:[#allocation17 + $0xf0] sm:$0xff]
        %v3211 = vld [vmem:[#allocation17 + $0xf8] sm:$0xff]
        %v3212 = vld [vmem:[#allocation17 + $0x100] sm:$0xff]
        %v3213 = vld [vmem:[#allocation17 + $0x108] sm:$0xff]
        %v3214 = vld [vmem:[#allocation17 + $0x110] sm:$0xff]
        %v3215 = vld [vmem:[#allocation17 + $0x118] sm:$0xff]
        %v3216 = vld [vmem:[#allocation17 + $0x120] sm:$0xff]
        %v3217 = vld [vmem:[#allocation17 + $0x128] sm:$0xff]
        %v3218 = vld [vmem:[#allocation17 + $0x130] sm:$0xff]
        %v3219 = vld [vmem:[#allocation17 + $0x138] sm:$0xff]
        %v3220 = vld [vmem:[#allocation17 + $0x140] sm:$0xff]
        %v3221 = vld [vmem:[#allocation17 + $0x148] sm:$0xff]
        %v3222 = vld [vmem:[#allocation17 + $0x150] sm:$0xff]
        %v3223 = vld [vmem:[#allocation17 + $0x158] sm:$0xff]
        %v3224 = vld [vmem:[#allocation17 + $0x160] sm:$0xff]
        %v3225 = vld [vmem:[#allocation17 + $0x168] sm:$0xff]
        %v3226 = vld [vmem:[#allocation17 + $0x170] sm:$0xff]
        %v3227 = vld [vmem:[#allocation17 + $0x178] sm:$0xff]
        %v3228 = vld [vmem:[#allocation17 + $0x180] sm:$0xff]
        %v3229 = vld [vmem:[#allocation17 + $0x188] sm:$0xff]
        %v3230 = vld [vmem:[#allocation17 + $0x190] sm:$0xff]
        %v3231 = vld [vmem:[#allocation17 + $0x198] sm:$0xff]
        %v3232 = vld [vmem:[#allocation17 + $0x1a0] sm:$0xff]
        %v3233 = vld [vmem:[#allocation17 + $0x1a8] sm:$0xff]
        %v3234 = vld [vmem:[#allocation17 + $0x1b0] sm:$0xff]
        %v3235 = vld [vmem:[#allocation17 + $0x1b8] sm:$0xff]
        %v3236 = vld [vmem:[#allocation17 + $0x1c0] sm:$0xff]
        %v3237 = vld [vmem:[#allocation17 + $0x1c8] sm:$0xff]
        %v3238 = vld [vmem:[#allocation17 + $0x1d0] sm:$0xff]
        %v3239 = vld [vmem:[#allocation17 + $0x1d8] sm:$0xff]
        %v3240 = vld [vmem:[#allocation17 + $0x1e0] sm:$0xff]
        %v3241 = vld [vmem:[#allocation17 + $0x1e8] sm:$0xff]
        %v3242 = vld [vmem:[#allocation17 + $0x1f0] sm:$0xff]
        %v3243 = vld [vmem:[#allocation17 + $0x1f8] sm:$0xff]
        %3244 = vmatprep.subr.mxu0 %v3241
        %3245 = vmatpush1.msra.mxu0 %v3240
        %3246 = vmatprep.subr.mxu0 %v3237
        %3247 = vmatpush1.msra.mxu0 %v3236
        %3248 = vmatprep.subr.mxu0 %v3233
        %3249 = vmatpush1.msra.mxu0 %v3232
        %3250 = vmatprep.subr.mxu0 %v3229
        %3251 = vmatpush1.msra.mxu0 %v3228
        %3252 = vmatprep.subr.mxu0 %v3225
        %3253 = vmatpush1.msra.mxu0 %v3224
        %3254 = vmatprep.subr.mxu0 %v3221
        %3255 = vmatpush1.msra.mxu0 %v3220
        %3256 = vmatprep.subr.mxu0 %v3217
        %3257 = vmatpush1.msra.mxu0 %v3216
        %3258 = vmatprep.subr.mxu0 %v3213
        %3259 = vmatpush1.msra.mxu0 %v3212
        %3260 = vmatprep.subr.mxu0 %v3209
        %3261 = vmatpush1.msra.mxu0 %v3208
        %3262 = vmatprep.subr.mxu0 %v3205
        %3263 = vmatpush1.msra.mxu0 %v3204
        %3264 = vmatprep.subr.mxu0 %v3201
        %3265 = vmatpush1.msra.mxu0 %v3200
        %3266 = vmatprep.subr.mxu0 %v3197
        %3267 = vmatpush1.msra.mxu0 %v3196
        %3268 = vmatprep.subr.mxu0 %v3193
        %3269 = vmatpush1.msra.mxu0 %v3192
        %3270 = vmatprep.subr.mxu0 %v3189
        %3271 = vmatpush1.msra.mxu0 %v3188
        %3272 = vmatprep.subr.mxu0 %v3185
        %3273 = vmatpush1.msra.mxu0 %v3184
        %3274 = vmatprep.subr.mxu0 %v3181
        %3275 = vmatpush1.msra.mxu0 %v3180
        %3276 = vmatprep.subr.mxu0 0.0
        %3277 = vmatpush2.msra.mxu0 0.0
        %3278 = vmatprep.subr.mxu0 0.0
        %3279 = vmatpush2.msra.mxu0 0.0
        %3280 = vmatprep.subr.mxu0 0.0
        %3281 = vmatpush2.msra.mxu0 0.0
        %3282 = vmatprep.subr.mxu0 0.0
        %3283 = vmatpush2.msra.mxu0 0.0
        %3284 = vmatprep.subr.mxu0 0.0
        %3285 = vmatpush2.msra.mxu0 0.0
        %3286 = vmatprep.subr.mxu0 0.0
        %3287 = vmatpush2.msra.mxu0 0.0
        %3288 = vmatprep.subr.mxu0 0.0
        %3289 = vmatpush2.msra.mxu0 0.0
        %3290 = vmatprep.subr.mxu0 0.0
        %3291 = vmatpush2.msra.mxu0 0.0
        %3292 = vmatprep.subr.mxu0 0.0
        %3293 = vmatpush2.msra.mxu0 0.0
        %3294 = vmatprep.subr.mxu0 0.0
        %3295 = vmatpush2.msra.mxu0 0.0
        %3296 = vmatprep.subr.mxu0 0.0
        %3297 = vmatpush2.msra.mxu0 0.0
        %3298 = vmatprep.subr.mxu0 0.0
        %3299 = vmatpush2.msra.mxu0 0.0
        %3300 = vmatprep.subr.mxu0 0.0
        %3301 = vmatpush2.msra.mxu0 0.0
        %3302 = vmatprep.subr.mxu0 0.0
        %3303 = vmatpush2.msra.mxu0 0.0
        %3304 = vmatprep.subr.mxu0 0.0
        %3305 = vmatpush2.msra.mxu0 0.0
        %3306 = vmatprep.subr.mxu0 0.0
        %3307 = vmatpush2.msra.mxu0 0.0
        %3308 = vmatprep.mubr.f32.mxu0 0.0
        %3309 = vmatmul.mubr.f32.gmra.mxu0 %v1049
        %v3310 = vpop.f32.mrf.mxu0
        %v3311 = vadd.f32 0.0, %v3310
        %v3312 = vpop.f32.mrf.mxu0
        %v3313 = vadd.f32 0.0, %v3312
        %3314 = vdwg.mxu0
        %3315 = vmatprep.subr.mxu0 %v3243
        %3316 = vmatpush1.msra.mxu0 %v3242
        %3317 = vmatprep.subr.mxu0 %v3239
        %3318 = vmatpush1.msra.mxu0 %v3238
        %3319 = vmatprep.subr.mxu0 %v3235
        %3320 = vmatpush1.msra.mxu0 %v3234
        %3321 = vmatprep.subr.mxu0 %v3231
        %3322 = vmatpush1.msra.mxu0 %v3230
        %3323 = vmatprep.subr.mxu0 %v3227
        %3324 = vmatpush1.msra.mxu0 %v3226
        %3325 = vmatprep.subr.mxu0 %v3223
        %3326 = vmatpush1.msra.mxu0 %v3222
        %3327 = vmatprep.subr.mxu0 %v3219
        %3328 = vmatpush1.msra.mxu0 %v3218
        %3329 = vmatprep.subr.mxu0 %v3215
        %3330 = vmatpush1.msra.mxu0 %v3214
        %3331 = vmatprep.subr.mxu0 %v3211
        %3332 = vmatpush1.msra.mxu0 %v3210
        %3333 = vmatprep.subr.mxu0 %v3207
        %3334 = vmatpush1.msra.mxu0 %v3206
        %3335 = vmatprep.subr.mxu0 %v3203
        %3336 = vmatpush1.msra.mxu0 %v3202
        %3337 = vmatprep.subr.mxu0 %v3199
        %3338 = vmatpush1.msra.mxu0 %v3198
        %3339 = vmatprep.subr.mxu0 %v3195
        %3340 = vmatpush1.msra.mxu0 %v3194
        %3341 = vmatprep.subr.mxu0 %v3191
        %3342 = vmatpush1.msra.mxu0 %v3190
        %3343 = vmatprep.subr.mxu0 %v3187
        %3344 = vmatpush1.msra.mxu0 %v3186
        %3345 = vmatprep.subr.mxu0 %v3183
        %3346 = vmatpush1.msra.mxu0 %v3182
        %3347 = vmatprep.subr.mxu0 0.0
        %3348 = vmatpush2.msra.mxu0 0.0
        %3349 = vmatprep.subr.mxu0 0.0
        %3350 = vmatpush2.msra.mxu0 0.0
        %3351 = vmatprep.subr.mxu0 0.0
        %3352 = vmatpush2.msra.mxu0 0.0
        %3353 = vmatprep.subr.mxu0 0.0
        %3354 = vmatpush2.msra.mxu0 0.0
        %3355 = vmatprep.subr.mxu0 0.0
        %3356 = vmatpush2.msra.mxu0 0.0
        %3357 = vmatprep.subr.mxu0 0.0
        %3358 = vmatpush2.msra.mxu0 0.0
        %3359 = vmatprep.subr.mxu0 0.0
        %3360 = vmatpush2.msra.mxu0 0.0
        %3361 = vmatprep.subr.mxu0 0.0
        %3362 = vmatpush2.msra.mxu0 0.0
        %3363 = vmatprep.subr.mxu0 0.0
        %3364 = vmatpush2.msra.mxu0 0.0
        %3365 = vmatprep.subr.mxu0 0.0
        %3366 = vmatpush2.msra.mxu0 0.0
        %3367 = vmatprep.subr.mxu0 0.0
        %3368 = vmatpush2.msra.mxu0 0.0
        %3369 = vmatprep.subr.mxu0 0.0
        %3370 = vmatpush2.msra.mxu0 0.0
        %3371 = vmatprep.subr.mxu0 0.0
        %3372 = vmatpush2.msra.mxu0 0.0
        %3373 = vmatprep.subr.mxu0 0.0
        %3374 = vmatpush2.msra.mxu0 0.0
        %3375 = vmatprep.subr.mxu0 0.0
        %3376 = vmatpush2.msra.mxu0 0.0
        %3377 = vmatprep.subr.mxu0 0.0
        %3378 = vmatpush2.msra.mxu0 0.0
        %3379 = vmatprep.mubr.f32.mxu0 0.0
        %3380 = vmatmul.mubr.f32.gmra.mxu0 %v1049
        %v3381 = vpop.f32.mrf.mxu0
        %v3382 = vadd.f32 0.0, %v3381
        %v3383 = vpop.f32.mrf.mxu0
        %v3384 = vadd.f32 0.0, %v3383
        %3385 = vdwg.mxu0
        %3386 = vmatprep.subr.mxu0 %v3049
        %3387 = vmatpush1.msra.mxu0 %v3048
        %3388 = vmatprep.subr.mxu0 %v3045
        %3389 = vmatpush1.msra.mxu0 %v3044
        %3390 = vmatprep.subr.mxu0 %v3041
        %3391 = vmatpush1.msra.mxu0 %v3040
        %3392 = vmatprep.subr.mxu0 %v3037
        %3393 = vmatpush1.msra.mxu0 %v3036
        %3394 = vmatprep.subr.mxu0 %v3033
        %3395 = vmatpush1.msra.mxu0 %v3032
        %3396 = vmatprep.subr.mxu0 %v3029
        %3397 = vmatpush1.msra.mxu0 %v3028
        %3398 = vmatprep.subr.mxu0 %v3025
        %3399 = vmatpush1.msra.mxu0 %v3024
        %3400 = vmatprep.subr.mxu0 %v3021
        %3401 = vmatpush1.msra.mxu0 %v3020
        %3402 = vmatprep.subr.mxu0 %v3017
        %3403 = vmatpush1.msra.mxu0 %v3016
        %3404 = vmatprep.subr.mxu0 %v3013
        %3405 = vmatpush1.msra.mxu0 %v3012
        %3406 = vmatprep.subr.mxu0 %v3009
        %3407 = vmatpush1.msra.mxu0 %v3008
        %3408 = vmatprep.subr.mxu0 %v3005
        %3409 = vmatpush1.msra.mxu0 %v3004
        %3410 = vmatprep.subr.mxu0 %v3001
        %3411 = vmatpush1.msra.mxu0 %v3000
        %3412 = vmatprep.subr.mxu0 %v2997
        %3413 = vmatpush1.msra.mxu0 %v2996
        %3414 = vmatprep.subr.mxu0 %v2993
        %3415 = vmatpush1.msra.mxu0 %v2992
        %3416 = vmatprep.subr.mxu0 %v2989
        %3417 = vmatpush1.msra.mxu0 %v2988
        %3418 = vmatprep.subr.mxu0 %v3113
        %3419 = vmatpush2.msra.mxu0 %v3112
        %3420 = vmatprep.subr.mxu0 %v3109
        %3421 = vmatpush2.msra.mxu0 %v3108
        %3422 = vmatprep.subr.mxu0 %v3105
        %3423 = vmatpush2.msra.mxu0 %v3104
        %3424 = vmatprep.subr.mxu0 %v3101
        %3425 = vmatpush2.msra.mxu0 %v3100
        %3426 = vmatprep.subr.mxu0 %v3097
        %3427 = vmatpush2.msra.mxu0 %v3096
        %3428 = vmatprep.subr.mxu0 %v3093
        %3429 = vmatpush2.msra.mxu0 %v3092
        %3430 = vmatprep.subr.mxu0 %v3089
        %3431 = vmatpush2.msra.mxu0 %v3088
        %3432 = vmatprep.subr.mxu0 %v3085
        %3433 = vmatpush2.msra.mxu0 %v3084
        %3434 = vmatprep.subr.mxu0 %v3081
        %3435 = vmatpush2.msra.mxu0 %v3080
        %3436 = vmatprep.subr.mxu0 %v3077
        %3437 = vmatpush2.msra.mxu0 %v3076
        %3438 = vmatprep.subr.mxu0 %v3073
        %3439 = vmatpush2.msra.mxu0 %v3072
        %3440 = vmatprep.subr.mxu0 %v3069
        %3441 = vmatpush2.msra.mxu0 %v3068
        %3442 = vmatprep.subr.mxu0 %v3065
        %3443 = vmatpush2.msra.mxu0 %v3064
        %3444 = vmatprep.subr.mxu0 %v3061
        %3445 = vmatpush2.msra.mxu0 %v3060
        %3446 = vmatprep.subr.mxu0 %v3057
        %3447 = vmatpush2.msra.mxu0 %v3056
        %3448 = vmatprep.subr.mxu0 %v3053
        %3449 = vmatpush2.msra.mxu0 %v3052
        %3450 = vmatprep.mubr.f32.mxu0 %v2984
        %3451 = vmatmul.mubr.f32.gmra.mxu0 %v2535
        %v3452 = vpop.f32.mrf.mxu0
        %v3453 = vadd.f32 %v3311, %v3452
        %v3454 = vpop.f32.mrf.mxu0
        %v3455 = vadd.f32 %v3313, %v3454
        %3456 = vdwg.mxu0
        %3457 = vmatprep.subr.mxu0 %v3177
        %3458 = vmatpush1.msra.mxu0 %v3176
        %3459 = vmatprep.subr.mxu0 %v3173
        %3460 = vmatpush1.msra.mxu0 %v3172
        %3461 = vmatprep.subr.mxu0 %v3169
        %3462 = vmatpush1.msra.mxu0 %v3168
        %3463 = vmatprep.subr.mxu0 %v3165
        %3464 = vmatpush1.msra.mxu0 %v3164
        %3465 = vmatprep.subr.mxu0 %v3161
        %3466 = vmatpush1.msra.mxu0 %v3160
        %3467 = vmatprep.subr.mxu0 %v3157
        %3468 = vmatpush1.msra.mxu0 %v3156
        %3469 = vmatprep.subr.mxu0 %v3153
        %3470 = vmatpush1.msra.mxu0 %v3152
        %3471 = vmatprep.subr.mxu0 %v3149
        %3472 = vmatpush1.msra.mxu0 %v3148
        %3473 = vmatprep.subr.mxu0 %v3145
        %3474 = vmatpush1.msra.mxu0 %v3144
        %3475 = vmatprep.subr.mxu0 %v3141
        %3476 = vmatpush1.msra.mxu0 %v3140
        %3477 = vmatprep.subr.mxu0 %v3137
        %3478 = vmatpush1.msra.mxu0 %v3136
        %3479 = vmatprep.subr.mxu0 %v3133
        %3480 = vmatpush1.msra.mxu0 %v3132
        %3481 = vmatprep.subr.mxu0 %v3129
        %3482 = vmatpush1.msra.mxu0 %v3128
        %3483 = vmatprep.subr.mxu0 %v3125
        %3484 = vmatpush1.msra.mxu0 %v3124
        %3485 = vmatprep.subr.mxu0 %v3121
        %3486 = vmatpush1.msra.mxu0 %v3120
        %3487 = vmatprep.subr.mxu0 %v3117
        %3488 = vmatpush1.msra.mxu0 %v3116
        %3489 = vmatprep.subr.mxu0 0.0
        %3490 = vmatpush2.msra.mxu0 0.0
        %3491 = vmatprep.subr.mxu0 0.0
        %3492 = vmatpush2.msra.mxu0 0.0
        %3493 = vmatprep.subr.mxu0 0.0
        %3494 = vmatpush2.msra.mxu0 0.0
        %3495 = vmatprep.subr.mxu0 0.0
        %3496 = vmatpush2.msra.mxu0 0.0
        %3497 = vmatprep.subr.mxu0 0.0
        %3498 = vmatpush2.msra.mxu0 0.0
        %3499 = vmatprep.subr.mxu0 0.0
        %3500 = vmatpush2.msra.mxu0 0.0
        %3501 = vmatprep.subr.mxu0 0.0
        %3502 = vmatpush2.msra.mxu0 0.0
        %3503 = vmatprep.subr.mxu0 0.0
        %3504 = vmatpush2.msra.mxu0 0.0
        %3505 = vmatprep.subr.mxu0 0.0
        %3506 = vmatpush2.msra.mxu0 0.0
        %3507 = vmatprep.subr.mxu0 0.0
        %3508 = vmatpush2.msra.mxu0 0.0
        %3509 = vmatprep.subr.mxu0 0.0
        %3510 = vmatpush2.msra.mxu0 0.0
        %3511 = vmatprep.subr.mxu0 0.0
        %3512 = vmatpush2.msra.mxu0 0.0
        %3513 = vmatprep.subr.mxu0 0.0
        %3514 = vmatpush2.msra.mxu0 0.0
        %3515 = vmatprep.subr.mxu0 0.0
        %3516 = vmatpush2.msra.mxu0 0.0
        %3517 = vmatprep.subr.mxu0 0.0
        %3518 = vmatpush2.msra.mxu0 0.0
        %3519 = vmatprep.subr.mxu0 0.0
        %3520 = vmatpush2.msra.mxu0 0.0
        %3521 = vmatprep.mubr.f32.mxu0 0.0
        %3522 = vmatmul.mubr.f32.gmra.mxu0 %v2985
        %v3523 = vpop.f32.mrf.mxu0
        %v3524 = vadd.f32 %v3453, %v3523
        %v3525 = vpop.f32.mrf.mxu0
        %v3526 = vadd.f32 %v3455, %v3525
        %3527 = vdwg.mxu0
        %3528 = vmatprep.subr.mxu0 %v3051
        %3529 = vmatpush1.msra.mxu0 %v3050
        %3530 = vmatprep.subr.mxu0 %v3047
        %3531 = vmatpush1.msra.mxu0 %v3046
        %3532 = vmatprep.subr.mxu0 %v3043
        %3533 = vmatpush1.msra.mxu0 %v3042
        %3534 = vmatprep.subr.mxu0 %v3039
        %3535 = vmatpush1.msra.mxu0 %v3038
        %3536 = vmatprep.subr.mxu0 %v3035
        %3537 = vmatpush1.msra.mxu0 %v3034
        %3538 = vmatprep.subr.mxu0 %v3031
        %3539 = vmatpush1.msra.mxu0 %v3030
        %3540 = vmatprep.subr.mxu0 %v3027
        %3541 = vmatpush1.msra.mxu0 %v3026
        %3542 = vmatprep.subr.mxu0 %v3023
        %3543 = vmatpush1.msra.mxu0 %v3022
        %3544 = vmatprep.subr.mxu0 %v3019
        %3545 = vmatpush1.msra.mxu0 %v3018
        %3546 = vmatprep.subr.mxu0 %v3015
        %3547 = vmatpush1.msra.mxu0 %v3014
        %3548 = vmatprep.subr.mxu0 %v3011
        %3549 = vmatpush1.msra.mxu0 %v3010
        %3550 = vmatprep.subr.mxu0 %v3007
        %3551 = vmatpush1.msra.mxu0 %v3006
        %3552 = vmatprep.subr.mxu0 %v3003
        %3553 = vmatpush1.msra.mxu0 %v3002
        %3554 = vmatprep.subr.mxu0 %v2999
        %3555 = vmatpush1.msra.mxu0 %v2998
        %3556 = vmatprep.subr.mxu0 %v2995
        %3557 = vmatpush1.msra.mxu0 %v2994
        %3558 = vmatprep.subr.mxu0 %v2991
        %3559 = vmatpush1.msra.mxu0 %v2990
        %3560 = vmatprep.subr.mxu0 %v3115
        %3561 = vmatpush2.msra.mxu0 %v3114
        %3562 = vmatprep.subr.mxu0 %v3111
        %3563 = vmatpush2.msra.mxu0 %v3110
        %3564 = vmatprep.subr.mxu0 %v3107
        %3565 = vmatpush2.msra.mxu0 %v3106
        %3566 = vmatprep.subr.mxu0 %v3103
        %3567 = vmatpush2.msra.mxu0 %v3102
        %3568 = vmatprep.subr.mxu0 %v3099
        %3569 = vmatpush2.msra.mxu0 %v3098
        %3570 = vmatprep.subr.mxu0 %v3095
        %3571 = vmatpush2.msra.mxu0 %v3094
        %3572 = vmatprep.subr.mxu0 %v3091
        %3573 = vmatpush2.msra.mxu0 %v3090
        %3574 = vmatprep.subr.mxu0 %v3087
        %3575 = vmatpush2.msra.mxu0 %v3086
        %3576 = vmatprep.subr.mxu0 %v3083
        %3577 = vmatpush2.msra.mxu0 %v3082
        %3578 = vmatprep.subr.mxu0 %v3079
        %3579 = vmatpush2.msra.mxu0 %v3078
        %3580 = vmatprep.subr.mxu0 %v3075
        %3581 = vmatpush2.msra.mxu0 %v3074
        %3582 = vmatprep.subr.mxu0 %v3071
        %3583 = vmatpush2.msra.mxu0 %v3070
        %3584 = vmatprep.subr.mxu0 %v3067
        %3585 = vmatpush2.msra.mxu0 %v3066
        %3586 = vmatprep.subr.mxu0 %v3063
        %3587 = vmatpush2.msra.mxu0 %v3062
        %3588 = vmatprep.subr.mxu0 %v3059
        %3589 = vmatpush2.msra.mxu0 %v3058
        %3590 = vmatprep.subr.mxu0 %v3055
        %3591 = vmatpush2.msra.mxu0 %v3054
        %3592 = vmatprep.mubr.f32.mxu0 %v2984
        %3593 = vmatmul.mubr.f32.gmra.mxu0 %v2535
        %v3594 = vpop.f32.mrf.mxu0
        %v3595 = vadd.f32 %v3382, %v3594
        %v3596 = vpop.f32.mrf.mxu0
        %v3597 = vadd.f32 %v3384, %v3596
        %3598 = vdwg.mxu0
        %3599 = vmatprep.subr.mxu0 %v3179
        %3600 = vmatpush1.msra.mxu0 %v3178
        %3601 = vmatprep.subr.mxu0 %v3175
        %3602 = vmatpush1.msra.mxu0 %v3174
        %3603 = vmatprep.subr.mxu0 %v3171
        %3604 = vmatpush1.msra.mxu0 %v3170
        %3605 = vmatprep.subr.mxu0 %v3167
        %3606 = vmatpush1.msra.mxu0 %v3166
        %3607 = vmatprep.subr.mxu0 %v3163
        %3608 = vmatpush1.msra.mxu0 %v3162
        %3609 = vmatprep.subr.mxu0 %v3159
        %3610 = vmatpush1.msra.mxu0 %v3158
        %3611 = vmatprep.subr.mxu0 %v3155
        %3612 = vmatpush1.msra.mxu0 %v3154
        %3613 = vmatprep.subr.mxu0 %v3151
        %3614 = vmatpush1.msra.mxu0 %v3150
        %3615 = vmatprep.subr.mxu0 %v3147
        %3616 = vmatpush1.msra.mxu0 %v3146
        %3617 = vmatprep.subr.mxu0 %v3143
        %3618 = vmatpush1.msra.mxu0 %v3142
        %3619 = vmatprep.subr.mxu0 %v3139
        %3620 = vmatpush1.msra.mxu0 %v3138
        %3621 = vmatprep.subr.mxu0 %v3135
        %3622 = vmatpush1.msra.mxu0 %v3134
        %3623 = vmatprep.subr.mxu0 %v3131
        %3624 = vmatpush1.msra.mxu0 %v3130
        %3625 = vmatprep.subr.mxu0 %v3127
        %3626 = vmatpush1.msra.mxu0 %v3126
        %3627 = vmatprep.subr.mxu0 %v3123
        %3628 = vmatpush1.msra.mxu0 %v3122
        %3629 = vmatprep.subr.mxu0 %v3119
        %3630 = vmatpush1.msra.mxu0 %v3118
        %3631 = vmatprep.subr.mxu0 0.0
        %3632 = vmatpush2.msra.mxu0 0.0
        %3633 = vmatprep.subr.mxu0 0.0
        %3634 = vmatpush2.msra.mxu0 0.0
        %3635 = vmatprep.subr.mxu0 0.0
        %3636 = vmatpush2.msra.mxu0 0.0
        %3637 = vmatprep.subr.mxu0 0.0
        %3638 = vmatpush2.msra.mxu0 0.0
        %3639 = vmatprep.subr.mxu0 0.0
        %3640 = vmatpush2.msra.mxu0 0.0
        %3641 = vmatprep.subr.mxu0 0.0
        %3642 = vmatpush2.msra.mxu0 0.0
        %3643 = vmatprep.subr.mxu0 0.0
        %3644 = vmatpush2.msra.mxu0 0.0
        %3645 = vmatprep.subr.mxu0 0.0
        %3646 = vmatpush2.msra.mxu0 0.0
        %3647 = vmatprep.subr.mxu0 0.0
        %3648 = vmatpush2.msra.mxu0 0.0
        %3649 = vmatprep.subr.mxu0 0.0
        %3650 = vmatpush2.msra.mxu0 0.0
        %3651 = vmatprep.subr.mxu0 0.0
        %3652 = vmatpush2.msra.mxu0 0.0
        %3653 = vmatprep.subr.mxu0 0.0
        %3654 = vmatpush2.msra.mxu0 0.0
        %3655 = vmatprep.subr.mxu0 0.0
        %3656 = vmatpush2.msra.mxu0 0.0
        %3657 = vmatprep.subr.mxu0 0.0
        %3658 = vmatpush2.msra.mxu0 0.0
        %3659 = vmatprep.subr.mxu0 0.0
        %3660 = vmatpush2.msra.mxu0 0.0
        %3661 = vmatprep.subr.mxu0 0.0
        %3662 = vmatpush2.msra.mxu0 0.0
        %3663 = vmatprep.mubr.f32.mxu0 0.0
        %3664 = vmatmul.mubr.f32.gmra.mxu0 %v2985
        %v3665 = vpop.f32.mrf.mxu0
        %v3666 = vadd.f32 %v3595, %v3665
        %v3667 = vpop.f32.mrf.mxu0
        %v3668 = vadd.f32 %v3597, %v3667
        %3669 = vdwg.mxu0
        %v3670 = vld [vmem:[%s51] sm:$0xf]
        %v3672 = vlaneseq
        %v3673 = vshrl.u32 %v3672, 7
        %v3674 = vsub.s32 0, %v3673
        %v3675 = vrot.slane %v3670, %v3674
        %v3676 = vlaneseq
        %v3677 = vshrl.u32 %v3676, 7
        %v3678 = vsub.s32 1, %v3677
        %v3679 = vrot.slane %v3670, %v3678
        %v3680 = vlaneseq
        %v3681 = vshrl.u32 %v3680, 7
        %v3682 = vsub.s32 2, %v3681
        %v3683 = vrot.slane %v3670, %v3682
        %v3684 = vlaneseq
        %v3685 = vshrl.u32 %v3684, 7
        %v3686 = vsub.s32 3, %v3685
        %v3687 = vrot.slane %v3670, %v3686
        %v3692 = vadd.f32 %v3524, %v3675
        %v3693 = vadd.f32 %v3526, %v3679
        %v3694 = vadd.f32 %v3666, %v3683
        %v3695 = vadd.f32 %v3668, %v3687
        %v3696 = vsub.f32 0.0, %v3692
        %v3697 = vmul.f32 %v3696, 1.442695
        %v3698 = vpow.pop %v3697
        %v3699 = vadd.f32 %v3698, 1.0
        %v3700 = vrcp.pop %v3699
        %v3701 = vmul.f32 1.0, %v3700
        %v3702 = vsub.f32 0.0, %v3693
        %v3703 = vmul.f32 %v3702, 1.442695
        %v3704 = vpow.pop %v3703
        %v3705 = vadd.f32 %v3704, 1.0
        %v3706 = vrcp.pop %v3705
        %v3707 = vmul.f32 1.0, %v3706
        %v3708 = vtanh.pop %v3694
        %v3709 = vsub.f32 0.0, %v3695
        %v3710 = vmul.f32 %v3709, 1.442695
        %v3711 = vpow.pop %v3710
        %v3712 = vadd.f32 %v3711, 1.0
        %v3713 = vrcp.pop %v3712
        %v3714 = vmul.f32 1.0, %v3713
        %v3715 = vmul.f32 %v3707, %v1050
        %v3716 = vmul.f32 %v3701, %v3708
        %v3717 = vadd.f32 %v3715, %v3716
        %v3718 = vtanh.pop %v3717
        %v3719 = vmul.f32 %v3714, %v3718
        %v3720 = vld [vmem:[#allocation18] sm:$0xff]
        %v3721 = vld [vmem:[#allocation18 + $0x8] sm:$0xff]
        %v3722 = vld [vmem:[#allocation18 + $0x10] sm:$0xff]
        %v3723 = vld [vmem:[#allocation18 + $0x18] sm:$0xff]
        %v3724 = vld [vmem:[#allocation18 + $0x20] sm:$0xff]
        %v3725 = vld [vmem:[#allocation18 + $0x28] sm:$0xff]
        %v3726 = vld [vmem:[#allocation18 + $0x30] sm:$0xff]
        %v3727 = vld [vmem:[#allocation18 + $0x38] sm:$0xff]
        %v3728 = vld [vmem:[#allocation18 + $0x40] sm:$0xff]
        %v3729 = vld [vmem:[#allocation18 + $0x48] sm:$0xff]
        %v3730 = vld [vmem:[#allocation18 + $0x50] sm:$0xff]
        %v3731 = vld [vmem:[#allocation18 + $0x58] sm:$0xff]
        %v3732 = vld [vmem:[#allocation18 + $0x60] sm:$0xff]
        %v3733 = vld [vmem:[#allocation18 + $0x68] sm:$0xff]
        %v3734 = vld [vmem:[#allocation18 + $0x70] sm:$0xff]
        %v3735 = vld [vmem:[#allocation18 + $0x78] sm:$0xff]
        %v3736 = vld [vmem:[#allocation18 + $0x80] sm:$0xff]
        %v3737 = vld [vmem:[#allocation18 + $0x88] sm:$0xff]
        %v3738 = vld [vmem:[#allocation18 + $0x90] sm:$0xff]
        %v3739 = vld [vmem:[#allocation18 + $0x98] sm:$0xff]
        %v3740 = vld [vmem:[#allocation18 + $0xa0] sm:$0xff]
        %v3741 = vld [vmem:[#allocation18 + $0xa8] sm:$0xff]
        %v3742 = vld [vmem:[#allocation18 + $0xb0] sm:$0xff]
        %v3743 = vld [vmem:[#allocation18 + $0xb8] sm:$0xff]
        %v3744 = vld [vmem:[#allocation18 + $0xc0] sm:$0xff]
        %v3745 = vld [vmem:[#allocation18 + $0xc8] sm:$0xff]
        %v3746 = vld [vmem:[#allocation18 + $0xd0] sm:$0xff]
        %v3747 = vld [vmem:[#allocation18 + $0xd8] sm:$0xff]
        %v3748 = vld [vmem:[#allocation18 + $0xe0] sm:$0xff]
        %v3749 = vld [vmem:[#allocation18 + $0xe8] sm:$0xff]
        %v3750 = vld [vmem:[#allocation18 + $0xf0] sm:$0xff]
        %v3751 = vld [vmem:[#allocation18 + $0xf8] sm:$0xff]
        %v3752 = vld [vmem:[#allocation18 + $0x100] sm:$0xff]
        %v3753 = vld [vmem:[#allocation18 + $0x108] sm:$0xff]
        %v3754 = vld [vmem:[#allocation18 + $0x110] sm:$0xff]
        %v3755 = vld [vmem:[#allocation18 + $0x118] sm:$0xff]
        %v3756 = vld [vmem:[#allocation18 + $0x120] sm:$0xff]
        %v3757 = vld [vmem:[#allocation18 + $0x128] sm:$0xff]
        %v3758 = vld [vmem:[#allocation18 + $0x130] sm:$0xff]
        %v3759 = vld [vmem:[#allocation18 + $0x138] sm:$0xff]
        %v3760 = vld [vmem:[#allocation18 + $0x140] sm:$0xff]
        %v3761 = vld [vmem:[#allocation18 + $0x148] sm:$0xff]
        %v3762 = vld [vmem:[#allocation18 + $0x150] sm:$0xff]
        %v3763 = vld [vmem:[#allocation18 + $0x158] sm:$0xff]
        %v3764 = vld [vmem:[#allocation18 + $0x160] sm:$0xff]
        %v3765 = vld [vmem:[#allocation18 + $0x168] sm:$0xff]
        %v3766 = vld [vmem:[#allocation18 + $0x170] sm:$0xff]
        %v3767 = vld [vmem:[#allocation18 + $0x178] sm:$0xff]
        %v3768 = vld [vmem:[#allocation18 + $0x180] sm:$0xff]
        %v3769 = vld [vmem:[#allocation18 + $0x188] sm:$0xff]
        %v3770 = vld [vmem:[#allocation18 + $0x190] sm:$0xff]
        %v3771 = vld [vmem:[#allocation18 + $0x198] sm:$0xff]
        %v3772 = vld [vmem:[#allocation18 + $0x1a0] sm:$0xff]
        %v3773 = vld [vmem:[#allocation18 + $0x1a8] sm:$0xff]
        %v3774 = vld [vmem:[#allocation18 + $0x1b0] sm:$0xff]
        %v3775 = vld [vmem:[#allocation18 + $0x1b8] sm:$0xff]
        %v3776 = vld [vmem:[#allocation18 + $0x1c0] sm:$0xff]
        %v3777 = vld [vmem:[#allocation18 + $0x1c8] sm:$0xff]
        %v3778 = vld [vmem:[#allocation18 + $0x1d0] sm:$0xff]
        %v3779 = vld [vmem:[#allocation18 + $0x1d8] sm:$0xff]
        %v3780 = vld [vmem:[#allocation18 + $0x1e0] sm:$0xff]
        %v3781 = vld [vmem:[#allocation18 + $0x1e8] sm:$0xff]
        %v3782 = vld [vmem:[#allocation18 + $0x1f0] sm:$0xff]
        %v3783 = vld [vmem:[#allocation18 + $0x1f8] sm:$0xff]
        %v3784 = vld [vmem:[%s55] sm:$0xf]
        %v3786 = vlaneseq
        %v3787 = vshrl.u32 %v3786, 7
        %v3788 = vsub.s32 0, %v3787
        %v3789 = vrot.slane %v3784, %v3788
        %v3790 = vlaneseq
        %v3791 = vshrl.u32 %v3790, 7
        %v3792 = vsub.s32 1, %v3791
        %v3793 = vrot.slane %v3784, %v3792
        %v3794 = vlaneseq
        %v3795 = vshrl.u32 %v3794, 7
        %v3796 = vsub.s32 2, %v3795
        %v3797 = vrot.slane %v3784, %v3796
        %v3798 = vlaneseq
        %v3799 = vshrl.u32 %v3798, 7
        %v3800 = vsub.s32 3, %v3799
        %v3801 = vrot.slane %v3784, %v3800
        %3806 = vmatprep.subr.mxu0 %v3781
        %3807 = vmatpush1.msra.mxu0 %v3780
        %3808 = vmatprep.subr.mxu0 %v3777
        %3809 = vmatpush1.msra.mxu0 %v3776
        %3810 = vmatprep.subr.mxu0 %v3773
        %3811 = vmatpush1.msra.mxu0 %v3772
        %3812 = vmatprep.subr.mxu0 %v3769
        %3813 = vmatpush1.msra.mxu0 %v3768
        %3814 = vmatprep.subr.mxu0 %v3765
        %3815 = vmatpush1.msra.mxu0 %v3764
        %3816 = vmatprep.subr.mxu0 %v3761
        %3817 = vmatpush1.msra.mxu0 %v3760
        %3818 = vmatprep.subr.mxu0 %v3757
        %3819 = vmatpush1.msra.mxu0 %v3756
        %3820 = vmatprep.subr.mxu0 %v3753
        %3821 = vmatpush1.msra.mxu0 %v3752
        %3822 = vmatprep.subr.mxu0 %v3749
        %3823 = vmatpush1.msra.mxu0 %v3748
        %3824 = vmatprep.subr.mxu0 %v3745
        %3825 = vmatpush1.msra.mxu0 %v3744
        %3826 = vmatprep.subr.mxu0 %v3741
        %3827 = vmatpush1.msra.mxu0 %v3740
        %3828 = vmatprep.subr.mxu0 %v3737
        %3829 = vmatpush1.msra.mxu0 %v3736
        %3830 = vmatprep.subr.mxu0 %v3733
        %3831 = vmatpush1.msra.mxu0 %v3732
        %3832 = vmatprep.subr.mxu0 %v3729
        %3833 = vmatpush1.msra.mxu0 %v3728
        %3834 = vmatprep.subr.mxu0 %v3725
        %3835 = vmatpush1.msra.mxu0 %v3724
        %3836 = vmatprep.subr.mxu0 %v3721
        %3837 = vmatpush1.msra.mxu0 %v3720
        %3838 = vmatprep.subr.mxu0 0.0
        %3839 = vmatpush2.msra.mxu0 0.0
        %3840 = vmatprep.subr.mxu0 0.0
        %3841 = vmatpush2.msra.mxu0 0.0
        %3842 = vmatprep.subr.mxu0 0.0
        %3843 = vmatpush2.msra.mxu0 0.0
        %3844 = vmatprep.subr.mxu0 0.0
        %3845 = vmatpush2.msra.mxu0 0.0
        %3846 = vmatprep.subr.mxu0 0.0
        %3847 = vmatpush2.msra.mxu0 0.0
        %3848 = vmatprep.subr.mxu0 0.0
        %3849 = vmatpush2.msra.mxu0 0.0
        %3850 = vmatprep.subr.mxu0 0.0
        %3851 = vmatpush2.msra.mxu0 0.0
        %3852 = vmatprep.subr.mxu0 0.0
        %3853 = vmatpush2.msra.mxu0 0.0
        %3854 = vmatprep.subr.mxu0 0.0
        %3855 = vmatpush2.msra.mxu0 0.0
        %3856 = vmatprep.subr.mxu0 0.0
        %3857 = vmatpush2.msra.mxu0 0.0
        %3858 = vmatprep.subr.mxu0 0.0
        %3859 = vmatpush2.msra.mxu0 0.0
        %3860 = vmatprep.subr.mxu0 0.0
        %3861 = vmatpush2.msra.mxu0 0.0
        %3862 = vmatprep.subr.mxu0 0.0
        %3863 = vmatpush2.msra.mxu0 0.0
        %3864 = vmatprep.subr.mxu0 0.0
        %3865 = vmatpush2.msra.mxu0 0.0
        %3866 = vmatprep.subr.mxu0 0.0
        %3867 = vmatpush2.msra.mxu0 0.0
        %3868 = vmatprep.subr.mxu0 0.0
        %3869 = vmatpush2.msra.mxu0 0.0
        %3870 = vmatprep.mubr.f32.mxu0 0.0
        %3871 = vmatmul.mubr.f32.gmra.mxu0 %v3719
        %v3872 = vpop.f32.mrf.mxu0
        %v3873 = vadd.f32 %v3789, %v3872
        %v3874 = vpop.f32.mrf.mxu0
        %v3875 = vadd.f32 %v3793, %v3874
        %3876 = vdwg.mxu0
        %3877 = vmatprep.subr.mxu0 %v3783
        %3878 = vmatpush1.msra.mxu0 %v3782
        %3879 = vmatprep.subr.mxu0 %v3779
        %3880 = vmatpush1.msra.mxu0 %v3778
        %3881 = vmatprep.subr.mxu0 %v3775
        %3882 = vmatpush1.msra.mxu0 %v3774
        %3883 = vmatprep.subr.mxu0 %v3771
        %3884 = vmatpush1.msra.mxu0 %v3770
        %3885 = vmatprep.subr.mxu0 %v3767
        %3886 = vmatpush1.msra.mxu0 %v3766
        %3887 = vmatprep.subr.mxu0 %v3763
        %3888 = vmatpush1.msra.mxu0 %v3762
        %3889 = vmatprep.subr.mxu0 %v3759
        %3890 = vmatpush1.msra.mxu0 %v3758
        %3891 = vmatprep.subr.mxu0 %v3755
        %3892 = vmatpush1.msra.mxu0 %v3754
        %3893 = vmatprep.subr.mxu0 %v3751
        %3894 = vmatpush1.msra.mxu0 %v3750
        %3895 = vmatprep.subr.mxu0 %v3747
        %3896 = vmatpush1.msra.mxu0 %v3746
        %3897 = vmatprep.subr.mxu0 %v3743
        %3898 = vmatpush1.msra.mxu0 %v3742
        %3899 = vmatprep.subr.mxu0 %v3739
        %3900 = vmatpush1.msra.mxu0 %v3738
        %3901 = vmatprep.subr.mxu0 %v3735
        %3902 = vmatpush1.msra.mxu0 %v3734
        %3903 = vmatprep.subr.mxu0 %v3731
        %3904 = vmatpush1.msra.mxu0 %v3730
        %3905 = vmatprep.subr.mxu0 %v3727
        %3906 = vmatpush1.msra.mxu0 %v3726
        %3907 = vmatprep.subr.mxu0 %v3723
        %3908 = vmatpush1.msra.mxu0 %v3722
        %3909 = vmatprep.subr.mxu0 0.0
        %3910 = vmatpush2.msra.mxu0 0.0
        %3911 = vmatprep.subr.mxu0 0.0
        %3912 = vmatpush2.msra.mxu0 0.0
        %3913 = vmatprep.subr.mxu0 0.0
        %3914 = vmatpush2.msra.mxu0 0.0
        %3915 = vmatprep.subr.mxu0 0.0
        %3916 = vmatpush2.msra.mxu0 0.0
        %3917 = vmatprep.subr.mxu0 0.0
        %3918 = vmatpush2.msra.mxu0 0.0
        %3919 = vmatprep.subr.mxu0 0.0
        %3920 = vmatpush2.msra.mxu0 0.0
        %3921 = vmatprep.subr.mxu0 0.0
        %3922 = vmatpush2.msra.mxu0 0.0
        %3923 = vmatprep.subr.mxu0 0.0
        %3924 = vmatpush2.msra.mxu0 0.0
        %3925 = vmatprep.subr.mxu0 0.0
        %3926 = vmatpush2.msra.mxu0 0.0
        %3927 = vmatprep.subr.mxu0 0.0
        %3928 = vmatpush2.msra.mxu0 0.0
        %3929 = vmatprep.subr.mxu0 0.0
        %3930 = vmatpush2.msra.mxu0 0.0
        %3931 = vmatprep.subr.mxu0 0.0
        %3932 = vmatpush2.msra.mxu0 0.0
        %3933 = vmatprep.subr.mxu0 0.0
        %3934 = vmatpush2.msra.mxu0 0.0
        %3935 = vmatprep.subr.mxu0 0.0
        %3936 = vmatpush2.msra.mxu0 0.0
        %3937 = vmatprep.subr.mxu0 0.0
        %3938 = vmatpush2.msra.mxu0 0.0
        %3939 = vmatprep.subr.mxu0 0.0
        %3940 = vmatpush2.msra.mxu0 0.0
        %3941 = vmatprep.mubr.f32.mxu0 0.0
        %3942 = vmatmul.mubr.f32.gmra.mxu0 %v3719
        %v3943 = vpop.f32.mrf.mxu0
        %v3944 = vadd.f32 %v3797, %v3943
        %v3945 = vpop.f32.mrf.mxu0
        %v3946 = vadd.f32 %v3801, %v3945
        %3947 = vdwg.mxu0
        %v3948 = vld [vmem:[%s5] sm:$0x3]
        %v3949 = vstv %s82
        %vm3950 = vcmp.gt.s32.totalorder %v3948, %v3949
        %v3951 = vsel %vm3950, 1, 0
        %v3952 = vcvt.s32.f32 %v3951
        %3954 = vset.pattern.permute.xlu0 0
        %3955 = vperm.xlu0 %3954, %v3952
        %v3956 = vpop.permute.xlu0 %3955
        %v3958 = vmul.f32 %v3873, %v3956
        %v3959 = vmul.f32 %v3875, %v3956
        %v3960 = vmul.f32 %v3944, %v3956
        %v3961 = vmul.f32 %v3946, %v3956
        %v3966 = vcombine.low %v3958, %v3959
        %v3967 = vcombine.low %v3960, %v3961
        %v3969 = vunpack.c.l.s4 1983009808
        %v3970 = vunpack.c.0.s8 %v3969
        %v3971 = vlaneseq
        %v3972 = vshrl.u32 %v3971, 7
        %v3973 = vsub.s32 %v3970, %v3972
        %v3974 = vrot.slane %v3966, %v3973
        %v3976 = vunpack.c.l.s4 1983009808
        %v3977 = vunpack.c.0.s8 %v3976
        %v3978 = vlaneseq
        %v3979 = vshrl.u32 %v3978, 7
        %v3980 = vsub.s32 %v3977, %v3979
        %v3981 = vrot.slane %v3967, %v3980
        %v3982 = vcombine.low %v3974, %v3981
        %3984 = vst [vmem:[%s1014] sm:$0xff] %v3982
        %v3985 = vlaneseq
        %v3986 = vshrl.u32 %v3985, 7
        %v3987 = vsub.s32 0, %v3986
        %v3988 = vrot.slane %v3956, %v3987
        %v3989 = vlaneseq
        %v3990 = vshrl.u32 %v3989, 7
        %v3991 = vsub.s32 1, %v3990
        %v3992 = vrot.slane %v3956, %v3991
        %v3995 = vmul.f32 %v2919, %v3988
        %v3996 = vmul.f32 %v2920, %v3988
        %v3997 = vmul.f32 %v2922, %v3992
        %v3998 = vmul.f32 %v2923, %v3992
        %4003 = vset.pattern.permute.xlu0 0
        %4004 = vperm.xlu0 %4003, %v3995
        %v4005 = vpop.permute.xlu0 %4004
        %4006 = vset.pattern.permute.xlu0 0
        %4007 = vperm.xlu0 %4006, %v3996
        %v4008 = vpop.permute.xlu0 %4007
        %4009 = vset.pattern.permute.xlu0 0
        %4010 = vperm.xlu0 %4009, %v3997
        %v4011 = vpop.permute.xlu0 %4010
        %4012 = vset.pattern.permute.xlu0 0
        %4013 = vperm.xlu0 %4012, %v3998
        %v4014 = vpop.permute.xlu0 %4013
        %v4015 = vlaneseq
        %v4016 = vshrl.u32 %v4015, 7
        %v4017 = vsub.s32 %v2818, %v4016
        %v4018 = vrot.slane %v4005, %v4017
        %v4019 = vlaneseq
        %v4020 = vshrl.u32 %v4019, 7
        %v4021 = vsub.s32 %v2823, %v4020
        %v4022 = vrot.slane %v4008, %v4021
        %v4023 = vsel %vm2828, %v4022, %v4018
        %v4024 = vlaneseq
        %v4025 = vshrl.u32 %v4024, 7
        %v4026 = vsub.s32 %v2818, %v4025
        %v4027 = vrot.slane %v4011, %v4026
        %v4028 = vlaneseq
        %v4029 = vshrl.u32 %v4028, 7
        %v4030 = vsub.s32 %v2823, %v4029
        %v4031 = vrot.slane %v4014, %v4030
        %v4032 = vsel %vm2828, %v4031, %v4027
        %v4033 = vsel %vm1735, %v4032, %v4023
        %4035 = vst.msk [vmem:[%s1021] sm:$0x3] %vm2841, %v4033
        %4036 = vst [vmem:[#allocation2] sm:$0x3] %v2535
        %4037 = vst [vmem:[#allocation3] sm:$0x3] %v2533
        %4038 = vst [vmem:[#allocation4] sm:$0x3] %v3719
        %4039 = vst [vmem:[#allocation5] sm:$0x3] %v3717
        %s4040 = sand.u32 %s683, 1
        %s4041 = scalar_lea.sflag [#allocation8], %s4040
        %s4042 = sand.u32 %s683, 1
        %s4043 = smul.addr %s4042, 8
        %s4044 = scalar_lea.vmem [#allocation20], %s4043
        %s4045 = sand.u32 %s709, 1
        %s4046 = scalar_lea.sflag [#allocation22], %s4045
        %s4047 = sand.u32 %s709, 1
        %s4048 = smul.addr %s4047, 2
        %s4049 = scalar_lea.vmem [#allocation21], %s4048
        // Predicated region
        $region169: #{decoder_forward.5} parent=131 // pred_check
          %p4050 = pneg %p693
        $region170: #{decoder_forward.5} parent=131 // pred_check_branch
          %4052 = sbr.rel (%p4050) target = $region172
        $region171: #{decoder_forward.5} parent=131 // pred_region
          %s4054 = ssub.s32 128, 128
          %4055 = vsyncadd %s4041, %s4054
          %s4056 = smul.addr %s82, 4
          %s4057 = smul.addr %s4056, 32
          %s4058 = scalar_lea.hbm %s57, %s4057
          %s4060 = sshll.u32 %s4044, 4
          %s4061 = int_to_ptr.vmem [resolvable:$true] %s4060
          %4063 = dma.vmem_to_hbm [thread:$0]  %s4061, 128, %s4058, %s4041
        $region172: #{decoder_forward.5} parent=131 // pred_fallthru
          _
        // Predicated region
        $region173: #{decoder_forward.5} parent=131 // pred_check
          %p4064 = pneg %p719
        $region174: #{decoder_forward.5} parent=131 // pred_check_branch
          %4066 = sbr.rel (%p4064) target = $region176
        $region175: #{decoder_forward.5} parent=131 // pred_region
          %s4068 = ssub.s32 32, 32
          %4069 = vsyncadd %s4046, %s4068
          %s4070 = smul.addr %s82, 32
          %s4071 = scalar_lea.hbm %s59, %s4070
          %s4073 = sshll.u32 %s4049, 4
          %s4074 = int_to_ptr.vmem [resolvable:$true] %s4073
          %4076 = dma.vmem_to_hbm [thread:$0]  %s4074, 32, %s4071, %s4046
        $region176: #{decoder_forward.5} parent=131 // pred_fallthru
          _
      $region132: #{decoder_forward.5} parent=5 // pred_fallthru
        _
      %p4077 = scmp.le.s32.totalorder 2, %s77
      // Predicated region
      $region177: #{decoder_forward.5} parent=5 // pred_check
        %p4078 = pneg %p4077
      $region178: #{decoder_forward.5} parent=5 // pred_check_branch
        %4080 = sbr.rel (%p4078) target = $region180
      $region179: #{decoder_forward.5} parent=5 // pred_region
        %s4081 = ssub.s32 %s77, 2
        // Predicated region
        $region181: #{decoder_forward.5} parent=179 // pred_check
          %p4082 = pneg %p699
        $region182: #{decoder_forward.5} parent=179 // pred_check_branch
          %4084 = sbr.rel (%p4082) target = $region184
        $region183: #{decoder_forward.5} parent=179 // pred_region
          %s4085 = sand.u32 %s684, 1
          %s4086 = scalar_lea.sflag [#allocation8], %s4085
          %s4087 = sand.u32 %s684, 1
          %s4088 = smul.addr %s4087, 8
          %s4089 = scalar_lea.vmem [#allocation20], %s4088
          %4090 = dma.done %s4086, 128
        $region184: #{decoder_forward.5} parent=179 // pred_fallthru
          _
        // Predicated region
        $region185: #{decoder_forward.5} parent=179 // pred_check
          %p4091 = pneg %p725
        $region186: #{decoder_forward.5} parent=179 // pred_check_branch
          %4093 = sbr.rel (%p4091) target = $region188
        $region187: #{decoder_forward.5} parent=179 // pred_region
          %s4094 = sand.u32 %s710, 1
          %s4095 = scalar_lea.sflag [#allocation22], %s4094
          %s4096 = sand.u32 %s710, 1
          %s4097 = smul.addr %s4096, 2
          %s4098 = scalar_lea.vmem [#allocation21], %s4097
          %4099 = dma.done %s4095, 32
        $region188: #{decoder_forward.5} parent=179 // pred_fallthru
          _
      $region180: #{decoder_forward.5} parent=5 // pred_fallthru
        _
    $region6: #{decoder_forward.5} parent=1 // loop_footer
      %s81 = sadd.s32 1, %s77
    $region7: #{decoder_forward.5} parent=1 // loop_footer_branch
      %76 = sbr.rel target = $region3
    $region8: #{decoder_forward.5} parent=1 // loop_exit
      _
    %4100 = vsyncpa [#allocation7], 1
    %s4101 = scalar_lea.sflag [#allocation7], 1
    %4102 = vsyncpa %s4101, 1
    %4103 = vsyncpa [#allocation10], 1
    %4104 = vsyncpa [#allocation13], 1
    %4105 = vsyncpa [#allocation16], 1
    %4106 = vsyncpa [#allocation19], 1
    %4107 = vsyncpa [#allocation8], 1
    %s4108 = scalar_lea.sflag [#allocation8], 1
    %4109 = vsyncpa %s4108, 1
    %4110 = vsyncpa [#allocation22], 1
    %s4111 = scalar_lea.sflag [#allocation22], 1
    %4112 = vsyncpa %s4111, 1

</llo_original>
